<compile_context>
chip_gen: v7x
topology: tpu7x:2x2x1
jax: 0.10.0
libtpu: 0.0.40
codegen_flags: <defaults>
</compile_context>

<pallas_src>
import functools

import jax
import jax.numpy as jnp
from jax.experimental import pallas as pl
from jax.experimental.pallas import tpu as pltpu

KS = 5              # kernel_size per pseudo-dimension
DIM = 2             # pseudo-coordinate dimension
KTOT = KS ** DIM    # 25 spline weight matrices per layer
CIN = 2             # raw input channels
HID = 16            # hidden width (input channels zero-padded up to HID)


# ----------------------------------------------------------------------------
# Pallas kernels
# ----------------------------------------------------------------------------
def xw_pack_kernel(h_ref, wall_ref, xw_ref):
    """xw[s, k*HID + j] = (h[s] @ W[k])[j] — ONE MXU matmul, lane-dense store."""
    xw_ref[...] = jnp.dot(h_ref[...], wall_ref[...],
                          preferred_element_type=jnp.float32).astype(xw_ref.dtype)


def spline_layer_kernel(a_ref, xw_ref, h_ref, wroot_ref, b_ref, wf_ref, bf_ref,
                        out_ref, acc_ref, *, apply_head):
    """K-tiled dense spline aggregation: acc += A_tile @ XW_tile (src-major cols).

    deg_inv is already folded into A.  Root transform, bias, ReLU (and on the
    final layer the fused Linear(16,1)+sigmoid head) are applied at the last
    K step of each dst tile.
    """
    k = pl.program_id(1)

    @pl.when(k == 0)
    def _():
        acc_ref[...] = jnp.zeros_like(acc_ref)

    acc_ref[...] += jnp.dot(a_ref[...], xw_ref[...],
                            preferred_element_type=jnp.float32)

    @pl.when(k == pl.num_programs(1) - 1)
    def _():
        root = jnp.dot(h_ref[...], wroot_ref[...],
                       preferred_element_type=jnp.float32)
        act = jnp.maximum(acc_ref[...] + root + b_ref[...], 0.0)      # ReLU, f32
        if apply_head:  # fused final Linear(16, 1) + sigmoid (last layer only)
            y = jnp.dot(act, wf_ref[...],
                        preferred_element_type=jnp.float32) + bf_ref[...]
            out_ref[...] = jax.nn.sigmoid(y)
        else:
            out_ref[...] = act.astype(out_ref.dtype)


# ----------------------------------------------------------------------------
# Tile / VMEM budgeting (per-generation via get_tpu_info, safe fallback)
# ----------------------------------------------------------------------------
def _vmem_cap():
    try:
        cap = int(pltpu.get_tpu_info().vmem_capacity_bytes)
    except Exception:
        cap = 64 << 20          # v7x physical VMEM (smallest of all generations)
    # leave headroom for Mosaic internal scratch / semaphores
    return min(int(cap * 0.8), 104 << 20)


def _vmem_limit(need_bytes, cap):
    return int(min(max(int(1.5 * need_bytes), 32 << 20), cap))


def _pick_tile(n_pad):
    """Largest dst tile that (a) divides n_pad and (b) leaves >= 2 parallel steps
    (keeps v7x's second TensorCore busy even for tiny graphs)."""
    target = max(8, n_pad // 2)
    for t in (512, 256, 128, 64, 32, 16, 8):
        if t <= target and n_pad % t == 0:
            return t
    return n_pad


def _layer_need(tile, tk, out_w):
    return (2 * tile * tk * 2          # A dst x K tiles (bf16, double-buffered)
            + 2 * tk * HID * 2         # XW K tiles (bf16)
            + 2 * tile * HID * 2       # h dst tiles (bf16)
            + 2 * tile * out_w * 4     # output tiles
            + tile * HID * 4           # f32 accumulator scratch
            + (HID * HID + 3 * HID + 4) * 4)   # small broadcast operands


def _pick_tk(n_pad, tile, out_w, budget):
    """Largest K tile (multiple of 128, dividing 25*n_pad) fitting the budget."""
    k_total = KTOT * n_pad
    cands = {c * n_pad for c in (25, 5, 1)}
    cands |= {t for t in (8192, 4096, 2048, 1024, 512, 256, 128) if n_pad % t == 0}
    for tk in sorted(cands, reverse=True):
        if tk > k_total or (k_total % tk) != 0:
            continue
        if _layer_need(tile, tk, out_w) <= budget:
            return tk
    return 128


# ----------------------------------------------------------------------------
# pallas_call wrappers
# ----------------------------------------------------------------------------
def _pack_call(h, w_all, n_pad, tile, cap):
    """(n_pad, HID) @ (HID, KTOT*HID) -> lane-dense (n_pad, KTOT*HID) bf16."""
    kw = KTOT * HID
    need = 2 * (tile * HID * 2 + HID * kw * 2 + tile * kw * 2) + tile * kw * 4
    return pl.pallas_call(
        xw_pack_kernel,
        out_shape=jax.ShapeDtypeStruct((n_pad, kw), jnp.bfloat16),
        grid=(n_pad // tile,),
        in_specs=[pl.BlockSpec((tile, HID), lambda i: (i, 0)),
                  pl.BlockSpec((HID, kw), lambda i: (0, 0))],
        out_specs=pl.BlockSpec((tile, kw), lambda i: (i, 0)),
        compiler_params=pltpu.CompilerParams(
            dimension_semantics=("parallel",),
            vmem_limit_bytes=_vmem_limit(need, cap)),
        cost_estimate=pl.CostEstimate(
            flops=int(2 * n_pad * HID * kw), transcendentals=0,
            bytes_accessed=int(n_pad * HID * 2 + HID * kw * 2 + n_pad * kw * 2)),
    )(h, w_all)


def _layer_call(a2d, xw, h, w_root, b, wf, bfc, *, apply_head, n_pad, tile, cap):
    k_total = KTOT * n_pad
    out_w = 1 if apply_head else HID
    out_dt = jnp.float32 if apply_head else jnp.bfloat16
    tk = _pick_tk(n_pad, tile, out_w, budget=cap)
    grid = (n_pad // tile, k_total // tk)

    need = _layer_need(tile, tk, out_w)
    flops = 2 * n_pad * k_total * HID + 2 * n_pad * HID * (HID + out_w)
    bytes_accessed = (n_pad * k_total * 2 + k_total * HID * 2 * (n_pad // tile)
                      + n_pad * HID * 2 + n_pad * out_w * 4)

    return pl.pallas_call(
        functools.partial(spline_layer_kernel, apply_head=apply_head),
        out_shape=jax.ShapeDtypeStruct((n_pad, out_w), out_dt),
        grid=grid,
        in_specs=[
            pl.BlockSpec((tile, tk), lambda i, k: (i, k)),   # A2D dst x K tile (bf16)
            pl.BlockSpec((tk, HID), lambda i, k: (k, 0)),    # src-major XW K tile
            pl.BlockSpec((tile, HID), lambda i, k: (i, 0)),  # h (root path, dst tile)
            pl.BlockSpec((HID, HID), lambda i, k: (0, 0)),   # W_root
            pl.BlockSpec((1, HID), lambda i, k: (0, 0)),     # bias
            pl.BlockSpec((HID, 1), lambda i, k: (0, 0)),     # fc weight (layer 3 only)
            pl.BlockSpec((1, 1), lambda i, k: (0, 0)),       # fc bias   (layer 3 only)
        ],
        out_specs=pl.BlockSpec((tile, out_w), lambda i, k: (i, 0)),
        scratch_shapes=[pltpu.VMEM((tile, HID), jnp.float32)],
        compiler_params=pltpu.CompilerParams(
            dimension_semantics=("parallel", "arbitrary"),
            vmem_limit_bytes=_vmem_limit(need, cap)),
        cost_estimate=pl.CostEstimate(
            flops=int(flops),
            transcendentals=int(n_pad if apply_head else 0),
            bytes_accessed=int(bytes_accessed)),
    )(a2d, xw, h, w_root, b, wf, bfc)


# ----------------------------------------------------------------------------
# Glue: degree-1 open B-spline basis (torch_spline_conv convention) + dense A
# ----------------------------------------------------------------------------
def spline_basis(edge_attr):
    """edge_attr: (E, DIM) in [0,1]. Returns (E,4) weight indices and basis values."""
    e = edge_attr.shape[0]
    v = edge_attr * (KS - 1.0)
    lo = jnp.floor(v)
    frac = v - lo
    lo = lo.astype(jnp.int32)
    idx = jnp.stack([lo % KS, (lo + 1) % KS], axis=-1)        # (E, DIM, 2)
    wgt = jnp.stack([1.0 - frac, frac], axis=-1)              # (E, DIM, 2)
    kidx, kb = [], []
    for s in range(2 ** DIM):
        ki = jnp.zeros((e,), jnp.int32)
        b = jnp.ones((e,), jnp.float32)
        stride = 1
        for d in range(DIM):
            bit = (s >> d) & 1
            ki = ki + idx[:, d, bit] * stride
            b = b * wgt[:, d, bit]
            stride *= KS
        kidx.append(ki)
        kb.append(b)
    return jnp.stack(kidx, axis=1), jnp.stack(kb, axis=1)     # (E,4), (E,4)


def build_dense_graph(edge_index, edge_attr, n_pad):
    """Dense, degree-normalized, SRC-MAJOR adjacency A2D[dst, src*KTOT + k] (bf16)."""
    src, dst = edge_index[0], edge_index[1]
    kidx, kb = spline_basis(edge_attr)
    deg = jnp.zeros((n_pad,), jnp.float32).at[dst].add(1.0)
    deginv = 1.0 / jnp.maximum(deg, 1.0)                      # mean aggregation
    vals = kb * deginv[dst][:, None]                          # fold 1/deg into A
    rows = jnp.broadcast_to(dst[:, None], kidx.shape).reshape(-1)
    cols = (src[:, None] * KTOT + kidx).reshape(-1)           # src-major columns
    # TODO(synk): build per K-tile / directly in bf16 and cache for static graphs.
    a2d = (jnp.zeros((n_pad, KTOT * n_pad), jnp.float32)
           .at[rows, cols].add(vals.reshape(-1)))
    return a2d.astype(jnp.bfloat16)


# ----------------------------------------------------------------------------
# Forward pass
# ----------------------------------------------------------------------------
def gnn_forward(x, edge_index, edge_attr, packed_params):
    n = x.shape[0]
    n_pad = ((n + 127) // 128) * 128                          # lane-full node count
    tile = _pick_tile(n_pad)
    cap = _vmem_cap()
    (w1, r1, b1, w2, r2, b2, w3, r3, b3, wf, bfc) = packed_params

    x_pad = (jnp.zeros((n_pad, HID), jnp.float32)
             .at[:n, :CIN].set(x).astype(jnp.bfloat16))
    a2d = build_dense_graph(edge_index, edge_attr, n_pad)

    def layer(h, w_all, w_root, b, apply_head):
        xw2d = _pack_call(h, w_all, n_pad, tile, cap)         # (n_pad, 400) lane-dense
        xw = xw2d.reshape(KTOT * n_pad, HID)                  # free row-major view
        return _layer_call(a2d, xw, h, w_root, b, wf, bfc,
                           apply_head=apply_head, n_pad=n_pad, tile=tile, cap=cap)

    h = layer(x_pad, w1, r1, b1, False)       # (n_pad, 16) bf16
    h = layer(h, w2, r2, b2, False)
    y = layer(h, w3, r3, b3, True)            # (n_pad, 1) f32, fc+sigmoid fused
    return y[:n, 0]


# ----------------------------------------------------------------------------
# Pure-JAX reference (edge-level message passing) for verification
# ----------------------------------------------------------------------------
def reference_forward(x, edge_index, edge_attr, raw_params):
    n = x.shape[0]
    src, dst = edge_index[0], edge_index[1]
    kidx, kb = spline_basis(edge_attr)
    deg = jnp.zeros((n,), jnp.float32).at[dst].add(1.0)
    deginv = (1.0 / jnp.maximum(deg, 1.0))[:, None]
    (w1, r1, b1, w2, r2, b2, w3, r3, b3, wf, bfc) = raw_params

    def layer(h, w, r, b):
        wg = w[kidx]                                          # (E, 4, Cin, Cout)
        m = jnp.einsum('ei,esio->eso', h[src], wg)            # (E, 4, Cout)
        m = (m * kb[..., None]).sum(axis=1)                   # (E, Cout)
        agg = jax.ops.segment_sum(m, dst, num_segments=n) * deginv
        return jax.nn.relu(agg + h @ r + b)

    h = layer(x, w1, r1, b1)
    h = layer(h, w2, r2, b2)
    h = layer(h, w3, r3, b3)
    return jax.nn.sigmoid((h @ wf)[:, 0] + bfc[0])


# ----------------------------------------------------------------------------
# Deterministic synthetic parameters (raw + kernel-packed)
# ----------------------------------------------------------------------------
def init_params(key):
    ks = jax.random.split(key, 11)
    rnd = lambda k, shape, s: jax.random.normal(k, shape, jnp.float32) * s
    w1 = rnd(ks[0], (KTOT, CIN, HID), 0.3)
    r1 = rnd(ks[1], (CIN, HID), 0.3)
    b1 = rnd(ks[2], (HID,), 0.1)
    w2 = rnd(ks[3], (KTOT, HID, HID), 0.1)
    r2 = rnd(ks[4], (HID, HID), 0.1)
    b2 = rnd(ks[5], (HID,), 0.1)
    w3 = rnd(ks[6], (KTOT, HID, HID), 0.1)
    r3 = rnd(ks[7], (HID, HID), 0.1)
    b3 = rnd(ks[8], (HID,), 0.1)
    wf = rnd(ks[9], (HID, 1), 0.3)
    bfc = rnd(ks[10], (1,), 0.1)
    return (w1, r1, b1, w2, r2, b2, w3, r3, b3, wf, bfc)


def _pack_w(w):
    """(KTOT, Cin, HID) -> (HID, KTOT*HID) bf16 with W_all[c, k*HID+j] = W[k,c,j]."""
    cin = w.shape[1]
    wp = jnp.zeros((KTOT, HID, HID), jnp.float32).at[:, :cin, :].set(w)
    return jnp.transpose(wp, (1, 0, 2)).reshape(HID, KTOT * HID).astype(jnp.bfloat16)


def _pack_r(r):
    cin = r.shape[0]
    return jnp.zeros((HID, HID), jnp.float32).at[:cin, :].set(r).astype(jnp.bfloat16)


def pack_params(raw):
    (w1, r1, b1, w2, r2, b2, w3, r3, b3, wf, bfc) = raw
    return (_pack_w(w1), _pack_r(r1), b1.reshape(1, HID),
            _pack_w(w2), _pack_r(r2), b2.reshape(1, HID),
            _pack_w(w3), _pack_r(r3), b3.reshape(1, HID),
            wf.astype(jnp.float32), bfc.reshape(1, 1).astype(jnp.float32))


if __name__ == "__main__":
    N, E = 64, 256
    key = jax.random.PRNGKey(0)
    kx, ks_, kd, ka, kp = jax.random.split(key, 5)
    x = jax.random.uniform(kx, (N, CIN), jnp.float32)
    src = jax.random.randint(ks_, (E,), 0, N)
    dst = jax.random.randint(kd, (E,), 0, N)
    edge_index = jnp.stack([src, dst])                    # PyG convention: row 0 = source
    edge_attr = jax.random.uniform(ka, (E, DIM), jnp.float32)
    raw_params = init_params(kp)
    packed = pack_params(raw_params)

    fwd = jax.jit(gnn_forward)
    out = jax.block_until_ready(fwd(x, edge_index, edge_attr, packed))

    ref = reference_forward(x, edge_index, edge_attr, raw_params)
    assert out.shape == (N,)
    max_err = float(jnp.max(jnp.abs(out - ref)))
    # bf16 MXU operands with f32 accumulation -> loosened tolerance vs f32 reference
    assert jnp.allclose(out, ref, atol=2e-2, rtol=2e-2), ("max_abs_err", max_err)
    print("KERNEL_OK")
</pallas_src>

<mosaic_0001>
module attributes {stable_mosaic.version = 11 : i64} {
  func.func private @main(%arg0: i32) attributes {dimension_semantics = [#tpu.dimension_semantics<core_parallel>], iteration_bounds = array<i64: 2>, tpu.core_type = #tpu.core_type<sc_scalar_subcore>, window_params = []} {
    return
  }
}

module attributes {stable_mosaic.version = 11 : i64} {
  func.func private @main(%arg0: i32) attributes {dimension_semantics = [#tpu.dimension_semantics<core_parallel>], iteration_bounds = array<i64: 2>, tpu.core_type = #tpu.core_type<sc_scalar_subcore>, window_params = []} {
    return
  }
}

module attributes {stable_mosaic.version = 11 : i64} {
  func.func @xw_pack_kernel(%arg0: i32, %arg1: memref<64x16xbf16, #tpu.memory_space<vmem>>, %arg2: memref<16x400xbf16, #tpu.memory_space<vmem>>, %arg3: memref<64x400xbf16, #tpu.memory_space<vmem>>) attributes {dimension_semantics = [#tpu.dimension_semantics<parallel>], iteration_bounds = array<i64: 2>, scalar_prefetch = 0 : i64, scratch_operands = 0 : i64, tpu.core_type = #tpu.core_type<tc>, window_params = [{transform_indices = @transform_0, window_bounds = array<i64: 64, 16>}, {pipeline_mode = #tpu.pipeline_mode<synchronous>, transform_indices = @transform_1, window_bounds = array<i64: 16, 400>}, {transform_indices = @transform_2, window_bounds = array<i64: 64, 400>}]} {
    %c0 = arith.constant 0 : index
    %c0_0 = arith.constant 0 : index
    %0 = vector.load %arg1[%c0, %c0_0] : memref<64x16xbf16, #tpu.memory_space<vmem>>, vector<64x16xbf16>
    %c0_1 = arith.constant 0 : index
    %c0_2 = arith.constant 0 : index
    %1 = vector.load %arg2[%c0_1, %c0_2] : memref<16x400xbf16, #tpu.memory_space<vmem>>, vector<16x400xbf16>
    %cst = arith.constant dense<0.000000e+00> : vector<64x400xf32>
    %2 = tpu.matmul %0, %1, %cst {dimension_numbers = #tpu.dot_dimension_numbers<[1], [0], [0], [1], [0, 0, 1, 1], [], []>} : vector<64x16xbf16>, vector<16x400xbf16>, vector<64x400xf32> -> vector<64x400xf32>
    %3 = arith.truncf %2 : vector<64x400xf32> to vector<64x400xbf16>
    %c0_3 = arith.constant 0 : index
    %c0_4 = arith.constant 0 : index
    %4 = vector.load %arg3[%c0_3, %c0_4] : memref<64x400xbf16, #tpu.memory_space<vmem>>, vector<64x400xbf16>
    tpu.vector_store %arg3[%c0_3, %c0_4], %3 {strides = array<i32>} : memref<64x400xbf16, #tpu.memory_space<vmem>>, vector<64x400xbf16>,
    return
  }
  func.func @transform_0(%arg0: i32) -> (i32, i32) {
    %c0_i32 = arith.constant 0 : i32
    %c0_i32_0 = arith.constant 0 : i32
    return %arg0, %c0_i32 : i32, i32
  }
  func.func @transform_1(%arg0: i32) -> (i32, i32) {
    %c0_i32 = arith.constant 0 : i32
    %c0_i32_0 = arith.constant 0 : i32
    %c0_i32_1 = arith.constant 0 : i32
    return %c0_i32, %c0_i32_0 : i32, i32
  }
  func.func @transform_2(%arg0: i32) -> (i32, i32) {
    %c0_i32 = arith.constant 0 : i32
    %c0_i32_0 = arith.constant 0 : i32
    return %arg0, %c0_i32 : i32, i32
  }
}

module attributes {stable_mosaic.version = 11 : i64} {
  func.func @spline_layer_kernel(%arg0: i32, %arg1: i32, %arg2: memref<64x3200xbf16, #tpu.memory_space<vmem>>, %arg3: memref<3200x16xbf16, #tpu.memory_space<vmem>>, %arg4: memref<64x16xbf16, #tpu.memory_space<vmem>>, %arg5: memref<16x16xbf16, #tpu.memory_space<vmem>>, %arg6: memref<1x16xf32, #tpu.memory_space<vmem>>, %arg7: memref<16x1xf32, #tpu.memory_space<vmem>>, %arg8: memref<1x1xf32, #tpu.memory_space<vmem>>, %arg9: memref<64x16xbf16, #tpu.memory_space<vmem>>, %arg10: memref<64x16xf32, #tpu.memory_space<vmem>>) attributes {dimension_semantics = [#tpu.dimension_semantics<parallel>, #tpu.dimension_semantics<arbitrary>], iteration_bounds = array<i64: 2, 1>, scalar_prefetch = 0 : i64, scratch_operands = 1 : i64, tpu.core_type = #tpu.core_type<tc>, window_params = [{transform_indices = @transform_0, window_bounds = array<i64: 64, 3200>}, {transform_indices = @transform_1, window_bounds = array<i64: 3200, 16>}, {transform_indices = @transform_2, window_bounds = array<i64: 64, 16>}, {pipeline_mode = #tpu.pipeline_mode<synchronous>, transform_indices = @transform_3, window_bounds = array<i64: 16, 16>}, {pipeline_mode = #tpu.pipeline_mode<synchronous>, transform_indices = @transform_4, window_bounds = array<i64: 1, 16>}, {pipeline_mode = #tpu.pipeline_mode<synchronous>, transform_indices = @transform_5, window_bounds = array<i64: 16, 1>}, {pipeline_mode = #tpu.pipeline_mode<synchronous>, transform_indices = @transform_6, window_bounds = array<i64: 1, 1>}, {transform_indices = @transform_7, window_bounds = array<i64: 64, 16>}]} {
    %c0_i32 = arith.constant 0 : i32
    %0 = arith.cmpi eq, %arg1, %c0_i32 : i32
    %1 = arith.extui %0 : i1 to i32
    %c0_i32_0 = arith.constant 0 : i32
    %2 = arith.cmpi ne, %1, %c0_i32_0 : i32
    scf.if %2 {
      %cst_10 = arith.constant 0.000000e+00 : f32
      %12 = vector.broadcast %cst_10 : f32 to vector<64x16xf32>
      %c0_11 = arith.constant 0 : index
      %c0_12 = arith.constant 0 : index
      %13 = vector.load %arg10[%c0_11, %c0_12] : memref<64x16xf32, #tpu.memory_space<vmem>>, vector<64x16xf32>
      tpu.vector_store %arg10[%c0_11, %c0_12], %12 {strides = array<i32>} : memref<64x16xf32, #tpu.memory_space<vmem>>, vector<64x16xf32>,
    } else {
    }
    %c0 = arith.constant 0 : index
    %c0_1 = arith.constant 0 : index
    %3 = vector.load %arg10[%c0, %c0_1] : memref<64x16xf32, #tpu.memory_space<vmem>>, vector<64x16xf32>
    %c0_2 = arith.constant 0 : index
    %c0_3 = arith.constant 0 : index
    %4 = vector.load %arg2[%c0_2, %c0_3] : memref<64x3200xbf16, #tpu.memory_space<vmem>>, vector<64x3200xbf16>
    %c0_4 = arith.constant 0 : index
    %c0_5 = arith.constant 0 : index
    %5 = vector.load %arg3[%c0_4, %c0_5] : memref<3200x16xbf16, #tpu.memory_space<vmem>>, vector<3200x16xbf16>
    %cst = arith.constant dense<0.000000e+00> : vector<64x16xf32>
    %6 = tpu.matmul %4, %5, %cst {dimension_numbers = #tpu.dot_dimension_numbers<[1], [0], [0], [1], [0, 0, 1, 1], [], []>} : vector<64x3200xbf16>, vector<3200x16xbf16>, vector<64x16xf32> -> vector<64x16xf32>
    %7 = arith.addf %3, %6 : vector<64x16xf32>
    %c0_6 = arith.constant 0 : index
    %c0_7 = arith.constant 0 : index
    %8 = vector.load %arg10[%c0_6, %c0_7] : memref<64x16xf32, #tpu.memory_space<vmem>>, vector<64x16xf32>
    tpu.vector_store %arg10[%c0_6, %c0_7], %7 {strides = array<i32>} : memref<64x16xf32, #tpu.memory_space<vmem>>, vector<64x16xf32>,
    %c0_i32_8 = arith.constant 0 : i32
    %9 = arith.cmpi eq, %arg1, %c0_i32_8 : i32
    %10 = arith.extui %9 : i1 to i32
    %c0_i32_9 = arith.constant 0 : i32
    %11 = arith.cmpi ne, %10, %c0_i32_9 : i32
    scf.if %11 {
      %c0_10 = arith.constant 0 : index
      %c0_11 = arith.constant 0 : index
      %12 = vector.load %arg4[%c0_10, %c0_11] : memref<64x16xbf16, #tpu.memory_space<vmem>>, vector<64x16xbf16>
      %c0_12 = arith.constant 0 : index
      %c0_13 = arith.constant 0 : index
      %13 = vector.load %arg5[%c0_12, %c0_13] : memref<16x16xbf16, #tpu.memory_space<vmem>>, vector<16x16xbf16>
      %cst_14 = arith.constant dense<0.000000e+00> : vector<64x16xf32>
      %14 = tpu.matmul %12, %13, %cst_14 {dimension_numbers = #tpu.dot_dimension_numbers<[1], [0], [0], [1], [0, 0, 1, 1], [], []>} : vector<64x16xbf16>, vector<16x16xbf16>, vector<64x16xf32> -> vector<64x16xf32>
      %c0_15 = arith.constant 0 : index
      %c0_16 = arith.constant 0 : index
      %15 = vector.load %arg10[%c0_15, %c0_16] : memref<64x16xf32, #tpu.memory_space<vmem>>, vector<64x16xf32>
      %16 = arith.addf %15, %14 : vector<64x16xf32>
      %c0_17 = arith.constant 0 : index
      %c0_18 = arith.constant 0 : index
      %17 = vector.load %arg6[%c0_17, %c0_18] : memref<1x16xf32, #tpu.memory_space<vmem>>, vector<1x16xf32>
      %18 = vector.broadcast %17 : vector<1x16xf32> to vector<64x16xf32>
      %19 = arith.addf %16, %18 : vector<64x16xf32>
      %cst_19 = arith.constant 0.000000e+00 : f32
      %20 = vector.broadcast %cst_19 : f32 to vector<64x16xf32>
      %21 = arith.maximumf %19, %20 : vector<64x16xf32>
      %22 = arith.truncf %21 : vector<64x16xf32> to vector<64x16xbf16>
      %c0_20 = arith.constant 0 : index
      %c0_21 = arith.constant 0 : index
      %23 = vector.load %arg9[%c0_20, %c0_21] : memref<64x16xbf16, #tpu.memory_space<vmem>>, vector<64x16xbf16>
      tpu.vector_store %arg9[%c0_20, %c0_21], %22 {strides = array<i32>} : memref<64x16xbf16, #tpu.memory_space<vmem>>, vector<64x16xbf16>,
    } else {
    }
    return
  }
  func.func @transform_0(%arg0: i32, %arg1: i32) -> (i32, i32) {
    %c0_i32 = arith.constant 0 : i32
    return %arg0, %arg1 : i32, i32
  }
  func.func @transform_1(%arg0: i32, %arg1: i32) -> (i32, i32) {
    %c0_i32 = arith.constant 0 : i32
    %c0_i32_0 = arith.constant 0 : i32
    return %arg1, %c0_i32 : i32, i32
  }
  func.func @transform_2(%arg0: i32, %arg1: i32) -> (i32, i32) {
    %c0_i32 = arith.constant 0 : i32
    %c0_i32_0 = arith.constant 0 : i32
    return %arg0, %c0_i32 : i32, i32
  }
  func.func @transform_3(%arg0: i32, %arg1: i32) -> (i32, i32) {
    %c0_i32 = arith.constant 0 : i32
    %c0_i32_0 = arith.constant 0 : i32
    %c0_i32_1 = arith.constant 0 : i32
    return %c0_i32, %c0_i32_0 : i32, i32
  }
  func.func @transform_4(%arg0: i32, %arg1: i32) -> (i32, i32) {
    %c0_i32 = arith.constant 0 : i32
    %c0_i32_0 = arith.constant 0 : i32
    %c0_i32_1 = arith.constant 0 : i32
    return %c0_i32, %c0_i32_0 : i32, i32
  }
  func.func @transform_5(%arg0: i32, %arg1: i32) -> (i32, i32) {
    %c0_i32 = arith.constant 0 : i32
    %c0_i32_0 = arith.constant 0 : i32
    %c0_i32_1 = arith.constant 0 : i32
    return %c0_i32, %c0_i32_0 : i32, i32
  }
  func.func @transform_6(%arg0: i32, %arg1: i32) -> (i32, i32) {
    %c0_i32 = arith.constant 0 : i32
    %c0_i32_0 = arith.constant 0 : i32
    %c0_i32_1 = arith.constant 0 : i32
    return %c0_i32, %c0_i32_0 : i32, i32
  }
  func.func @transform_7(%arg0: i32, %arg1: i32) -> (i32, i32) {
    %c0_i32 = arith.constant 0 : i32
    %c0_i32_0 = arith.constant 0 : i32
    return %arg0, %c0_i32 : i32, i32
  }
}

module attributes {stable_mosaic.version = 11 : i64} {
  func.func @xw_pack_kernel(%arg0: i32, %arg1: memref<64x16xbf16, #tpu.memory_space<vmem>>, %arg2: memref<16x400xbf16, #tpu.memory_space<vmem>>, %arg3: memref<64x400xbf16, #tpu.memory_space<vmem>>) attributes {dimension_semantics = [#tpu.dimension_semantics<parallel>], iteration_bounds = array<i64: 2>, scalar_prefetch = 0 : i64, scratch_operands = 0 : i64, tpu.core_type = #tpu.core_type<tc>, window_params = [{transform_indices = @transform_0, window_bounds = array<i64: 64, 16>}, {pipeline_mode = #tpu.pipeline_mode<synchronous>, transform_indices = @transform_1, window_bounds = array<i64: 16, 400>}, {transform_indices = @transform_2, window_bounds = array<i64: 64, 400>}]} {
    %c0 = arith.constant 0 : index
    %c0_0 = arith.constant 0 : index
    %0 = vector.load %arg1[%c0, %c0_0] : memref<64x16xbf16, #tpu.memory_space<vmem>>, vector<64x16xbf16>
    %c0_1 = arith.constant 0 : index
    %c0_2 = arith.constant 0 : index
    %1 = vector.load %arg2[%c0_1, %c0_2] : memref<16x400xbf16, #tpu.memory_space<vmem>>, vector<16x400xbf16>
    %cst = arith.constant dense<0.000000e+00> : vector<64x400xf32>
    %2 = tpu.matmul %0, %1, %cst {dimension_numbers = #tpu.dot_dimension_numbers<[1], [0], [0], [1], [0, 0, 1, 1], [], []>} : vector<64x16xbf16>, vector<16x400xbf16>, vector<64x400xf32> -> vector<64x400xf32>
    %3 = arith.truncf %2 : vector<64x400xf32> to vector<64x400xbf16>
    %c0_3 = arith.constant 0 : index
    %c0_4 = arith.constant 0 : index
    %4 = vector.load %arg3[%c0_3, %c0_4] : memref<64x400xbf16, #tpu.memory_space<vmem>>, vector<64x400xbf16>
    tpu.vector_store %arg3[%c0_3, %c0_4], %3 {strides = array<i32>} : memref<64x400xbf16, #tpu.memory_space<vmem>>, vector<64x400xbf16>,
    return
  }
  func.func @transform_0(%arg0: i32) -> (i32, i32) {
    %c0_i32 = arith.constant 0 : i32
    %c0_i32_0 = arith.constant 0 : i32
    return %arg0, %c0_i32 : i32, i32
  }
  func.func @transform_1(%arg0: i32) -> (i32, i32) {
    %c0_i32 = arith.constant 0 : i32
    %c0_i32_0 = arith.constant 0 : i32
    %c0_i32_1 = arith.constant 0 : i32
    return %c0_i32, %c0_i32_0 : i32, i32
  }
  func.func @transform_2(%arg0: i32) -> (i32, i32) {
    %c0_i32 = arith.constant 0 : i32
    %c0_i32_0 = arith.constant 0 : i32
    return %arg0, %c0_i32 : i32, i32
  }
}

module attributes {stable_mosaic.version = 11 : i64} {
  func.func @spline_layer_kernel(%arg0: i32, %arg1: i32, %arg2: memref<64x3200xbf16, #tpu.memory_space<vmem>>, %arg3: memref<3200x16xbf16, #tpu.memory_space<vmem>>, %arg4: memref<64x16xbf16, #tpu.memory_space<vmem>>, %arg5: memref<16x16xbf16, #tpu.memory_space<vmem>>, %arg6: memref<1x16xf32, #tpu.memory_space<vmem>>, %arg7: memref<16x1xf32, #tpu.memory_space<vmem>>, %arg8: memref<1x1xf32, #tpu.memory_space<vmem>>, %arg9: memref<64x1xf32, #tpu.memory_space<vmem>>, %arg10: memref<64x16xf32, #tpu.memory_space<vmem>>) attributes {dimension_semantics = [#tpu.dimension_semantics<parallel>, #tpu.dimension_semantics<arbitrary>], iteration_bounds = array<i64: 2, 1>, scalar_prefetch = 0 : i64, scratch_operands = 1 : i64, tpu.core_type = #tpu.core_type<tc>, window_params = [{transform_indices = @transform_0, window_bounds = array<i64: 64, 3200>}, {transform_indices = @transform_1, window_bounds = array<i64: 3200, 16>}, {transform_indices = @transform_2, window_bounds = array<i64: 64, 16>}, {pipeline_mode = #tpu.pipeline_mode<synchronous>, transform_indices = @transform_3, window_bounds = array<i64: 16, 16>}, {pipeline_mode = #tpu.pipeline_mode<synchronous>, transform_indices = @transform_4, window_bounds = array<i64: 1, 16>}, {pipeline_mode = #tpu.pipeline_mode<synchronous>, transform_indices = @transform_5, window_bounds = array<i64: 16, 1>}, {pipeline_mode = #tpu.pipeline_mode<synchronous>, transform_indices = @transform_6, window_bounds = array<i64: 1, 1>}, {transform_indices = @transform_7, window_bounds = array<i64: 64, 1>}]} {
    %c0_i32 = arith.constant 0 : i32
    %0 = arith.cmpi eq, %arg1, %c0_i32 : i32
    %1 = arith.extui %0 : i1 to i32
    %c0_i32_0 = arith.constant 0 : i32
    %2 = arith.cmpi ne, %1, %c0_i32_0 : i32
    scf.if %2 {
      %cst_10 = arith.constant 0.000000e+00 : f32
      %12 = vector.broadcast %cst_10 : f32 to vector<64x16xf32>
      %c0_11 = arith.constant 0 : index
      %c0_12 = arith.constant 0 : index
      %13 = vector.load %arg10[%c0_11, %c0_12] : memref<64x16xf32, #tpu.memory_space<vmem>>, vector<64x16xf32>
      tpu.vector_store %arg10[%c0_11, %c0_12], %12 {strides = array<i32>} : memref<64x16xf32, #tpu.memory_space<vmem>>, vector<64x16xf32>,
    } else {
    }
    %c0 = arith.constant 0 : index
    %c0_1 = arith.constant 0 : index
    %3 = vector.load %arg10[%c0, %c0_1] : memref<64x16xf32, #tpu.memory_space<vmem>>, vector<64x16xf32>
    %c0_2 = arith.constant 0 : index
    %c0_3 = arith.constant 0 : index
    %4 = vector.load %arg2[%c0_2, %c0_3] : memref<64x3200xbf16, #tpu.memory_space<vmem>>, vector<64x3200xbf16>
    %c0_4 = arith.constant 0 : index
    %c0_5 = arith.constant 0 : index
    %5 = vector.load %arg3[%c0_4, %c0_5] : memref<3200x16xbf16, #tpu.memory_space<vmem>>, vector<3200x16xbf16>
    %cst = arith.constant dense<0.000000e+00> : vector<64x16xf32>
    %6 = tpu.matmul %4, %5, %cst {dimension_numbers = #tpu.dot_dimension_numbers<[1], [0], [0], [1], [0, 0, 1, 1], [], []>} : vector<64x3200xbf16>, vector<3200x16xbf16>, vector<64x16xf32> -> vector<64x16xf32>
    %7 = arith.addf %3, %6 : vector<64x16xf32>
    %c0_6 = arith.constant 0 : index
    %c0_7 = arith.constant 0 : index
    %8 = vector.load %arg10[%c0_6, %c0_7] : memref<64x16xf32, #tpu.memory_space<vmem>>, vector<64x16xf32>
    tpu.vector_store %arg10[%c0_6, %c0_7], %7 {strides = array<i32>} : memref<64x16xf32, #tpu.memory_space<vmem>>, vector<64x16xf32>,
    %c0_i32_8 = arith.constant 0 : i32
    %9 = arith.cmpi eq, %arg1, %c0_i32_8 : i32
    %10 = arith.extui %9 : i1 to i32
    %c0_i32_9 = arith.constant 0 : i32
    %11 = arith.cmpi ne, %10, %c0_i32_9 : i32
    scf.if %11 {
      %c0_10 = arith.constant 0 : index
      %c0_11 = arith.constant 0 : index
      %12 = vector.load %arg4[%c0_10, %c0_11] : memref<64x16xbf16, #tpu.memory_space<vmem>>, vector<64x16xbf16>
      %c0_12 = arith.constant 0 : index
      %c0_13 = arith.constant 0 : index
      %13 = vector.load %arg5[%c0_12, %c0_13] : memref<16x16xbf16, #tpu.memory_space<vmem>>, vector<16x16xbf16>
      %cst_14 = arith.constant dense<0.000000e+00> : vector<64x16xf32>
      %14 = tpu.matmul %12, %13, %cst_14 {dimension_numbers = #tpu.dot_dimension_numbers<[1], [0], [0], [1], [0, 0, 1, 1], [], []>} : vector<64x16xbf16>, vector<16x16xbf16>, vector<64x16xf32> -> vector<64x16xf32>
      %c0_15 = arith.constant 0 : index
      %c0_16 = arith.constant 0 : index
      %15 = vector.load %arg10[%c0_15, %c0_16] : memref<64x16xf32, #tpu.memory_space<vmem>>, vector<64x16xf32>
      %16 = arith.addf %15, %14 : vector<64x16xf32>
      %c0_17 = arith.constant 0 : index
      %c0_18 = arith.constant 0 : index
      %17 = vector.load %arg6[%c0_17, %c0_18] : memref<1x16xf32, #tpu.memory_space<vmem>>, vector<1x16xf32>
      %18 = vector.broadcast %17 : vector<1x16xf32> to vector<64x16xf32>
      %19 = arith.addf %16, %18 : vector<64x16xf32>
      %cst_19 = arith.constant 0.000000e+00 : f32
      %20 = vector.broadcast %cst_19 : f32 to vector<64x16xf32>
      %21 = arith.maximumf %19, %20 : vector<64x16xf32>
      %c0_20 = arith.constant 0 : index
      %c0_21 = arith.constant 0 : index
      %22 = vector.load %arg7[%c0_20, %c0_21] : memref<16x1xf32, #tpu.memory_space<vmem>>, vector<16x1xf32>
      %cst_22 = arith.constant dense<0.000000e+00> : vector<64x1xf32>
      %23 = tpu.matmul %21, %22, %cst_22 {dimension_numbers = #tpu.dot_dimension_numbers<[1], [0], [0], [1], [0, 0, 1, 1], [], []>} : vector<64x16xf32>, vector<16x1xf32>, vector<64x1xf32> -> vector<64x1xf32>
      %c0_23 = arith.constant 0 : index
      %c0_24 = arith.constant 0 : index
      %24 = vector.load %arg8[%c0_23, %c0_24] : memref<1x1xf32, #tpu.memory_space<vmem>>, vector<1x1xf32>
      %25 = vector.broadcast %24 : vector<1x1xf32> to vector<64x1xf32>
      %26 = arith.addf %23, %25 : vector<64x1xf32>
      %27 = arith.negf %26 : vector<64x1xf32>
      %28 = math.exp %27 : vector<64x1xf32>
      %cst_25 = arith.constant 1.000000e+00 : f32
      %29 = vector.broadcast %cst_25 : f32 to vector<64x1xf32>
      %30 = arith.addf %29, %28 : vector<64x1xf32>
      %31 = arith.divf %29, %30 : vector<64x1xf32>
      %c0_26 = arith.constant 0 : index
      %c0_27 = arith.constant 0 : index
      %32 = vector.load %arg9[%c0_26, %c0_27] : memref<64x1xf32, #tpu.memory_space<vmem>>, vector<64x1xf32>
      tpu.vector_store %arg9[%c0_26, %c0_27], %31 {strides = array<i32>} : memref<64x1xf32, #tpu.memory_space<vmem>>, vector<64x1xf32>,
    } else {
    }
    return
  }
  func.func @transform_0(%arg0: i32, %arg1: i32) -> (i32, i32) {
    %c0_i32 = arith.constant 0 : i32
    return %arg0, %arg1 : i32, i32
  }
  func.func @transform_1(%arg0: i32, %arg1: i32) -> (i32, i32) {
    %c0_i32 = arith.constant 0 : i32
    %c0_i32_0 = arith.constant 0 : i32
    return %arg1, %c0_i32 : i32, i32
  }
  func.func @transform_2(%arg0: i32, %arg1: i32) -> (i32, i32) {
    %c0_i32 = arith.constant 0 : i32
    %c0_i32_0 = arith.constant 0 : i32
    return %arg0, %c0_i32 : i32, i32
  }
  func.func @transform_3(%arg0: i32, %arg1: i32) -> (i32, i32) {
    %c0_i32 = arith.constant 0 : i32
    %c0_i32_0 = arith.constant 0 : i32
    %c0_i32_1 = arith.constant 0 : i32
    return %c0_i32, %c0_i32_0 : i32, i32
  }
  func.func @transform_4(%arg0: i32, %arg1: i32) -> (i32, i32) {
    %c0_i32 = arith.constant 0 : i32
    %c0_i32_0 = arith.constant 0 : i32
    %c0_i32_1 = arith.constant 0 : i32
    return %c0_i32, %c0_i32_0 : i32, i32
  }
  func.func @transform_5(%arg0: i32, %arg1: i32) -> (i32, i32) {
    %c0_i32 = arith.constant 0 : i32
    %c0_i32_0 = arith.constant 0 : i32
    %c0_i32_1 = arith.constant 0 : i32
    return %c0_i32, %c0_i32_0 : i32, i32
  }
  func.func @transform_6(%arg0: i32, %arg1: i32) -> (i32, i32) {
    %c0_i32 = arith.constant 0 : i32
    %c0_i32_0 = arith.constant 0 : i32
    %c0_i32_1 = arith.constant 0 : i32
    return %c0_i32, %c0_i32_0 : i32, i32
  }
  func.func @transform_7(%arg0: i32, %arg1: i32) -> (i32, i32) {
    %c0_i32 = arith.constant 0 : i32
    %c0_i32_0 = arith.constant 0 : i32
    return %arg0, %c0_i32 : i32, i32
  }
}

</mosaic_0001>

<llo_original>
// kernel: gnn_forward.6
$region0: #{gnn_forward.6}
  #allocation0 [shape = 'u32[]', space=smem, size = 0x4, offset = 0x4, fixed_abs, tag = 'smem constant byte address 0x4 - core index']
  #allocation1 [shape = 'u32[144,128]{1,0:T(1,128)}', space=vmem, size = 0x12000, scoped, tag = 'internal scratch']
  %s0 = inlined_call_operand.vmem [shape: bf16[128,16], index: 0, kind: input, shape index: {}]
  %s1 = inlined_call_operand.hbm [shape: bf16[16,400], index: 1, kind: input, shape index: {}]
  %s2 = inlined_call_operand.vmem [shape: bf16[128,400], index: 2, kind: output, shape index: {}]
  %s3 = sld [smem:[#allocation0]]
  $region45: #{gnn_forward.6} parent=0
    _
  %s5 = ssub.s32 1, %s3
  %s6 = scalar_select 0, %s5, %s3
  $region1: #{gnn_forward.6} parent=0
    #allocation2 [shape = 'u8[16384]{0}', space=vmem, size = 0x4000, scoped, tag = 'input window, operand 1, single buffered']
    #allocation3 [shape = 's32[2]{0}', space=sflag, size = 0x8, scoped, tag = 'scoped memory for gnn_forward.6']
    %7 = vsyncpa [#allocation3], 0
    loop: start=0, step=1, limit=4
    $region2: #{gnn_forward.6} parent=1 // loop_pre_header
      _
    $region3: #{gnn_forward.6} parent=1 // loop_header
      %s9 = sphi 0, %s13
      %p10 = scmp.ge.s32.totalorder %s9, 4
      %s19 = sphi 0, %s21
      %s22 = sphi 0, %s19
      %s23 = sphi 0, %s22
      %s39 = sphi 0, %s23
      %s43 = sphi 0, %s43
      %s45 = sphi 0, %s43
      %s46 = sphi 0, %s45
      %s60 = sphi 0, %s46
      %s66 = sphi 0, %s68
      %s69 = sphi 0, %s66
      %s70 = sphi 0, %s69
      %s86 = sphi 0, %s70
    $region4: #{gnn_forward.6} parent=1 // loop_header_branch
      %12 = sbr.rel (%p10) target = $region8
    $region5: #{gnn_forward.6} parent=1 // loop_body
      %s14 = ssub.s32 %s9, 1
      %s15 = ssub.s32 %s9, 2
      %s16 = sadd.s32 %s9, 1
      %s17 = ssub.s32 %s9, %s16
      %p18 = scmp.eq.s32.totalorder %s17, 0
      %s20 = sadd.s32 %s19, 1
      %s21 = scalar_select %p18, %s19, %s20
      %p24 = pneg %p18
      %p25 = scmp.eq.s32.totalorder %s9, 1
      %p26 = por %p24, %p25
      %p27 = scmp.ne.s32.totalorder %s19, %s22
      %p28 = scmp.eq.s32.totalorder %s9, 0
      %p29 = por %p27, %p28
      %p30 = scmp.ne.s32.totalorder %s19, %s22
      %p31 = scmp.eq.s32.totalorder %s14, 1
      %p32 = por %p30, %p31
      %p33 = scmp.ne.s32.totalorder %s22, %s23
      %p34 = scmp.eq.s32.totalorder %s14, 0
      %p35 = por %p33, %p34
      %p36 = scmp.ne.s32.totalorder %s22, %s23
      %p37 = scmp.eq.s32.totalorder %s15, 1
      %p38 = por %p36, %p37
      %p40 = scmp.ne.s32.totalorder %s23, %s39
      %p41 = scmp.eq.s32.totalorder %s15, 0
      %p42 = por %p40, %p41
      %s44 = sadd.s32 %s43, 1
      %p47 = scmp.eq.s32.totalorder %s9, 1
      %p48 = scmp.ne.s32.totalorder %s43, %s45
      %p49 = scmp.eq.s32.totalorder %s9, 0
      %p50 = por %p48, %p49
      %p51 = scmp.ne.s32.totalorder %s43, %s45
      %p52 = scmp.eq.s32.totalorder %s14, 1
      %p53 = por %p51, %p52
      %p54 = scmp.ne.s32.totalorder %s45, %s46
      %p55 = scmp.eq.s32.totalorder %s14, 0
      %p56 = por %p54, %p55
      %p57 = scmp.ne.s32.totalorder %s45, %s46
      %p58 = scmp.eq.s32.totalorder %s15, 1
      %p59 = por %p57, %p58
      %p61 = scmp.ne.s32.totalorder %s46, %s60
      %p62 = scmp.eq.s32.totalorder %s15, 0
      %p63 = por %p61, %p62
      %s64 = ssub.s32 %s9, %s16
      %p65 = scmp.eq.s32.totalorder %s64, 0
      %s67 = sadd.s32 %s66, 1
      %s68 = scalar_select %p65, %s66, %s67
      %p71 = pneg %p65
      %p72 = scmp.eq.s32.totalorder %s9, 1
      %p73 = por %p71, %p72
      %p74 = scmp.ne.s32.totalorder %s66, %s69
      %p75 = scmp.eq.s32.totalorder %s9, 0
      %p76 = por %p74, %p75
      %p77 = scmp.ne.s32.totalorder %s66, %s69
      %p78 = scmp.eq.s32.totalorder %s14, 1
      %p79 = por %p77, %p78
      %p80 = scmp.ne.s32.totalorder %s69, %s70
      %p81 = scmp.eq.s32.totalorder %s14, 0
      %p82 = por %p80, %p81
      %p83 = scmp.ne.s32.totalorder %s69, %s70
      %p84 = scmp.eq.s32.totalorder %s15, 1
      %p85 = por %p83, %p84
      %p87 = scmp.ne.s32.totalorder %s70, %s86
      %p88 = scmp.eq.s32.totalorder %s15, 0
      %p89 = por %p87, %p88
      %p90 = scmp.le.s32.totalorder 1, %s9
      %p91 = scmp.lt.s32.totalorder %s9, 3
      %p92 = pnand %p90, %p91
      %p93 = pneg %p92
      // Predicated region
      $region9: #{gnn_forward.6} parent=5 // pred_check
        _
      $region10: #{gnn_forward.6} parent=5 // pred_check_branch
        %95 = sbr.rel (%p92) target = $region12
      $region11: #{gnn_forward.6} parent=5 // pred_region
        %s96 = ssub.s32 %s9, 1
        // Predicated region
        $region13: #{gnn_forward.6} parent=11 // pred_check
          %p97 = pneg %p56
        $region14: #{gnn_forward.6} parent=11 // pred_check_branch
          %99 = sbr.rel (%p97) target = $region16
        $region15: #{gnn_forward.6} parent=11 // pred_region
          %s101 = ssub.s32 512, 512
          %102 = vsyncadd [#allocation3], %s101
          %s103 = sshll.u32 [#allocation2], 4
          %s104 = int_to_ptr.vmem [resolvable:$true] %s103
          %109 = dma.hbm_to_vmem [thread:$0]  %s1, 512, %s104, [#allocation3], 256, 256, 16
        $region16: #{gnn_forward.6} parent=11 // pred_fallthru
          _
      $region12: #{gnn_forward.6} parent=5 // pred_fallthru
        _
      %p110 = scmp.lt.s32.totalorder %s9, 2
      // Predicated region
      $region17: #{gnn_forward.6} parent=5 // pred_check
        %p111 = pneg %p110
      $region18: #{gnn_forward.6} parent=5 // pred_check_branch
        %113 = sbr.rel (%p111) target = $region20
      $region19: #{gnn_forward.6} parent=5 // pred_region
        // Predicated region
        $region21: #{gnn_forward.6} parent=19 // pred_check
          %p114 = pneg %p29
        $region22: #{gnn_forward.6} parent=19 // pred_check_branch
          %116 = sbr.rel (%p114) target = $region24
        $region23: #{gnn_forward.6} parent=19 // pred_region
          %s117 = smul.u32 8, %s9
          %p118 = scmp.lt.s32.totalorder %s117, 15
          %s119 = scalar_select %p118, %s117, 15
          %s120 = smul.addr %s119, 4
          %s121 = scalar_lea.vmem %s0, %s120
          %s122 = smul.u32 8, %s9
        $region24: #{gnn_forward.6} parent=19 // pred_fallthru
          _
      $region20: #{gnn_forward.6} parent=5 // pred_fallthru
        _
      %p123 = scmp.le.s32.totalorder 1, %s9
      %p124 = scmp.lt.s32.totalorder %s9, 3
      %p125 = pnand %p123, %p124
      %p126 = pneg %p125
      // Predicated region
      $region25: #{gnn_forward.6} parent=5 // pred_check
        _
      $region26: #{gnn_forward.6} parent=5 // pred_check_branch
        %128 = sbr.rel (%p125) target = $region28
      $region27: #{gnn_forward.6} parent=5 // pred_region
        %s129 = ssub.s32 %s9, 1
        // Predicated region
        $region29: #{gnn_forward.6} parent=27 // pred_check
          %p130 = pneg %p56
        $region30: #{gnn_forward.6} parent=27 // pred_check_branch
          %132 = sbr.rel (%p130) target = $region32
        $region31: #{gnn_forward.6} parent=27 // pred_region
          %133 = dma.done [#allocation3], 512
        $region32: #{gnn_forward.6} parent=27 // pred_fallthru
          _
        %s134 = smul.u32 8, %s14
        %p135 = scmp.lt.s32.totalorder %s134, 15
        %s136 = scalar_select %p135, %s134, 15
        %s137 = smul.addr %s136, 4
        %s138 = scalar_lea.vmem %s0, %s137
        %p139 = pneg %p35
        %p140 = pneg %p32
        %p141 = pneg %p56
        %p142 = pneg %p53
        %p143 = pneg %p82
        %p144 = pneg %p79
        %s145 = smul.u32 8, %s14
        %p146 = scmp.lt.s32.totalorder %s145, 15
        %s147 = scalar_select %p146, %s145, 15
        %s148 = smul.addr %s147, 4
        %s149 = smul.addr %s148, 4
        %s150 = scalar_lea.vmem %s2, %s149
        %s151 = smul.u32 8, %s14
        %p152 = scmp.lt.s32.totalorder %s151, 15
        %s153 = scalar_select %p152, %s151, 15
        %s154 = smul.addr %s153, 4
        %s155 = scalar_lea.vmem %s0, %s154
        %s156 = smul.u32 8, %s14
        %s157 = smul.u32 8, %s14
        %p158 = scmp.lt.s32.totalorder %s157, 15
        %s159 = scalar_select %p158, %s157, 15
        %s160 = smul.addr %s159, 4
        %s161 = smul.addr %s160, 4
        %s162 = scalar_lea.vmem %s2, %s161
        %s163 = smul.u32 8, %s14
        %v165 = vld [vmem:[%s155] sm:$0xf]
        %v166 = vld [vmem:[%s155 + $0x4] sm:$0xf]
        %v167 = vld [vmem:[%s155 + $0x8] sm:$0xf]
        %v168 = vld [vmem:[%s155 + $0xc] sm:$0xf]
        %v169 = vld [vmem:[%s155 + $0x10] sm:$0xf]
        %v170 = vld [vmem:[%s155 + $0x14] sm:$0xf]
        %v171 = vld [vmem:[%s155 + $0x18] sm:$0xf]
        %v172 = vld [vmem:[%s155 + $0x1c] sm:$0xf]
        %v173 = vld [vmem:[#allocation2] sm:$0xff]
        %v174 = vld [vmem:[#allocation2 + $0x8] sm:$0xff]
        %v175 = vld [vmem:[#allocation2 + $0x10] sm:$0xff]
        %v176 = vld [vmem:[#allocation2 + $0x18] sm:$0xff]
        %v185 = vunpack.c.l.b16 %v165
        %v186 = vunpack.c.l.b16 %v166
        %v187 = vunpack.c.l.b16 %v167
        %v188 = vunpack.c.l.b16 %v168
        %v189 = vunpack.c.l.b16 %v169
        %v190 = vunpack.c.l.b16 %v170
        %v191 = vunpack.c.l.b16 %v171
        %v192 = vunpack.c.l.b16 %v172
        %v193 = vpack.c.b16 %v186, %v185
        %v194 = vpack.c.b16 %v188, %v187
        %v195 = vpack.c.b16 %v190, %v189
        %v196 = vpack.c.b16 %v192, %v191
        %v201 = vunpack.c.l.b16 %v173
        %v202 = vunpack.c.h.b16 %v173
        %v203 = vunpack.c.l.b16 %v174
        %v204 = vunpack.c.h.b16 %v174
        %v205 = vunpack.c.l.b16 %v175
        %v206 = vunpack.c.h.b16 %v175
        %v207 = vunpack.c.l.b16 %v176
        %v208 = vunpack.c.h.b16 %v176
        %v209 = vpack.c.b16 %v205, %v201
        %v210 = vpack.c.b16 %v206, %v202
        %v211 = vpack.c.b16 %v207, %v203
        %v212 = vpack.c.b16 %v208, %v204
        %vm217 = vcmask 130048
        %v219 = vsel %vm217, %v193, 0
        %v222 = vsel %vm217, %v194, 0
        %v225 = vsel %vm217, %v195, 0
        %v228 = vsel %vm217, %v196, 0
        %230 = vmatprep.subr.bf16.mxu0 %v210
        %231 = vmatpush1.bf16.msra.mxu0 %v209
        %232 = vmatprep.subr.bf16.mxu0 0
        %233 = vmatpush1.bf16.msra.mxu0 0
        %234 = vmatprep.subr.bf16.mxu0 0
        %235 = vmatpush1.bf16.msra.mxu0 0
        %236 = vmatprep.subr.bf16.mxu0 0
        %237 = vmatpush1.bf16.msra.mxu0 0
        %238 = vmatprep.subr.bf16.mxu0 0
        %239 = vmatpush1.bf16.msra.mxu0 0
        %240 = vmatprep.subr.bf16.mxu0 0
        %241 = vmatpush1.bf16.msra.mxu0 0
        %242 = vmatprep.subr.bf16.mxu0 0
        %243 = vmatpush1.bf16.msra.mxu0 0
        %244 = vmatprep.subr.bf16.mxu0 0
        %245 = vmatpush1.bf16.msra.mxu0 0
        %246 = vmatprep.subr.bf16.mxu0 0
        %247 = vmatpush1.bf16.msra.mxu0 0
        %248 = vmatprep.subr.bf16.mxu0 0
        %249 = vmatpush1.bf16.msra.mxu0 0
        %250 = vmatprep.subr.bf16.mxu0 0
        %251 = vmatpush1.bf16.msra.mxu0 0
        %252 = vmatprep.subr.bf16.mxu0 0
        %253 = vmatpush1.bf16.msra.mxu0 0
        %254 = vmatprep.subr.bf16.mxu0 0
        %255 = vmatpush1.bf16.msra.mxu0 0
        %256 = vmatprep.subr.bf16.mxu0 0
        %257 = vmatpush1.bf16.msra.mxu0 0
        %258 = vmatprep.subr.bf16.mxu0 0
        %259 = vmatpush1.bf16.msra.mxu0 0
        %260 = vmatprep.subr.bf16.mxu0 0
        %261 = vmatpush1.bf16.msra.mxu0 0
        %262 = vmatprep.mubr.bf16.mxu0 0
        %263 = vmatmul.mubr.bf16.gmra.mrb[0].mxu0 %v219
        %v264 = vpop.f32.mrb[0].mxu0
        %v265 = vadd.f32 0.0, %v264
        %v266 = vpop.f32.mrb[0].mxu0
        %v267 = vadd.f32 0.0, %v266
        %v268 = vpop.f32.mrb[0].mxu0
        %v269 = vadd.f32 0.0, %v268
        %v270 = vpop.f32.mrb[0].mxu0
        %v271 = vadd.f32 0.0, %v270
        %272 = vmatprep.mubr.bf16.mxu0 0
        %273 = vmatmul.mubr.bf16.gmra.mrb[0].mxu0 %v222
        %v274 = vpop.f32.mrb[0].mxu0
        %v275 = vadd.f32 0.0, %v274
        %v276 = vpop.f32.mrb[0].mxu0
        %v277 = vadd.f32 0.0, %v276
        %v278 = vpop.f32.mrb[0].mxu0
        %v279 = vadd.f32 0.0, %v278
        %v280 = vpop.f32.mrb[0].mxu0
        %v281 = vadd.f32 0.0, %v280
        %282 = vmatprep.mubr.bf16.mxu0 0
        %283 = vmatmul.mubr.bf16.gmra.mrb[0].mxu0 %v225
        %v284 = vpop.f32.mrb[0].mxu0
        %v285 = vadd.f32 0.0, %v284
        %v286 = vpop.f32.mrb[0].mxu0
        %v287 = vadd.f32 0.0, %v286
        %v288 = vpop.f32.mrb[0].mxu0
        %v289 = vadd.f32 0.0, %v288
        %v290 = vpop.f32.mrb[0].mxu0
        %v291 = vadd.f32 0.0, %v290
        %292 = vmatprep.mubr.bf16.mxu0 0
        %293 = vmatmul.mubr.bf16.gmra.mrb[0].mxu0 %v228
        %v294 = vpop.f32.mrb[0].mxu0
        %v295 = vadd.f32 0.0, %v294
        %v296 = vpop.f32.mrb[0].mxu0
        %v297 = vadd.f32 0.0, %v296
        %v298 = vpop.f32.mrb[0].mxu0
        %v299 = vadd.f32 0.0, %v298
        %v300 = vpop.f32.mrb[0].mxu0
        %v301 = vadd.f32 0.0, %v300
        %302 = vdwg.mxu0
        %303 = vmatprep.subr.bf16.mxu0 %v212
        %304 = vmatpush1.bf16.msra.mxu0 %v211
        %305 = vmatprep.subr.bf16.mxu0 0
        %306 = vmatpush1.bf16.msra.mxu0 0
        %307 = vmatprep.subr.bf16.mxu0 0
        %308 = vmatpush1.bf16.msra.mxu0 0
        %309 = vmatprep.subr.bf16.mxu0 0
        %310 = vmatpush1.bf16.msra.mxu0 0
        %311 = vmatprep.subr.bf16.mxu0 0
        %312 = vmatpush1.bf16.msra.mxu0 0
        %313 = vmatprep.subr.bf16.mxu0 0
        %314 = vmatpush1.bf16.msra.mxu0 0
        %315 = vmatprep.subr.bf16.mxu0 0
        %316 = vmatpush1.bf16.msra.mxu0 0
        %317 = vmatprep.subr.bf16.mxu0 0
        %318 = vmatpush1.bf16.msra.mxu0 0
        %319 = vmatprep.subr.bf16.mxu0 0
        %320 = vmatpush1.bf16.msra.mxu0 0
        %321 = vmatprep.subr.bf16.mxu0 0
        %322 = vmatpush1.bf16.msra.mxu0 0
        %323 = vmatprep.subr.bf16.mxu0 0
        %324 = vmatpush1.bf16.msra.mxu0 0
        %325 = vmatprep.subr.bf16.mxu0 0
        %326 = vmatpush1.bf16.msra.mxu0 0
        %327 = vmatprep.subr.bf16.mxu0 0
        %328 = vmatpush1.bf16.msra.mxu0 0
        %329 = vmatprep.subr.bf16.mxu0 0
        %330 = vmatpush1.bf16.msra.mxu0 0
        %331 = vmatprep.subr.bf16.mxu0 0
        %332 = vmatpush1.bf16.msra.mxu0 0
        %333 = vmatprep.subr.bf16.mxu0 0
        %334 = vmatpush1.bf16.msra.mxu0 0
        %335 = vmatprep.mubr.bf16.mxu0 0
        %336 = vmatmul.mubr.bf16.gmra.mrb[0].mxu0 %v219
        %v337 = vpop.f32.mrb[0].mxu0
        %v338 = vadd.f32 0.0, %v337
        %v339 = vpop.f32.mrb[0].mxu0
        %v340 = vadd.f32 0.0, %v339
        %v341 = vpop.f32.mrb[0].mxu0
        %v342 = vadd.f32 0.0, %v341
        %v343 = vpop.f32.mrb[0].mxu0
        %v344 = vadd.f32 0.0, %v343
        %345 = vmatprep.mubr.bf16.mxu0 0
        %346 = vmatmul.mubr.bf16.gmra.mrb[0].mxu0 %v222
        %v347 = vpop.f32.mrb[0].mxu0
        %v348 = vadd.f32 0.0, %v347
        %v349 = vpop.f32.mrb[0].mxu0
        %v350 = vadd.f32 0.0, %v349
        %v351 = vpop.f32.mrb[0].mxu0
        %v352 = vadd.f32 0.0, %v351
        %v353 = vpop.f32.mrb[0].mxu0
        %v354 = vadd.f32 0.0, %v353
        %355 = vmatprep.mubr.bf16.mxu0 0
        %356 = vmatmul.mubr.bf16.gmra.mrb[0].mxu0 %v225
        %v357 = vpop.f32.mrb[0].mxu0
        %v358 = vadd.f32 0.0, %v357
        %v359 = vpop.f32.mrb[0].mxu0
        %v360 = vadd.f32 0.0, %v359
        %v361 = vpop.f32.mrb[0].mxu0
        %v362 = vadd.f32 0.0, %v361
        %v363 = vpop.f32.mrb[0].mxu0
        %v364 = vadd.f32 0.0, %v363
        %365 = vmatprep.mubr.bf16.mxu0 0
        %366 = vmatmul.mubr.bf16.gmra.mrb[0].mxu0 %v228
        %v367 = vpop.f32.mrb[0].mxu0
        %v368 = vadd.f32 0.0, %v367
        %v369 = vpop.f32.mrb[0].mxu0
        %v370 = vadd.f32 0.0, %v369
        %v371 = vpop.f32.mrb[0].mxu0
        %v372 = vadd.f32 0.0, %v371
        %v373 = vpop.f32.mrb[0].mxu0
        %v374 = vadd.f32 0.0, %v373
        %375 = vdwg.mxu0
        %v376 = vpack.c.bf16 %v269, %v265
        %v377 = vpack.c.bf16 %v271, %v267
        %v378 = vpack.c.bf16 %v342, %v338
        %v379 = vpack.c.bf16 %v344, %v340
        %v380 = vpack.c.bf16 %v279, %v275
        %v381 = vpack.c.bf16 %v281, %v277
        %v382 = vpack.c.bf16 %v352, %v348
        %v383 = vpack.c.bf16 %v354, %v350
        %v384 = vpack.c.bf16 %v289, %v285
        %v385 = vpack.c.bf16 %v291, %v287
        %v386 = vpack.c.bf16 %v362, %v358
        %v387 = vpack.c.bf16 %v364, %v360
        %v388 = vpack.c.bf16 %v299, %v295
        %v389 = vpack.c.bf16 %v301, %v297
        %v390 = vpack.c.bf16 %v372, %v368
        %v391 = vpack.c.bf16 %v374, %v370
        %v408 = vunpack.c.l.b16 %v376
        %v409 = vunpack.c.l.b16 %v377
        %v410 = vunpack.c.l.b16 %v378
        %v411 = vunpack.c.l.b16 %v379
        %v412 = vunpack.c.h.b16 %v376
        %v413 = vunpack.c.h.b16 %v377
        %v414 = vunpack.c.h.b16 %v378
        %v415 = vunpack.c.h.b16 %v379
        %v416 = vunpack.c.l.b16 %v380
        %v417 = vunpack.c.l.b16 %v381
        %v418 = vunpack.c.l.b16 %v382
        %v419 = vunpack.c.l.b16 %v383
        %v420 = vunpack.c.h.b16 %v380
        %v421 = vunpack.c.h.b16 %v381
        %v422 = vunpack.c.h.b16 %v382
        %v423 = vunpack.c.h.b16 %v383
        %v424 = vunpack.c.l.b16 %v384
        %v425 = vunpack.c.l.b16 %v385
        %v426 = vunpack.c.l.b16 %v386
        %v427 = vunpack.c.l.b16 %v387
        %v428 = vunpack.c.h.b16 %v384
        %v429 = vunpack.c.h.b16 %v385
        %v430 = vunpack.c.h.b16 %v386
        %v431 = vunpack.c.h.b16 %v387
        %v432 = vunpack.c.l.b16 %v388
        %v433 = vunpack.c.l.b16 %v389
        %v434 = vunpack.c.l.b16 %v390
        %v435 = vunpack.c.l.b16 %v391
        %v436 = vunpack.c.h.b16 %v388
        %v437 = vunpack.c.h.b16 %v389
        %v438 = vunpack.c.h.b16 %v390
        %v439 = vunpack.c.h.b16 %v391
        %v440 = vpack.c.b16 %v409, %v408
        %v441 = vpack.c.b16 %v411, %v410
        %v442 = vpack.c.b16 %v413, %v412
        %v443 = vpack.c.b16 %v415, %v414
        %v444 = vpack.c.b16 %v417, %v416
        %v445 = vpack.c.b16 %v419, %v418
        %v446 = vpack.c.b16 %v421, %v420
        %v447 = vpack.c.b16 %v423, %v422
        %v448 = vpack.c.b16 %v425, %v424
        %v449 = vpack.c.b16 %v427, %v426
        %v450 = vpack.c.b16 %v429, %v428
        %v451 = vpack.c.b16 %v431, %v430
        %v452 = vpack.c.b16 %v433, %v432
        %v453 = vpack.c.b16 %v435, %v434
        %v454 = vpack.c.b16 %v437, %v436
        %v455 = vpack.c.b16 %v439, %v438
        %472 = vst [vmem:[%s162] sm:$0xff] %v440
        %vm473 = vcmask 1043456
        %vm474 = vcmask 130052
        %vm475 = vmor %vm474, %vm473
        %476 = vst.msk [vmem:[%s162 + $0x8] sm:$0xff] %vm475, %v441
        %477 = vst [vmem:[%s162 + $0x10] sm:$0xff] %v442
        %478 = vst.msk [vmem:[%s162 + $0x18] sm:$0xff] %vm475, %v443
        %479 = vst [vmem:[%s162 + $0x20] sm:$0xff] %v444
        %480 = vst.msk [vmem:[%s162 + $0x28] sm:$0xff] %vm475, %v445
        %481 = vst [vmem:[%s162 + $0x30] sm:$0xff] %v446
        %482 = vst.msk [vmem:[%s162 + $0x38] sm:$0xff] %vm475, %v447
        %483 = vst [vmem:[%s162 + $0x40] sm:$0xff] %v448
        %484 = vst.msk [vmem:[%s162 + $0x48] sm:$0xff] %vm475, %v449
        %485 = vst [vmem:[%s162 + $0x50] sm:$0xff] %v450
        %486 = vst.msk [vmem:[%s162 + $0x58] sm:$0xff] %vm475, %v451
        %487 = vst [vmem:[%s162 + $0x60] sm:$0xff] %v452
        %488 = vst.msk [vmem:[%s162 + $0x68] sm:$0xff] %vm475, %v453
        %489 = vst [vmem:[%s162 + $0x70] sm:$0xff] %v454
        %490 = vst.msk [vmem:[%s162 + $0x78] sm:$0xff] %vm475, %v455
        %s491 = smul.u32 8, %s14
        %p492 = scmp.lt.s32.totalorder %s491, 15
        %s493 = scalar_select %p492, %s491, 15
        %s494 = smul.addr %s493, 4
        %s495 = smul.addr %s494, 4
        %s496 = scalar_lea.vmem %s2, %s495
        // Predicated region
        $region33: #{gnn_forward.6} parent=27 // pred_check
          %p497 = pneg %p79
        $region34: #{gnn_forward.6} parent=27 // pred_check_branch
          %499 = sbr.rel (%p497) target = $region36
        $region35: #{gnn_forward.6} parent=27 // pred_region
          %s500 = smul.u32 8, %s14
        $region36: #{gnn_forward.6} parent=27 // pred_fallthru
          _
      $region28: #{gnn_forward.6} parent=5 // pred_fallthru
        _
      %p501 = scmp.le.s32.totalorder 2, %s9
      // Predicated region
      $region37: #{gnn_forward.6} parent=5 // pred_check
        %p502 = pneg %p501
      $region38: #{gnn_forward.6} parent=5 // pred_check_branch
        %504 = sbr.rel (%p502) target = $region40
      $region39: #{gnn_forward.6} parent=5 // pred_region
        %s505 = ssub.s32 %s9, 2
        // Predicated region
        $region41: #{gnn_forward.6} parent=39 // pred_check
          %p506 = pneg %p85
        $region42: #{gnn_forward.6} parent=39 // pred_check_branch
          %508 = sbr.rel (%p506) target = $region44
        $region43: #{gnn_forward.6} parent=39 // pred_region
          %s509 = smul.u32 8, %s15
          %p510 = scmp.lt.s32.totalorder %s509, 15
          %s511 = scalar_select %p510, %s509, 15
          %s512 = smul.addr %s511, 4
          %s513 = smul.addr %s512, 4
          %s514 = scalar_lea.vmem %s2, %s513
        $region44: #{gnn_forward.6} parent=39 // pred_fallthru
          _
      $region40: #{gnn_forward.6} parent=5 // pred_fallthru
        _
    $region6: #{gnn_forward.6} parent=1 // loop_footer
      %s13 = sadd.s32 1, %s9
    $region7: #{gnn_forward.6} parent=1 // loop_footer_branch
      %8 = sbr.rel target = $region3
    $region8: #{gnn_forward.6} parent=1 // loop_exit
      _
    %515 = vsyncpa [#allocation3], 1
    %s516 = scalar_lea.sflag [#allocation3], 1
    %517 = vsyncpa %s516, 1

// kernel: gnn_forward.8
$region0: #{gnn_forward.8}
  #allocation0 [shape = 'u32[]', space=smem, size = 0x4, offset = 0x4, fixed_abs, tag = 'smem constant byte address 0x4 - core index']
  #allocation1 [shape = 'u32[144,128]{1,0:T(1,128)}', space=vmem, size = 0x12000, scoped, tag = 'internal scratch']
  %s0 = inlined_call_operand.vmem [shape: bf16[128,16], index: 0, kind: input, shape index: {}]
  %s1 = inlined_call_operand.vmem [shape: bf16[16,400], index: 1, kind: input, shape index: {}]
  %s2 = inlined_call_operand.vmem [shape: bf16[128,400], index: 2, kind: output, shape index: {}]
  %s3 = sld [smem:[#allocation0]]
  $region41: #{gnn_forward.8} parent=0
    _
  %s5 = ssub.s32 1, %s3
  %s6 = scalar_select 0, %s5, %s3
  loop: start=0, step=1, limit=4
  $region2: #{gnn_forward.8} parent=0 // loop_pre_header
    _
  $region3: #{gnn_forward.8} parent=0 // loop_header
    %s8 = sphi 0, %s12
    %p9 = scmp.ge.s32.totalorder %s8, 4
    %s18 = sphi 0, %s20
    %s21 = sphi 0, %s18
    %s22 = sphi 0, %s21
    %s38 = sphi 0, %s22
    %s42 = sphi 0, %s42
    %s44 = sphi 0, %s42
    %s45 = sphi 0, %s44
    %s59 = sphi 0, %s45
    %s65 = sphi 0, %s67
    %s68 = sphi 0, %s65
    %s69 = sphi 0, %s68
    %s85 = sphi 0, %s69
  $region4: #{gnn_forward.8} parent=0 // loop_header_branch
    %11 = sbr.rel (%p9) target = $region8
  $region5: #{gnn_forward.8} parent=0 // loop_body
    %s13 = ssub.s32 %s8, 1
    %s14 = ssub.s32 %s8, 2
    %s15 = sadd.s32 %s8, 1
    %s16 = ssub.s32 %s8, %s15
    %p17 = scmp.eq.s32.totalorder %s16, 0
    %s19 = sadd.s32 %s18, 1
    %s20 = scalar_select %p17, %s18, %s19
    %p23 = pneg %p17
    %p24 = scmp.eq.s32.totalorder %s8, 1
    %p25 = por %p23, %p24
    %p26 = scmp.ne.s32.totalorder %s18, %s21
    %p27 = scmp.eq.s32.totalorder %s8, 0
    %p28 = por %p26, %p27
    %p29 = scmp.ne.s32.totalorder %s18, %s21
    %p30 = scmp.eq.s32.totalorder %s13, 1
    %p31 = por %p29, %p30
    %p32 = scmp.ne.s32.totalorder %s21, %s22
    %p33 = scmp.eq.s32.totalorder %s13, 0
    %p34 = por %p32, %p33
    %p35 = scmp.ne.s32.totalorder %s21, %s22
    %p36 = scmp.eq.s32.totalorder %s14, 1
    %p37 = por %p35, %p36
    %p39 = scmp.ne.s32.totalorder %s22, %s38
    %p40 = scmp.eq.s32.totalorder %s14, 0
    %p41 = por %p39, %p40
    %s43 = sadd.s32 %s42, 1
    %p46 = scmp.eq.s32.totalorder %s8, 1
    %p47 = scmp.ne.s32.totalorder %s42, %s44
    %p48 = scmp.eq.s32.totalorder %s8, 0
    %p49 = por %p47, %p48
    %p50 = scmp.ne.s32.totalorder %s42, %s44
    %p51 = scmp.eq.s32.totalorder %s13, 1
    %p52 = por %p50, %p51
    %p53 = scmp.ne.s32.totalorder %s44, %s45
    %p54 = scmp.eq.s32.totalorder %s13, 0
    %p55 = por %p53, %p54
    %p56 = scmp.ne.s32.totalorder %s44, %s45
    %p57 = scmp.eq.s32.totalorder %s14, 1
    %p58 = por %p56, %p57
    %p60 = scmp.ne.s32.totalorder %s45, %s59
    %p61 = scmp.eq.s32.totalorder %s14, 0
    %p62 = por %p60, %p61
    %s63 = ssub.s32 %s8, %s15
    %p64 = scmp.eq.s32.totalorder %s63, 0
    %s66 = sadd.s32 %s65, 1
    %s67 = scalar_select %p64, %s65, %s66
    %p70 = pneg %p64
    %p71 = scmp.eq.s32.totalorder %s8, 1
    %p72 = por %p70, %p71
    %p73 = scmp.ne.s32.totalorder %s65, %s68
    %p74 = scmp.eq.s32.totalorder %s8, 0
    %p75 = por %p73, %p74
    %p76 = scmp.ne.s32.totalorder %s65, %s68
    %p77 = scmp.eq.s32.totalorder %s13, 1
    %p78 = por %p76, %p77
    %p79 = scmp.ne.s32.totalorder %s68, %s69
    %p80 = scmp.eq.s32.totalorder %s13, 0
    %p81 = por %p79, %p80
    %p82 = scmp.ne.s32.totalorder %s68, %s69
    %p83 = scmp.eq.s32.totalorder %s14, 1
    %p84 = por %p82, %p83
    %p86 = scmp.ne.s32.totalorder %s69, %s85
    %p87 = scmp.eq.s32.totalorder %s14, 0
    %p88 = por %p86, %p87
    %p89 = scmp.le.s32.totalorder 1, %s8
    %p90 = scmp.lt.s32.totalorder %s8, 3
    %p91 = pnand %p89, %p90
    %p92 = pneg %p91
    // Predicated region
    $region9: #{gnn_forward.8} parent=5 // pred_check
      _
    $region10: #{gnn_forward.8} parent=5 // pred_check_branch
      %94 = sbr.rel (%p91) target = $region12
    $region11: #{gnn_forward.8} parent=5 // pred_region
      %s95 = ssub.s32 %s8, 1
      // Predicated region
      $region13: #{gnn_forward.8} parent=11 // pred_check
        %p96 = pneg %p55
      $region14: #{gnn_forward.8} parent=11 // pred_check_branch
        %98 = sbr.rel (%p96) target = $region16
      $region15: #{gnn_forward.8} parent=11 // pred_region
        _
      $region16: #{gnn_forward.8} parent=11 // pred_fallthru
        _
    $region12: #{gnn_forward.8} parent=5 // pred_fallthru
      _
    %p99 = scmp.lt.s32.totalorder %s8, 2
    // Predicated region
    $region17: #{gnn_forward.8} parent=5 // pred_check
      %p100 = pneg %p99
    $region18: #{gnn_forward.8} parent=5 // pred_check_branch
      %102 = sbr.rel (%p100) target = $region20
    $region19: #{gnn_forward.8} parent=5 // pred_region
      // Predicated region
      $region21: #{gnn_forward.8} parent=19 // pred_check
        %p103 = pneg %p28
      $region22: #{gnn_forward.8} parent=19 // pred_check_branch
        %105 = sbr.rel (%p103) target = $region24
      $region23: #{gnn_forward.8} parent=19 // pred_region
        %s106 = smul.u32 8, %s8
        %p107 = scmp.lt.s32.totalorder %s106, 15
        %s108 = scalar_select %p107, %s106, 15
        %s109 = smul.addr %s108, 4
        %s110 = scalar_lea.vmem %s0, %s109
        %s111 = smul.u32 8, %s8
      $region24: #{gnn_forward.8} parent=19 // pred_fallthru
        _
    $region20: #{gnn_forward.8} parent=5 // pred_fallthru
      _
    %p112 = scmp.le.s32.totalorder 1, %s8
    %p113 = scmp.lt.s32.totalorder %s8, 3
    %p114 = pnand %p112, %p113
    %p115 = pneg %p114
    // Predicated region
    $region25: #{gnn_forward.8} parent=5 // pred_check
      _
    $region26: #{gnn_forward.8} parent=5 // pred_check_branch
      %117 = sbr.rel (%p114) target = $region28
    $region27: #{gnn_forward.8} parent=5 // pred_region
      %s118 = ssub.s32 %s8, 1
      %s119 = smul.u32 8, %s13
      %p120 = scmp.lt.s32.totalorder %s119, 15
      %s121 = scalar_select %p120, %s119, 15
      %s122 = smul.addr %s121, 4
      %s123 = scalar_lea.vmem %s0, %s122
      %p124 = pneg %p34
      %p125 = pneg %p31
      %p126 = pneg %p55
      %p127 = pneg %p52
      %p128 = pneg %p81
      %p129 = pneg %p78
      %s130 = smul.u32 8, %s13
      %p131 = scmp.lt.s32.totalorder %s130, 15
      %s132 = scalar_select %p131, %s130, 15
      %s133 = smul.addr %s132, 4
      %s134 = smul.addr %s133, 4
      %s135 = scalar_lea.vmem %s2, %s134
      %s136 = smul.u32 8, %s13
      %p137 = scmp.lt.s32.totalorder %s136, 15
      %s138 = scalar_select %p137, %s136, 15
      %s139 = smul.addr %s138, 4
      %s140 = scalar_lea.vmem %s0, %s139
      %s141 = smul.u32 8, %s13
      %s142 = smul.u32 8, %s13
      %p143 = scmp.lt.s32.totalorder %s142, 15
      %s144 = scalar_select %p143, %s142, 15
      %s145 = smul.addr %s144, 4
      %s146 = smul.addr %s145, 4
      %s147 = scalar_lea.vmem %s2, %s146
      %s148 = smul.u32 8, %s13
      %v150 = vld [vmem:[%s140] sm:$0xf]
      %v151 = vld [vmem:[%s140 + $0x4] sm:$0xf]
      %v152 = vld [vmem:[%s140 + $0x8] sm:$0xf]
      %v153 = vld [vmem:[%s140 + $0xc] sm:$0xf]
      %v154 = vld [vmem:[%s140 + $0x10] sm:$0xf]
      %v155 = vld [vmem:[%s140 + $0x14] sm:$0xf]
      %v156 = vld [vmem:[%s140 + $0x18] sm:$0xf]
      %v157 = vld [vmem:[%s140 + $0x1c] sm:$0xf]
      %v158 = vld [vmem:[%s1] sm:$0xff]
      %v159 = vld [vmem:[%s1 + $0x8] sm:$0xff]
      %v160 = vld [vmem:[%s1 + $0x10] sm:$0xff]
      %v161 = vld [vmem:[%s1 + $0x18] sm:$0xff]
      %v170 = vunpack.c.l.b16 %v150
      %v171 = vunpack.c.l.b16 %v151
      %v172 = vunpack.c.l.b16 %v152
      %v173 = vunpack.c.l.b16 %v153
      %v174 = vunpack.c.l.b16 %v154
      %v175 = vunpack.c.l.b16 %v155
      %v176 = vunpack.c.l.b16 %v156
      %v177 = vunpack.c.l.b16 %v157
      %v178 = vpack.c.b16 %v171, %v170
      %v179 = vpack.c.b16 %v173, %v172
      %v180 = vpack.c.b16 %v175, %v174
      %v181 = vpack.c.b16 %v177, %v176
      %v186 = vunpack.c.l.b16 %v158
      %v187 = vunpack.c.h.b16 %v158
      %v188 = vunpack.c.l.b16 %v159
      %v189 = vunpack.c.h.b16 %v159
      %v190 = vunpack.c.l.b16 %v160
      %v191 = vunpack.c.h.b16 %v160
      %v192 = vunpack.c.l.b16 %v161
      %v193 = vunpack.c.h.b16 %v161
      %v194 = vpack.c.b16 %v190, %v186
      %v195 = vpack.c.b16 %v191, %v187
      %v196 = vpack.c.b16 %v192, %v188
      %v197 = vpack.c.b16 %v193, %v189
      %vm202 = vcmask 130048
      %v204 = vsel %vm202, %v178, 0
      %v207 = vsel %vm202, %v179, 0
      %v210 = vsel %vm202, %v180, 0
      %v213 = vsel %vm202, %v181, 0
      %215 = vmatprep.subr.bf16.mxu0 %v195
      %216 = vmatpush1.bf16.msra.mxu0 %v194
      %217 = vmatprep.subr.bf16.mxu0 0
      %218 = vmatpush1.bf16.msra.mxu0 0
      %219 = vmatprep.subr.bf16.mxu0 0
      %220 = vmatpush1.bf16.msra.mxu0 0
      %221 = vmatprep.subr.bf16.mxu0 0
      %222 = vmatpush1.bf16.msra.mxu0 0
      %223 = vmatprep.subr.bf16.mxu0 0
      %224 = vmatpush1.bf16.msra.mxu0 0
      %225 = vmatprep.subr.bf16.mxu0 0
      %226 = vmatpush1.bf16.msra.mxu0 0
      %227 = vmatprep.subr.bf16.mxu0 0
      %228 = vmatpush1.bf16.msra.mxu0 0
      %229 = vmatprep.subr.bf16.mxu0 0
      %230 = vmatpush1.bf16.msra.mxu0 0
      %231 = vmatprep.subr.bf16.mxu0 0
      %232 = vmatpush1.bf16.msra.mxu0 0
      %233 = vmatprep.subr.bf16.mxu0 0
      %234 = vmatpush1.bf16.msra.mxu0 0
      %235 = vmatprep.subr.bf16.mxu0 0
      %236 = vmatpush1.bf16.msra.mxu0 0
      %237 = vmatprep.subr.bf16.mxu0 0
      %238 = vmatpush1.bf16.msra.mxu0 0
      %239 = vmatprep.subr.bf16.mxu0 0
      %240 = vmatpush1.bf16.msra.mxu0 0
      %241 = vmatprep.subr.bf16.mxu0 0
      %242 = vmatpush1.bf16.msra.mxu0 0
      %243 = vmatprep.subr.bf16.mxu0 0
      %244 = vmatpush1.bf16.msra.mxu0 0
      %245 = vmatprep.subr.bf16.mxu0 0
      %246 = vmatpush1.bf16.msra.mxu0 0
      %247 = vmatprep.mubr.bf16.mxu0 0
      %248 = vmatmul.mubr.bf16.gmra.mrb[0].mxu0 %v204
      %v249 = vpop.f32.mrb[0].mxu0
      %v250 = vadd.f32 0.0, %v249
      %v251 = vpop.f32.mrb[0].mxu0
      %v252 = vadd.f32 0.0, %v251
      %v253 = vpop.f32.mrb[0].mxu0
      %v254 = vadd.f32 0.0, %v253
      %v255 = vpop.f32.mrb[0].mxu0
      %v256 = vadd.f32 0.0, %v255
      %257 = vmatprep.mubr.bf16.mxu0 0
      %258 = vmatmul.mubr.bf16.gmra.mrb[0].mxu0 %v207
      %v259 = vpop.f32.mrb[0].mxu0
      %v260 = vadd.f32 0.0, %v259
      %v261 = vpop.f32.mrb[0].mxu0
      %v262 = vadd.f32 0.0, %v261
      %v263 = vpop.f32.mrb[0].mxu0
      %v264 = vadd.f32 0.0, %v263
      %v265 = vpop.f32.mrb[0].mxu0
      %v266 = vadd.f32 0.0, %v265
      %267 = vmatprep.mubr.bf16.mxu0 0
      %268 = vmatmul.mubr.bf16.gmra.mrb[0].mxu0 %v210
      %v269 = vpop.f32.mrb[0].mxu0
      %v270 = vadd.f32 0.0, %v269
      %v271 = vpop.f32.mrb[0].mxu0
      %v272 = vadd.f32 0.0, %v271
      %v273 = vpop.f32.mrb[0].mxu0
      %v274 = vadd.f32 0.0, %v273
      %v275 = vpop.f32.mrb[0].mxu0
      %v276 = vadd.f32 0.0, %v275
      %277 = vmatprep.mubr.bf16.mxu0 0
      %278 = vmatmul.mubr.bf16.gmra.mrb[0].mxu0 %v213
      %v279 = vpop.f32.mrb[0].mxu0
      %v280 = vadd.f32 0.0, %v279
      %v281 = vpop.f32.mrb[0].mxu0
      %v282 = vadd.f32 0.0, %v281
      %v283 = vpop.f32.mrb[0].mxu0
      %v284 = vadd.f32 0.0, %v283
      %v285 = vpop.f32.mrb[0].mxu0
      %v286 = vadd.f32 0.0, %v285
      %287 = vdwg.mxu0
      %288 = vmatprep.subr.bf16.mxu0 %v197
      %289 = vmatpush1.bf16.msra.mxu0 %v196
      %290 = vmatprep.subr.bf16.mxu0 0
      %291 = vmatpush1.bf16.msra.mxu0 0
      %292 = vmatprep.subr.bf16.mxu0 0
      %293 = vmatpush1.bf16.msra.mxu0 0
      %294 = vmatprep.subr.bf16.mxu0 0
      %295 = vmatpush1.bf16.msra.mxu0 0
      %296 = vmatprep.subr.bf16.mxu0 0
      %297 = vmatpush1.bf16.msra.mxu0 0
      %298 = vmatprep.subr.bf16.mxu0 0
      %299 = vmatpush1.bf16.msra.mxu0 0
      %300 = vmatprep.subr.bf16.mxu0 0
      %301 = vmatpush1.bf16.msra.mxu0 0
      %302 = vmatprep.subr.bf16.mxu0 0
      %303 = vmatpush1.bf16.msra.mxu0 0
      %304 = vmatprep.subr.bf16.mxu0 0
      %305 = vmatpush1.bf16.msra.mxu0 0
      %306 = vmatprep.subr.bf16.mxu0 0
      %307 = vmatpush1.bf16.msra.mxu0 0
      %308 = vmatprep.subr.bf16.mxu0 0
      %309 = vmatpush1.bf16.msra.mxu0 0
      %310 = vmatprep.subr.bf16.mxu0 0
      %311 = vmatpush1.bf16.msra.mxu0 0
      %312 = vmatprep.subr.bf16.mxu0 0
      %313 = vmatpush1.bf16.msra.mxu0 0
      %314 = vmatprep.subr.bf16.mxu0 0
      %315 = vmatpush1.bf16.msra.mxu0 0
      %316 = vmatprep.subr.bf16.mxu0 0
      %317 = vmatpush1.bf16.msra.mxu0 0
      %318 = vmatprep.subr.bf16.mxu0 0
      %319 = vmatpush1.bf16.msra.mxu0 0
      %320 = vmatprep.mubr.bf16.mxu0 0
      %321 = vmatmul.mubr.bf16.gmra.mrb[0].mxu0 %v204
      %v322 = vpop.f32.mrb[0].mxu0
      %v323 = vadd.f32 0.0, %v322
      %v324 = vpop.f32.mrb[0].mxu0
      %v325 = vadd.f32 0.0, %v324
      %v326 = vpop.f32.mrb[0].mxu0
      %v327 = vadd.f32 0.0, %v326
      %v328 = vpop.f32.mrb[0].mxu0
      %v329 = vadd.f32 0.0, %v328
      %330 = vmatprep.mubr.bf16.mxu0 0
      %331 = vmatmul.mubr.bf16.gmra.mrb[0].mxu0 %v207
      %v332 = vpop.f32.mrb[0].mxu0
      %v333 = vadd.f32 0.0, %v332
      %v334 = vpop.f32.mrb[0].mxu0
      %v335 = vadd.f32 0.0, %v334
      %v336 = vpop.f32.mrb[0].mxu0
      %v337 = vadd.f32 0.0, %v336
      %v338 = vpop.f32.mrb[0].mxu0
      %v339 = vadd.f32 0.0, %v338
      %340 = vmatprep.mubr.bf16.mxu0 0
      %341 = vmatmul.mubr.bf16.gmra.mrb[0].mxu0 %v210
      %v342 = vpop.f32.mrb[0].mxu0
      %v343 = vadd.f32 0.0, %v342
      %v344 = vpop.f32.mrb[0].mxu0
      %v345 = vadd.f32 0.0, %v344
      %v346 = vpop.f32.mrb[0].mxu0
      %v347 = vadd.f32 0.0, %v346
      %v348 = vpop.f32.mrb[0].mxu0
      %v349 = vadd.f32 0.0, %v348
      %350 = vmatprep.mubr.bf16.mxu0 0
      %351 = vmatmul.mubr.bf16.gmra.mrb[0].mxu0 %v213
      %v352 = vpop.f32.mrb[0].mxu0
      %v353 = vadd.f32 0.0, %v352
      %v354 = vpop.f32.mrb[0].mxu0
      %v355 = vadd.f32 0.0, %v354
      %v356 = vpop.f32.mrb[0].mxu0
      %v357 = vadd.f32 0.0, %v356
      %v358 = vpop.f32.mrb[0].mxu0
      %v359 = vadd.f32 0.0, %v358
      %360 = vdwg.mxu0
      %v361 = vpack.c.bf16 %v254, %v250
      %v362 = vpack.c.bf16 %v256, %v252
      %v363 = vpack.c.bf16 %v327, %v323
      %v364 = vpack.c.bf16 %v329, %v325
      %v365 = vpack.c.bf16 %v264, %v260
      %v366 = vpack.c.bf16 %v266, %v262
      %v367 = vpack.c.bf16 %v337, %v333
      %v368 = vpack.c.bf16 %v339, %v335
      %v369 = vpack.c.bf16 %v274, %v270
      %v370 = vpack.c.bf16 %v276, %v272
      %v371 = vpack.c.bf16 %v347, %v343
      %v372 = vpack.c.bf16 %v349, %v345
      %v373 = vpack.c.bf16 %v284, %v280
      %v374 = vpack.c.bf16 %v286, %v282
      %v375 = vpack.c.bf16 %v357, %v353
      %v376 = vpack.c.bf16 %v359, %v355
      %v393 = vunpack.c.l.b16 %v361
      %v394 = vunpack.c.l.b16 %v362
      %v395 = vunpack.c.l.b16 %v363
      %v396 = vunpack.c.l.b16 %v364
      %v397 = vunpack.c.h.b16 %v361
      %v398 = vunpack.c.h.b16 %v362
      %v399 = vunpack.c.h.b16 %v363
      %v400 = vunpack.c.h.b16 %v364
      %v401 = vunpack.c.l.b16 %v365
      %v402 = vunpack.c.l.b16 %v366
      %v403 = vunpack.c.l.b16 %v367
      %v404 = vunpack.c.l.b16 %v368
      %v405 = vunpack.c.h.b16 %v365
      %v406 = vunpack.c.h.b16 %v366
      %v407 = vunpack.c.h.b16 %v367
      %v408 = vunpack.c.h.b16 %v368
      %v409 = vunpack.c.l.b16 %v369
      %v410 = vunpack.c.l.b16 %v370
      %v411 = vunpack.c.l.b16 %v371
      %v412 = vunpack.c.l.b16 %v372
      %v413 = vunpack.c.h.b16 %v369
      %v414 = vunpack.c.h.b16 %v370
      %v415 = vunpack.c.h.b16 %v371
      %v416 = vunpack.c.h.b16 %v372
      %v417 = vunpack.c.l.b16 %v373
      %v418 = vunpack.c.l.b16 %v374
      %v419 = vunpack.c.l.b16 %v375
      %v420 = vunpack.c.l.b16 %v376
      %v421 = vunpack.c.h.b16 %v373
      %v422 = vunpack.c.h.b16 %v374
      %v423 = vunpack.c.h.b16 %v375
      %v424 = vunpack.c.h.b16 %v376
      %v425 = vpack.c.b16 %v394, %v393
      %v426 = vpack.c.b16 %v396, %v395
      %v427 = vpack.c.b16 %v398, %v397
      %v428 = vpack.c.b16 %v400, %v399
      %v429 = vpack.c.b16 %v402, %v401
      %v430 = vpack.c.b16 %v404, %v403
      %v431 = vpack.c.b16 %v406, %v405
      %v432 = vpack.c.b16 %v408, %v407
      %v433 = vpack.c.b16 %v410, %v409
      %v434 = vpack.c.b16 %v412, %v411
      %v435 = vpack.c.b16 %v414, %v413
      %v436 = vpack.c.b16 %v416, %v415
      %v437 = vpack.c.b16 %v418, %v417
      %v438 = vpack.c.b16 %v420, %v419
      %v439 = vpack.c.b16 %v422, %v421
      %v440 = vpack.c.b16 %v424, %v423
      %457 = vst [vmem:[%s147] sm:$0xff] %v425
      %vm458 = vcmask 1043456
      %vm459 = vcmask 130052
      %vm460 = vmor %vm459, %vm458
      %461 = vst.msk [vmem:[%s147 + $0x8] sm:$0xff] %vm460, %v426
      %462 = vst [vmem:[%s147 + $0x10] sm:$0xff] %v427
      %463 = vst.msk [vmem:[%s147 + $0x18] sm:$0xff] %vm460, %v428
      %464 = vst [vmem:[%s147 + $0x20] sm:$0xff] %v429
      %465 = vst.msk [vmem:[%s147 + $0x28] sm:$0xff] %vm460, %v430
      %466 = vst [vmem:[%s147 + $0x30] sm:$0xff] %v431
      %467 = vst.msk [vmem:[%s147 + $0x38] sm:$0xff] %vm460, %v432
      %468 = vst [vmem:[%s147 + $0x40] sm:$0xff] %v433
      %469 = vst.msk [vmem:[%s147 + $0x48] sm:$0xff] %vm460, %v434
      %470 = vst [vmem:[%s147 + $0x50] sm:$0xff] %v435
      %471 = vst.msk [vmem:[%s147 + $0x58] sm:$0xff] %vm460, %v436
      %472 = vst [vmem:[%s147 + $0x60] sm:$0xff] %v437
      %473 = vst.msk [vmem:[%s147 + $0x68] sm:$0xff] %vm460, %v438
      %474 = vst [vmem:[%s147 + $0x70] sm:$0xff] %v439
      %475 = vst.msk [vmem:[%s147 + $0x78] sm:$0xff] %vm460, %v440
      %s476 = smul.u32 8, %s13
      %p477 = scmp.lt.s32.totalorder %s476, 15
      %s478 = scalar_select %p477, %s476, 15
      %s479 = smul.addr %s478, 4
      %s480 = smul.addr %s479, 4
      %s481 = scalar_lea.vmem %s2, %s480
      // Predicated region
      $region29: #{gnn_forward.8} parent=27 // pred_check
        %p482 = pneg %p78
      $region30: #{gnn_forward.8} parent=27 // pred_check_branch
        %484 = sbr.rel (%p482) target = $region32
      $region31: #{gnn_forward.8} parent=27 // pred_region
        %s485 = smul.u32 8, %s13
      $region32: #{gnn_forward.8} parent=27 // pred_fallthru
        _
    $region28: #{gnn_forward.8} parent=5 // pred_fallthru
      _
    %p486 = scmp.le.s32.totalorder 2, %s8
    // Predicated region
    $region33: #{gnn_forward.8} parent=5 // pred_check
      %p487 = pneg %p486
    $region34: #{gnn_forward.8} parent=5 // pred_check_branch
      %489 = sbr.rel (%p487) target = $region36
    $region35: #{gnn_forward.8} parent=5 // pred_region
      %s490 = ssub.s32 %s8, 2
      // Predicated region
      $region37: #{gnn_forward.8} parent=35 // pred_check
        %p491 = pneg %p84
      $region38: #{gnn_forward.8} parent=35 // pred_check_branch
        %493 = sbr.rel (%p491) target = $region40
      $region39: #{gnn_forward.8} parent=35 // pred_region
        %s494 = smul.u32 8, %s14
        %p495 = scmp.lt.s32.totalorder %s494, 15
        %s496 = scalar_select %p495, %s494, 15
        %s497 = smul.addr %s496, 4
        %s498 = smul.addr %s497, 4
        %s499 = scalar_lea.vmem %s2, %s498
      $region40: #{gnn_forward.8} parent=35 // pred_fallthru
        _
    $region36: #{gnn_forward.8} parent=5 // pred_fallthru
      _
  $region6: #{gnn_forward.8} parent=0 // loop_footer
    %s12 = sadd.s32 1, %s8
  $region7: #{gnn_forward.8} parent=0 // loop_footer_branch
    %7 = sbr.rel target = $region3
  $region8: #{gnn_forward.8} parent=0 // loop_exit
    _

// kernel: gnn_forward.7
$region0: #{gnn_forward.7}
  #allocation0 [shape = 'u32[]', space=smem, size = 0x4, offset = 0x4, fixed_abs, tag = 'smem constant byte address 0x4 - core index']
  #allocation1 [shape = 'u32[144,128]{1,0:T(1,128)}', space=vmem, size = 0x12000, scoped, tag = 'internal scratch']
  #allocation2 [shape = 'f32[64,16]{1,0:T(8,128)}', space=vmem, size = 0x8000, scoped, tag = 'scratch operand']
  #allocation3 [shape = 'f32[1,1]{1,0:T(1,128)S(1)}', space=vmem, size = 0x200, scoped, tag = 'scoped memory for gnn_forward.7']
  %s0 = inlined_call_operand.vmem [shape: bf16[128,3200], index: 0, kind: input, shape index: {}]
  %s1 = inlined_call_operand.vmem [shape: bf16[3200,16], index: 1, kind: input, shape index: {}]
  %s2 = inlined_call_operand.vmem [shape: bf16[128,16], index: 2, kind: input, shape index: {}]
  %s3 = inlined_call_operand.vmem [shape: bf16[16,16], index: 3, kind: input, shape index: {}]
  %s4 = inlined_call_operand.vmem [shape: f32[1,16], index: 4, kind: input, shape index: {}]
  %s5 = inlined_call_operand.vmem [shape: f32[16,1], index: 5, kind: input, shape index: {}]
  %s6 = inlined_call_operand.<no memory space> [shape: f32[1,1], index: 6, kind: input, shape index: {}]
  %s7 = inlined_call_operand.vmem [shape: bf16[128,16], index: 7, kind: output, shape index: {}]
  %s8 = sld [smem:[#allocation0]]
  $region69: #{gnn_forward.7} parent=0
    _
  %s10 = ssub.s32 1, %s8
  %s11 = scalar_select 0, %s10, %s8
  %v12 = vstv %s6
  %13 = vst [vmem:[#allocation3] sm:$0x1] %v12
  loop: start=0, step=1, limit=4
  $region2: #{gnn_forward.7} parent=0 // loop_pre_header
    _
  $region3: #{gnn_forward.7} parent=0 // loop_header
    %s15 = sphi 0, %s19
    %p16 = scmp.ge.s32.totalorder %s15, 4
    %s22 = sphi 0, %s34
    %s23 = sphi 0, %s30
    %s24 = sphi 0, %s22
    %s25 = sphi 0, %s23
    %s26 = sphi 0, %s24
    %s27 = sphi 0, %s25
    %s39 = sphi 0, %s41
    %s42 = sphi 0, %s39
    %s43 = sphi 0, %s42
    %s59 = sphi 0, %s43
    %s65 = sphi 0, %s67
    %s68 = sphi 0, %s65
    %s69 = sphi 0, %s68
    %s85 = sphi 0, %s69
    %s91 = sphi 0, %s93
    %s94 = sphi 0, %s91
    %s95 = sphi 0, %s94
    %s111 = sphi 0, %s95
    %s115 = sphi 0, %s115
    %s117 = sphi 0, %s115
    %s118 = sphi 0, %s117
    %s132 = sphi 0, %s118
    %s136 = sphi 0, %s136
    %s138 = sphi 0, %s136
    %s139 = sphi 0, %s138
    %s153 = sphi 0, %s139
    %s157 = sphi 0, %s157
    %s159 = sphi 0, %s157
    %s160 = sphi 0, %s159
    %s174 = sphi 0, %s160
    %s178 = sphi 0, %s178
    %s180 = sphi 0, %s178
    %s181 = sphi 0, %s180
    %s195 = sphi 0, %s181
    %s201 = sphi 0, %s203
    %s204 = sphi 0, %s201
    %s205 = sphi 0, %s204
    %s221 = sphi 0, %s205
  $region4: #{gnn_forward.7} parent=0 // loop_header_branch
    %18 = sbr.rel (%p16) target = $region8
  $region5: #{gnn_forward.7} parent=0 // loop_body
    %s20 = ssub.s32 %s15, 1
    %s21 = ssub.s32 %s15, 2
    %s28 = sadd.s32 1, %s23
    %p29 = scmp.ge.s32.totalorder %s28, 1
    %s30 = scalar_select %p29, 0, %s28
    %s31 = sadd.s32 1, %s22
    %s32 = scalar_select %p29, %s31, %s22
    %p33 = scmp.ge.s32.totalorder %s32, 2
    %s34 = scalar_select %p33, 0, %s32
    %s35 = ssub.s32 %s22, %s34
    %s36 = ssub.s32 %s23, %s30
    %s37 = sor.u32 %s35, %s36
    %p38 = scmp.eq.s32.totalorder %s37, 0
    %s40 = sadd.s32 %s39, 1
    %s41 = scalar_select %p38, %s39, %s40
    %p44 = pneg %p38
    %p45 = scmp.eq.s32.totalorder %s15, 1
    %p46 = por %p44, %p45
    %p47 = scmp.ne.s32.totalorder %s39, %s42
    %p48 = scmp.eq.s32.totalorder %s15, 0
    %p49 = por %p47, %p48
    %p50 = scmp.ne.s32.totalorder %s39, %s42
    %p51 = scmp.eq.s32.totalorder %s20, 1
    %p52 = por %p50, %p51
    %p53 = scmp.ne.s32.totalorder %s42, %s43
    %p54 = scmp.eq.s32.totalorder %s20, 0
    %p55 = por %p53, %p54
    %p56 = scmp.ne.s32.totalorder %s42, %s43
    %p57 = scmp.eq.s32.totalorder %s21, 1
    %p58 = por %p56, %p57
    %p60 = scmp.ne.s32.totalorder %s43, %s59
    %p61 = scmp.eq.s32.totalorder %s21, 0
    %p62 = por %p60, %p61
    %s63 = ssub.s32 %s23, %s30
    %p64 = scmp.eq.s32.totalorder %s63, 0
    %s66 = sadd.s32 %s65, 1
    %s67 = scalar_select %p64, %s65, %s66
    %p70 = pneg %p64
    %p71 = scmp.eq.s32.totalorder %s15, 1
    %p72 = por %p70, %p71
    %p73 = scmp.ne.s32.totalorder %s65, %s68
    %p74 = scmp.eq.s32.totalorder %s15, 0
    %p75 = por %p73, %p74
    %p76 = scmp.ne.s32.totalorder %s65, %s68
    %p77 = scmp.eq.s32.totalorder %s20, 1
    %p78 = por %p76, %p77
    %p79 = scmp.ne.s32.totalorder %s68, %s69
    %p80 = scmp.eq.s32.totalorder %s20, 0
    %p81 = por %p79, %p80
    %p82 = scmp.ne.s32.totalorder %s68, %s69
    %p83 = scmp.eq.s32.totalorder %s21, 1
    %p84 = por %p82, %p83
    %p86 = scmp.ne.s32.totalorder %s69, %s85
    %p87 = scmp.eq.s32.totalorder %s21, 0
    %p88 = por %p86, %p87
    %s89 = ssub.s32 %s22, %s34
    %p90 = scmp.eq.s32.totalorder %s89, 0
    %s92 = sadd.s32 %s91, 1
    %s93 = scalar_select %p90, %s91, %s92
    %p96 = pneg %p90
    %p97 = scmp.eq.s32.totalorder %s15, 1
    %p98 = por %p96, %p97
    %p99 = scmp.ne.s32.totalorder %s91, %s94
    %p100 = scmp.eq.s32.totalorder %s15, 0
    %p101 = por %p99, %p100
    %p102 = scmp.ne.s32.totalorder %s91, %s94
    %p103 = scmp.eq.s32.totalorder %s20, 1
    %p104 = por %p102, %p103
    %p105 = scmp.ne.s32.totalorder %s94, %s95
    %p106 = scmp.eq.s32.totalorder %s20, 0
    %p107 = por %p105, %p106
    %p108 = scmp.ne.s32.totalorder %s94, %s95
    %p109 = scmp.eq.s32.totalorder %s21, 1
    %p110 = por %p108, %p109
    %p112 = scmp.ne.s32.totalorder %s95, %s111
    %p113 = scmp.eq.s32.totalorder %s21, 0
    %p114 = por %p112, %p113
    %s116 = sadd.s32 %s115, 1
    %p119 = scmp.eq.s32.totalorder %s15, 1
    %p120 = scmp.ne.s32.totalorder %s115, %s117
    %p121 = scmp.eq.s32.totalorder %s15, 0
    %p122 = por %p120, %p121
    %p123 = scmp.ne.s32.totalorder %s115, %s117
    %p124 = scmp.eq.s32.totalorder %s20, 1
    %p125 = por %p123, %p124
    %p126 = scmp.ne.s32.totalorder %s117, %s118
    %p127 = scmp.eq.s32.totalorder %s20, 0
    %p128 = por %p126, %p127
    %p129 = scmp.ne.s32.totalorder %s117, %s118
    %p130 = scmp.eq.s32.totalorder %s21, 1
    %p131 = por %p129, %p130
    %p133 = scmp.ne.s32.totalorder %s118, %s132
    %p134 = scmp.eq.s32.totalorder %s21, 0
    %p135 = por %p133, %p134
    %s137 = sadd.s32 %s136, 1
    %p140 = scmp.eq.s32.totalorder %s15, 1
    %p141 = scmp.ne.s32.totalorder %s136, %s138
    %p142 = scmp.eq.s32.totalorder %s15, 0
    %p143 = por %p141, %p142
    %p144 = scmp.ne.s32.totalorder %s136, %s138
    %p145 = scmp.eq.s32.totalorder %s20, 1
    %p146 = por %p144, %p145
    %p147 = scmp.ne.s32.totalorder %s138, %s139
    %p148 = scmp.eq.s32.totalorder %s20, 0
    %p149 = por %p147, %p148
    %p150 = scmp.ne.s32.totalorder %s138, %s139
    %p151 = scmp.eq.s32.totalorder %s21, 1
    %p152 = por %p150, %p151
    %p154 = scmp.ne.s32.totalorder %s139, %s153
    %p155 = scmp.eq.s32.totalorder %s21, 0
    %p156 = por %p154, %p155
    %s158 = sadd.s32 %s157, 1
    %p161 = scmp.eq.s32.totalorder %s15, 1
    %p162 = scmp.ne.s32.totalorder %s157, %s159
    %p163 = scmp.eq.s32.totalorder %s15, 0
    %p164 = por %p162, %p163
    %p165 = scmp.ne.s32.totalorder %s157, %s159
    %p166 = scmp.eq.s32.totalorder %s20, 1
    %p167 = por %p165, %p166
    %p168 = scmp.ne.s32.totalorder %s159, %s160
    %p169 = scmp.eq.s32.totalorder %s20, 0
    %p170 = por %p168, %p169
    %p171 = scmp.ne.s32.totalorder %s159, %s160
    %p172 = scmp.eq.s32.totalorder %s21, 1
    %p173 = por %p171, %p172
    %p175 = scmp.ne.s32.totalorder %s160, %s174
    %p176 = scmp.eq.s32.totalorder %s21, 0
    %p177 = por %p175, %p176
    %s179 = sadd.s32 %s178, 1
    %p182 = scmp.eq.s32.totalorder %s15, 1
    %p183 = scmp.ne.s32.totalorder %s178, %s180
    %p184 = scmp.eq.s32.totalorder %s15, 0
    %p185 = por %p183, %p184
    %p186 = scmp.ne.s32.totalorder %s178, %s180
    %p187 = scmp.eq.s32.totalorder %s20, 1
    %p188 = por %p186, %p187
    %p189 = scmp.ne.s32.totalorder %s180, %s181
    %p190 = scmp.eq.s32.totalorder %s20, 0
    %p191 = por %p189, %p190
    %p192 = scmp.ne.s32.totalorder %s180, %s181
    %p193 = scmp.eq.s32.totalorder %s21, 1
    %p194 = por %p192, %p193
    %p196 = scmp.ne.s32.totalorder %s181, %s195
    %p197 = scmp.eq.s32.totalorder %s21, 0
    %p198 = por %p196, %p197
    %s199 = ssub.s32 %s22, %s34
    %p200 = scmp.eq.s32.totalorder %s199, 0
    %s202 = sadd.s32 %s201, 1
    %s203 = scalar_select %p200, %s201, %s202
    %p206 = pneg %p200
    %p207 = scmp.eq.s32.totalorder %s15, 1
    %p208 = por %p206, %p207
    %p209 = scmp.ne.s32.totalorder %s201, %s204
    %p210 = scmp.eq.s32.totalorder %s15, 0
    %p211 = por %p209, %p210
    %p212 = scmp.ne.s32.totalorder %s201, %s204
    %p213 = scmp.eq.s32.totalorder %s20, 1
    %p214 = por %p212, %p213
    %p215 = scmp.ne.s32.totalorder %s204, %s205
    %p216 = scmp.eq.s32.totalorder %s20, 0
    %p217 = por %p215, %p216
    %p218 = scmp.ne.s32.totalorder %s204, %s205
    %p219 = scmp.eq.s32.totalorder %s21, 1
    %p220 = por %p218, %p219
    %p222 = scmp.ne.s32.totalorder %s205, %s221
    %p223 = scmp.eq.s32.totalorder %s21, 0
    %p224 = por %p222, %p223
    %p225 = scmp.le.s32.totalorder 1, %s15
    %p226 = scmp.lt.s32.totalorder %s15, 3
    %p227 = pnand %p225, %p226
    %p228 = pneg %p227
    // Predicated region
    $region9: #{gnn_forward.7} parent=5 // pred_check
      _
    $region10: #{gnn_forward.7} parent=5 // pred_check_branch
      %230 = sbr.rel (%p227) target = $region12
    $region11: #{gnn_forward.7} parent=5 // pred_region
      %s231 = ssub.s32 %s15, 1
      // Predicated region
      $region13: #{gnn_forward.7} parent=11 // pred_check
        %p232 = pneg %p81
      $region14: #{gnn_forward.7} parent=11 // pred_check_branch
        %234 = sbr.rel (%p232) target = $region16
      $region15: #{gnn_forward.7} parent=11 // pred_region
        %s235 = smul.u32 400, %s25
        %p236 = scmp.lt.s32.totalorder %s235, 399
        %s237 = scalar_select %p236, %s235, 399
        %s238 = smul.addr %s237, 4
        %s239 = scalar_lea.vmem %s1, %s238
        %s240 = smul.u32 400, %s25
      $region16: #{gnn_forward.7} parent=11 // pred_fallthru
        _
      // Predicated region
      $region17: #{gnn_forward.7} parent=11 // pred_check
        %p241 = pneg %p128
      $region18: #{gnn_forward.7} parent=11 // pred_check_branch
        %243 = sbr.rel (%p241) target = $region20
      $region19: #{gnn_forward.7} parent=11 // pred_region
        _
      $region20: #{gnn_forward.7} parent=11 // pred_fallthru
        _
      // Predicated region
      $region21: #{gnn_forward.7} parent=11 // pred_check
        %p244 = pneg %p149
      $region22: #{gnn_forward.7} parent=11 // pred_check_branch
        %246 = sbr.rel (%p244) target = $region24
      $region23: #{gnn_forward.7} parent=11 // pred_region
        _
      $region24: #{gnn_forward.7} parent=11 // pred_fallthru
        _
      // Predicated region
      $region25: #{gnn_forward.7} parent=11 // pred_check
        %p247 = pneg %p170
      $region26: #{gnn_forward.7} parent=11 // pred_check_branch
        %249 = sbr.rel (%p247) target = $region28
      $region27: #{gnn_forward.7} parent=11 // pred_region
        _
      $region28: #{gnn_forward.7} parent=11 // pred_fallthru
        _
      // Predicated region
      $region29: #{gnn_forward.7} parent=11 // pred_check
        %p250 = pneg %p191
      $region30: #{gnn_forward.7} parent=11 // pred_check_branch
        %252 = sbr.rel (%p250) target = $region32
      $region31: #{gnn_forward.7} parent=11 // pred_region
        _
      $region32: #{gnn_forward.7} parent=11 // pred_fallthru
        _
    $region12: #{gnn_forward.7} parent=5 // pred_fallthru
      _
    %p253 = scmp.lt.s32.totalorder %s15, 2
    // Predicated region
    $region33: #{gnn_forward.7} parent=5 // pred_check
      %p254 = pneg %p253
    $region34: #{gnn_forward.7} parent=5 // pred_check_branch
      %256 = sbr.rel (%p254) target = $region36
    $region35: #{gnn_forward.7} parent=5 // pred_region
      // Predicated region
      $region37: #{gnn_forward.7} parent=35 // pred_check
        %p257 = pneg %p49
      $region38: #{gnn_forward.7} parent=35 // pred_check_branch
        %259 = sbr.rel (%p257) target = $region40
      $region39: #{gnn_forward.7} parent=35 // pred_region
        %s260 = smul.u32 8, %s22
        %s261 = smul.u32 25, %s23
        %p262 = scmp.lt.s32.totalorder %s260, 15
        %s263 = scalar_select %p262, %s260, 15
        %p264 = scmp.lt.s32.totalorder %s261, 24
        %s265 = scalar_select %p264, %s261, 24
        %s266 = smul.addr %s263, 25
        %s267 = sadd.s32 %s265, %s266
        %s268 = smul.addr %s267, 4
        %s269 = scalar_lea.vmem %s0, %s268
        %s270 = smul.u32 8, %s22
        %s271 = smul.u32 25, %s23
      $region40: #{gnn_forward.7} parent=35 // pred_fallthru
        _
      // Predicated region
      $region41: #{gnn_forward.7} parent=35 // pred_check
        %p272 = pneg %p101
      $region42: #{gnn_forward.7} parent=35 // pred_check_branch
        %274 = sbr.rel (%p272) target = $region44
      $region43: #{gnn_forward.7} parent=35 // pred_region
        %s275 = smul.u32 8, %s22
        %p276 = scmp.lt.s32.totalorder %s275, 15
        %s277 = scalar_select %p276, %s275, 15
        %s278 = smul.addr %s277, 4
        %s279 = scalar_lea.vmem %s2, %s278
        %s280 = smul.u32 8, %s22
      $region44: #{gnn_forward.7} parent=35 // pred_fallthru
        _
    $region36: #{gnn_forward.7} parent=5 // pred_fallthru
      _
    %p281 = scmp.le.s32.totalorder 1, %s15
    %p282 = scmp.lt.s32.totalorder %s15, 3
    %p283 = pnand %p281, %p282
    %p284 = pneg %p283
    // Predicated region
    $region45: #{gnn_forward.7} parent=5 // pred_check
      _
    $region46: #{gnn_forward.7} parent=5 // pred_check_branch
      %286 = sbr.rel (%p283) target = $region48
    $region47: #{gnn_forward.7} parent=5 // pred_region
      %s287 = ssub.s32 %s15, 1
      %s288 = smul.u32 8, %s24
      %s289 = smul.u32 25, %s25
      %p290 = scmp.lt.s32.totalorder %s288, 15
      %s291 = scalar_select %p290, %s288, 15
      %p292 = scmp.lt.s32.totalorder %s289, 24
      %s293 = scalar_select %p292, %s289, 24
      %s294 = smul.addr %s291, 25
      %s295 = sadd.s32 %s293, %s294
      %s296 = smul.addr %s295, 4
      %s297 = scalar_lea.vmem %s0, %s296
      %p298 = pneg %p55
      %p299 = pneg %p52
      %s300 = smul.u32 400, %s25
      %p301 = scmp.lt.s32.totalorder %s300, 399
      %s302 = scalar_select %p301, %s300, 399
      %s303 = smul.addr %s302, 4
      %s304 = scalar_lea.vmem %s1, %s303
      %p305 = pneg %p81
      %p306 = pneg %p78
      %s307 = smul.u32 8, %s24
      %p308 = scmp.lt.s32.totalorder %s307, 15
      %s309 = scalar_select %p308, %s307, 15
      %s310 = smul.addr %s309, 4
      %s311 = scalar_lea.vmem %s2, %s310
      %p312 = pneg %p107
      %p313 = pneg %p104
      %p314 = pneg %p128
      %p315 = pneg %p125
      %p316 = pneg %p149
      %p317 = pneg %p146
      %p318 = pneg %p170
      %p319 = pneg %p167
      %p320 = pneg %p191
      %p321 = pneg %p188
      %p322 = pneg %p217
      %p323 = pneg %p214
      %s324 = smul.u32 8, %s24
      %p325 = scmp.lt.s32.totalorder %s324, 15
      %s326 = scalar_select %p325, %s324, 15
      %s327 = smul.addr %s326, 4
      %s328 = scalar_lea.vmem %s7, %s327
      %s329 = smul.u32 8, %s24
      %s330 = smul.u32 25, %s25
      %p331 = scmp.lt.s32.totalorder %s329, 15
      %s332 = scalar_select %p331, %s329, 15
      %p333 = scmp.lt.s32.totalorder %s330, 24
      %s334 = scalar_select %p333, %s330, 24
      %s335 = smul.addr %s332, 25
      %s336 = sadd.s32 %s334, %s335
      %s337 = smul.addr %s336, 4
      %s338 = scalar_lea.vmem %s0, %s337
      %s339 = smul.u32 8, %s24
      %s340 = smul.u32 25, %s25
      %s341 = smul.u32 400, %s25
      %p342 = scmp.lt.s32.totalorder %s341, 399
      %s343 = scalar_select %p342, %s341, 399
      %s344 = smul.addr %s343, 4
      %s345 = scalar_lea.vmem %s1, %s344
      %s346 = smul.u32 400, %s25
      %s347 = smul.u32 8, %s24
      %p348 = scmp.lt.s32.totalorder %s347, 15
      %s349 = scalar_select %p348, %s347, 15
      %s350 = smul.addr %s349, 4
      %s351 = scalar_lea.vmem %s2, %s350
      %s352 = smul.u32 8, %s24
      %s353 = smul.u32 8, %s24
      %p354 = scmp.lt.s32.totalorder %s353, 15
      %s355 = scalar_select %p354, %s353, 15
      %s356 = smul.addr %s355, 4
      %s357 = scalar_lea.vmem %s7, %s356
      %s358 = smul.u32 8, %s24
      %p360 = scmp.eq.s32.totalorder %s25, 0
      // Predicated region
      $region49: #{gnn_forward.7} parent=47 // pred_check
        %p361 = pneg %p360
      $region50: #{gnn_forward.7} parent=47 // pred_check_branch
        %363 = sbr.rel (%p361) target = $region52
      $region51: #{gnn_forward.7} parent=47 // pred_region
        %vm364 = vcmask 130048
        %365 = vst.msk [vmem:[#allocation2] sm:$0xff] %vm364, 0.0
        %366 = vst.msk [vmem:[#allocation2 + $0x8] sm:$0xff] %vm364, 0.0
        %367 = vst.msk [vmem:[#allocation2 + $0x10] sm:$0xff] %vm364, 0.0
        %368 = vst.msk [vmem:[#allocation2 + $0x18] sm:$0xff] %vm364, 0.0
        %369 = vst.msk [vmem:[#allocation2 + $0x20] sm:$0xff] %vm364, 0.0
        %370 = vst.msk [vmem:[#allocation2 + $0x28] sm:$0xff] %vm364, 0.0
        %371 = vst.msk [vmem:[#allocation2 + $0x30] sm:$0xff] %vm364, 0.0
        %372 = vst.msk [vmem:[#allocation2 + $0x38] sm:$0xff] %vm364, 0.0
      $region52: #{gnn_forward.7} parent=47 // pred_fallthru
        _
      %v373 = vld [vmem:[#allocation2] sm:$0xff]
      %v374 = vld [vmem:[#allocation2 + $0x8] sm:$0xff]
      %v375 = vld [vmem:[#allocation2 + $0x10] sm:$0xff]
      %v376 = vld [vmem:[#allocation2 + $0x18] sm:$0xff]
      %v377 = vld [vmem:[#allocation2 + $0x20] sm:$0xff]
      %v378 = vld [vmem:[#allocation2 + $0x28] sm:$0xff]
      %v379 = vld [vmem:[#allocation2 + $0x30] sm:$0xff]
      %v380 = vld [vmem:[#allocation2 + $0x38] sm:$0xff]
      %v381 = vld [vmem:[%s338] sm:$0xff]
      %v382 = vld [vmem:[%s338 + $0x8] sm:$0xff]
      %v383 = vld [vmem:[%s338 + $0x10] sm:$0xff]
      %v384 = vld [vmem:[%s338 + $0x18] sm:$0xff]
      %v385 = vld [vmem:[%s338 + $0x20] sm:$0xff]
      %v386 = vld [vmem:[%s338 + $0x28] sm:$0xff]
      %v387 = vld [vmem:[%s338 + $0x30] sm:$0xff]
      %v388 = vld [vmem:[%s338 + $0x38] sm:$0xff]
      %v389 = vld [vmem:[%s338 + $0x40] sm:$0xff]
      %v390 = vld [vmem:[%s338 + $0x48] sm:$0xff]
      %v391 = vld [vmem:[%s338 + $0x50] sm:$0xff]
      %v392 = vld [vmem:[%s338 + $0x58] sm:$0xff]
      %v393 = vld [vmem:[%s338 + $0x60] sm:$0xf]
      %v394 = vld [vmem:[%s338 + $0x64] sm:$0xff]
      %v395 = vld [vmem:[%s338 + $0x6c] sm:$0xff]
      %v396 = vld [vmem:[%s338 + $0x74] sm:$0xff]
      %v397 = vld [vmem:[%s338 + $0x7c] sm:$0xff]
      %v398 = vld [vmem:[%s338 + $0x84] sm:$0xff]
      %v399 = vld [vmem:[%s338 + $0x8c] sm:$0xff]
      %v400 = vld [vmem:[%s338 + $0x94] sm:$0xff]
      %v401 = vld [vmem:[%s338 + $0x9c] sm:$0xff]
      %v402 = vld [vmem:[%s338 + $0xa4] sm:$0xff]
      %v403 = vld [vmem:[%s338 + $0xac] sm:$0xff]
      %v404 = vld [vmem:[%s338 + $0xb4] sm:$0xff]
      %v405 = vld [vmem:[%s338 + $0xbc] sm:$0xff]
      %v406 = vld [vmem:[%s338 + $0xc4] sm:$0xf]
      %v407 = vld [vmem:[%s338 + $0xc8] sm:$0xff]
      %v408 = vld [vmem:[%s338 + $0xd0] sm:$0xff]
      %v409 = vld [vmem:[%s338 + $0xd8] sm:$0xff]
      %v410 = vld [vmem:[%s338 + $0xe0] sm:$0xff]
      %v411 = vld [vmem:[%s338 + $0xe8] sm:$0xff]
      %v412 = vld [vmem:[%s338 + $0xf0] sm:$0xff]
      %v413 = vld [vmem:[%s338 + $0xf8] sm:$0xff]
      %v414 = vld [vmem:[%s338 + $0x100] sm:$0xff]
      %v415 = vld [vmem:[%s338 + $0x108] sm:$0xff]
      %v416 = vld [vmem:[%s338 + $0x110] sm:$0xff]
      %v417 = vld [vmem:[%s338 + $0x118] sm:$0xff]
      %v418 = vld [vmem:[%s338 + $0x120] sm:$0xff]
      %v419 = vld [vmem:[%s338 + $0x128] sm:$0xf]
      %v420 = vld [vmem:[%s338 + $0x12c] sm:$0xff]
      %v421 = vld [vmem:[%s338 + $0x134] sm:$0xff]
      %v422 = vld [vmem:[%s338 + $0x13c] sm:$0xff]
      %v423 = vld [vmem:[%s338 + $0x144] sm:$0xff]
      %v424 = vld [vmem:[%s338 + $0x14c] sm:$0xff]
      %v425 = vld [vmem:[%s338 + $0x154] sm:$0xff]
      %v426 = vld [vmem:[%s338 + $0x15c] sm:$0xff]
      %v427 = vld [vmem:[%s338 + $0x164] sm:$0xff]
      %v428 = vld [vmem:[%s338 + $0x16c] sm:$0xff]
      %v429 = vld [vmem:[%s338 + $0x174] sm:$0xff]
      %v430 = vld [vmem:[%s338 + $0x17c] sm:$0xff]
      %v431 = vld [vmem:[%s338 + $0x184] sm:$0xff]
      %v432 = vld [vmem:[%s338 + $0x18c] sm:$0xf]
      %v433 = vld [vmem:[%s338 + $0x190] sm:$0xff]
      %v434 = vld [vmem:[%s338 + $0x198] sm:$0xff]
      %v435 = vld [vmem:[%s338 + $0x1a0] sm:$0xff]
      %v436 = vld [vmem:[%s338 + $0x1a8] sm:$0xff]
      %v437 = vld [vmem:[%s338 + $0x1b0] sm:$0xff]
      %v438 = vld [vmem:[%s338 + $0x1b8] sm:$0xff]
      %v439 = vld [vmem:[%s338 + $0x1c0] sm:$0xff]
      %v440 = vld [vmem:[%s338 + $0x1c8] sm:$0xff]
      %v441 = vld [vmem:[%s338 + $0x1d0] sm:$0xff]
      %v442 = vld [vmem:[%s338 + $0x1d8] sm:$0xff]
      %v443 = vld [vmem:[%s338 + $0x1e0] sm:$0xff]
      %v444 = vld [vmem:[%s338 + $0x1e8] sm:$0xff]
      %v445 = vld [vmem:[%s338 + $0x1f0] sm:$0xf]
      %v446 = vld [vmem:[%s338 + $0x1f4] sm:$0xff]
      %v447 = vld [vmem:[%s338 + $0x1fc] sm:$0xff]
      %v448 = vld [vmem:[%s338 + $0x204] sm:$0xff]
      %v449 = vld [vmem:[%s338 + $0x20c] sm:$0xff]
      %v450 = vld [vmem:[%s338 + $0x214] sm:$0xff]
      %v451 = vld [vmem:[%s338 + $0x21c] sm:$0xff]
      %v452 = vld [vmem:[%s338 + $0x224] sm:$0xff]
      %v453 = vld [vmem:[%s338 + $0x22c] sm:$0xff]
      %v454 = vld [vmem:[%s338 + $0x234] sm:$0xff]
      %v455 = vld [vmem:[%s338 + $0x23c] sm:$0xff]
      %v456 = vld [vmem:[%s338 + $0x244] sm:$0xff]
      %v457 = vld [vmem:[%s338 + $0x24c] sm:$0xff]
      %v458 = vld [vmem:[%s338 + $0x254] sm:$0xf]
      %v459 = vld [vmem:[%s338 + $0x258] sm:$0xff]
      %v460 = vld [vmem:[%s338 + $0x260] sm:$0xff]
      %v461 = vld [vmem:[%s338 + $0x268] sm:$0xff]
      %v462 = vld [vmem:[%s338 + $0x270] sm:$0xff]
      %v463 = vld [vmem:[%s338 + $0x278] sm:$0xff]
      %v464 = vld [vmem:[%s338 + $0x280] sm:$0xff]
      %v465 = vld [vmem:[%s338 + $0x288] sm:$0xff]
      %v466 = vld [vmem:[%s338 + $0x290] sm:$0xff]
      %v467 = vld [vmem:[%s338 + $0x298] sm:$0xff]
      %v468 = vld [vmem:[%s338 + $0x2a0] sm:$0xff]
      %v469 = vld [vmem:[%s338 + $0x2a8] sm:$0xff]
      %v470 = vld [vmem:[%s338 + $0x2b0] sm:$0xff]
      %v471 = vld [vmem:[%s338 + $0x2b8] sm:$0xf]
      %v472 = vld [vmem:[%s338 + $0x2bc] sm:$0xff]
      %v473 = vld [vmem:[%s338 + $0x2c4] sm:$0xff]
      %v474 = vld [vmem:[%s338 + $0x2cc] sm:$0xff]
      %v475 = vld [vmem:[%s338 + $0x2d4] sm:$0xff]
      %v476 = vld [vmem:[%s338 + $0x2dc] sm:$0xff]
      %v477 = vld [vmem:[%s338 + $0x2e4] sm:$0xff]
      %v478 = vld [vmem:[%s338 + $0x2ec] sm:$0xff]
      %v479 = vld [vmem:[%s338 + $0x2f4] sm:$0xff]
      %v480 = vld [vmem:[%s338 + $0x2fc] sm:$0xff]
      %v481 = vld [vmem:[%s338 + $0x304] sm:$0xff]
      %v482 = vld [vmem:[%s338 + $0x30c] sm:$0xff]
      %v483 = vld [vmem:[%s338 + $0x314] sm:$0xff]
      %v484 = vld [vmem:[%s338 + $0x31c] sm:$0xf]
      %v485 = vld [vmem:[%s345] sm:$0xf]
      %v486 = vld [vmem:[%s345 + $0x4] sm:$0xf]
      %v487 = vld [vmem:[%s345 + $0x8] sm:$0xf]
      %v488 = vld [vmem:[%s345 + $0xc] sm:$0xf]
      %v489 = vld [vmem:[%s345 + $0x10] sm:$0xf]
      %v490 = vld [vmem:[%s345 + $0x14] sm:$0xf]
      %v491 = vld [vmem:[%s345 + $0x18] sm:$0xf]
      %v492 = vld [vmem:[%s345 + $0x1c] sm:$0xf]
      %v493 = vld [vmem:[%s345 + $0x20] sm:$0xf]
      %v494 = vld [vmem:[%s345 + $0x24] sm:$0xf]
      %v495 = vld [vmem:[%s345 + $0x28] sm:$0xf]
      %v496 = vld [vmem:[%s345 + $0x2c] sm:$0xf]
      %v497 = vld [vmem:[%s345 + $0x30] sm:$0xf]
      %v498 = vld [vmem:[%s345 + $0x34] sm:$0xf]
      %v499 = vld [vmem:[%s345 + $0x38] sm:$0xf]
      %v500 = vld [vmem:[%s345 + $0x3c] sm:$0xf]
      %v501 = vld [vmem:[%s345 + $0x40] sm:$0xf]
      %v502 = vld [vmem:[%s345 + $0x44] sm:$0xf]
      %v503 = vld [vmem:[%s345 + $0x48] sm:$0xf]
      %v504 = vld [vmem:[%s345 + $0x4c] sm:$0xf]
      %v505 = vld [vmem:[%s345 + $0x50] sm:$0xf]
      %v506 = vld [vmem:[%s345 + $0x54] sm:$0xf]
      %v507 = vld [vmem:[%s345 + $0x58] sm:$0xf]
      %v508 = vld [vmem:[%s345 + $0x5c] sm:$0xf]
      %v509 = vld [vmem:[%s345 + $0x60] sm:$0xf]
      %v510 = vld [vmem:[%s345 + $0x64] sm:$0xf]
      %v511 = vld [vmem:[%s345 + $0x68] sm:$0xf]
      %v512 = vld [vmem:[%s345 + $0x6c] sm:$0xf]
      %v513 = vld [vmem:[%s345 + $0x70] sm:$0xf]
      %v514 = vld [vmem:[%s345 + $0x74] sm:$0xf]
      %v515 = vld [vmem:[%s345 + $0x78] sm:$0xf]
      %v516 = vld [vmem:[%s345 + $0x7c] sm:$0xf]
      %v517 = vld [vmem:[%s345 + $0x80] sm:$0xf]
      %v518 = vld [vmem:[%s345 + $0x84] sm:$0xf]
      %v519 = vld [vmem:[%s345 + $0x88] sm:$0xf]
      %v520 = vld [vmem:[%s345 + $0x8c] sm:$0xf]
      %v521 = vld [vmem:[%s345 + $0x90] sm:$0xf]
      %v522 = vld [vmem:[%s345 + $0x94] sm:$0xf]
      %v523 = vld [vmem:[%s345 + $0x98] sm:$0xf]
      %v524 = vld [vmem:[%s345 + $0x9c] sm:$0xf]
      %v525 = vld [vmem:[%s345 + $0xa0] sm:$0xf]
      %v526 = vld [vmem:[%s345 + $0xa4] sm:$0xf]
      %v527 = vld [vmem:[%s345 + $0xa8] sm:$0xf]
      %v528 = vld [vmem:[%s345 + $0xac] sm:$0xf]
      %v529 = vld [vmem:[%s345 + $0xb0] sm:$0xf]
      %v530 = vld [vmem:[%s345 + $0xb4] sm:$0xf]
      %v531 = vld [vmem:[%s345 + $0xb8] sm:$0xf]
      %v532 = vld [vmem:[%s345 + $0xbc] sm:$0xf]
      %v533 = vld [vmem:[%s345 + $0xc0] sm:$0xf]
      %v534 = vld [vmem:[%s345 + $0xc4] sm:$0xf]
      %v535 = vld [vmem:[%s345 + $0xc8] sm:$0xf]
      %v536 = vld [vmem:[%s345 + $0xcc] sm:$0xf]
      %v537 = vld [vmem:[%s345 + $0xd0] sm:$0xf]
      %v538 = vld [vmem:[%s345 + $0xd4] sm:$0xf]
      %v539 = vld [vmem:[%s345 + $0xd8] sm:$0xf]
      %v540 = vld [vmem:[%s345 + $0xdc] sm:$0xf]
      %v541 = vld [vmem:[%s345 + $0xe0] sm:$0xf]
      %v542 = vld [vmem:[%s345 + $0xe4] sm:$0xf]
      %v543 = vld [vmem:[%s345 + $0xe8] sm:$0xf]
      %v544 = vld [vmem:[%s345 + $0xec] sm:$0xf]
      %v545 = vld [vmem:[%s345 + $0xf0] sm:$0xf]
      %v546 = vld [vmem:[%s345 + $0xf4] sm:$0xf]
      %v547 = vld [vmem:[%s345 + $0xf8] sm:$0xf]
      %v548 = vld [vmem:[%s345 + $0xfc] sm:$0xf]
      %v549 = vld [vmem:[%s345 + $0x100] sm:$0xf]
      %v550 = vld [vmem:[%s345 + $0x104] sm:$0xf]
      %v551 = vld [vmem:[%s345 + $0x108] sm:$0xf]
      %v552 = vld [vmem:[%s345 + $0x10c] sm:$0xf]
      %v553 = vld [vmem:[%s345 + $0x110] sm:$0xf]
      %v554 = vld [vmem:[%s345 + $0x114] sm:$0xf]
      %v555 = vld [vmem:[%s345 + $0x118] sm:$0xf]
      %v556 = vld [vmem:[%s345 + $0x11c] sm:$0xf]
      %v557 = vld [vmem:[%s345 + $0x120] sm:$0xf]
      %v558 = vld [vmem:[%s345 + $0x124] sm:$0xf]
      %v559 = vld [vmem:[%s345 + $0x128] sm:$0xf]
      %v560 = vld [vmem:[%s345 + $0x12c] sm:$0xf]
      %v561 = vld [vmem:[%s345 + $0x130] sm:$0xf]
      %v562 = vld [vmem:[%s345 + $0x134] sm:$0xf]
      %v563 = vld [vmem:[%s345 + $0x138] sm:$0xf]
      %v564 = vld [vmem:[%s345 + $0x13c] sm:$0xf]
      %v565 = vld [vmem:[%s345 + $0x140] sm:$0xf]
      %v566 = vld [vmem:[%s345 + $0x144] sm:$0xf]
      %v567 = vld [vmem:[%s345 + $0x148] sm:$0xf]
      %v568 = vld [vmem:[%s345 + $0x14c] sm:$0xf]
      %v569 = vld [vmem:[%s345 + $0x150] sm:$0xf]
      %v570 = vld [vmem:[%s345 + $0x154] sm:$0xf]
      %v571 = vld [vmem:[%s345 + $0x158] sm:$0xf]
      %v572 = vld [vmem:[%s345 + $0x15c] sm:$0xf]
      %v573 = vld [vmem:[%s345 + $0x160] sm:$0xf]
      %v574 = vld [vmem:[%s345 + $0x164] sm:$0xf]
      %v575 = vld [vmem:[%s345 + $0x168] sm:$0xf]
      %v576 = vld [vmem:[%s345 + $0x16c] sm:$0xf]
      %v577 = vld [vmem:[%s345 + $0x170] sm:$0xf]
      %v578 = vld [vmem:[%s345 + $0x174] sm:$0xf]
      %v579 = vld [vmem:[%s345 + $0x178] sm:$0xf]
      %v580 = vld [vmem:[%s345 + $0x17c] sm:$0xf]
      %v581 = vld [vmem:[%s345 + $0x180] sm:$0xf]
      %v582 = vld [vmem:[%s345 + $0x184] sm:$0xf]
      %v583 = vld [vmem:[%s345 + $0x188] sm:$0xf]
      %v584 = vld [vmem:[%s345 + $0x18c] sm:$0xf]
      %v585 = vld [vmem:[%s345 + $0x190] sm:$0xf]
      %v586 = vld [vmem:[%s345 + $0x194] sm:$0xf]
      %v587 = vld [vmem:[%s345 + $0x198] sm:$0xf]
      %v588 = vld [vmem:[%s345 + $0x19c] sm:$0xf]
      %v589 = vld [vmem:[%s345 + $0x1a0] sm:$0xf]
      %v590 = vld [vmem:[%s345 + $0x1a4] sm:$0xf]
      %v591 = vld [vmem:[%s345 + $0x1a8] sm:$0xf]
      %v592 = vld [vmem:[%s345 + $0x1ac] sm:$0xf]
      %v593 = vld [vmem:[%s345 + $0x1b0] sm:$0xf]
      %v594 = vld [vmem:[%s345 + $0x1b4] sm:$0xf]
      %v595 = vld [vmem:[%s345 + $0x1b8] sm:$0xf]
      %v596 = vld [vmem:[%s345 + $0x1bc] sm:$0xf]
      %v597 = vld [vmem:[%s345 + $0x1c0] sm:$0xf]
      %v598 = vld [vmem:[%s345 + $0x1c4] sm:$0xf]
      %v599 = vld [vmem:[%s345 + $0x1c8] sm:$0xf]
      %v600 = vld [vmem:[%s345 + $0x1cc] sm:$0xf]
      %v601 = vld [vmem:[%s345 + $0x1d0] sm:$0xf]
      %v602 = vld [vmem:[%s345 + $0x1d4] sm:$0xf]
      %v603 = vld [vmem:[%s345 + $0x1d8] sm:$0xf]
      %v604 = vld [vmem:[%s345 + $0x1dc] sm:$0xf]
      %v605 = vld [vmem:[%s345 + $0x1e0] sm:$0xf]
      %v606 = vld [vmem:[%s345 + $0x1e4] sm:$0xf]
      %v607 = vld [vmem:[%s345 + $0x1e8] sm:$0xf]
      %v608 = vld [vmem:[%s345 + $0x1ec] sm:$0xf]
      %v609 = vld [vmem:[%s345 + $0x1f0] sm:$0xf]
      %v610 = vld [vmem:[%s345 + $0x1f4] sm:$0xf]
      %v611 = vld [vmem:[%s345 + $0x1f8] sm:$0xf]
      %v612 = vld [vmem:[%s345 + $0x1fc] sm:$0xf]
      %v613 = vld [vmem:[%s345 + $0x200] sm:$0xf]
      %v614 = vld [vmem:[%s345 + $0x204] sm:$0xf]
      %v615 = vld [vmem:[%s345 + $0x208] sm:$0xf]
      %v616 = vld [vmem:[%s345 + $0x20c] sm:$0xf]
      %v617 = vld [vmem:[%s345 + $0x210] sm:$0xf]
      %v618 = vld [vmem:[%s345 + $0x214] sm:$0xf]
      %v619 = vld [vmem:[%s345 + $0x218] sm:$0xf]
      %v620 = vld [vmem:[%s345 + $0x21c] sm:$0xf]
      %v621 = vld [vmem:[%s345 + $0x220] sm:$0xf]
      %v622 = vld [vmem:[%s345 + $0x224] sm:$0xf]
      %v623 = vld [vmem:[%s345 + $0x228] sm:$0xf]
      %v624 = vld [vmem:[%s345 + $0x22c] sm:$0xf]
      %v625 = vld [vmem:[%s345 + $0x230] sm:$0xf]
      %v626 = vld [vmem:[%s345 + $0x234] sm:$0xf]
      %v627 = vld [vmem:[%s345 + $0x238] sm:$0xf]
      %v628 = vld [vmem:[%s345 + $0x23c] sm:$0xf]
      %v629 = vld [vmem:[%s345 + $0x240] sm:$0xf]
      %v630 = vld [vmem:[%s345 + $0x244] sm:$0xf]
      %v631 = vld [vmem:[%s345 + $0x248] sm:$0xf]
      %v632 = vld [vmem:[%s345 + $0x24c] sm:$0xf]
      %v633 = vld [vmem:[%s345 + $0x250] sm:$0xf]
      %v634 = vld [vmem:[%s345 + $0x254] sm:$0xf]
      %v635 = vld [vmem:[%s345 + $0x258] sm:$0xf]
      %v636 = vld [vmem:[%s345 + $0x25c] sm:$0xf]
      %v637 = vld [vmem:[%s345 + $0x260] sm:$0xf]
      %v638 = vld [vmem:[%s345 + $0x264] sm:$0xf]
      %v639 = vld [vmem:[%s345 + $0x268] sm:$0xf]
      %v640 = vld [vmem:[%s345 + $0x26c] sm:$0xf]
      %v641 = vld [vmem:[%s345 + $0x270] sm:$0xf]
      %v642 = vld [vmem:[%s345 + $0x274] sm:$0xf]
      %v643 = vld [vmem:[%s345 + $0x278] sm:$0xf]
      %v644 = vld [vmem:[%s345 + $0x27c] sm:$0xf]
      %v645 = vld [vmem:[%s345 + $0x280] sm:$0xf]
      %v646 = vld [vmem:[%s345 + $0x284] sm:$0xf]
      %v647 = vld [vmem:[%s345 + $0x288] sm:$0xf]
      %v648 = vld [vmem:[%s345 + $0x28c] sm:$0xf]
      %v649 = vld [vmem:[%s345 + $0x290] sm:$0xf]
      %v650 = vld [vmem:[%s345 + $0x294] sm:$0xf]
      %v651 = vld [vmem:[%s345 + $0x298] sm:$0xf]
      %v652 = vld [vmem:[%s345 + $0x29c] sm:$0xf]
      %v653 = vld [vmem:[%s345 + $0x2a0] sm:$0xf]
      %v654 = vld [vmem:[%s345 + $0x2a4] sm:$0xf]
      %v655 = vld [vmem:[%s345 + $0x2a8] sm:$0xf]
      %v656 = vld [vmem:[%s345 + $0x2ac] sm:$0xf]
      %v657 = vld [vmem:[%s345 + $0x2b0] sm:$0xf]
      %v658 = vld [vmem:[%s345 + $0x2b4] sm:$0xf]
      %v659 = vld [vmem:[%s345 + $0x2b8] sm:$0xf]
      %v660 = vld [vmem:[%s345 + $0x2bc] sm:$0xf]
      %v661 = vld [vmem:[%s345 + $0x2c0] sm:$0xf]
      %v662 = vld [vmem:[%s345 + $0x2c4] sm:$0xf]
      %v663 = vld [vmem:[%s345 + $0x2c8] sm:$0xf]
      %v664 = vld [vmem:[%s345 + $0x2cc] sm:$0xf]
      %v665 = vld [vmem:[%s345 + $0x2d0] sm:$0xf]
      %v666 = vld [vmem:[%s345 + $0x2d4] sm:$0xf]
      %v667 = vld [vmem:[%s345 + $0x2d8] sm:$0xf]
      %v668 = vld [vmem:[%s345 + $0x2dc] sm:$0xf]
      %v669 = vld [vmem:[%s345 + $0x2e0] sm:$0xf]
      %v670 = vld [vmem:[%s345 + $0x2e4] sm:$0xf]
      %v671 = vld [vmem:[%s345 + $0x2e8] sm:$0xf]
      %v672 = vld [vmem:[%s345 + $0x2ec] sm:$0xf]
      %v673 = vld [vmem:[%s345 + $0x2f0] sm:$0xf]
      %v674 = vld [vmem:[%s345 + $0x2f4] sm:$0xf]
      %v675 = vld [vmem:[%s345 + $0x2f8] sm:$0xf]
      %v676 = vld [vmem:[%s345 + $0x2fc] sm:$0xf]
      %v677 = vld [vmem:[%s345 + $0x300] sm:$0xf]
      %v678 = vld [vmem:[%s345 + $0x304] sm:$0xf]
      %v679 = vld [vmem:[%s345 + $0x308] sm:$0xf]
      %v680 = vld [vmem:[%s345 + $0x30c] sm:$0xf]
      %v681 = vld [vmem:[%s345 + $0x310] sm:$0xf]
      %v682 = vld [vmem:[%s345 + $0x314] sm:$0xf]
      %v683 = vld [vmem:[%s345 + $0x318] sm:$0xf]
      %v684 = vld [vmem:[%s345 + $0x31c] sm:$0xf]
      %v685 = vld [vmem:[%s345 + $0x320] sm:$0xf]
      %v686 = vld [vmem:[%s345 + $0x324] sm:$0xf]
      %v687 = vld [vmem:[%s345 + $0x328] sm:$0xf]
      %v688 = vld [vmem:[%s345 + $0x32c] sm:$0xf]
      %v689 = vld [vmem:[%s345 + $0x330] sm:$0xf]
      %v690 = vld [vmem:[%s345 + $0x334] sm:$0xf]
      %v691 = vld [vmem:[%s345 + $0x338] sm:$0xf]
      %v692 = vld [vmem:[%s345 + $0x33c] sm:$0xf]
      %v693 = vld [vmem:[%s345 + $0x340] sm:$0xf]
      %v694 = vld [vmem:[%s345 + $0x344] sm:$0xf]
      %v695 = vld [vmem:[%s345 + $0x348] sm:$0xf]
      %v696 = vld [vmem:[%s345 + $0x34c] sm:$0xf]
      %v697 = vld [vmem:[%s345 + $0x350] sm:$0xf]
      %v698 = vld [vmem:[%s345 + $0x354] sm:$0xf]
      %v699 = vld [vmem:[%s345 + $0x358] sm:$0xf]
      %v700 = vld [vmem:[%s345 + $0x35c] sm:$0xf]
      %v701 = vld [vmem:[%s345 + $0x360] sm:$0xf]
      %v702 = vld [vmem:[%s345 + $0x364] sm:$0xf]
      %v703 = vld [vmem:[%s345 + $0x368] sm:$0xf]
      %v704 = vld [vmem:[%s345 + $0x36c] sm:$0xf]
      %v705 = vld [vmem:[%s345 + $0x370] sm:$0xf]
      %v706 = vld [vmem:[%s345 + $0x374] sm:$0xf]
      %v707 = vld [vmem:[%s345 + $0x378] sm:$0xf]
      %v708 = vld [vmem:[%s345 + $0x37c] sm:$0xf]
      %v709 = vld [vmem:[%s345 + $0x380] sm:$0xf]
      %v710 = vld [vmem:[%s345 + $0x384] sm:$0xf]
      %v711 = vld [vmem:[%s345 + $0x388] sm:$0xf]
      %v712 = vld [vmem:[%s345 + $0x38c] sm:$0xf]
      %v713 = vld [vmem:[%s345 + $0x390] sm:$0xf]
      %v714 = vld [vmem:[%s345 + $0x394] sm:$0xf]
      %v715 = vld [vmem:[%s345 + $0x398] sm:$0xf]
      %v716 = vld [vmem:[%s345 + $0x39c] sm:$0xf]
      %v717 = vld [vmem:[%s345 + $0x3a0] sm:$0xf]
      %v718 = vld [vmem:[%s345 + $0x3a4] sm:$0xf]
      %v719 = vld [vmem:[%s345 + $0x3a8] sm:$0xf]
      %v720 = vld [vmem:[%s345 + $0x3ac] sm:$0xf]
      %v721 = vld [vmem:[%s345 + $0x3b0] sm:$0xf]
      %v722 = vld [vmem:[%s345 + $0x3b4] sm:$0xf]
      %v723 = vld [vmem:[%s345 + $0x3b8] sm:$0xf]
      %v724 = vld [vmem:[%s345 + $0x3bc] sm:$0xf]
      %v725 = vld [vmem:[%s345 + $0x3c0] sm:$0xf]
      %v726 = vld [vmem:[%s345 + $0x3c4] sm:$0xf]
      %v727 = vld [vmem:[%s345 + $0x3c8] sm:$0xf]
      %v728 = vld [vmem:[%s345 + $0x3cc] sm:$0xf]
      %v729 = vld [vmem:[%s345 + $0x3d0] sm:$0xf]
      %v730 = vld [vmem:[%s345 + $0x3d4] sm:$0xf]
      %v731 = vld [vmem:[%s345 + $0x3d8] sm:$0xf]
      %v732 = vld [vmem:[%s345 + $0x3dc] sm:$0xf]
      %v733 = vld [vmem:[%s345 + $0x3e0] sm:$0xf]
      %v734 = vld [vmem:[%s345 + $0x3e4] sm:$0xf]
      %v735 = vld [vmem:[%s345 + $0x3e8] sm:$0xf]
      %v736 = vld [vmem:[%s345 + $0x3ec] sm:$0xf]
      %v737 = vld [vmem:[%s345 + $0x3f0] sm:$0xf]
      %v738 = vld [vmem:[%s345 + $0x3f4] sm:$0xf]
      %v739 = vld [vmem:[%s345 + $0x3f8] sm:$0xf]
      %v740 = vld [vmem:[%s345 + $0x3fc] sm:$0xf]
      %v741 = vld [vmem:[%s345 + $0x400] sm:$0xf]
      %v742 = vld [vmem:[%s345 + $0x404] sm:$0xf]
      %v743 = vld [vmem:[%s345 + $0x408] sm:$0xf]
      %v744 = vld [vmem:[%s345 + $0x40c] sm:$0xf]
      %v745 = vld [vmem:[%s345 + $0x410] sm:$0xf]
      %v746 = vld [vmem:[%s345 + $0x414] sm:$0xf]
      %v747 = vld [vmem:[%s345 + $0x418] sm:$0xf]
      %v748 = vld [vmem:[%s345 + $0x41c] sm:$0xf]
      %v749 = vld [vmem:[%s345 + $0x420] sm:$0xf]
      %v750 = vld [vmem:[%s345 + $0x424] sm:$0xf]
      %v751 = vld [vmem:[%s345 + $0x428] sm:$0xf]
      %v752 = vld [vmem:[%s345 + $0x42c] sm:$0xf]
      %v753 = vld [vmem:[%s345 + $0x430] sm:$0xf]
      %v754 = vld [vmem:[%s345 + $0x434] sm:$0xf]
      %v755 = vld [vmem:[%s345 + $0x438] sm:$0xf]
      %v756 = vld [vmem:[%s345 + $0x43c] sm:$0xf]
      %v757 = vld [vmem:[%s345 + $0x440] sm:$0xf]
      %v758 = vld [vmem:[%s345 + $0x444] sm:$0xf]
      %v759 = vld [vmem:[%s345 + $0x448] sm:$0xf]
      %v760 = vld [vmem:[%s345 + $0x44c] sm:$0xf]
      %v761 = vld [vmem:[%s345 + $0x450] sm:$0xf]
      %v762 = vld [vmem:[%s345 + $0x454] sm:$0xf]
      %v763 = vld [vmem:[%s345 + $0x458] sm:$0xf]
      %v764 = vld [vmem:[%s345 + $0x45c] sm:$0xf]
      %v765 = vld [vmem:[%s345 + $0x460] sm:$0xf]
      %v766 = vld [vmem:[%s345 + $0x464] sm:$0xf]
      %v767 = vld [vmem:[%s345 + $0x468] sm:$0xf]
      %v768 = vld [vmem:[%s345 + $0x46c] sm:$0xf]
      %v769 = vld [vmem:[%s345 + $0x470] sm:$0xf]
      %v770 = vld [vmem:[%s345 + $0x474] sm:$0xf]
      %v771 = vld [vmem:[%s345 + $0x478] sm:$0xf]
      %v772 = vld [vmem:[%s345 + $0x47c] sm:$0xf]
      %v773 = vld [vmem:[%s345 + $0x480] sm:$0xf]
      %v774 = vld [vmem:[%s345 + $0x484] sm:$0xf]
      %v775 = vld [vmem:[%s345 + $0x488] sm:$0xf]
      %v776 = vld [vmem:[%s345 + $0x48c] sm:$0xf]
      %v777 = vld [vmem:[%s345 + $0x490] sm:$0xf]
      %v778 = vld [vmem:[%s345 + $0x494] sm:$0xf]
      %v779 = vld [vmem:[%s345 + $0x498] sm:$0xf]
      %v780 = vld [vmem:[%s345 + $0x49c] sm:$0xf]
      %v781 = vld [vmem:[%s345 + $0x4a0] sm:$0xf]
      %v782 = vld [vmem:[%s345 + $0x4a4] sm:$0xf]
      %v783 = vld [vmem:[%s345 + $0x4a8] sm:$0xf]
      %v784 = vld [vmem:[%s345 + $0x4ac] sm:$0xf]
      %v785 = vld [vmem:[%s345 + $0x4b0] sm:$0xf]
      %v786 = vld [vmem:[%s345 + $0x4b4] sm:$0xf]
      %v787 = vld [vmem:[%s345 + $0x4b8] sm:$0xf]
      %v788 = vld [vmem:[%s345 + $0x4bc] sm:$0xf]
      %v789 = vld [vmem:[%s345 + $0x4c0] sm:$0xf]
      %v790 = vld [vmem:[%s345 + $0x4c4] sm:$0xf]
      %v791 = vld [vmem:[%s345 + $0x4c8] sm:$0xf]
      %v792 = vld [vmem:[%s345 + $0x4cc] sm:$0xf]
      %v793 = vld [vmem:[%s345 + $0x4d0] sm:$0xf]
      %v794 = vld [vmem:[%s345 + $0x4d4] sm:$0xf]
      %v795 = vld [vmem:[%s345 + $0x4d8] sm:$0xf]
      %v796 = vld [vmem:[%s345 + $0x4dc] sm:$0xf]
      %v797 = vld [vmem:[%s345 + $0x4e0] sm:$0xf]
      %v798 = vld [vmem:[%s345 + $0x4e4] sm:$0xf]
      %v799 = vld [vmem:[%s345 + $0x4e8] sm:$0xf]
      %v800 = vld [vmem:[%s345 + $0x4ec] sm:$0xf]
      %v801 = vld [vmem:[%s345 + $0x4f0] sm:$0xf]
      %v802 = vld [vmem:[%s345 + $0x4f4] sm:$0xf]
      %v803 = vld [vmem:[%s345 + $0x4f8] sm:$0xf]
      %v804 = vld [vmem:[%s345 + $0x4fc] sm:$0xf]
      %v805 = vld [vmem:[%s345 + $0x500] sm:$0xf]
      %v806 = vld [vmem:[%s345 + $0x504] sm:$0xf]
      %v807 = vld [vmem:[%s345 + $0x508] sm:$0xf]
      %v808 = vld [vmem:[%s345 + $0x50c] sm:$0xf]
      %v809 = vld [vmem:[%s345 + $0x510] sm:$0xf]
      %v810 = vld [vmem:[%s345 + $0x514] sm:$0xf]
      %v811 = vld [vmem:[%s345 + $0x518] sm:$0xf]
      %v812 = vld [vmem:[%s345 + $0x51c] sm:$0xf]
      %v813 = vld [vmem:[%s345 + $0x520] sm:$0xf]
      %v814 = vld [vmem:[%s345 + $0x524] sm:$0xf]
      %v815 = vld [vmem:[%s345 + $0x528] sm:$0xf]
      %v816 = vld [vmem:[%s345 + $0x52c] sm:$0xf]
      %v817 = vld [vmem:[%s345 + $0x530] sm:$0xf]
      %v818 = vld [vmem:[%s345 + $0x534] sm:$0xf]
      %v819 = vld [vmem:[%s345 + $0x538] sm:$0xf]
      %v820 = vld [vmem:[%s345 + $0x53c] sm:$0xf]
      %v821 = vld [vmem:[%s345 + $0x540] sm:$0xf]
      %v822 = vld [vmem:[%s345 + $0x544] sm:$0xf]
      %v823 = vld [vmem:[%s345 + $0x548] sm:$0xf]
      %v824 = vld [vmem:[%s345 + $0x54c] sm:$0xf]
      %v825 = vld [vmem:[%s345 + $0x550] sm:$0xf]
      %v826 = vld [vmem:[%s345 + $0x554] sm:$0xf]
      %v827 = vld [vmem:[%s345 + $0x558] sm:$0xf]
      %v828 = vld [vmem:[%s345 + $0x55c] sm:$0xf]
      %v829 = vld [vmem:[%s345 + $0x560] sm:$0xf]
      %v830 = vld [vmem:[%s345 + $0x564] sm:$0xf]
      %v831 = vld [vmem:[%s345 + $0x568] sm:$0xf]
      %v832 = vld [vmem:[%s345 + $0x56c] sm:$0xf]
      %v833 = vld [vmem:[%s345 + $0x570] sm:$0xf]
      %v834 = vld [vmem:[%s345 + $0x574] sm:$0xf]
      %v835 = vld [vmem:[%s345 + $0x578] sm:$0xf]
      %v836 = vld [vmem:[%s345 + $0x57c] sm:$0xf]
      %v837 = vld [vmem:[%s345 + $0x580] sm:$0xf]
      %v838 = vld [vmem:[%s345 + $0x584] sm:$0xf]
      %v839 = vld [vmem:[%s345 + $0x588] sm:$0xf]
      %v840 = vld [vmem:[%s345 + $0x58c] sm:$0xf]
      %v841 = vld [vmem:[%s345 + $0x590] sm:$0xf]
      %v842 = vld [vmem:[%s345 + $0x594] sm:$0xf]
      %v843 = vld [vmem:[%s345 + $0x598] sm:$0xf]
      %v844 = vld [vmem:[%s345 + $0x59c] sm:$0xf]
      %v845 = vld [vmem:[%s345 + $0x5a0] sm:$0xf]
      %v846 = vld [vmem:[%s345 + $0x5a4] sm:$0xf]
      %v847 = vld [vmem:[%s345 + $0x5a8] sm:$0xf]
      %v848 = vld [vmem:[%s345 + $0x5ac] sm:$0xf]
      %v849 = vld [vmem:[%s345 + $0x5b0] sm:$0xf]
      %v850 = vld [vmem:[%s345 + $0x5b4] sm:$0xf]
      %v851 = vld [vmem:[%s345 + $0x5b8] sm:$0xf]
      %v852 = vld [vmem:[%s345 + $0x5bc] sm:$0xf]
      %v853 = vld [vmem:[%s345 + $0x5c0] sm:$0xf]
      %v854 = vld [vmem:[%s345 + $0x5c4] sm:$0xf]
      %v855 = vld [vmem:[%s345 + $0x5c8] sm:$0xf]
      %v856 = vld [vmem:[%s345 + $0x5cc] sm:$0xf]
      %v857 = vld [vmem:[%s345 + $0x5d0] sm:$0xf]
      %v858 = vld [vmem:[%s345 + $0x5d4] sm:$0xf]
      %v859 = vld [vmem:[%s345 + $0x5d8] sm:$0xf]
      %v860 = vld [vmem:[%s345 + $0x5dc] sm:$0xf]
      %v861 = vld [vmem:[%s345 + $0x5e0] sm:$0xf]
      %v862 = vld [vmem:[%s345 + $0x5e4] sm:$0xf]
      %v863 = vld [vmem:[%s345 + $0x5e8] sm:$0xf]
      %v864 = vld [vmem:[%s345 + $0x5ec] sm:$0xf]
      %v865 = vld [vmem:[%s345 + $0x5f0] sm:$0xf]
      %v866 = vld [vmem:[%s345 + $0x5f4] sm:$0xf]
      %v867 = vld [vmem:[%s345 + $0x5f8] sm:$0xf]
      %v868 = vld [vmem:[%s345 + $0x5fc] sm:$0xf]
      %v869 = vld [vmem:[%s345 + $0x600] sm:$0xf]
      %v870 = vld [vmem:[%s345 + $0x604] sm:$0xf]
      %v871 = vld [vmem:[%s345 + $0x608] sm:$0xf]
      %v872 = vld [vmem:[%s345 + $0x60c] sm:$0xf]
      %v873 = vld [vmem:[%s345 + $0x610] sm:$0xf]
      %v874 = vld [vmem:[%s345 + $0x614] sm:$0xf]
      %v875 = vld [vmem:[%s345 + $0x618] sm:$0xf]
      %v876 = vld [vmem:[%s345 + $0x61c] sm:$0xf]
      %v877 = vld [vmem:[%s345 + $0x620] sm:$0xf]
      %v878 = vld [vmem:[%s345 + $0x624] sm:$0xf]
      %v879 = vld [vmem:[%s345 + $0x628] sm:$0xf]
      %v880 = vld [vmem:[%s345 + $0x62c] sm:$0xf]
      %v881 = vld [vmem:[%s345 + $0x630] sm:$0xf]
      %v882 = vld [vmem:[%s345 + $0x634] sm:$0xf]
      %v883 = vld [vmem:[%s345 + $0x638] sm:$0xf]
      %v884 = vld [vmem:[%s345 + $0x63c] sm:$0xf]
      %v989 = vunpack.c.l.b16 %v381
      %v990 = vunpack.c.h.b16 %v381
      %v991 = vunpack.c.l.b16 %v382
      %v992 = vunpack.c.h.b16 %v382
      %v993 = vunpack.c.l.b16 %v383
      %v994 = vunpack.c.h.b16 %v383
      %v995 = vunpack.c.l.b16 %v384
      %v996 = vunpack.c.h.b16 %v384
      %v997 = vunpack.c.l.b16 %v385
      %v998 = vunpack.c.h.b16 %v385
      %v999 = vunpack.c.l.b16 %v386
      %v1000 = vunpack.c.h.b16 %v386
      %v1001 = vunpack.c.l.b16 %v387
      %v1002 = vunpack.c.h.b16 %v387
      %v1003 = vunpack.c.l.b16 %v388
      %v1004 = vunpack.c.h.b16 %v388
      %v1005 = vunpack.c.l.b16 %v389
      %v1006 = vunpack.c.h.b16 %v389
      %v1007 = vunpack.c.l.b16 %v390
      %v1008 = vunpack.c.h.b16 %v390
      %v1009 = vunpack.c.l.b16 %v391
      %v1010 = vunpack.c.h.b16 %v391
      %v1011 = vunpack.c.l.b16 %v392
      %v1012 = vunpack.c.h.b16 %v392
      %v1013 = vunpack.c.l.b16 %v393
      %v1014 = vunpack.c.l.b16 %v394
      %v1015 = vunpack.c.h.b16 %v394
      %v1016 = vunpack.c.l.b16 %v395
      %v1017 = vunpack.c.h.b16 %v395
      %v1018 = vunpack.c.l.b16 %v396
      %v1019 = vunpack.c.h.b16 %v396
      %v1020 = vunpack.c.l.b16 %v397
      %v1021 = vunpack.c.h.b16 %v397
      %v1022 = vunpack.c.l.b16 %v398
      %v1023 = vunpack.c.h.b16 %v398
      %v1024 = vunpack.c.l.b16 %v399
      %v1025 = vunpack.c.h.b16 %v399
      %v1026 = vunpack.c.l.b16 %v400
      %v1027 = vunpack.c.h.b16 %v400
      %v1028 = vunpack.c.l.b16 %v401
      %v1029 = vunpack.c.h.b16 %v401
      %v1030 = vunpack.c.l.b16 %v402
      %v1031 = vunpack.c.h.b16 %v402
      %v1032 = vunpack.c.l.b16 %v403
      %v1033 = vunpack.c.h.b16 %v403
      %v1034 = vunpack.c.l.b16 %v404
      %v1035 = vunpack.c.h.b16 %v404
      %v1036 = vunpack.c.l.b16 %v405
      %v1037 = vunpack.c.h.b16 %v405
      %v1038 = vunpack.c.l.b16 %v406
      %v1039 = vunpack.c.l.b16 %v407
      %v1040 = vunpack.c.h.b16 %v407
      %v1041 = vunpack.c.l.b16 %v408
      %v1042 = vunpack.c.h.b16 %v408
      %v1043 = vunpack.c.l.b16 %v409
      %v1044 = vunpack.c.h.b16 %v409
      %v1045 = vunpack.c.l.b16 %v410
      %v1046 = vunpack.c.h.b16 %v410
      %v1047 = vunpack.c.l.b16 %v411
      %v1048 = vunpack.c.h.b16 %v411
      %v1049 = vunpack.c.l.b16 %v412
      %v1050 = vunpack.c.h.b16 %v412
      %v1051 = vunpack.c.l.b16 %v413
      %v1052 = vunpack.c.h.b16 %v413
      %v1053 = vunpack.c.l.b16 %v414
      %v1054 = vunpack.c.h.b16 %v414
      %v1055 = vunpack.c.l.b16 %v415
      %v1056 = vunpack.c.h.b16 %v415
      %v1057 = vunpack.c.l.b16 %v416
      %v1058 = vunpack.c.h.b16 %v416
      %v1059 = vunpack.c.l.b16 %v417
      %v1060 = vunpack.c.h.b16 %v417
      %v1061 = vunpack.c.l.b16 %v418
      %v1062 = vunpack.c.h.b16 %v418
      %v1063 = vunpack.c.l.b16 %v419
      %v1064 = vunpack.c.l.b16 %v420
      %v1065 = vunpack.c.h.b16 %v420
      %v1066 = vunpack.c.l.b16 %v421
      %v1067 = vunpack.c.h.b16 %v421
      %v1068 = vunpack.c.l.b16 %v422
      %v1069 = vunpack.c.h.b16 %v422
      %v1070 = vunpack.c.l.b16 %v423
      %v1071 = vunpack.c.h.b16 %v423
      %v1072 = vunpack.c.l.b16 %v424
      %v1073 = vunpack.c.h.b16 %v424
      %v1074 = vunpack.c.l.b16 %v425
      %v1075 = vunpack.c.h.b16 %v425
      %v1076 = vunpack.c.l.b16 %v426
      %v1077 = vunpack.c.h.b16 %v426
      %v1078 = vunpack.c.l.b16 %v427
      %v1079 = vunpack.c.h.b16 %v427
      %v1080 = vunpack.c.l.b16 %v428
      %v1081 = vunpack.c.h.b16 %v428
      %v1082 = vunpack.c.l.b16 %v429
      %v1083 = vunpack.c.h.b16 %v429
      %v1084 = vunpack.c.l.b16 %v430
      %v1085 = vunpack.c.h.b16 %v430
      %v1086 = vunpack.c.l.b16 %v431
      %v1087 = vunpack.c.h.b16 %v431
      %v1088 = vunpack.c.l.b16 %v432
      %v1089 = vunpack.c.l.b16 %v433
      %v1090 = vunpack.c.h.b16 %v433
      %v1091 = vunpack.c.l.b16 %v434
      %v1092 = vunpack.c.h.b16 %v434
      %v1093 = vunpack.c.l.b16 %v435
      %v1094 = vunpack.c.h.b16 %v435
      %v1095 = vunpack.c.l.b16 %v436
      %v1096 = vunpack.c.h.b16 %v436
      %v1097 = vunpack.c.l.b16 %v437
      %v1098 = vunpack.c.h.b16 %v437
      %v1099 = vunpack.c.l.b16 %v438
      %v1100 = vunpack.c.h.b16 %v438
      %v1101 = vunpack.c.l.b16 %v439
      %v1102 = vunpack.c.h.b16 %v439
      %v1103 = vunpack.c.l.b16 %v440
      %v1104 = vunpack.c.h.b16 %v440
      %v1105 = vunpack.c.l.b16 %v441
      %v1106 = vunpack.c.h.b16 %v441
      %v1107 = vunpack.c.l.b16 %v442
      %v1108 = vunpack.c.h.b16 %v442
      %v1109 = vunpack.c.l.b16 %v443
      %v1110 = vunpack.c.h.b16 %v443
      %v1111 = vunpack.c.l.b16 %v444
      %v1112 = vunpack.c.h.b16 %v444
      %v1113 = vunpack.c.l.b16 %v445
      %v1114 = vunpack.c.l.b16 %v446
      %v1115 = vunpack.c.h.b16 %v446
      %v1116 = vunpack.c.l.b16 %v447
      %v1117 = vunpack.c.h.b16 %v447
      %v1118 = vunpack.c.l.b16 %v448
      %v1119 = vunpack.c.h.b16 %v448
      %v1120 = vunpack.c.l.b16 %v449
      %v1121 = vunpack.c.h.b16 %v449
      %v1122 = vunpack.c.l.b16 %v450
      %v1123 = vunpack.c.h.b16 %v450
      %v1124 = vunpack.c.l.b16 %v451
      %v1125 = vunpack.c.h.b16 %v451
      %v1126 = vunpack.c.l.b16 %v452
      %v1127 = vunpack.c.h.b16 %v452
      %v1128 = vunpack.c.l.b16 %v453
      %v1129 = vunpack.c.h.b16 %v453
      %v1130 = vunpack.c.l.b16 %v454
      %v1131 = vunpack.c.h.b16 %v454
      %v1132 = vunpack.c.l.b16 %v455
      %v1133 = vunpack.c.h.b16 %v455
      %v1134 = vunpack.c.l.b16 %v456
      %v1135 = vunpack.c.h.b16 %v456
      %v1136 = vunpack.c.l.b16 %v457
      %v1137 = vunpack.c.h.b16 %v457
      %v1138 = vunpack.c.l.b16 %v458
      %v1139 = vunpack.c.l.b16 %v459
      %v1140 = vunpack.c.h.b16 %v459
      %v1141 = vunpack.c.l.b16 %v460
      %v1142 = vunpack.c.h.b16 %v460
      %v1143 = vunpack.c.l.b16 %v461
      %v1144 = vunpack.c.h.b16 %v461
      %v1145 = vunpack.c.l.b16 %v462
      %v1146 = vunpack.c.h.b16 %v462
      %v1147 = vunpack.c.l.b16 %v463
      %v1148 = vunpack.c.h.b16 %v463
      %v1149 = vunpack.c.l.b16 %v464
      %v1150 = vunpack.c.h.b16 %v464
      %v1151 = vunpack.c.l.b16 %v465
      %v1152 = vunpack.c.h.b16 %v465
      %v1153 = vunpack.c.l.b16 %v466
      %v1154 = vunpack.c.h.b16 %v466
      %v1155 = vunpack.c.l.b16 %v467
      %v1156 = vunpack.c.h.b16 %v467
      %v1157 = vunpack.c.l.b16 %v468
      %v1158 = vunpack.c.h.b16 %v468
      %v1159 = vunpack.c.l.b16 %v469
      %v1160 = vunpack.c.h.b16 %v469
      %v1161 = vunpack.c.l.b16 %v470
      %v1162 = vunpack.c.h.b16 %v470
      %v1163 = vunpack.c.l.b16 %v471
      %v1164 = vunpack.c.l.b16 %v472
      %v1165 = vunpack.c.h.b16 %v472
      %v1166 = vunpack.c.l.b16 %v473
      %v1167 = vunpack.c.h.b16 %v473
      %v1168 = vunpack.c.l.b16 %v474
      %v1169 = vunpack.c.h.b16 %v474
      %v1170 = vunpack.c.l.b16 %v475
      %v1171 = vunpack.c.h.b16 %v475
      %v1172 = vunpack.c.l.b16 %v476
      %v1173 = vunpack.c.h.b16 %v476
      %v1174 = vunpack.c.l.b16 %v477
      %v1175 = vunpack.c.h.b16 %v477
      %v1176 = vunpack.c.l.b16 %v478
      %v1177 = vunpack.c.h.b16 %v478
      %v1178 = vunpack.c.l.b16 %v479
      %v1179 = vunpack.c.h.b16 %v479
      %v1180 = vunpack.c.l.b16 %v480
      %v1181 = vunpack.c.h.b16 %v480
      %v1182 = vunpack.c.l.b16 %v481
      %v1183 = vunpack.c.h.b16 %v481
      %v1184 = vunpack.c.l.b16 %v482
      %v1185 = vunpack.c.h.b16 %v482
      %v1186 = vunpack.c.l.b16 %v483
      %v1187 = vunpack.c.h.b16 %v483
      %v1188 = vunpack.c.l.b16 %v484
      %v1189 = vpack.c.b16 %v1014, %v989
      %v1190 = vpack.c.b16 %v1015, %v990
      %v1191 = vpack.c.b16 %v1016, %v991
      %v1192 = vpack.c.b16 %v1017, %v992
      %v1193 = vpack.c.b16 %v1018, %v993
      %v1194 = vpack.c.b16 %v1019, %v994
      %v1195 = vpack.c.b16 %v1020, %v995
      %v1196 = vpack.c.b16 %v1021, %v996
      %v1197 = vpack.c.b16 %v1022, %v997
      %v1198 = vpack.c.b16 %v1023, %v998
      %v1199 = vpack.c.b16 %v1024, %v999
      %v1200 = vpack.c.b16 %v1025, %v1000
      %v1201 = vpack.c.b16 %v1026, %v1001
      %v1202 = vpack.c.b16 %v1027, %v1002
      %v1203 = vpack.c.b16 %v1028, %v1003
      %v1204 = vpack.c.b16 %v1029, %v1004
      %v1205 = vpack.c.b16 %v1030, %v1005
      %v1206 = vpack.c.b16 %v1031, %v1006
      %v1207 = vpack.c.b16 %v1032, %v1007
      %v1208 = vpack.c.b16 %v1033, %v1008
      %v1209 = vpack.c.b16 %v1034, %v1009
      %v1210 = vpack.c.b16 %v1035, %v1010
      %v1211 = vpack.c.b16 %v1036, %v1011
      %v1212 = vpack.c.b16 %v1037, %v1012
      %v1213 = vpack.c.b16 %v1038, %v1013
      %v1214 = vpack.c.b16 %v1064, %v1039
      %v1215 = vpack.c.b16 %v1065, %v1040
      %v1216 = vpack.c.b16 %v1066, %v1041
      %v1217 = vpack.c.b16 %v1067, %v1042
      %v1218 = vpack.c.b16 %v1068, %v1043
      %v1219 = vpack.c.b16 %v1069, %v1044
      %v1220 = vpack.c.b16 %v1070, %v1045
      %v1221 = vpack.c.b16 %v1071, %v1046
      %v1222 = vpack.c.b16 %v1072, %v1047
      %v1223 = vpack.c.b16 %v1073, %v1048
      %v1224 = vpack.c.b16 %v1074, %v1049
      %v1225 = vpack.c.b16 %v1075, %v1050
      %v1226 = vpack.c.b16 %v1076, %v1051
      %v1227 = vpack.c.b16 %v1077, %v1052
      %v1228 = vpack.c.b16 %v1078, %v1053
      %v1229 = vpack.c.b16 %v1079, %v1054
      %v1230 = vpack.c.b16 %v1080, %v1055
      %v1231 = vpack.c.b16 %v1081, %v1056
      %v1232 = vpack.c.b16 %v1082, %v1057
      %v1233 = vpack.c.b16 %v1083, %v1058
      %v1234 = vpack.c.b16 %v1084, %v1059
      %v1235 = vpack.c.b16 %v1085, %v1060
      %v1236 = vpack.c.b16 %v1086, %v1061
      %v1237 = vpack.c.b16 %v1087, %v1062
      %v1238 = vpack.c.b16 %v1088, %v1063
      %v1239 = vpack.c.b16 %v1114, %v1089
      %v1240 = vpack.c.b16 %v1115, %v1090
      %v1241 = vpack.c.b16 %v1116, %v1091
      %v1242 = vpack.c.b16 %v1117, %v1092
      %v1243 = vpack.c.b16 %v1118, %v1093
      %v1244 = vpack.c.b16 %v1119, %v1094
      %v1245 = vpack.c.b16 %v1120, %v1095
      %v1246 = vpack.c.b16 %v1121, %v1096
      %v1247 = vpack.c.b16 %v1122, %v1097
      %v1248 = vpack.c.b16 %v1123, %v1098
      %v1249 = vpack.c.b16 %v1124, %v1099
      %v1250 = vpack.c.b16 %v1125, %v1100
      %v1251 = vpack.c.b16 %v1126, %v1101
      %v1252 = vpack.c.b16 %v1127, %v1102
      %v1253 = vpack.c.b16 %v1128, %v1103
      %v1254 = vpack.c.b16 %v1129, %v1104
      %v1255 = vpack.c.b16 %v1130, %v1105
      %v1256 = vpack.c.b16 %v1131, %v1106
      %v1257 = vpack.c.b16 %v1132, %v1107
      %v1258 = vpack.c.b16 %v1133, %v1108
      %v1259 = vpack.c.b16 %v1134, %v1109
      %v1260 = vpack.c.b16 %v1135, %v1110
      %v1261 = vpack.c.b16 %v1136, %v1111
      %v1262 = vpack.c.b16 %v1137, %v1112
      %v1263 = vpack.c.b16 %v1138, %v1113
      %v1264 = vpack.c.b16 %v1164, %v1139
      %v1265 = vpack.c.b16 %v1165, %v1140
      %v1266 = vpack.c.b16 %v1166, %v1141
      %v1267 = vpack.c.b16 %v1167, %v1142
      %v1268 = vpack.c.b16 %v1168, %v1143
      %v1269 = vpack.c.b16 %v1169, %v1144
      %v1270 = vpack.c.b16 %v1170, %v1145
      %v1271 = vpack.c.b16 %v1171, %v1146
      %v1272 = vpack.c.b16 %v1172, %v1147
      %v1273 = vpack.c.b16 %v1173, %v1148
      %v1274 = vpack.c.b16 %v1174, %v1149
      %v1275 = vpack.c.b16 %v1175, %v1150
      %v1276 = vpack.c.b16 %v1176, %v1151
      %v1277 = vpack.c.b16 %v1177, %v1152
      %v1278 = vpack.c.b16 %v1178, %v1153
      %v1279 = vpack.c.b16 %v1179, %v1154
      %v1280 = vpack.c.b16 %v1180, %v1155
      %v1281 = vpack.c.b16 %v1181, %v1156
      %v1282 = vpack.c.b16 %v1182, %v1157
      %v1283 = vpack.c.b16 %v1183, %v1158
      %v1284 = vpack.c.b16 %v1184, %v1159
      %v1285 = vpack.c.b16 %v1185, %v1160
      %v1286 = vpack.c.b16 %v1186, %v1161
      %v1287 = vpack.c.b16 %v1187, %v1162
      %v1288 = vpack.c.b16 %v1188, %v1163
      %v1789 = vunpack.c.l.b16 %v485
      %v1790 = vunpack.c.l.b16 %v486
      %v1791 = vunpack.c.l.b16 %v487
      %v1792 = vunpack.c.l.b16 %v488
      %v1793 = vunpack.c.l.b16 %v489
      %v1794 = vunpack.c.l.b16 %v490
      %v1795 = vunpack.c.l.b16 %v491
      %v1796 = vunpack.c.l.b16 %v492
      %v1797 = vunpack.c.l.b16 %v493
      %v1798 = vunpack.c.l.b16 %v494
      %v1799 = vunpack.c.l.b16 %v495
      %v1800 = vunpack.c.l.b16 %v496
      %v1801 = vunpack.c.l.b16 %v497
      %v1802 = vunpack.c.l.b16 %v498
      %v1803 = vunpack.c.l.b16 %v499
      %v1804 = vunpack.c.l.b16 %v500
      %v1805 = vunpack.c.l.b16 %v501
      %v1806 = vunpack.c.l.b16 %v502
      %v1807 = vunpack.c.l.b16 %v503
      %v1808 = vunpack.c.l.b16 %v504
      %v1809 = vunpack.c.l.b16 %v505
      %v1810 = vunpack.c.l.b16 %v506
      %v1811 = vunpack.c.l.b16 %v507
      %v1812 = vunpack.c.l.b16 %v508
      %v1813 = vunpack.c.l.b16 %v509
      %v1814 = vunpack.c.l.b16 %v510
      %v1815 = vunpack.c.l.b16 %v511
      %v1816 = vunpack.c.l.b16 %v512
      %v1817 = vunpack.c.l.b16 %v513
      %v1818 = vunpack.c.l.b16 %v514
      %v1819 = vunpack.c.l.b16 %v515
      %v1820 = vunpack.c.l.b16 %v516
      %v1821 = vunpack.c.l.b16 %v517
      %v1822 = vunpack.c.l.b16 %v518
      %v1823 = vunpack.c.l.b16 %v519
      %v1824 = vunpack.c.l.b16 %v520
      %v1825 = vunpack.c.l.b16 %v521
      %v1826 = vunpack.c.l.b16 %v522
      %v1827 = vunpack.c.l.b16 %v523
      %v1828 = vunpack.c.l.b16 %v524
      %v1829 = vunpack.c.l.b16 %v525
      %v1830 = vunpack.c.l.b16 %v526
      %v1831 = vunpack.c.l.b16 %v527
      %v1832 = vunpack.c.l.b16 %v528
      %v1833 = vunpack.c.l.b16 %v529
      %v1834 = vunpack.c.l.b16 %v530
      %v1835 = vunpack.c.l.b16 %v531
      %v1836 = vunpack.c.l.b16 %v532
      %v1837 = vunpack.c.l.b16 %v533
      %v1838 = vunpack.c.l.b16 %v534
      %v1839 = vunpack.c.l.b16 %v535
      %v1840 = vunpack.c.l.b16 %v536
      %v1841 = vunpack.c.l.b16 %v537
      %v1842 = vunpack.c.l.b16 %v538
      %v1843 = vunpack.c.l.b16 %v539
      %v1844 = vunpack.c.l.b16 %v540
      %v1845 = vunpack.c.l.b16 %v541
      %v1846 = vunpack.c.l.b16 %v542
      %v1847 = vunpack.c.l.b16 %v543
      %v1848 = vunpack.c.l.b16 %v544
      %v1849 = vunpack.c.l.b16 %v545
      %v1850 = vunpack.c.l.b16 %v546
      %v1851 = vunpack.c.l.b16 %v547
      %v1852 = vunpack.c.l.b16 %v548
      %v1853 = vunpack.c.l.b16 %v549
      %v1854 = vunpack.c.l.b16 %v550
      %v1855 = vunpack.c.l.b16 %v551
      %v1856 = vunpack.c.l.b16 %v552
      %v1857 = vunpack.c.l.b16 %v553
      %v1858 = vunpack.c.l.b16 %v554
      %v1859 = vunpack.c.l.b16 %v555
      %v1860 = vunpack.c.l.b16 %v556
      %v1861 = vunpack.c.l.b16 %v557
      %v1862 = vunpack.c.l.b16 %v558
      %v1863 = vunpack.c.l.b16 %v559
      %v1864 = vunpack.c.l.b16 %v560
      %v1865 = vunpack.c.l.b16 %v561
      %v1866 = vunpack.c.l.b16 %v562
      %v1867 = vunpack.c.l.b16 %v563
      %v1868 = vunpack.c.l.b16 %v564
      %v1869 = vunpack.c.l.b16 %v565
      %v1870 = vunpack.c.l.b16 %v566
      %v1871 = vunpack.c.l.b16 %v567
      %v1872 = vunpack.c.l.b16 %v568
      %v1873 = vunpack.c.l.b16 %v569
      %v1874 = vunpack.c.l.b16 %v570
      %v1875 = vunpack.c.l.b16 %v571
      %v1876 = vunpack.c.l.b16 %v572
      %v1877 = vunpack.c.l.b16 %v573
      %v1878 = vunpack.c.l.b16 %v574
      %v1879 = vunpack.c.l.b16 %v575
      %v1880 = vunpack.c.l.b16 %v576
      %v1881 = vunpack.c.l.b16 %v577
      %v1882 = vunpack.c.l.b16 %v578
      %v1883 = vunpack.c.l.b16 %v579
      %v1884 = vunpack.c.l.b16 %v580
      %v1885 = vunpack.c.l.b16 %v581
      %v1886 = vunpack.c.l.b16 %v582
      %v1887 = vunpack.c.l.b16 %v583
      %v1888 = vunpack.c.l.b16 %v584
      %v1889 = vunpack.c.l.b16 %v585
      %v1890 = vunpack.c.l.b16 %v586
      %v1891 = vunpack.c.l.b16 %v587
      %v1892 = vunpack.c.l.b16 %v588
      %v1893 = vunpack.c.l.b16 %v589
      %v1894 = vunpack.c.l.b16 %v590
      %v1895 = vunpack.c.l.b16 %v591
      %v1896 = vunpack.c.l.b16 %v592
      %v1897 = vunpack.c.l.b16 %v593
      %v1898 = vunpack.c.l.b16 %v594
      %v1899 = vunpack.c.l.b16 %v595
      %v1900 = vunpack.c.l.b16 %v596
      %v1901 = vunpack.c.l.b16 %v597
      %v1902 = vunpack.c.l.b16 %v598
      %v1903 = vunpack.c.l.b16 %v599
      %v1904 = vunpack.c.l.b16 %v600
      %v1905 = vunpack.c.l.b16 %v601
      %v1906 = vunpack.c.l.b16 %v602
      %v1907 = vunpack.c.l.b16 %v603
      %v1908 = vunpack.c.l.b16 %v604
      %v1909 = vunpack.c.l.b16 %v605
      %v1910 = vunpack.c.l.b16 %v606
      %v1911 = vunpack.c.l.b16 %v607
      %v1912 = vunpack.c.l.b16 %v608
      %v1913 = vunpack.c.l.b16 %v609
      %v1914 = vunpack.c.l.b16 %v610
      %v1915 = vunpack.c.l.b16 %v611
      %v1916 = vunpack.c.l.b16 %v612
      %v1917 = vunpack.c.l.b16 %v613
      %v1918 = vunpack.c.l.b16 %v614
      %v1919 = vunpack.c.l.b16 %v615
      %v1920 = vunpack.c.l.b16 %v616
      %v1921 = vunpack.c.l.b16 %v617
      %v1922 = vunpack.c.l.b16 %v618
      %v1923 = vunpack.c.l.b16 %v619
      %v1924 = vunpack.c.l.b16 %v620
      %v1925 = vunpack.c.l.b16 %v621
      %v1926 = vunpack.c.l.b16 %v622
      %v1927 = vunpack.c.l.b16 %v623
      %v1928 = vunpack.c.l.b16 %v624
      %v1929 = vunpack.c.l.b16 %v625
      %v1930 = vunpack.c.l.b16 %v626
      %v1931 = vunpack.c.l.b16 %v627
      %v1932 = vunpack.c.l.b16 %v628
      %v1933 = vunpack.c.l.b16 %v629
      %v1934 = vunpack.c.l.b16 %v630
      %v1935 = vunpack.c.l.b16 %v631
      %v1936 = vunpack.c.l.b16 %v632
      %v1937 = vunpack.c.l.b16 %v633
      %v1938 = vunpack.c.l.b16 %v634
      %v1939 = vunpack.c.l.b16 %v635
      %v1940 = vunpack.c.l.b16 %v636
      %v1941 = vunpack.c.l.b16 %v637
      %v1942 = vunpack.c.l.b16 %v638
      %v1943 = vunpack.c.l.b16 %v639
      %v1944 = vunpack.c.l.b16 %v640
      %v1945 = vunpack.c.l.b16 %v641
      %v1946 = vunpack.c.l.b16 %v642
      %v1947 = vunpack.c.l.b16 %v643
      %v1948 = vunpack.c.l.b16 %v644
      %v1949 = vunpack.c.l.b16 %v645
      %v1950 = vunpack.c.l.b16 %v646
      %v1951 = vunpack.c.l.b16 %v647
      %v1952 = vunpack.c.l.b16 %v648
      %v1953 = vunpack.c.l.b16 %v649
      %v1954 = vunpack.c.l.b16 %v650
      %v1955 = vunpack.c.l.b16 %v651
      %v1956 = vunpack.c.l.b16 %v652
      %v1957 = vunpack.c.l.b16 %v653
      %v1958 = vunpack.c.l.b16 %v654
      %v1959 = vunpack.c.l.b16 %v655
      %v1960 = vunpack.c.l.b16 %v656
      %v1961 = vunpack.c.l.b16 %v657
      %v1962 = vunpack.c.l.b16 %v658
      %v1963 = vunpack.c.l.b16 %v659
      %v1964 = vunpack.c.l.b16 %v660
      %v1965 = vunpack.c.l.b16 %v661
      %v1966 = vunpack.c.l.b16 %v662
      %v1967 = vunpack.c.l.b16 %v663
      %v1968 = vunpack.c.l.b16 %v664
      %v1969 = vunpack.c.l.b16 %v665
      %v1970 = vunpack.c.l.b16 %v666
      %v1971 = vunpack.c.l.b16 %v667
      %v1972 = vunpack.c.l.b16 %v668
      %v1973 = vunpack.c.l.b16 %v669
      %v1974 = vunpack.c.l.b16 %v670
      %v1975 = vunpack.c.l.b16 %v671
      %v1976 = vunpack.c.l.b16 %v672
      %v1977 = vunpack.c.l.b16 %v673
      %v1978 = vunpack.c.l.b16 %v674
      %v1979 = vunpack.c.l.b16 %v675
      %v1980 = vunpack.c.l.b16 %v676
      %v1981 = vunpack.c.l.b16 %v677
      %v1982 = vunpack.c.l.b16 %v678
      %v1983 = vunpack.c.l.b16 %v679
      %v1984 = vunpack.c.l.b16 %v680
      %v1985 = vunpack.c.l.b16 %v681
      %v1986 = vunpack.c.l.b16 %v682
      %v1987 = vunpack.c.l.b16 %v683
      %v1988 = vunpack.c.l.b16 %v684
      %v1989 = vunpack.c.l.b16 %v685
      %v1990 = vunpack.c.l.b16 %v686
      %v1991 = vunpack.c.l.b16 %v687
      %v1992 = vunpack.c.l.b16 %v688
      %v1993 = vunpack.c.l.b16 %v689
      %v1994 = vunpack.c.l.b16 %v690
      %v1995 = vunpack.c.l.b16 %v691
      %v1996 = vunpack.c.l.b16 %v692
      %v1997 = vunpack.c.l.b16 %v693
      %v1998 = vunpack.c.l.b16 %v694
      %v1999 = vunpack.c.l.b16 %v695
      %v2000 = vunpack.c.l.b16 %v696
      %v2001 = vunpack.c.l.b16 %v697
      %v2002 = vunpack.c.l.b16 %v698
      %v2003 = vunpack.c.l.b16 %v699
      %v2004 = vunpack.c.l.b16 %v700
      %v2005 = vunpack.c.l.b16 %v701
      %v2006 = vunpack.c.l.b16 %v702
      %v2007 = vunpack.c.l.b16 %v703
      %v2008 = vunpack.c.l.b16 %v704
      %v2009 = vunpack.c.l.b16 %v705
      %v2010 = vunpack.c.l.b16 %v706
      %v2011 = vunpack.c.l.b16 %v707
      %v2012 = vunpack.c.l.b16 %v708
      %v2013 = vunpack.c.l.b16 %v709
      %v2014 = vunpack.c.l.b16 %v710
      %v2015 = vunpack.c.l.b16 %v711
      %v2016 = vunpack.c.l.b16 %v712
      %v2017 = vunpack.c.l.b16 %v713
      %v2018 = vunpack.c.l.b16 %v714
      %v2019 = vunpack.c.l.b16 %v715
      %v2020 = vunpack.c.l.b16 %v716
      %v2021 = vunpack.c.l.b16 %v717
      %v2022 = vunpack.c.l.b16 %v718
      %v2023 = vunpack.c.l.b16 %v719
      %v2024 = vunpack.c.l.b16 %v720
      %v2025 = vunpack.c.l.b16 %v721
      %v2026 = vunpack.c.l.b16 %v722
      %v2027 = vunpack.c.l.b16 %v723
      %v2028 = vunpack.c.l.b16 %v724
      %v2029 = vunpack.c.l.b16 %v725
      %v2030 = vunpack.c.l.b16 %v726
      %v2031 = vunpack.c.l.b16 %v727
      %v2032 = vunpack.c.l.b16 %v728
      %v2033 = vunpack.c.l.b16 %v729
      %v2034 = vunpack.c.l.b16 %v730
      %v2035 = vunpack.c.l.b16 %v731
      %v2036 = vunpack.c.l.b16 %v732
      %v2037 = vunpack.c.l.b16 %v733
      %v2038 = vunpack.c.l.b16 %v734
      %v2039 = vunpack.c.l.b16 %v735
      %v2040 = vunpack.c.l.b16 %v736
      %v2041 = vunpack.c.l.b16 %v737
      %v2042 = vunpack.c.l.b16 %v738
      %v2043 = vunpack.c.l.b16 %v739
      %v2044 = vunpack.c.l.b16 %v740
      %v2045 = vunpack.c.l.b16 %v741
      %v2046 = vunpack.c.l.b16 %v742
      %v2047 = vunpack.c.l.b16 %v743
      %v2048 = vunpack.c.l.b16 %v744
      %v2049 = vunpack.c.l.b16 %v745
      %v2050 = vunpack.c.l.b16 %v746
      %v2051 = vunpack.c.l.b16 %v747
      %v2052 = vunpack.c.l.b16 %v748
      %v2053 = vunpack.c.l.b16 %v749
      %v2054 = vunpack.c.l.b16 %v750
      %v2055 = vunpack.c.l.b16 %v751
      %v2056 = vunpack.c.l.b16 %v752
      %v2057 = vunpack.c.l.b16 %v753
      %v2058 = vunpack.c.l.b16 %v754
      %v2059 = vunpack.c.l.b16 %v755
      %v2060 = vunpack.c.l.b16 %v756
      %v2061 = vunpack.c.l.b16 %v757
      %v2062 = vunpack.c.l.b16 %v758
      %v2063 = vunpack.c.l.b16 %v759
      %v2064 = vunpack.c.l.b16 %v760
      %v2065 = vunpack.c.l.b16 %v761
      %v2066 = vunpack.c.l.b16 %v762
      %v2067 = vunpack.c.l.b16 %v763
      %v2068 = vunpack.c.l.b16 %v764
      %v2069 = vunpack.c.l.b16 %v765
      %v2070 = vunpack.c.l.b16 %v766
      %v2071 = vunpack.c.l.b16 %v767
      %v2072 = vunpack.c.l.b16 %v768
      %v2073 = vunpack.c.l.b16 %v769
      %v2074 = vunpack.c.l.b16 %v770
      %v2075 = vunpack.c.l.b16 %v771
      %v2076 = vunpack.c.l.b16 %v772
      %v2077 = vunpack.c.l.b16 %v773
      %v2078 = vunpack.c.l.b16 %v774
      %v2079 = vunpack.c.l.b16 %v775
      %v2080 = vunpack.c.l.b16 %v776
      %v2081 = vunpack.c.l.b16 %v777
      %v2082 = vunpack.c.l.b16 %v778
      %v2083 = vunpack.c.l.b16 %v779
      %v2084 = vunpack.c.l.b16 %v780
      %v2085 = vunpack.c.l.b16 %v781
      %v2086 = vunpack.c.l.b16 %v782
      %v2087 = vunpack.c.l.b16 %v783
      %v2088 = vunpack.c.l.b16 %v784
      %v2089 = vunpack.c.l.b16 %v785
      %v2090 = vunpack.c.l.b16 %v786
      %v2091 = vunpack.c.l.b16 %v787
      %v2092 = vunpack.c.l.b16 %v788
      %v2093 = vunpack.c.l.b16 %v789
      %v2094 = vunpack.c.l.b16 %v790
      %v2095 = vunpack.c.l.b16 %v791
      %v2096 = vunpack.c.l.b16 %v792
      %v2097 = vunpack.c.l.b16 %v793
      %v2098 = vunpack.c.l.b16 %v794
      %v2099 = vunpack.c.l.b16 %v795
      %v2100 = vunpack.c.l.b16 %v796
      %v2101 = vunpack.c.l.b16 %v797
      %v2102 = vunpack.c.l.b16 %v798
      %v2103 = vunpack.c.l.b16 %v799
      %v2104 = vunpack.c.l.b16 %v800
      %v2105 = vunpack.c.l.b16 %v801
      %v2106 = vunpack.c.l.b16 %v802
      %v2107 = vunpack.c.l.b16 %v803
      %v2108 = vunpack.c.l.b16 %v804
      %v2109 = vunpack.c.l.b16 %v805
      %v2110 = vunpack.c.l.b16 %v806
      %v2111 = vunpack.c.l.b16 %v807
      %v2112 = vunpack.c.l.b16 %v808
      %v2113 = vunpack.c.l.b16 %v809
      %v2114 = vunpack.c.l.b16 %v810
      %v2115 = vunpack.c.l.b16 %v811
      %v2116 = vunpack.c.l.b16 %v812
      %v2117 = vunpack.c.l.b16 %v813
      %v2118 = vunpack.c.l.b16 %v814
      %v2119 = vunpack.c.l.b16 %v815
      %v2120 = vunpack.c.l.b16 %v816
      %v2121 = vunpack.c.l.b16 %v817
      %v2122 = vunpack.c.l.b16 %v818
      %v2123 = vunpack.c.l.b16 %v819
      %v2124 = vunpack.c.l.b16 %v820
      %v2125 = vunpack.c.l.b16 %v821
      %v2126 = vunpack.c.l.b16 %v822
      %v2127 = vunpack.c.l.b16 %v823
      %v2128 = vunpack.c.l.b16 %v824
      %v2129 = vunpack.c.l.b16 %v825
      %v2130 = vunpack.c.l.b16 %v826
      %v2131 = vunpack.c.l.b16 %v827
      %v2132 = vunpack.c.l.b16 %v828
      %v2133 = vunpack.c.l.b16 %v829
      %v2134 = vunpack.c.l.b16 %v830
      %v2135 = vunpack.c.l.b16 %v831
      %v2136 = vunpack.c.l.b16 %v832
      %v2137 = vunpack.c.l.b16 %v833
      %v2138 = vunpack.c.l.b16 %v834
      %v2139 = vunpack.c.l.b16 %v835
      %v2140 = vunpack.c.l.b16 %v836
      %v2141 = vunpack.c.l.b16 %v837
      %v2142 = vunpack.c.l.b16 %v838
      %v2143 = vunpack.c.l.b16 %v839
      %v2144 = vunpack.c.l.b16 %v840
      %v2145 = vunpack.c.l.b16 %v841
      %v2146 = vunpack.c.l.b16 %v842
      %v2147 = vunpack.c.l.b16 %v843
      %v2148 = vunpack.c.l.b16 %v844
      %v2149 = vunpack.c.l.b16 %v845
      %v2150 = vunpack.c.l.b16 %v846
      %v2151 = vunpack.c.l.b16 %v847
      %v2152 = vunpack.c.l.b16 %v848
      %v2153 = vunpack.c.l.b16 %v849
      %v2154 = vunpack.c.l.b16 %v850
      %v2155 = vunpack.c.l.b16 %v851
      %v2156 = vunpack.c.l.b16 %v852
      %v2157 = vunpack.c.l.b16 %v853
      %v2158 = vunpack.c.l.b16 %v854
      %v2159 = vunpack.c.l.b16 %v855
      %v2160 = vunpack.c.l.b16 %v856
      %v2161 = vunpack.c.l.b16 %v857
      %v2162 = vunpack.c.l.b16 %v858
      %v2163 = vunpack.c.l.b16 %v859
      %v2164 = vunpack.c.l.b16 %v860
      %v2165 = vunpack.c.l.b16 %v861
      %v2166 = vunpack.c.l.b16 %v862
      %v2167 = vunpack.c.l.b16 %v863
      %v2168 = vunpack.c.l.b16 %v864
      %v2169 = vunpack.c.l.b16 %v865
      %v2170 = vunpack.c.l.b16 %v866
      %v2171 = vunpack.c.l.b16 %v867
      %v2172 = vunpack.c.l.b16 %v868
      %v2173 = vunpack.c.l.b16 %v869
      %v2174 = vunpack.c.l.b16 %v870
      %v2175 = vunpack.c.l.b16 %v871
      %v2176 = vunpack.c.l.b16 %v872
      %v2177 = vunpack.c.l.b16 %v873
      %v2178 = vunpack.c.l.b16 %v874
      %v2179 = vunpack.c.l.b16 %v875
      %v2180 = vunpack.c.l.b16 %v876
      %v2181 = vunpack.c.l.b16 %v877
      %v2182 = vunpack.c.l.b16 %v878
      %v2183 = vunpack.c.l.b16 %v879
      %v2184 = vunpack.c.l.b16 %v880
      %v2185 = vunpack.c.l.b16 %v881
      %v2186 = vunpack.c.l.b16 %v882
      %v2187 = vunpack.c.l.b16 %v883
      %v2188 = vunpack.c.l.b16 %v884
      %v2189 = vpack.c.b16 %v1790, %v1789
      %v2190 = vpack.c.b16 %v1792, %v1791
      %v2191 = vpack.c.b16 %v1794, %v1793
      %v2192 = vpack.c.b16 %v1796, %v1795
      %v2193 = vpack.c.b16 %v1798, %v1797
      %v2194 = vpack.c.b16 %v1800, %v1799
      %v2195 = vpack.c.b16 %v1802, %v1801
      %v2196 = vpack.c.b16 %v1804, %v1803
      %v2197 = vpack.c.b16 %v1806, %v1805
      %v2198 = vpack.c.b16 %v1808, %v1807
      %v2199 = vpack.c.b16 %v1810, %v1809
      %v2200 = vpack.c.b16 %v1812, %v1811
      %v2201 = vpack.c.b16 %v1814, %v1813
      %v2202 = vpack.c.b16 %v1816, %v1815
      %v2203 = vpack.c.b16 %v1818, %v1817
      %v2204 = vpack.c.b16 %v1820, %v1819
      %v2205 = vpack.c.b16 %v1822, %v1821
      %v2206 = vpack.c.b16 %v1824, %v1823
      %v2207 = vpack.c.b16 %v1826, %v1825
      %v2208 = vpack.c.b16 %v1828, %v1827
      %v2209 = vpack.c.b16 %v1830, %v1829
      %v2210 = vpack.c.b16 %v1832, %v1831
      %v2211 = vpack.c.b16 %v1834, %v1833
      %v2212 = vpack.c.b16 %v1836, %v1835
      %v2213 = vpack.c.b16 %v1838, %v1837
      %v2214 = vpack.c.b16 %v1840, %v1839
      %v2215 = vpack.c.b16 %v1842, %v1841
      %v2216 = vpack.c.b16 %v1844, %v1843
      %v2217 = vpack.c.b16 %v1846, %v1845
      %v2218 = vpack.c.b16 %v1848, %v1847
      %v2219 = vpack.c.b16 %v1850, %v1849
      %v2220 = vpack.c.b16 %v1852, %v1851
      %v2221 = vpack.c.b16 %v1854, %v1853
      %v2222 = vpack.c.b16 %v1856, %v1855
      %v2223 = vpack.c.b16 %v1858, %v1857
      %v2224 = vpack.c.b16 %v1860, %v1859
      %v2225 = vpack.c.b16 %v1862, %v1861
      %v2226 = vpack.c.b16 %v1864, %v1863
      %v2227 = vpack.c.b16 %v1866, %v1865
      %v2228 = vpack.c.b16 %v1868, %v1867
      %v2229 = vpack.c.b16 %v1870, %v1869
      %v2230 = vpack.c.b16 %v1872, %v1871
      %v2231 = vpack.c.b16 %v1874, %v1873
      %v2232 = vpack.c.b16 %v1876, %v1875
      %v2233 = vpack.c.b16 %v1878, %v1877
      %v2234 = vpack.c.b16 %v1880, %v1879
      %v2235 = vpack.c.b16 %v1882, %v1881
      %v2236 = vpack.c.b16 %v1884, %v1883
      %v2237 = vpack.c.b16 %v1886, %v1885
      %v2238 = vpack.c.b16 %v1888, %v1887
      %v2239 = vpack.c.b16 %v1890, %v1889
      %v2240 = vpack.c.b16 %v1892, %v1891
      %v2241 = vpack.c.b16 %v1894, %v1893
      %v2242 = vpack.c.b16 %v1896, %v1895
      %v2243 = vpack.c.b16 %v1898, %v1897
      %v2244 = vpack.c.b16 %v1900, %v1899
      %v2245 = vpack.c.b16 %v1902, %v1901
      %v2246 = vpack.c.b16 %v1904, %v1903
      %v2247 = vpack.c.b16 %v1906, %v1905
      %v2248 = vpack.c.b16 %v1908, %v1907
      %v2249 = vpack.c.b16 %v1910, %v1909
      %v2250 = vpack.c.b16 %v1912, %v1911
      %v2251 = vpack.c.b16 %v1914, %v1913
      %v2252 = vpack.c.b16 %v1916, %v1915
      %v2253 = vpack.c.b16 %v1918, %v1917
      %v2254 = vpack.c.b16 %v1920, %v1919
      %v2255 = vpack.c.b16 %v1922, %v1921
      %v2256 = vpack.c.b16 %v1924, %v1923
      %v2257 = vpack.c.b16 %v1926, %v1925
      %v2258 = vpack.c.b16 %v1928, %v1927
      %v2259 = vpack.c.b16 %v1930, %v1929
      %v2260 = vpack.c.b16 %v1932, %v1931
      %v2261 = vpack.c.b16 %v1934, %v1933
      %v2262 = vpack.c.b16 %v1936, %v1935
      %v2263 = vpack.c.b16 %v1938, %v1937
      %v2264 = vpack.c.b16 %v1940, %v1939
      %v2265 = vpack.c.b16 %v1942, %v1941
      %v2266 = vpack.c.b16 %v1944, %v1943
      %v2267 = vpack.c.b16 %v1946, %v1945
      %v2268 = vpack.c.b16 %v1948, %v1947
      %v2269 = vpack.c.b16 %v1950, %v1949
      %v2270 = vpack.c.b16 %v1952, %v1951
      %v2271 = vpack.c.b16 %v1954, %v1953
      %v2272 = vpack.c.b16 %v1956, %v1955
      %v2273 = vpack.c.b16 %v1958, %v1957
      %v2274 = vpack.c.b16 %v1960, %v1959
      %v2275 = vpack.c.b16 %v1962, %v1961
      %v2276 = vpack.c.b16 %v1964, %v1963
      %v2277 = vpack.c.b16 %v1966, %v1965
      %v2278 = vpack.c.b16 %v1968, %v1967
      %v2279 = vpack.c.b16 %v1970, %v1969
      %v2280 = vpack.c.b16 %v1972, %v1971
      %v2281 = vpack.c.b16 %v1974, %v1973
      %v2282 = vpack.c.b16 %v1976, %v1975
      %v2283 = vpack.c.b16 %v1978, %v1977
      %v2284 = vpack.c.b16 %v1980, %v1979
      %v2285 = vpack.c.b16 %v1982, %v1981
      %v2286 = vpack.c.b16 %v1984, %v1983
      %v2287 = vpack.c.b16 %v1986, %v1985
      %v2288 = vpack.c.b16 %v1988, %v1987
      %v2289 = vpack.c.b16 %v1990, %v1989
      %v2290 = vpack.c.b16 %v1992, %v1991
      %v2291 = vpack.c.b16 %v1994, %v1993
      %v2292 = vpack.c.b16 %v1996, %v1995
      %v2293 = vpack.c.b16 %v1998, %v1997
      %v2294 = vpack.c.b16 %v2000, %v1999
      %v2295 = vpack.c.b16 %v2002, %v2001
      %v2296 = vpack.c.b16 %v2004, %v2003
      %v2297 = vpack.c.b16 %v2006, %v2005
      %v2298 = vpack.c.b16 %v2008, %v2007
      %v2299 = vpack.c.b16 %v2010, %v2009
      %v2300 = vpack.c.b16 %v2012, %v2011
      %v2301 = vpack.c.b16 %v2014, %v2013
      %v2302 = vpack.c.b16 %v2016, %v2015
      %v2303 = vpack.c.b16 %v2018, %v2017
      %v2304 = vpack.c.b16 %v2020, %v2019
      %v2305 = vpack.c.b16 %v2022, %v2021
      %v2306 = vpack.c.b16 %v2024, %v2023
      %v2307 = vpack.c.b16 %v2026, %v2025
      %v2308 = vpack.c.b16 %v2028, %v2027
      %v2309 = vpack.c.b16 %v2030, %v2029
      %v2310 = vpack.c.b16 %v2032, %v2031
      %v2311 = vpack.c.b16 %v2034, %v2033
      %v2312 = vpack.c.b16 %v2036, %v2035
      %v2313 = vpack.c.b16 %v2038, %v2037
      %v2314 = vpack.c.b16 %v2040, %v2039
      %v2315 = vpack.c.b16 %v2042, %v2041
      %v2316 = vpack.c.b16 %v2044, %v2043
      %v2317 = vpack.c.b16 %v2046, %v2045
      %v2318 = vpack.c.b16 %v2048, %v2047
      %v2319 = vpack.c.b16 %v2050, %v2049
      %v2320 = vpack.c.b16 %v2052, %v2051
      %v2321 = vpack.c.b16 %v2054, %v2053
      %v2322 = vpack.c.b16 %v2056, %v2055
      %v2323 = vpack.c.b16 %v2058, %v2057
      %v2324 = vpack.c.b16 %v2060, %v2059
      %v2325 = vpack.c.b16 %v2062, %v2061
      %v2326 = vpack.c.b16 %v2064, %v2063
      %v2327 = vpack.c.b16 %v2066, %v2065
      %v2328 = vpack.c.b16 %v2068, %v2067
      %v2329 = vpack.c.b16 %v2070, %v2069
      %v2330 = vpack.c.b16 %v2072, %v2071
      %v2331 = vpack.c.b16 %v2074, %v2073
      %v2332 = vpack.c.b16 %v2076, %v2075
      %v2333 = vpack.c.b16 %v2078, %v2077
      %v2334 = vpack.c.b16 %v2080, %v2079
      %v2335 = vpack.c.b16 %v2082, %v2081
      %v2336 = vpack.c.b16 %v2084, %v2083
      %v2337 = vpack.c.b16 %v2086, %v2085
      %v2338 = vpack.c.b16 %v2088, %v2087
      %v2339 = vpack.c.b16 %v2090, %v2089
      %v2340 = vpack.c.b16 %v2092, %v2091
      %v2341 = vpack.c.b16 %v2094, %v2093
      %v2342 = vpack.c.b16 %v2096, %v2095
      %v2343 = vpack.c.b16 %v2098, %v2097
      %v2344 = vpack.c.b16 %v2100, %v2099
      %v2345 = vpack.c.b16 %v2102, %v2101
      %v2346 = vpack.c.b16 %v2104, %v2103
      %v2347 = vpack.c.b16 %v2106, %v2105
      %v2348 = vpack.c.b16 %v2108, %v2107
      %v2349 = vpack.c.b16 %v2110, %v2109
      %v2350 = vpack.c.b16 %v2112, %v2111
      %v2351 = vpack.c.b16 %v2114, %v2113
      %v2352 = vpack.c.b16 %v2116, %v2115
      %v2353 = vpack.c.b16 %v2118, %v2117
      %v2354 = vpack.c.b16 %v2120, %v2119
      %v2355 = vpack.c.b16 %v2122, %v2121
      %v2356 = vpack.c.b16 %v2124, %v2123
      %v2357 = vpack.c.b16 %v2126, %v2125
      %v2358 = vpack.c.b16 %v2128, %v2127
      %v2359 = vpack.c.b16 %v2130, %v2129
      %v2360 = vpack.c.b16 %v2132, %v2131
      %v2361 = vpack.c.b16 %v2134, %v2133
      %v2362 = vpack.c.b16 %v2136, %v2135
      %v2363 = vpack.c.b16 %v2138, %v2137
      %v2364 = vpack.c.b16 %v2140, %v2139
      %v2365 = vpack.c.b16 %v2142, %v2141
      %v2366 = vpack.c.b16 %v2144, %v2143
      %v2367 = vpack.c.b16 %v2146, %v2145
      %v2368 = vpack.c.b16 %v2148, %v2147
      %v2369 = vpack.c.b16 %v2150, %v2149
      %v2370 = vpack.c.b16 %v2152, %v2151
      %v2371 = vpack.c.b16 %v2154, %v2153
      %v2372 = vpack.c.b16 %v2156, %v2155
      %v2373 = vpack.c.b16 %v2158, %v2157
      %v2374 = vpack.c.b16 %v2160, %v2159
      %v2375 = vpack.c.b16 %v2162, %v2161
      %v2376 = vpack.c.b16 %v2164, %v2163
      %v2377 = vpack.c.b16 %v2166, %v2165
      %v2378 = vpack.c.b16 %v2168, %v2167
      %v2379 = vpack.c.b16 %v2170, %v2169
      %v2380 = vpack.c.b16 %v2172, %v2171
      %v2381 = vpack.c.b16 %v2174, %v2173
      %v2382 = vpack.c.b16 %v2176, %v2175
      %v2383 = vpack.c.b16 %v2178, %v2177
      %v2384 = vpack.c.b16 %v2180, %v2179
      %v2385 = vpack.c.b16 %v2182, %v2181
      %v2386 = vpack.c.b16 %v2184, %v2183
      %v2387 = vpack.c.b16 %v2186, %v2185
      %v2388 = vpack.c.b16 %v2188, %v2187
      %2589 = vmatprep.subr.bf16.mxu0 0
      %2590 = vmatpush1.bf16.msra.mxu0 %v2189
      %2591 = vmatprep.subr.bf16.mxu0 0
      %2592 = vmatpush1.bf16.msra.mxu0 %v2190
      %2593 = vmatprep.subr.bf16.mxu0 0
      %2594 = vmatpush1.bf16.msra.mxu0 %v2191
      %2595 = vmatprep.subr.bf16.mxu0 0
      %2596 = vmatpush1.bf16.msra.mxu0 %v2192
      %2597 = vmatprep.subr.bf16.mxu0 0
      %2598 = vmatpush1.bf16.msra.mxu0 %v2193
      %2599 = vmatprep.subr.bf16.mxu0 0
      %2600 = vmatpush1.bf16.msra.mxu0 %v2194
      %2601 = vmatprep.subr.bf16.mxu0 0
      %2602 = vmatpush1.bf16.msra.mxu0 %v2195
      %2603 = vmatprep.subr.bf16.mxu0 0
      %2604 = vmatpush1.bf16.msra.mxu0 %v2196
      %2605 = vmatprep.subr.bf16.mxu0 0
      %2606 = vmatpush1.bf16.msra.mxu0 %v2197
      %2607 = vmatprep.subr.bf16.mxu0 0
      %2608 = vmatpush1.bf16.msra.mxu0 %v2198
      %2609 = vmatprep.subr.bf16.mxu0 0
      %2610 = vmatpush1.bf16.msra.mxu0 %v2199
      %2611 = vmatprep.subr.bf16.mxu0 0
      %2612 = vmatpush1.bf16.msra.mxu0 %v2200
      %2613 = vmatprep.subr.bf16.mxu0 0
      %2614 = vmatpush1.bf16.msra.mxu0 %v2201
      %2615 = vmatprep.subr.bf16.mxu0 0
      %2616 = vmatpush1.bf16.msra.mxu0 %v2202
      %2617 = vmatprep.subr.bf16.mxu0 0
      %2618 = vmatpush1.bf16.msra.mxu0 %v2203
      %2619 = vmatprep.subr.bf16.mxu0 0
      %2620 = vmatpush1.bf16.msra.mxu0 %v2204
      %2621 = vmatprep.mubr.bf16.mxu0 %v1190
      %2622 = vmatmul.mubr.bf16.gmra.mrb[0].mxu0 %v1189
      %v2623 = vpop.f32.mrb[0].mxu0
      %v2624 = vadd.f32 0.0, %v2623
      %v2625 = vpop.f32.mrb[0].mxu0
      %v2626 = vpop.f32.mrb[0].mxu0
      %v2627 = vadd.f32 0.0, %v2626
      %v2628 = vpop.f32.mrb[0].mxu0
      %2629 = vmatprep.mubr.bf16.mxu0 %v1215
      %2630 = vmatmul.mubr.bf16.gmra.mrb[0].mxu0 %v1214
      %v2631 = vpop.f32.mrb[0].mxu0
      %v2632 = vadd.f32 0.0, %v2631
      %v2633 = vpop.f32.mrb[0].mxu0
      %v2634 = vpop.f32.mrb[0].mxu0
      %v2635 = vadd.f32 0.0, %v2634
      %v2636 = vpop.f32.mrb[0].mxu0
      %2637 = vmatprep.mubr.bf16.mxu0 %v1240
      %2638 = vmatmul.mubr.bf16.gmra.mrb[0].mxu0 %v1239
      %v2639 = vpop.f32.mrb[0].mxu0
      %v2640 = vadd.f32 0.0, %v2639
      %v2641 = vpop.f32.mrb[0].mxu0
      %v2642 = vpop.f32.mrb[0].mxu0
      %v2643 = vadd.f32 0.0, %v2642
      %v2644 = vpop.f32.mrb[0].mxu0
      %2645 = vmatprep.mubr.bf16.mxu0 %v1265
      %2646 = vmatmul.mubr.bf16.gmra.mrb[0].mxu0 %v1264
      %v2647 = vpop.f32.mrb[0].mxu0
      %v2648 = vadd.f32 0.0, %v2647
      %v2649 = vpop.f32.mrb[0].mxu0
      %v2650 = vpop.f32.mrb[0].mxu0
      %v2651 = vadd.f32 0.0, %v2650
      %v2652 = vpop.f32.mrb[0].mxu0
      %2653 = vdwg.mxu0
      %2654 = vmatprep.subr.bf16.mxu0 0
      %2655 = vmatpush1.bf16.msra.mxu0 %v2205
      %2656 = vmatprep.subr.bf16.mxu0 0
      %2657 = vmatpush1.bf16.msra.mxu0 %v2206
      %2658 = vmatprep.subr.bf16.mxu0 0
      %2659 = vmatpush1.bf16.msra.mxu0 %v2207
      %2660 = vmatprep.subr.bf16.mxu0 0
      %2661 = vmatpush1.bf16.msra.mxu0 %v2208
      %2662 = vmatprep.subr.bf16.mxu0 0
      %2663 = vmatpush1.bf16.msra.mxu0 %v2209
      %2664 = vmatprep.subr.bf16.mxu0 0
      %2665 = vmatpush1.bf16.msra.mxu0 %v2210
      %2666 = vmatprep.subr.bf16.mxu0 0
      %2667 = vmatpush1.bf16.msra.mxu0 %v2211
      %2668 = vmatprep.subr.bf16.mxu0 0
      %2669 = vmatpush1.bf16.msra.mxu0 %v2212
      %2670 = vmatprep.subr.bf16.mxu0 0
      %2671 = vmatpush1.bf16.msra.mxu0 %v2213
      %2672 = vmatprep.subr.bf16.mxu0 0
      %2673 = vmatpush1.bf16.msra.mxu0 %v2214
      %2674 = vmatprep.subr.bf16.mxu0 0
      %2675 = vmatpush1.bf16.msra.mxu0 %v2215
      %2676 = vmatprep.subr.bf16.mxu0 0
      %2677 = vmatpush1.bf16.msra.mxu0 %v2216
      %2678 = vmatprep.subr.bf16.mxu0 0
      %2679 = vmatpush1.bf16.msra.mxu0 %v2217
      %2680 = vmatprep.subr.bf16.mxu0 0
      %2681 = vmatpush1.bf16.msra.mxu0 %v2218
      %2682 = vmatprep.subr.bf16.mxu0 0
      %2683 = vmatpush1.bf16.msra.mxu0 %v2219
      %2684 = vmatprep.subr.bf16.mxu0 0
      %2685 = vmatpush1.bf16.msra.mxu0 %v2220
      %2686 = vmatprep.mubr.bf16.mxu0 %v1192
      %2687 = vmatmul.mubr.bf16.gmra.mrb[0].mxu0 %v1191
      %v2688 = vpop.f32.mrb[0].mxu0
      %v2689 = vadd.f32 %v2624, %v2688
      %v2690 = vpop.f32.mrb[0].mxu0
      %v2691 = vpop.f32.mrb[0].mxu0
      %v2692 = vadd.f32 %v2627, %v2691
      %v2693 = vpop.f32.mrb[0].mxu0
      %2694 = vmatprep.mubr.bf16.mxu0 %v1217
      %2695 = vmatmul.mubr.bf16.gmra.mrb[0].mxu0 %v1216
      %v2696 = vpop.f32.mrb[0].mxu0
      %v2697 = vadd.f32 %v2632, %v2696
      %v2698 = vpop.f32.mrb[0].mxu0
      %v2699 = vpop.f32.mrb[0].mxu0
      %v2700 = vadd.f32 %v2635, %v2699
      %v2701 = vpop.f32.mrb[0].mxu0
      %2702 = vmatprep.mubr.bf16.mxu0 %v1242
      %2703 = vmatmul.mubr.bf16.gmra.mrb[0].mxu0 %v1241
      %v2704 = vpop.f32.mrb[0].mxu0
      %v2705 = vadd.f32 %v2640, %v2704
      %v2706 = vpop.f32.mrb[0].mxu0
      %v2707 = vpop.f32.mrb[0].mxu0
      %v2708 = vadd.f32 %v2643, %v2707
      %v2709 = vpop.f32.mrb[0].mxu0
      %2710 = vmatprep.mubr.bf16.mxu0 %v1267
      %2711 = vmatmul.mubr.bf16.gmra.mrb[0].mxu0 %v1266
      %v2712 = vpop.f32.mrb[0].mxu0
      %v2713 = vadd.f32 %v2648, %v2712
      %v2714 = vpop.f32.mrb[0].mxu0
      %v2715 = vpop.f32.mrb[0].mxu0
      %v2716 = vadd.f32 %v2651, %v2715
      %v2717 = vpop.f32.mrb[0].mxu0
      %2718 = vdwg.mxu0
      %2719 = vmatprep.subr.bf16.mxu0 0
      %2720 = vmatpush1.bf16.msra.mxu0 %v2221
      %2721 = vmatprep.subr.bf16.mxu0 0
      %2722 = vmatpush1.bf16.msra.mxu0 %v2222
      %2723 = vmatprep.subr.bf16.mxu0 0
      %2724 = vmatpush1.bf16.msra.mxu0 %v2223
      %2725 = vmatprep.subr.bf16.mxu0 0
      %2726 = vmatpush1.bf16.msra.mxu0 %v2224
      %2727 = vmatprep.subr.bf16.mxu0 0
      %2728 = vmatpush1.bf16.msra.mxu0 %v2225
      %2729 = vmatprep.subr.bf16.mxu0 0
      %2730 = vmatpush1.bf16.msra.mxu0 %v2226
      %2731 = vmatprep.subr.bf16.mxu0 0
      %2732 = vmatpush1.bf16.msra.mxu0 %v2227
      %2733 = vmatprep.subr.bf16.mxu0 0
      %2734 = vmatpush1.bf16.msra.mxu0 %v2228
      %2735 = vmatprep.subr.bf16.mxu0 0
      %2736 = vmatpush1.bf16.msra.mxu0 %v2229
      %2737 = vmatprep.subr.bf16.mxu0 0
      %2738 = vmatpush1.bf16.msra.mxu0 %v2230
      %2739 = vmatprep.subr.bf16.mxu0 0
      %2740 = vmatpush1.bf16.msra.mxu0 %v2231
      %2741 = vmatprep.subr.bf16.mxu0 0
      %2742 = vmatpush1.bf16.msra.mxu0 %v2232
      %2743 = vmatprep.subr.bf16.mxu0 0
      %2744 = vmatpush1.bf16.msra.mxu0 %v2233
      %2745 = vmatprep.subr.bf16.mxu0 0
      %2746 = vmatpush1.bf16.msra.mxu0 %v2234
      %2747 = vmatprep.subr.bf16.mxu0 0
      %2748 = vmatpush1.bf16.msra.mxu0 %v2235
      %2749 = vmatprep.subr.bf16.mxu0 0
      %2750 = vmatpush1.bf16.msra.mxu0 %v2236
      %2751 = vmatprep.mubr.bf16.mxu0 %v1194
      %2752 = vmatmul.mubr.bf16.gmra.mrb[0].mxu0 %v1193
      %v2753 = vpop.f32.mrb[0].mxu0
      %v2754 = vadd.f32 %v2689, %v2753
      %v2755 = vpop.f32.mrb[0].mxu0
      %v2756 = vpop.f32.mrb[0].mxu0
      %v2757 = vadd.f32 %v2692, %v2756
      %v2758 = vpop.f32.mrb[0].mxu0
      %2759 = vmatprep.mubr.bf16.mxu0 %v1219
      %2760 = vmatmul.mubr.bf16.gmra.mrb[0].mxu0 %v1218
      %v2761 = vpop.f32.mrb[0].mxu0
      %v2762 = vadd.f32 %v2697, %v2761
      %v2763 = vpop.f32.mrb[0].mxu0
      %v2764 = vpop.f32.mrb[0].mxu0
      %v2765 = vadd.f32 %v2700, %v2764
      %v2766 = vpop.f32.mrb[0].mxu0
      %2767 = vmatprep.mubr.bf16.mxu0 %v1244
      %2768 = vmatmul.mubr.bf16.gmra.mrb[0].mxu0 %v1243
      %v2769 = vpop.f32.mrb[0].mxu0
      %v2770 = vadd.f32 %v2705, %v2769
      %v2771 = vpop.f32.mrb[0].mxu0
      %v2772 = vpop.f32.mrb[0].mxu0
      %v2773 = vadd.f32 %v2708, %v2772
      %v2774 = vpop.f32.mrb[0].mxu0
      %2775 = vmatprep.mubr.bf16.mxu0 %v1269
      %2776 = vmatmul.mubr.bf16.gmra.mrb[0].mxu0 %v1268
      %v2777 = vpop.f32.mrb[0].mxu0
      %v2778 = vadd.f32 %v2713, %v2777
      %v2779 = vpop.f32.mrb[0].mxu0
      %v2780 = vpop.f32.mrb[0].mxu0
      %v2781 = vadd.f32 %v2716, %v2780
      %v2782 = vpop.f32.mrb[0].mxu0
      %2783 = vdwg.mxu0
      %2784 = vmatprep.subr.bf16.mxu0 0
      %2785 = vmatpush1.bf16.msra.mxu0 %v2237
      %2786 = vmatprep.subr.bf16.mxu0 0
      %2787 = vmatpush1.bf16.msra.mxu0 %v2238
      %2788 = vmatprep.subr.bf16.mxu0 0
      %2789 = vmatpush1.bf16.msra.mxu0 %v2239
      %2790 = vmatprep.subr.bf16.mxu0 0
      %2791 = vmatpush1.bf16.msra.mxu0 %v2240
      %2792 = vmatprep.subr.bf16.mxu0 0
      %2793 = vmatpush1.bf16.msra.mxu0 %v2241
      %2794 = vmatprep.subr.bf16.mxu0 0
      %2795 = vmatpush1.bf16.msra.mxu0 %v2242
      %2796 = vmatprep.subr.bf16.mxu0 0
      %2797 = vmatpush1.bf16.msra.mxu0 %v2243
      %2798 = vmatprep.subr.bf16.mxu0 0
      %2799 = vmatpush1.bf16.msra.mxu0 %v2244
      %2800 = vmatprep.subr.bf16.mxu0 0
      %2801 = vmatpush1.bf16.msra.mxu0 %v2245
      %2802 = vmatprep.subr.bf16.mxu0 0
      %2803 = vmatpush1.bf16.msra.mxu0 %v2246
      %2804 = vmatprep.subr.bf16.mxu0 0
      %2805 = vmatpush1.bf16.msra.mxu0 %v2247
      %2806 = vmatprep.subr.bf16.mxu0 0
      %2807 = vmatpush1.bf16.msra.mxu0 %v2248
      %2808 = vmatprep.subr.bf16.mxu0 0
      %2809 = vmatpush1.bf16.msra.mxu0 %v2249
      %2810 = vmatprep.subr.bf16.mxu0 0
      %2811 = vmatpush1.bf16.msra.mxu0 %v2250
      %2812 = vmatprep.subr.bf16.mxu0 0
      %2813 = vmatpush1.bf16.msra.mxu0 %v2251
      %2814 = vmatprep.subr.bf16.mxu0 0
      %2815 = vmatpush1.bf16.msra.mxu0 %v2252
      %2816 = vmatprep.mubr.bf16.mxu0 %v1196
      %2817 = vmatmul.mubr.bf16.gmra.mrb[0].mxu0 %v1195
      %v2818 = vpop.f32.mrb[0].mxu0
      %v2819 = vadd.f32 %v2754, %v2818
      %v2820 = vpop.f32.mrb[0].mxu0
      %v2821 = vpop.f32.mrb[0].mxu0
      %v2822 = vadd.f32 %v2757, %v2821
      %v2823 = vpop.f32.mrb[0].mxu0
      %2824 = vmatprep.mubr.bf16.mxu0 %v1221
      %2825 = vmatmul.mubr.bf16.gmra.mrb[0].mxu0 %v1220
      %v2826 = vpop.f32.mrb[0].mxu0
      %v2827 = vadd.f32 %v2762, %v2826
      %v2828 = vpop.f32.mrb[0].mxu0
      %v2829 = vpop.f32.mrb[0].mxu0
      %v2830 = vadd.f32 %v2765, %v2829
      %v2831 = vpop.f32.mrb[0].mxu0
      %2832 = vmatprep.mubr.bf16.mxu0 %v1246
      %2833 = vmatmul.mubr.bf16.gmra.mrb[0].mxu0 %v1245
      %v2834 = vpop.f32.mrb[0].mxu0
      %v2835 = vadd.f32 %v2770, %v2834
      %v2836 = vpop.f32.mrb[0].mxu0
      %v2837 = vpop.f32.mrb[0].mxu0
      %v2838 = vadd.f32 %v2773, %v2837
      %v2839 = vpop.f32.mrb[0].mxu0
      %2840 = vmatprep.mubr.bf16.mxu0 %v1271
      %2841 = vmatmul.mubr.bf16.gmra.mrb[0].mxu0 %v1270
      %v2842 = vpop.f32.mrb[0].mxu0
      %v2843 = vadd.f32 %v2778, %v2842
      %v2844 = vpop.f32.mrb[0].mxu0
      %v2845 = vpop.f32.mrb[0].mxu0
      %v2846 = vadd.f32 %v2781, %v2845
      %v2847 = vpop.f32.mrb[0].mxu0
      %2848 = vdwg.mxu0
      %2849 = vmatprep.subr.bf16.mxu0 0
      %2850 = vmatpush1.bf16.msra.mxu0 %v2253
      %2851 = vmatprep.subr.bf16.mxu0 0
      %2852 = vmatpush1.bf16.msra.mxu0 %v2254
      %2853 = vmatprep.subr.bf16.mxu0 0
      %2854 = vmatpush1.bf16.msra.mxu0 %v2255
      %2855 = vmatprep.subr.bf16.mxu0 0
      %2856 = vmatpush1.bf16.msra.mxu0 %v2256
      %2857 = vmatprep.subr.bf16.mxu0 0
      %2858 = vmatpush1.bf16.msra.mxu0 %v2257
      %2859 = vmatprep.subr.bf16.mxu0 0
      %2860 = vmatpush1.bf16.msra.mxu0 %v2258
      %2861 = vmatprep.subr.bf16.mxu0 0
      %2862 = vmatpush1.bf16.msra.mxu0 %v2259
      %2863 = vmatprep.subr.bf16.mxu0 0
      %2864 = vmatpush1.bf16.msra.mxu0 %v2260
      %2865 = vmatprep.subr.bf16.mxu0 0
      %2866 = vmatpush1.bf16.msra.mxu0 %v2261
      %2867 = vmatprep.subr.bf16.mxu0 0
      %2868 = vmatpush1.bf16.msra.mxu0 %v2262
      %2869 = vmatprep.subr.bf16.mxu0 0
      %2870 = vmatpush1.bf16.msra.mxu0 %v2263
      %2871 = vmatprep.subr.bf16.mxu0 0
      %2872 = vmatpush1.bf16.msra.mxu0 %v2264
      %2873 = vmatprep.subr.bf16.mxu0 0
      %2874 = vmatpush1.bf16.msra.mxu0 %v2265
      %2875 = vmatprep.subr.bf16.mxu0 0
      %2876 = vmatpush1.bf16.msra.mxu0 %v2266
      %2877 = vmatprep.subr.bf16.mxu0 0
      %2878 = vmatpush1.bf16.msra.mxu0 %v2267
      %2879 = vmatprep.subr.bf16.mxu0 0
      %2880 = vmatpush1.bf16.msra.mxu0 %v2268
      %2881 = vmatprep.mubr.bf16.mxu0 %v1198
      %2882 = vmatmul.mubr.bf16.gmra.mrb[0].mxu0 %v1197
      %v2883 = vpop.f32.mrb[0].mxu0
      %v2884 = vadd.f32 %v2819, %v2883
      %v2885 = vpop.f32.mrb[0].mxu0
      %v2886 = vpop.f32.mrb[0].mxu0
      %v2887 = vadd.f32 %v2822, %v2886
      %v2888 = vpop.f32.mrb[0].mxu0
      %2889 = vmatprep.mubr.bf16.mxu0 %v1223
      %2890 = vmatmul.mubr.bf16.gmra.mrb[0].mxu0 %v1222
      %v2891 = vpop.f32.mrb[0].mxu0
      %v2892 = vadd.f32 %v2827, %v2891
      %v2893 = vpop.f32.mrb[0].mxu0
      %v2894 = vpop.f32.mrb[0].mxu0
      %v2895 = vadd.f32 %v2830, %v2894
      %v2896 = vpop.f32.mrb[0].mxu0
      %2897 = vmatprep.mubr.bf16.mxu0 %v1248
      %2898 = vmatmul.mubr.bf16.gmra.mrb[0].mxu0 %v1247
      %v2899 = vpop.f32.mrb[0].mxu0
      %v2900 = vadd.f32 %v2835, %v2899
      %v2901 = vpop.f32.mrb[0].mxu0
      %v2902 = vpop.f32.mrb[0].mxu0
      %v2903 = vadd.f32 %v2838, %v2902
      %v2904 = vpop.f32.mrb[0].mxu0
      %2905 = vmatprep.mubr.bf16.mxu0 %v1273
      %2906 = vmatmul.mubr.bf16.gmra.mrb[0].mxu0 %v1272
      %v2907 = vpop.f32.mrb[0].mxu0
      %v2908 = vadd.f32 %v2843, %v2907
      %v2909 = vpop.f32.mrb[0].mxu0
      %v2910 = vpop.f32.mrb[0].mxu0
      %v2911 = vadd.f32 %v2846, %v2910
      %v2912 = vpop.f32.mrb[0].mxu0
      %2913 = vdwg.mxu0
      %2914 = vmatprep.subr.bf16.mxu0 0
      %2915 = vmatpush1.bf16.msra.mxu0 %v2269
      %2916 = vmatprep.subr.bf16.mxu0 0
      %2917 = vmatpush1.bf16.msra.mxu0 %v2270
      %2918 = vmatprep.subr.bf16.mxu0 0
      %2919 = vmatpush1.bf16.msra.mxu0 %v2271
      %2920 = vmatprep.subr.bf16.mxu0 0
      %2921 = vmatpush1.bf16.msra.mxu0 %v2272
      %2922 = vmatprep.subr.bf16.mxu0 0
      %2923 = vmatpush1.bf16.msra.mxu0 %v2273
      %2924 = vmatprep.subr.bf16.mxu0 0
      %2925 = vmatpush1.bf16.msra.mxu0 %v2274
      %2926 = vmatprep.subr.bf16.mxu0 0
      %2927 = vmatpush1.bf16.msra.mxu0 %v2275
      %2928 = vmatprep.subr.bf16.mxu0 0
      %2929 = vmatpush1.bf16.msra.mxu0 %v2276
      %2930 = vmatprep.subr.bf16.mxu0 0
      %2931 = vmatpush1.bf16.msra.mxu0 %v2277
      %2932 = vmatprep.subr.bf16.mxu0 0
      %2933 = vmatpush1.bf16.msra.mxu0 %v2278
      %2934 = vmatprep.subr.bf16.mxu0 0
      %2935 = vmatpush1.bf16.msra.mxu0 %v2279
      %2936 = vmatprep.subr.bf16.mxu0 0
      %2937 = vmatpush1.bf16.msra.mxu0 %v2280
      %2938 = vmatprep.subr.bf16.mxu0 0
      %2939 = vmatpush1.bf16.msra.mxu0 %v2281
      %2940 = vmatprep.subr.bf16.mxu0 0
      %2941 = vmatpush1.bf16.msra.mxu0 %v2282
      %2942 = vmatprep.subr.bf16.mxu0 0
      %2943 = vmatpush1.bf16.msra.mxu0 %v2283
      %2944 = vmatprep.subr.bf16.mxu0 0
      %2945 = vmatpush1.bf16.msra.mxu0 %v2284
      %2946 = vmatprep.mubr.bf16.mxu0 %v1200
      %2947 = vmatmul.mubr.bf16.gmra.mrb[0].mxu0 %v1199
      %v2948 = vpop.f32.mrb[0].mxu0
      %v2949 = vadd.f32 %v2884, %v2948
      %v2950 = vpop.f32.mrb[0].mxu0
      %v2951 = vpop.f32.mrb[0].mxu0
      %v2952 = vadd.f32 %v2887, %v2951
      %v2953 = vpop.f32.mrb[0].mxu0
      %2954 = vmatprep.mubr.bf16.mxu0 %v1225
      %2955 = vmatmul.mubr.bf16.gmra.mrb[0].mxu0 %v1224
      %v2956 = vpop.f32.mrb[0].mxu0
      %v2957 = vadd.f32 %v2892, %v2956
      %v2958 = vpop.f32.mrb[0].mxu0
      %v2959 = vpop.f32.mrb[0].mxu0
      %v2960 = vadd.f32 %v2895, %v2959
      %v2961 = vpop.f32.mrb[0].mxu0
      %2962 = vmatprep.mubr.bf16.mxu0 %v1250
      %2963 = vmatmul.mubr.bf16.gmra.mrb[0].mxu0 %v1249
      %v2964 = vpop.f32.mrb[0].mxu0
      %v2965 = vadd.f32 %v2900, %v2964
      %v2966 = vpop.f32.mrb[0].mxu0
      %v2967 = vpop.f32.mrb[0].mxu0
      %v2968 = vadd.f32 %v2903, %v2967
      %v2969 = vpop.f32.mrb[0].mxu0
      %2970 = vmatprep.mubr.bf16.mxu0 %v1275
      %2971 = vmatmul.mubr.bf16.gmra.mrb[0].mxu0 %v1274
      %v2972 = vpop.f32.mrb[0].mxu0
      %v2973 = vadd.f32 %v2908, %v2972
      %v2974 = vpop.f32.mrb[0].mxu0
      %v2975 = vpop.f32.mrb[0].mxu0
      %v2976 = vadd.f32 %v2911, %v2975
      %v2977 = vpop.f32.mrb[0].mxu0
      %2978 = vdwg.mxu0
      %2979 = vmatprep.subr.bf16.mxu0 0
      %2980 = vmatpush1.bf16.msra.mxu0 %v2285
      %2981 = vmatprep.subr.bf16.mxu0 0
      %2982 = vmatpush1.bf16.msra.mxu0 %v2286
      %2983 = vmatprep.subr.bf16.mxu0 0
      %2984 = vmatpush1.bf16.msra.mxu0 %v2287
      %2985 = vmatprep.subr.bf16.mxu0 0
      %2986 = vmatpush1.bf16.msra.mxu0 %v2288
      %2987 = vmatprep.subr.bf16.mxu0 0
      %2988 = vmatpush1.bf16.msra.mxu0 %v2289
      %2989 = vmatprep.subr.bf16.mxu0 0
      %2990 = vmatpush1.bf16.msra.mxu0 %v2290
      %2991 = vmatprep.subr.bf16.mxu0 0
      %2992 = vmatpush1.bf16.msra.mxu0 %v2291
      %2993 = vmatprep.subr.bf16.mxu0 0
      %2994 = vmatpush1.bf16.msra.mxu0 %v2292
      %2995 = vmatprep.subr.bf16.mxu0 0
      %2996 = vmatpush1.bf16.msra.mxu0 %v2293
      %2997 = vmatprep.subr.bf16.mxu0 0
      %2998 = vmatpush1.bf16.msra.mxu0 %v2294
      %2999 = vmatprep.subr.bf16.mxu0 0
      %3000 = vmatpush1.bf16.msra.mxu0 %v2295
      %3001 = vmatprep.subr.bf16.mxu0 0
      %3002 = vmatpush1.bf16.msra.mxu0 %v2296
      %3003 = vmatprep.subr.bf16.mxu0 0
      %3004 = vmatpush1.bf16.msra.mxu0 %v2297
      %3005 = vmatprep.subr.bf16.mxu0 0
      %3006 = vmatpush1.bf16.msra.mxu0 %v2298
      %3007 = vmatprep.subr.bf16.mxu0 0
      %3008 = vmatpush1.bf16.msra.mxu0 %v2299
      %3009 = vmatprep.subr.bf16.mxu0 0
      %3010 = vmatpush1.bf16.msra.mxu0 %v2300
      %3011 = vmatprep.mubr.bf16.mxu0 %v1202
      %3012 = vmatmul.mubr.bf16.gmra.mrb[0].mxu0 %v1201
      %v3013 = vpop.f32.mrb[0].mxu0
      %v3014 = vadd.f32 %v2949, %v3013
      %v3015 = vpop.f32.mrb[0].mxu0
      %v3016 = vpop.f32.mrb[0].mxu0
      %v3017 = vadd.f32 %v2952, %v3016
      %v3018 = vpop.f32.mrb[0].mxu0
      %3019 = vmatprep.mubr.bf16.mxu0 %v1227
      %3020 = vmatmul.mubr.bf16.gmra.mrb[0].mxu0 %v1226
      %v3021 = vpop.f32.mrb[0].mxu0
      %v3022 = vadd.f32 %v2957, %v3021
      %v3023 = vpop.f32.mrb[0].mxu0
      %v3024 = vpop.f32.mrb[0].mxu0
      %v3025 = vadd.f32 %v2960, %v3024
      %v3026 = vpop.f32.mrb[0].mxu0
      %3027 = vmatprep.mubr.bf16.mxu0 %v1252
      %3028 = vmatmul.mubr.bf16.gmra.mrb[0].mxu0 %v1251
      %v3029 = vpop.f32.mrb[0].mxu0
      %v3030 = vadd.f32 %v2965, %v3029
      %v3031 = vpop.f32.mrb[0].mxu0
      %v3032 = vpop.f32.mrb[0].mxu0
      %v3033 = vadd.f32 %v2968, %v3032
      %v3034 = vpop.f32.mrb[0].mxu0
      %3035 = vmatprep.mubr.bf16.mxu0 %v1277
      %3036 = vmatmul.mubr.bf16.gmra.mrb[0].mxu0 %v1276
      %v3037 = vpop.f32.mrb[0].mxu0
      %v3038 = vadd.f32 %v2973, %v3037
      %v3039 = vpop.f32.mrb[0].mxu0
      %v3040 = vpop.f32.mrb[0].mxu0
      %v3041 = vadd.f32 %v2976, %v3040
      %v3042 = vpop.f32.mrb[0].mxu0
      %3043 = vdwg.mxu0
      %3044 = vmatprep.subr.bf16.mxu0 0
      %3045 = vmatpush1.bf16.msra.mxu0 %v2301
      %3046 = vmatprep.subr.bf16.mxu0 0
      %3047 = vmatpush1.bf16.msra.mxu0 %v2302
      %3048 = vmatprep.subr.bf16.mxu0 0
      %3049 = vmatpush1.bf16.msra.mxu0 %v2303
      %3050 = vmatprep.subr.bf16.mxu0 0
      %3051 = vmatpush1.bf16.msra.mxu0 %v2304
      %3052 = vmatprep.subr.bf16.mxu0 0
      %3053 = vmatpush1.bf16.msra.mxu0 %v2305
      %3054 = vmatprep.subr.bf16.mxu0 0
      %3055 = vmatpush1.bf16.msra.mxu0 %v2306
      %3056 = vmatprep.subr.bf16.mxu0 0
      %3057 = vmatpush1.bf16.msra.mxu0 %v2307
      %3058 = vmatprep.subr.bf16.mxu0 0
      %3059 = vmatpush1.bf16.msra.mxu0 %v2308
      %3060 = vmatprep.subr.bf16.mxu0 0
      %3061 = vmatpush1.bf16.msra.mxu0 %v2309
      %3062 = vmatprep.subr.bf16.mxu0 0
      %3063 = vmatpush1.bf16.msra.mxu0 %v2310
      %3064 = vmatprep.subr.bf16.mxu0 0
      %3065 = vmatpush1.bf16.msra.mxu0 %v2311
      %3066 = vmatprep.subr.bf16.mxu0 0
      %3067 = vmatpush1.bf16.msra.mxu0 %v2312
      %3068 = vmatprep.subr.bf16.mxu0 0
      %3069 = vmatpush1.bf16.msra.mxu0 %v2313
      %3070 = vmatprep.subr.bf16.mxu0 0
      %3071 = vmatpush1.bf16.msra.mxu0 %v2314
      %3072 = vmatprep.subr.bf16.mxu0 0
      %3073 = vmatpush1.bf16.msra.mxu0 %v2315
      %3074 = vmatprep.subr.bf16.mxu0 0
      %3075 = vmatpush1.bf16.msra.mxu0 %v2316
      %3076 = vmatprep.mubr.bf16.mxu0 %v1204
      %3077 = vmatmul.mubr.bf16.gmra.mrb[0].mxu0 %v1203
      %v3078 = vpop.f32.mrb[0].mxu0
      %v3079 = vadd.f32 %v3014, %v3078
      %v3080 = vpop.f32.mrb[0].mxu0
      %v3081 = vpop.f32.mrb[0].mxu0
      %v3082 = vadd.f32 %v3017, %v3081
      %v3083 = vpop.f32.mrb[0].mxu0
      %3084 = vmatprep.mubr.bf16.mxu0 %v1229
      %3085 = vmatmul.mubr.bf16.gmra.mrb[0].mxu0 %v1228
      %v3086 = vpop.f32.mrb[0].mxu0
      %v3087 = vadd.f32 %v3022, %v3086
      %v3088 = vpop.f32.mrb[0].mxu0
      %v3089 = vpop.f32.mrb[0].mxu0
      %v3090 = vadd.f32 %v3025, %v3089
      %v3091 = vpop.f32.mrb[0].mxu0
      %3092 = vmatprep.mubr.bf16.mxu0 %v1254
      %3093 = vmatmul.mubr.bf16.gmra.mrb[0].mxu0 %v1253
      %v3094 = vpop.f32.mrb[0].mxu0
      %v3095 = vadd.f32 %v3030, %v3094
      %v3096 = vpop.f32.mrb[0].mxu0
      %v3097 = vpop.f32.mrb[0].mxu0
      %v3098 = vadd.f32 %v3033, %v3097
      %v3099 = vpop.f32.mrb[0].mxu0
      %3100 = vmatprep.mubr.bf16.mxu0 %v1279
      %3101 = vmatmul.mubr.bf16.gmra.mrb[0].mxu0 %v1278
      %v3102 = vpop.f32.mrb[0].mxu0
      %v3103 = vadd.f32 %v3038, %v3102
      %v3104 = vpop.f32.mrb[0].mxu0
      %v3105 = vpop.f32.mrb[0].mxu0
      %v3106 = vadd.f32 %v3041, %v3105
      %v3107 = vpop.f32.mrb[0].mxu0
      %3108 = vdwg.mxu0
      %3109 = vmatprep.subr.bf16.mxu0 0
      %3110 = vmatpush1.bf16.msra.mxu0 %v2317
      %3111 = vmatprep.subr.bf16.mxu0 0
      %3112 = vmatpush1.bf16.msra.mxu0 %v2318
      %3113 = vmatprep.subr.bf16.mxu0 0
      %3114 = vmatpush1.bf16.msra.mxu0 %v2319
      %3115 = vmatprep.subr.bf16.mxu0 0
      %3116 = vmatpush1.bf16.msra.mxu0 %v2320
      %3117 = vmatprep.subr.bf16.mxu0 0
      %3118 = vmatpush1.bf16.msra.mxu0 %v2321
      %3119 = vmatprep.subr.bf16.mxu0 0
      %3120 = vmatpush1.bf16.msra.mxu0 %v2322
      %3121 = vmatprep.subr.bf16.mxu0 0
      %3122 = vmatpush1.bf16.msra.mxu0 %v2323
      %3123 = vmatprep.subr.bf16.mxu0 0
      %3124 = vmatpush1.bf16.msra.mxu0 %v2324
      %3125 = vmatprep.subr.bf16.mxu0 0
      %3126 = vmatpush1.bf16.msra.mxu0 %v2325
      %3127 = vmatprep.subr.bf16.mxu0 0
      %3128 = vmatpush1.bf16.msra.mxu0 %v2326
      %3129 = vmatprep.subr.bf16.mxu0 0
      %3130 = vmatpush1.bf16.msra.mxu0 %v2327
      %3131 = vmatprep.subr.bf16.mxu0 0
      %3132 = vmatpush1.bf16.msra.mxu0 %v2328
      %3133 = vmatprep.subr.bf16.mxu0 0
      %3134 = vmatpush1.bf16.msra.mxu0 %v2329
      %3135 = vmatprep.subr.bf16.mxu0 0
      %3136 = vmatpush1.bf16.msra.mxu0 %v2330
      %3137 = vmatprep.subr.bf16.mxu0 0
      %3138 = vmatpush1.bf16.msra.mxu0 %v2331
      %3139 = vmatprep.subr.bf16.mxu0 0
      %3140 = vmatpush1.bf16.msra.mxu0 %v2332
      %3141 = vmatprep.mubr.bf16.mxu0 %v1206
      %3142 = vmatmul.mubr.bf16.gmra.mrb[0].mxu0 %v1205
      %v3143 = vpop.f32.mrb[0].mxu0
      %v3144 = vadd.f32 %v3079, %v3143
      %v3145 = vpop.f32.mrb[0].mxu0
      %v3146 = vpop.f32.mrb[0].mxu0
      %v3147 = vadd.f32 %v3082, %v3146
      %v3148 = vpop.f32.mrb[0].mxu0
      %3149 = vmatprep.mubr.bf16.mxu0 %v1231
      %3150 = vmatmul.mubr.bf16.gmra.mrb[0].mxu0 %v1230
      %v3151 = vpop.f32.mrb[0].mxu0
      %v3152 = vadd.f32 %v3087, %v3151
      %v3153 = vpop.f32.mrb[0].mxu0
      %v3154 = vpop.f32.mrb[0].mxu0
      %v3155 = vadd.f32 %v3090, %v3154
      %v3156 = vpop.f32.mrb[0].mxu0
      %3157 = vmatprep.mubr.bf16.mxu0 %v1256
      %3158 = vmatmul.mubr.bf16.gmra.mrb[0].mxu0 %v1255
      %v3159 = vpop.f32.mrb[0].mxu0
      %v3160 = vadd.f32 %v3095, %v3159
      %v3161 = vpop.f32.mrb[0].mxu0
      %v3162 = vpop.f32.mrb[0].mxu0
      %v3163 = vadd.f32 %v3098, %v3162
      %v3164 = vpop.f32.mrb[0].mxu0
      %3165 = vmatprep.mubr.bf16.mxu0 %v1281
      %3166 = vmatmul.mubr.bf16.gmra.mrb[0].mxu0 %v1280
      %v3167 = vpop.f32.mrb[0].mxu0
      %v3168 = vadd.f32 %v3103, %v3167
      %v3169 = vpop.f32.mrb[0].mxu0
      %v3170 = vpop.f32.mrb[0].mxu0
      %v3171 = vadd.f32 %v3106, %v3170
      %v3172 = vpop.f32.mrb[0].mxu0
      %3173 = vdwg.mxu0
      %3174 = vmatprep.subr.bf16.mxu0 0
      %3175 = vmatpush1.bf16.msra.mxu0 %v2333
      %3176 = vmatprep.subr.bf16.mxu0 0
      %3177 = vmatpush1.bf16.msra.mxu0 %v2334
      %3178 = vmatprep.subr.bf16.mxu0 0
      %3179 = vmatpush1.bf16.msra.mxu0 %v2335
      %3180 = vmatprep.subr.bf16.mxu0 0
      %3181 = vmatpush1.bf16.msra.mxu0 %v2336
      %3182 = vmatprep.subr.bf16.mxu0 0
      %3183 = vmatpush1.bf16.msra.mxu0 %v2337
      %3184 = vmatprep.subr.bf16.mxu0 0
      %3185 = vmatpush1.bf16.msra.mxu0 %v2338
      %3186 = vmatprep.subr.bf16.mxu0 0
      %3187 = vmatpush1.bf16.msra.mxu0 %v2339
      %3188 = vmatprep.subr.bf16.mxu0 0
      %3189 = vmatpush1.bf16.msra.mxu0 %v2340
      %3190 = vmatprep.subr.bf16.mxu0 0
      %3191 = vmatpush1.bf16.msra.mxu0 %v2341
      %3192 = vmatprep.subr.bf16.mxu0 0
      %3193 = vmatpush1.bf16.msra.mxu0 %v2342
      %3194 = vmatprep.subr.bf16.mxu0 0
      %3195 = vmatpush1.bf16.msra.mxu0 %v2343
      %3196 = vmatprep.subr.bf16.mxu0 0
      %3197 = vmatpush1.bf16.msra.mxu0 %v2344
      %3198 = vmatprep.subr.bf16.mxu0 0
      %3199 = vmatpush1.bf16.msra.mxu0 %v2345
      %3200 = vmatprep.subr.bf16.mxu0 0
      %3201 = vmatpush1.bf16.msra.mxu0 %v2346
      %3202 = vmatprep.subr.bf16.mxu0 0
      %3203 = vmatpush1.bf16.msra.mxu0 %v2347
      %3204 = vmatprep.subr.bf16.mxu0 0
      %3205 = vmatpush1.bf16.msra.mxu0 %v2348
      %3206 = vmatprep.mubr.bf16.mxu0 %v1208
      %3207 = vmatmul.mubr.bf16.gmra.mrb[0].mxu0 %v1207
      %v3208 = vpop.f32.mrb[0].mxu0
      %v3209 = vadd.f32 %v3144, %v3208
      %v3210 = vpop.f32.mrb[0].mxu0
      %v3211 = vpop.f32.mrb[0].mxu0
      %v3212 = vadd.f32 %v3147, %v3211
      %v3213 = vpop.f32.mrb[0].mxu0
      %3214 = vmatprep.mubr.bf16.mxu0 %v1233
      %3215 = vmatmul.mubr.bf16.gmra.mrb[0].mxu0 %v1232
      %v3216 = vpop.f32.mrb[0].mxu0
      %v3217 = vadd.f32 %v3152, %v3216
      %v3218 = vpop.f32.mrb[0].mxu0
      %v3219 = vpop.f32.mrb[0].mxu0
      %v3220 = vadd.f32 %v3155, %v3219
      %v3221 = vpop.f32.mrb[0].mxu0
      %3222 = vmatprep.mubr.bf16.mxu0 %v1258
      %3223 = vmatmul.mubr.bf16.gmra.mrb[0].mxu0 %v1257
      %v3224 = vpop.f32.mrb[0].mxu0
      %v3225 = vadd.f32 %v3160, %v3224
      %v3226 = vpop.f32.mrb[0].mxu0
      %v3227 = vpop.f32.mrb[0].mxu0
      %v3228 = vadd.f32 %v3163, %v3227
      %v3229 = vpop.f32.mrb[0].mxu0
      %3230 = vmatprep.mubr.bf16.mxu0 %v1283
      %3231 = vmatmul.mubr.bf16.gmra.mrb[0].mxu0 %v1282
      %v3232 = vpop.f32.mrb[0].mxu0
      %v3233 = vadd.f32 %v3168, %v3232
      %v3234 = vpop.f32.mrb[0].mxu0
      %v3235 = vpop.f32.mrb[0].mxu0
      %v3236 = vadd.f32 %v3171, %v3235
      %v3237 = vpop.f32.mrb[0].mxu0
      %3238 = vdwg.mxu0
      %3239 = vmatprep.subr.bf16.mxu0 0
      %3240 = vmatpush1.bf16.msra.mxu0 %v2349
      %3241 = vmatprep.subr.bf16.mxu0 0
      %3242 = vmatpush1.bf16.msra.mxu0 %v2350
      %3243 = vmatprep.subr.bf16.mxu0 0
      %3244 = vmatpush1.bf16.msra.mxu0 %v2351
      %3245 = vmatprep.subr.bf16.mxu0 0
      %3246 = vmatpush1.bf16.msra.mxu0 %v2352
      %3247 = vmatprep.subr.bf16.mxu0 0
      %3248 = vmatpush1.bf16.msra.mxu0 %v2353
      %3249 = vmatprep.subr.bf16.mxu0 0
      %3250 = vmatpush1.bf16.msra.mxu0 %v2354
      %3251 = vmatprep.subr.bf16.mxu0 0
      %3252 = vmatpush1.bf16.msra.mxu0 %v2355
      %3253 = vmatprep.subr.bf16.mxu0 0
      %3254 = vmatpush1.bf16.msra.mxu0 %v2356
      %3255 = vmatprep.subr.bf16.mxu0 0
      %3256 = vmatpush1.bf16.msra.mxu0 %v2357
      %3257 = vmatprep.subr.bf16.mxu0 0
      %3258 = vmatpush1.bf16.msra.mxu0 %v2358
      %3259 = vmatprep.subr.bf16.mxu0 0
      %3260 = vmatpush1.bf16.msra.mxu0 %v2359
      %3261 = vmatprep.subr.bf16.mxu0 0
      %3262 = vmatpush1.bf16.msra.mxu0 %v2360
      %3263 = vmatprep.subr.bf16.mxu0 0
      %3264 = vmatpush1.bf16.msra.mxu0 %v2361
      %3265 = vmatprep.subr.bf16.mxu0 0
      %3266 = vmatpush1.bf16.msra.mxu0 %v2362
      %3267 = vmatprep.subr.bf16.mxu0 0
      %3268 = vmatpush1.bf16.msra.mxu0 %v2363
      %3269 = vmatprep.subr.bf16.mxu0 0
      %3270 = vmatpush1.bf16.msra.mxu0 %v2364
      %3271 = vmatprep.mubr.bf16.mxu0 %v1210
      %3272 = vmatmul.mubr.bf16.gmra.mrb[0].mxu0 %v1209
      %v3273 = vpop.f32.mrb[0].mxu0
      %v3274 = vadd.f32 %v3209, %v3273
      %v3275 = vpop.f32.mrb[0].mxu0
      %v3276 = vpop.f32.mrb[0].mxu0
      %v3277 = vadd.f32 %v3212, %v3276
      %v3278 = vpop.f32.mrb[0].mxu0
      %3279 = vmatprep.mubr.bf16.mxu0 %v1235
      %3280 = vmatmul.mubr.bf16.gmra.mrb[0].mxu0 %v1234
      %v3281 = vpop.f32.mrb[0].mxu0
      %v3282 = vadd.f32 %v3217, %v3281
      %v3283 = vpop.f32.mrb[0].mxu0
      %v3284 = vpop.f32.mrb[0].mxu0
      %v3285 = vadd.f32 %v3220, %v3284
      %v3286 = vpop.f32.mrb[0].mxu0
      %3287 = vmatprep.mubr.bf16.mxu0 %v1260
      %3288 = vmatmul.mubr.bf16.gmra.mrb[0].mxu0 %v1259
      %v3289 = vpop.f32.mrb[0].mxu0
      %v3290 = vadd.f32 %v3225, %v3289
      %v3291 = vpop.f32.mrb[0].mxu0
      %v3292 = vpop.f32.mrb[0].mxu0
      %v3293 = vadd.f32 %v3228, %v3292
      %v3294 = vpop.f32.mrb[0].mxu0
      %3295 = vmatprep.mubr.bf16.mxu0 %v1285
      %3296 = vmatmul.mubr.bf16.gmra.mrb[0].mxu0 %v1284
      %v3297 = vpop.f32.mrb[0].mxu0
      %v3298 = vadd.f32 %v3233, %v3297
      %v3299 = vpop.f32.mrb[0].mxu0
      %v3300 = vpop.f32.mrb[0].mxu0
      %v3301 = vadd.f32 %v3236, %v3300
      %v3302 = vpop.f32.mrb[0].mxu0
      %3303 = vdwg.mxu0
      %3304 = vmatprep.subr.bf16.mxu0 0
      %3305 = vmatpush1.bf16.msra.mxu0 %v2365
      %3306 = vmatprep.subr.bf16.mxu0 0
      %3307 = vmatpush1.bf16.msra.mxu0 %v2366
      %3308 = vmatprep.subr.bf16.mxu0 0
      %3309 = vmatpush1.bf16.msra.mxu0 %v2367
      %3310 = vmatprep.subr.bf16.mxu0 0
      %3311 = vmatpush1.bf16.msra.mxu0 %v2368
      %3312 = vmatprep.subr.bf16.mxu0 0
      %3313 = vmatpush1.bf16.msra.mxu0 %v2369
      %3314 = vmatprep.subr.bf16.mxu0 0
      %3315 = vmatpush1.bf16.msra.mxu0 %v2370
      %3316 = vmatprep.subr.bf16.mxu0 0
      %3317 = vmatpush1.bf16.msra.mxu0 %v2371
      %3318 = vmatprep.subr.bf16.mxu0 0
      %3319 = vmatpush1.bf16.msra.mxu0 %v2372
      %3320 = vmatprep.subr.bf16.mxu0 0
      %3321 = vmatpush1.bf16.msra.mxu0 %v2373
      %3322 = vmatprep.subr.bf16.mxu0 0
      %3323 = vmatpush1.bf16.msra.mxu0 %v2374
      %3324 = vmatprep.subr.bf16.mxu0 0
      %3325 = vmatpush1.bf16.msra.mxu0 %v2375
      %3326 = vmatprep.subr.bf16.mxu0 0
      %3327 = vmatpush1.bf16.msra.mxu0 %v2376
      %3328 = vmatprep.subr.bf16.mxu0 0
      %3329 = vmatpush1.bf16.msra.mxu0 %v2377
      %3330 = vmatprep.subr.bf16.mxu0 0
      %3331 = vmatpush1.bf16.msra.mxu0 %v2378
      %3332 = vmatprep.subr.bf16.mxu0 0
      %3333 = vmatpush1.bf16.msra.mxu0 %v2379
      %3334 = vmatprep.subr.bf16.mxu0 0
      %3335 = vmatpush1.bf16.msra.mxu0 %v2380
      %3336 = vmatprep.mubr.bf16.mxu0 %v1212
      %3337 = vmatmul.mubr.bf16.gmra.mrb[0].mxu0 %v1211
      %v3338 = vpop.f32.mrb[0].mxu0
      %v3339 = vadd.f32 %v3274, %v3338
      %v3340 = vpop.f32.mrb[0].mxu0
      %v3341 = vpop.f32.mrb[0].mxu0
      %v3342 = vadd.f32 %v3277, %v3341
      %v3343 = vpop.f32.mrb[0].mxu0
      %3344 = vmatprep.mubr.bf16.mxu0 %v1237
      %3345 = vmatmul.mubr.bf16.gmra.mrb[0].mxu0 %v1236
      %v3346 = vpop.f32.mrb[0].mxu0
      %v3347 = vadd.f32 %v3282, %v3346
      %v3348 = vpop.f32.mrb[0].mxu0
      %v3349 = vpop.f32.mrb[0].mxu0
      %v3350 = vadd.f32 %v3285, %v3349
      %v3351 = vpop.f32.mrb[0].mxu0
      %3352 = vmatprep.mubr.bf16.mxu0 %v1262
      %3353 = vmatmul.mubr.bf16.gmra.mrb[0].mxu0 %v1261
      %v3354 = vpop.f32.mrb[0].mxu0
      %v3355 = vadd.f32 %v3290, %v3354
      %v3356 = vpop.f32.mrb[0].mxu0
      %v3357 = vpop.f32.mrb[0].mxu0
      %v3358 = vadd.f32 %v3293, %v3357
      %v3359 = vpop.f32.mrb[0].mxu0
      %3360 = vmatprep.mubr.bf16.mxu0 %v1287
      %3361 = vmatmul.mubr.bf16.gmra.mrb[0].mxu0 %v1286
      %v3362 = vpop.f32.mrb[0].mxu0
      %v3363 = vadd.f32 %v3298, %v3362
      %v3364 = vpop.f32.mrb[0].mxu0
      %v3365 = vpop.f32.mrb[0].mxu0
      %v3366 = vadd.f32 %v3301, %v3365
      %v3367 = vpop.f32.mrb[0].mxu0
      %3368 = vdwg.mxu0
      %3369 = vmatprep.subr.bf16.mxu0 0
      %3370 = vmatpush1.bf16.msra.mxu0 %v2381
      %3371 = vmatprep.subr.bf16.mxu0 0
      %3372 = vmatpush1.bf16.msra.mxu0 %v2382
      %3373 = vmatprep.subr.bf16.mxu0 0
      %3374 = vmatpush1.bf16.msra.mxu0 %v2383
      %3375 = vmatprep.subr.bf16.mxu0 0
      %3376 = vmatpush1.bf16.msra.mxu0 %v2384
      %3377 = vmatprep.subr.bf16.mxu0 0
      %3378 = vmatpush1.bf16.msra.mxu0 %v2385
      %3379 = vmatprep.subr.bf16.mxu0 0
      %3380 = vmatpush1.bf16.msra.mxu0 %v2386
      %3381 = vmatprep.subr.bf16.mxu0 0
      %3382 = vmatpush1.bf16.msra.mxu0 %v2387
      %3383 = vmatprep.subr.bf16.mxu0 0
      %3384 = vmatpush1.bf16.msra.mxu0 %v2388
      %3385 = vmatprep.subr.bf16.mxu0 0
      %3386 = vmatpush1.bf16.msra.mxu0 0
      %3387 = vmatprep.subr.bf16.mxu0 0
      %3388 = vmatpush1.bf16.msra.mxu0 0
      %3389 = vmatprep.subr.bf16.mxu0 0
      %3390 = vmatpush1.bf16.msra.mxu0 0
      %3391 = vmatprep.subr.bf16.mxu0 0
      %3392 = vmatpush1.bf16.msra.mxu0 0
      %3393 = vmatprep.subr.bf16.mxu0 0
      %3394 = vmatpush1.bf16.msra.mxu0 0
      %3395 = vmatprep.subr.bf16.mxu0 0
      %3396 = vmatpush1.bf16.msra.mxu0 0
      %3397 = vmatprep.subr.bf16.mxu0 0
      %3398 = vmatpush1.bf16.msra.mxu0 0
      %3399 = vmatprep.subr.bf16.mxu0 0
      %3400 = vmatpush1.bf16.msra.mxu0 0
      %3401 = vmatprep.mubr.bf16.mxu0 0
      %3402 = vmatmul.mubr.bf16.gmra.mrb[0].mxu0 %v1213
      %v3403 = vpop.f32.mrb[0].mxu0
      %v3404 = vadd.f32 %v3339, %v3403
      %v3405 = vpop.f32.mrb[0].mxu0
      %v3406 = vpop.f32.mrb[0].mxu0
      %v3407 = vadd.f32 %v3342, %v3406
      %v3408 = vpop.f32.mrb[0].mxu0
      %3409 = vmatprep.mubr.bf16.mxu0 0
      %3410 = vmatmul.mubr.bf16.gmra.mrb[0].mxu0 %v1238
      %v3411 = vpop.f32.mrb[0].mxu0
      %v3412 = vadd.f32 %v3347, %v3411
      %v3413 = vpop.f32.mrb[0].mxu0
      %v3414 = vpop.f32.mrb[0].mxu0
      %v3415 = vadd.f32 %v3350, %v3414
      %v3416 = vpop.f32.mrb[0].mxu0
      %3417 = vmatprep.mubr.bf16.mxu0 0
      %3418 = vmatmul.mubr.bf16.gmra.mrb[0].mxu0 %v1263
      %v3419 = vpop.f32.mrb[0].mxu0
      %v3420 = vadd.f32 %v3355, %v3419
      %v3421 = vpop.f32.mrb[0].mxu0
      %v3422 = vpop.f32.mrb[0].mxu0
      %v3423 = vadd.f32 %v3358, %v3422
      %v3424 = vpop.f32.mrb[0].mxu0
      %3425 = vmatprep.mubr.bf16.mxu0 0
      %3426 = vmatmul.mubr.bf16.gmra.mrb[0].mxu0 %v1288
      %v3427 = vpop.f32.mrb[0].mxu0
      %v3428 = vadd.f32 %v3363, %v3427
      %v3429 = vpop.f32.mrb[0].mxu0
      %v3430 = vpop.f32.mrb[0].mxu0
      %v3431 = vadd.f32 %v3366, %v3430
      %v3432 = vpop.f32.mrb[0].mxu0
      %3433 = vdwg.mxu0
      %v3434 = vadd.f32 %v373, %v3404
      %v3435 = vadd.f32 %v374, %v3407
      %v3436 = vadd.f32 %v375, %v3412
      %v3437 = vadd.f32 %v376, %v3415
      %v3438 = vadd.f32 %v377, %v3420
      %v3439 = vadd.f32 %v378, %v3423
      %v3440 = vadd.f32 %v379, %v3428
      %v3441 = vadd.f32 %v380, %v3431
      %vm3442 = vcmask 130048
      %3443 = vst.msk [vmem:[#allocation2] sm:$0xff] %vm3442, %v3434
      %3444 = vst.msk [vmem:[#allocation2 + $0x8] sm:$0xff] %vm3442, %v3435
      %3445 = vst.msk [vmem:[#allocation2 + $0x10] sm:$0xff] %vm3442, %v3436
      %3446 = vst.msk [vmem:[#allocation2 + $0x18] sm:$0xff] %vm3442, %v3437
      %3447 = vst.msk [vmem:[#allocation2 + $0x20] sm:$0xff] %vm3442, %v3438
      %3448 = vst.msk [vmem:[#allocation2 + $0x28] sm:$0xff] %vm3442, %v3439
      %3449 = vst.msk [vmem:[#allocation2 + $0x30] sm:$0xff] %vm3442, %v3440
      %3450 = vst.msk [vmem:[#allocation2 + $0x38] sm:$0xff] %vm3442, %v3441
      // Predicated region
      $region53: #{gnn_forward.7} parent=47 // pred_check
        %p3451 = pneg %p360
      $region54: #{gnn_forward.7} parent=47 // pred_check_branch
        %3453 = sbr.rel (%p3451) target = $region56
      $region55: #{gnn_forward.7} parent=47 // pred_region
        %v3454 = vld [vmem:[%s351] sm:$0xf]
        %v3455 = vld [vmem:[%s351 + $0x4] sm:$0xf]
        %v3456 = vld [vmem:[%s351 + $0x8] sm:$0xf]
        %v3457 = vld [vmem:[%s351 + $0xc] sm:$0xf]
        %v3458 = vld [vmem:[%s351 + $0x10] sm:$0xf]
        %v3459 = vld [vmem:[%s351 + $0x14] sm:$0xf]
        %v3460 = vld [vmem:[%s351 + $0x18] sm:$0xf]
        %v3461 = vld [vmem:[%s351 + $0x1c] sm:$0xf]
        %v3462 = vld [vmem:[%s3] sm:$0xf]
        %v3463 = vld [vmem:[%s3 + $0x4] sm:$0xf]
        %v3472 = vunpack.c.l.b16 %v3454
        %v3473 = vunpack.c.l.b16 %v3455
        %v3474 = vunpack.c.l.b16 %v3456
        %v3475 = vunpack.c.l.b16 %v3457
        %v3476 = vunpack.c.l.b16 %v3458
        %v3477 = vunpack.c.l.b16 %v3459
        %v3478 = vunpack.c.l.b16 %v3460
        %v3479 = vunpack.c.l.b16 %v3461
        %v3480 = vpack.c.b16 %v3473, %v3472
        %v3481 = vpack.c.b16 %v3475, %v3474
        %v3482 = vpack.c.b16 %v3477, %v3476
        %v3483 = vpack.c.b16 %v3479, %v3478
        %v3486 = vunpack.c.l.b16 %v3462
        %v3487 = vunpack.c.l.b16 %v3463
        %v3488 = vpack.c.b16 %v3487, %v3486
        %v3491 = vsel %vm3442, %v3480, 0
        %v3494 = vsel %vm3442, %v3481, 0
        %v3497 = vsel %vm3442, %v3482, 0
        %v3500 = vsel %vm3442, %v3483, 0
        %3502 = vmatprep.subr.bf16.mxu0 0
        %3503 = vmatpush1.bf16.msra.mxu0 %v3488
        %3504 = vmatprep.subr.bf16.mxu0 0
        %3505 = vmatpush1.bf16.msra.mxu0 0
        %3506 = vmatprep.subr.bf16.mxu0 0
        %3507 = vmatpush1.bf16.msra.mxu0 0
        %3508 = vmatprep.subr.bf16.mxu0 0
        %3509 = vmatpush1.bf16.msra.mxu0 0
        %3510 = vmatprep.subr.bf16.mxu0 0
        %3511 = vmatpush1.bf16.msra.mxu0 0
        %3512 = vmatprep.subr.bf16.mxu0 0
        %3513 = vmatpush1.bf16.msra.mxu0 0
        %3514 = vmatprep.subr.bf16.mxu0 0
        %3515 = vmatpush1.bf16.msra.mxu0 0
        %3516 = vmatprep.subr.bf16.mxu0 0
        %3517 = vmatpush1.bf16.msra.mxu0 0
        %3518 = vmatprep.subr.bf16.mxu0 0
        %3519 = vmatpush1.bf16.msra.mxu0 0
        %3520 = vmatprep.subr.bf16.mxu0 0
        %3521 = vmatpush1.bf16.msra.mxu0 0
        %3522 = vmatprep.subr.bf16.mxu0 0
        %3523 = vmatpush1.bf16.msra.mxu0 0
        %3524 = vmatprep.subr.bf16.mxu0 0
        %3525 = vmatpush1.bf16.msra.mxu0 0
        %3526 = vmatprep.subr.bf16.mxu0 0
        %3527 = vmatpush1.bf16.msra.mxu0 0
        %3528 = vmatprep.subr.bf16.mxu0 0
        %3529 = vmatpush1.bf16.msra.mxu0 0
        %3530 = vmatprep.subr.bf16.mxu0 0
        %3531 = vmatpush1.bf16.msra.mxu0 0
        %3532 = vmatprep.subr.bf16.mxu0 0
        %3533 = vmatpush1.bf16.msra.mxu0 0
        %3534 = vmatprep.mubr.bf16.mxu0 0
        %3535 = vmatmul.mubr.bf16.gmra.mrb[0].mxu0 %v3491
        %v3536 = vpop.f32.mrb[0].mxu0
        %v3537 = vadd.f32 0.0, %v3536
        %v3538 = vpop.f32.mrb[0].mxu0
        %v3539 = vpop.f32.mrb[0].mxu0
        %v3540 = vadd.f32 0.0, %v3539
        %v3541 = vpop.f32.mrb[0].mxu0
        %3542 = vmatprep.mubr.bf16.mxu0 0
        %3543 = vmatmul.mubr.bf16.gmra.mrb[0].mxu0 %v3494
        %v3544 = vpop.f32.mrb[0].mxu0
        %v3545 = vadd.f32 0.0, %v3544
        %v3546 = vpop.f32.mrb[0].mxu0
        %v3547 = vpop.f32.mrb[0].mxu0
        %v3548 = vadd.f32 0.0, %v3547
        %v3549 = vpop.f32.mrb[0].mxu0
        %3550 = vmatprep.mubr.bf16.mxu0 0
        %3551 = vmatmul.mubr.bf16.gmra.mrb[0].mxu0 %v3497
        %v3552 = vpop.f32.mrb[0].mxu0
        %v3553 = vadd.f32 0.0, %v3552
        %v3554 = vpop.f32.mrb[0].mxu0
        %v3555 = vpop.f32.mrb[0].mxu0
        %v3556 = vadd.f32 0.0, %v3555
        %v3557 = vpop.f32.mrb[0].mxu0
        %3558 = vmatprep.mubr.bf16.mxu0 0
        %3559 = vmatmul.mubr.bf16.gmra.mrb[0].mxu0 %v3500
        %v3560 = vpop.f32.mrb[0].mxu0
        %v3561 = vadd.f32 0.0, %v3560
        %v3562 = vpop.f32.mrb[0].mxu0
        %v3563 = vpop.f32.mrb[0].mxu0
        %v3564 = vadd.f32 0.0, %v3563
        %v3565 = vpop.f32.mrb[0].mxu0
        %3566 = vdwg.mxu0
        %v3567 = vld [vmem:[#allocation2] sm:$0xff]
        %v3568 = vld [vmem:[#allocation2 + $0x8] sm:$0xff]
        %v3569 = vld [vmem:[#allocation2 + $0x10] sm:$0xff]
        %v3570 = vld [vmem:[#allocation2 + $0x18] sm:$0xff]
        %v3571 = vld [vmem:[#allocation2 + $0x20] sm:$0xff]
        %v3572 = vld [vmem:[#allocation2 + $0x28] sm:$0xff]
        %v3573 = vld [vmem:[#allocation2 + $0x30] sm:$0xff]
        %v3574 = vld [vmem:[#allocation2 + $0x38] sm:$0xff]
        %v3575 = vadd.f32 %v3567, %v3537
        %v3576 = vadd.f32 %v3568, %v3540
        %v3577 = vadd.f32 %v3569, %v3545
        %v3578 = vadd.f32 %v3570, %v3548
        %v3579 = vadd.f32 %v3571, %v3553
        %v3580 = vadd.f32 %v3572, %v3556
        %v3581 = vadd.f32 %v3573, %v3561
        %v3582 = vadd.f32 %v3574, %v3564
        %v3583 = vld [vmem:[%s4] sm:$0x1]
        %v3585 = vlaneseq
        %v3586 = vshrl.u32 %v3585, 7
        %v3587 = vsub.s32 0, %v3586
        %v3588 = vrot.slane %v3583, %v3587
        %v3590 = vadd.f32 %v3575, %v3588
        %v3591 = vadd.f32 %v3576, %v3588
        %v3592 = vadd.f32 %v3577, %v3588
        %v3593 = vadd.f32 %v3578, %v3588
        %v3594 = vadd.f32 %v3579, %v3588
        %v3595 = vadd.f32 %v3580, %v3588
        %v3596 = vadd.f32 %v3581, %v3588
        %v3597 = vadd.f32 %v3582, %v3588
        %v3598 = vmax.f32 %v3590, 0.0
        %v3599 = vmax.f32 %v3591, 0.0
        %v3600 = vmax.f32 %v3592, 0.0
        %v3601 = vmax.f32 %v3593, 0.0
        %v3602 = vmax.f32 %v3594, 0.0
        %v3603 = vmax.f32 %v3595, 0.0
        %v3604 = vmax.f32 %v3596, 0.0
        %v3605 = vmax.f32 %v3597, 0.0
        %v3606 = vpack.c.bf16 %v3599, %v3598
        %v3607 = vpack.c.bf16 %v3601, %v3600
        %v3608 = vpack.c.bf16 %v3603, %v3602
        %v3609 = vpack.c.bf16 %v3605, %v3604
        %v3614 = vunpack.c.l.b16 %v3606
        %v3615 = vunpack.c.h.b16 %v3606
        %v3616 = vunpack.c.l.b16 %v3607
        %v3617 = vunpack.c.h.b16 %v3607
        %v3618 = vunpack.c.l.b16 %v3608
        %v3619 = vunpack.c.h.b16 %v3608
        %v3620 = vunpack.c.l.b16 %v3609
        %v3621 = vunpack.c.h.b16 %v3609
        %v3622 = vpack.c.b16 %v3614, %v3614
        %v3623 = vpack.c.b16 %v3615, %v3615
        %v3624 = vpack.c.b16 %v3616, %v3616
        %v3625 = vpack.c.b16 %v3617, %v3617
        %v3626 = vpack.c.b16 %v3618, %v3618
        %v3627 = vpack.c.b16 %v3619, %v3619
        %v3628 = vpack.c.b16 %v3620, %v3620
        %v3629 = vpack.c.b16 %v3621, %v3621
        %vm3638 = vcmask 125952
        %3639 = vst.msk [vmem:[%s357] sm:$0xf] %vm3638, %v3622
        %3640 = vst.msk [vmem:[%s357 + $0x4] sm:$0xf] %vm3638, %v3623
        %3641 = vst.msk [vmem:[%s357 + $0x8] sm:$0xf] %vm3638, %v3624
        %3642 = vst.msk [vmem:[%s357 + $0xc] sm:$0xf] %vm3638, %v3625
        %3643 = vst.msk [vmem:[%s357 + $0x10] sm:$0xf] %vm3638, %v3626
        %3644 = vst.msk [vmem:[%s357 + $0x14] sm:$0xf] %vm3638, %v3627
        %3645 = vst.msk [vmem:[%s357 + $0x18] sm:$0xf] %vm3638, %v3628
        %3646 = vst.msk [vmem:[%s357 + $0x1c] sm:$0xf] %vm3638, %v3629
      $region56: #{gnn_forward.7} parent=47 // pred_fallthru
        _
      %s3647 = smul.u32 8, %s24
      %p3648 = scmp.lt.s32.totalorder %s3647, 15
      %s3649 = scalar_select %p3648, %s3647, 15
      %s3650 = smul.addr %s3649, 4
      %s3651 = scalar_lea.vmem %s7, %s3650
      // Predicated region
      $region57: #{gnn_forward.7} parent=47 // pred_check
        %p3652 = pneg %p214
      $region58: #{gnn_forward.7} parent=47 // pred_check_branch
        %3654 = sbr.rel (%p3652) target = $region60
      $region59: #{gnn_forward.7} parent=47 // pred_region
        %s3655 = smul.u32 8, %s24
      $region60: #{gnn_forward.7} parent=47 // pred_fallthru
        _
    $region48: #{gnn_forward.7} parent=5 // pred_fallthru
      _
    %p3656 = scmp.le.s32.totalorder 2, %s15
    // Predicated region
    $region61: #{gnn_forward.7} parent=5 // pred_check
      %p3657 = pneg %p3656
    $region62: #{gnn_forward.7} parent=5 // pred_check_branch
      %3659 = sbr.rel (%p3657) target = $region64
    $region63: #{gnn_forward.7} parent=5 // pred_region
      %s3660 = ssub.s32 %s15, 2
      // Predicated region
      $region65: #{gnn_forward.7} parent=63 // pred_check
        %p3661 = pneg %p220
      $region66: #{gnn_forward.7} parent=63 // pred_check_branch
        %3663 = sbr.rel (%p3661) target = $region68
      $region67: #{gnn_forward.7} parent=63 // pred_region
        %s3664 = smul.u32 8, %s26
        %p3665 = scmp.lt.s32.totalorder %s3664, 15
        %s3666 = scalar_select %p3665, %s3664, 15
        %s3667 = smul.addr %s3666, 4
        %s3668 = scalar_lea.vmem %s7, %s3667
      $region68: #{gnn_forward.7} parent=63 // pred_fallthru
        _
    $region64: #{gnn_forward.7} parent=5 // pred_fallthru
      _
  $region6: #{gnn_forward.7} parent=0 // loop_footer
    %s19 = sadd.s32 1, %s15
  $region7: #{gnn_forward.7} parent=0 // loop_footer_branch
    %14 = sbr.rel target = $region3
  $region8: #{gnn_forward.7} parent=0 // loop_exit
    _

// kernel: gnn_forward.11
$region0: #{gnn_forward.11}
  #allocation0 [shape = 'u32[]', space=smem, size = 0x4, offset = 0x4, fixed_abs, tag = 'smem constant byte address 0x4 - core index']
  #allocation1 [shape = 'u32[144,128]{1,0:T(1,128)}', space=vmem, size = 0x12000, scoped, tag = 'internal scratch']
  #allocation2 [shape = 'f32[64,16]{1,0:T(8,128)}', space=vmem, size = 0x8000, scoped, tag = 'scratch operand']
  #allocation3 [shape = 'f32[1,1]{1,0:T(1,128)S(1)}', space=vmem, size = 0x200, scoped, tag = 'scoped memory for gnn_forward.11']
  %s0 = inlined_call_operand.vmem [shape: bf16[128,3200], index: 0, kind: input, shape index: {}]
  %s1 = inlined_call_operand.vmem [shape: bf16[3200,16], index: 1, kind: input, shape index: {}]
  %s2 = inlined_call_operand.vmem [shape: bf16[128,16], index: 2, kind: input, shape index: {}]
  %s3 = inlined_call_operand.vmem [shape: bf16[16,16], index: 3, kind: input, shape index: {}]
  %s4 = inlined_call_operand.vmem [shape: f32[1,16], index: 4, kind: input, shape index: {}]
  %s5 = inlined_call_operand.vmem [shape: f32[16,1], index: 5, kind: input, shape index: {}]
  %s6 = inlined_call_operand.<no memory space> [shape: f32[1,1], index: 6, kind: input, shape index: {}]
  %s7 = inlined_call_operand.vmem [shape: f32[128,1], index: 7, kind: output, shape index: {}]
  %s8 = sld [smem:[#allocation0]]
  $region69: #{gnn_forward.11} parent=0
    _
  %s10 = ssub.s32 1, %s8
  %s11 = scalar_select 0, %s10, %s8
  %v12 = vstv %s6
  %13 = vst [vmem:[#allocation3] sm:$0x1] %v12
  loop: start=0, step=1, limit=4
  $region2: #{gnn_forward.11} parent=0 // loop_pre_header
    _
  $region3: #{gnn_forward.11} parent=0 // loop_header
    %s15 = sphi 0, %s19
    %p16 = scmp.ge.s32.totalorder %s15, 4
    %s22 = sphi 0, %s34
    %s23 = sphi 0, %s30
    %s24 = sphi 0, %s22
    %s25 = sphi 0, %s23
    %s26 = sphi 0, %s24
    %s27 = sphi 0, %s25
    %s39 = sphi 0, %s41
    %s42 = sphi 0, %s39
    %s43 = sphi 0, %s42
    %s59 = sphi 0, %s43
    %s65 = sphi 0, %s67
    %s68 = sphi 0, %s65
    %s69 = sphi 0, %s68
    %s85 = sphi 0, %s69
    %s91 = sphi 0, %s93
    %s94 = sphi 0, %s91
    %s95 = sphi 0, %s94
    %s111 = sphi 0, %s95
    %s115 = sphi 0, %s115
    %s117 = sphi 0, %s115
    %s118 = sphi 0, %s117
    %s132 = sphi 0, %s118
    %s136 = sphi 0, %s136
    %s138 = sphi 0, %s136
    %s139 = sphi 0, %s138
    %s153 = sphi 0, %s139
    %s157 = sphi 0, %s157
    %s159 = sphi 0, %s157
    %s160 = sphi 0, %s159
    %s174 = sphi 0, %s160
    %s178 = sphi 0, %s178
    %s180 = sphi 0, %s178
    %s181 = sphi 0, %s180
    %s195 = sphi 0, %s181
    %s201 = sphi 0, %s203
    %s204 = sphi 0, %s201
    %s205 = sphi 0, %s204
    %s221 = sphi 0, %s205
  $region4: #{gnn_forward.11} parent=0 // loop_header_branch
    %18 = sbr.rel (%p16) target = $region8
  $region5: #{gnn_forward.11} parent=0 // loop_body
    %s20 = ssub.s32 %s15, 1
    %s21 = ssub.s32 %s15, 2
    %s28 = sadd.s32 1, %s23
    %p29 = scmp.ge.s32.totalorder %s28, 1
    %s30 = scalar_select %p29, 0, %s28
    %s31 = sadd.s32 1, %s22
    %s32 = scalar_select %p29, %s31, %s22
    %p33 = scmp.ge.s32.totalorder %s32, 2
    %s34 = scalar_select %p33, 0, %s32
    %s35 = ssub.s32 %s22, %s34
    %s36 = ssub.s32 %s23, %s30
    %s37 = sor.u32 %s35, %s36
    %p38 = scmp.eq.s32.totalorder %s37, 0
    %s40 = sadd.s32 %s39, 1
    %s41 = scalar_select %p38, %s39, %s40
    %p44 = pneg %p38
    %p45 = scmp.eq.s32.totalorder %s15, 1
    %p46 = por %p44, %p45
    %p47 = scmp.ne.s32.totalorder %s39, %s42
    %p48 = scmp.eq.s32.totalorder %s15, 0
    %p49 = por %p47, %p48
    %p50 = scmp.ne.s32.totalorder %s39, %s42
    %p51 = scmp.eq.s32.totalorder %s20, 1
    %p52 = por %p50, %p51
    %p53 = scmp.ne.s32.totalorder %s42, %s43
    %p54 = scmp.eq.s32.totalorder %s20, 0
    %p55 = por %p53, %p54
    %p56 = scmp.ne.s32.totalorder %s42, %s43
    %p57 = scmp.eq.s32.totalorder %s21, 1
    %p58 = por %p56, %p57
    %p60 = scmp.ne.s32.totalorder %s43, %s59
    %p61 = scmp.eq.s32.totalorder %s21, 0
    %p62 = por %p60, %p61
    %s63 = ssub.s32 %s23, %s30
    %p64 = scmp.eq.s32.totalorder %s63, 0
    %s66 = sadd.s32 %s65, 1
    %s67 = scalar_select %p64, %s65, %s66
    %p70 = pneg %p64
    %p71 = scmp.eq.s32.totalorder %s15, 1
    %p72 = por %p70, %p71
    %p73 = scmp.ne.s32.totalorder %s65, %s68
    %p74 = scmp.eq.s32.totalorder %s15, 0
    %p75 = por %p73, %p74
    %p76 = scmp.ne.s32.totalorder %s65, %s68
    %p77 = scmp.eq.s32.totalorder %s20, 1
    %p78 = por %p76, %p77
    %p79 = scmp.ne.s32.totalorder %s68, %s69
    %p80 = scmp.eq.s32.totalorder %s20, 0
    %p81 = por %p79, %p80
    %p82 = scmp.ne.s32.totalorder %s68, %s69
    %p83 = scmp.eq.s32.totalorder %s21, 1
    %p84 = por %p82, %p83
    %p86 = scmp.ne.s32.totalorder %s69, %s85
    %p87 = scmp.eq.s32.totalorder %s21, 0
    %p88 = por %p86, %p87
    %s89 = ssub.s32 %s22, %s34
    %p90 = scmp.eq.s32.totalorder %s89, 0
    %s92 = sadd.s32 %s91, 1
    %s93 = scalar_select %p90, %s91, %s92
    %p96 = pneg %p90
    %p97 = scmp.eq.s32.totalorder %s15, 1
    %p98 = por %p96, %p97
    %p99 = scmp.ne.s32.totalorder %s91, %s94
    %p100 = scmp.eq.s32.totalorder %s15, 0
    %p101 = por %p99, %p100
    %p102 = scmp.ne.s32.totalorder %s91, %s94
    %p103 = scmp.eq.s32.totalorder %s20, 1
    %p104 = por %p102, %p103
    %p105 = scmp.ne.s32.totalorder %s94, %s95
    %p106 = scmp.eq.s32.totalorder %s20, 0
    %p107 = por %p105, %p106
    %p108 = scmp.ne.s32.totalorder %s94, %s95
    %p109 = scmp.eq.s32.totalorder %s21, 1
    %p110 = por %p108, %p109
    %p112 = scmp.ne.s32.totalorder %s95, %s111
    %p113 = scmp.eq.s32.totalorder %s21, 0
    %p114 = por %p112, %p113
    %s116 = sadd.s32 %s115, 1
    %p119 = scmp.eq.s32.totalorder %s15, 1
    %p120 = scmp.ne.s32.totalorder %s115, %s117
    %p121 = scmp.eq.s32.totalorder %s15, 0
    %p122 = por %p120, %p121
    %p123 = scmp.ne.s32.totalorder %s115, %s117
    %p124 = scmp.eq.s32.totalorder %s20, 1
    %p125 = por %p123, %p124
    %p126 = scmp.ne.s32.totalorder %s117, %s118
    %p127 = scmp.eq.s32.totalorder %s20, 0
    %p128 = por %p126, %p127
    %p129 = scmp.ne.s32.totalorder %s117, %s118
    %p130 = scmp.eq.s32.totalorder %s21, 1
    %p131 = por %p129, %p130
    %p133 = scmp.ne.s32.totalorder %s118, %s132
    %p134 = scmp.eq.s32.totalorder %s21, 0
    %p135 = por %p133, %p134
    %s137 = sadd.s32 %s136, 1
    %p140 = scmp.eq.s32.totalorder %s15, 1
    %p141 = scmp.ne.s32.totalorder %s136, %s138
    %p142 = scmp.eq.s32.totalorder %s15, 0
    %p143 = por %p141, %p142
    %p144 = scmp.ne.s32.totalorder %s136, %s138
    %p145 = scmp.eq.s32.totalorder %s20, 1
    %p146 = por %p144, %p145
    %p147 = scmp.ne.s32.totalorder %s138, %s139
    %p148 = scmp.eq.s32.totalorder %s20, 0
    %p149 = por %p147, %p148
    %p150 = scmp.ne.s32.totalorder %s138, %s139
    %p151 = scmp.eq.s32.totalorder %s21, 1
    %p152 = por %p150, %p151
    %p154 = scmp.ne.s32.totalorder %s139, %s153
    %p155 = scmp.eq.s32.totalorder %s21, 0
    %p156 = por %p154, %p155
    %s158 = sadd.s32 %s157, 1
    %p161 = scmp.eq.s32.totalorder %s15, 1
    %p162 = scmp.ne.s32.totalorder %s157, %s159
    %p163 = scmp.eq.s32.totalorder %s15, 0
    %p164 = por %p162, %p163
    %p165 = scmp.ne.s32.totalorder %s157, %s159
    %p166 = scmp.eq.s32.totalorder %s20, 1
    %p167 = por %p165, %p166
    %p168 = scmp.ne.s32.totalorder %s159, %s160
    %p169 = scmp.eq.s32.totalorder %s20, 0
    %p170 = por %p168, %p169
    %p171 = scmp.ne.s32.totalorder %s159, %s160
    %p172 = scmp.eq.s32.totalorder %s21, 1
    %p173 = por %p171, %p172
    %p175 = scmp.ne.s32.totalorder %s160, %s174
    %p176 = scmp.eq.s32.totalorder %s21, 0
    %p177 = por %p175, %p176
    %s179 = sadd.s32 %s178, 1
    %p182 = scmp.eq.s32.totalorder %s15, 1
    %p183 = scmp.ne.s32.totalorder %s178, %s180
    %p184 = scmp.eq.s32.totalorder %s15, 0
    %p185 = por %p183, %p184
    %p186 = scmp.ne.s32.totalorder %s178, %s180
    %p187 = scmp.eq.s32.totalorder %s20, 1
    %p188 = por %p186, %p187
    %p189 = scmp.ne.s32.totalorder %s180, %s181
    %p190 = scmp.eq.s32.totalorder %s20, 0
    %p191 = por %p189, %p190
    %p192 = scmp.ne.s32.totalorder %s180, %s181
    %p193 = scmp.eq.s32.totalorder %s21, 1
    %p194 = por %p192, %p193
    %p196 = scmp.ne.s32.totalorder %s181, %s195
    %p197 = scmp.eq.s32.totalorder %s21, 0
    %p198 = por %p196, %p197
    %s199 = ssub.s32 %s22, %s34
    %p200 = scmp.eq.s32.totalorder %s199, 0
    %s202 = sadd.s32 %s201, 1
    %s203 = scalar_select %p200, %s201, %s202
    %p206 = pneg %p200
    %p207 = scmp.eq.s32.totalorder %s15, 1
    %p208 = por %p206, %p207
    %p209 = scmp.ne.s32.totalorder %s201, %s204
    %p210 = scmp.eq.s32.totalorder %s15, 0
    %p211 = por %p209, %p210
    %p212 = scmp.ne.s32.totalorder %s201, %s204
    %p213 = scmp.eq.s32.totalorder %s20, 1
    %p214 = por %p212, %p213
    %p215 = scmp.ne.s32.totalorder %s204, %s205
    %p216 = scmp.eq.s32.totalorder %s20, 0
    %p217 = por %p215, %p216
    %p218 = scmp.ne.s32.totalorder %s204, %s205
    %p219 = scmp.eq.s32.totalorder %s21, 1
    %p220 = por %p218, %p219
    %p222 = scmp.ne.s32.totalorder %s205, %s221
    %p223 = scmp.eq.s32.totalorder %s21, 0
    %p224 = por %p222, %p223
    %p225 = scmp.le.s32.totalorder 1, %s15
    %p226 = scmp.lt.s32.totalorder %s15, 3
    %p227 = pnand %p225, %p226
    %p228 = pneg %p227
    // Predicated region
    $region9: #{gnn_forward.11} parent=5 // pred_check
      _
    $region10: #{gnn_forward.11} parent=5 // pred_check_branch
      %230 = sbr.rel (%p227) target = $region12
    $region11: #{gnn_forward.11} parent=5 // pred_region
      %s231 = ssub.s32 %s15, 1
      // Predicated region
      $region13: #{gnn_forward.11} parent=11 // pred_check
        %p232 = pneg %p81
      $region14: #{gnn_forward.11} parent=11 // pred_check_branch
        %234 = sbr.rel (%p232) target = $region16
      $region15: #{gnn_forward.11} parent=11 // pred_region
        %s235 = smul.u32 400, %s25
        %p236 = scmp.lt.s32.totalorder %s235, 399
        %s237 = scalar_select %p236, %s235, 399
        %s238 = smul.addr %s237, 4
        %s239 = scalar_lea.vmem %s1, %s238
        %s240 = smul.u32 400, %s25
      $region16: #{gnn_forward.11} parent=11 // pred_fallthru
        _
      // Predicated region
      $region17: #{gnn_forward.11} parent=11 // pred_check
        %p241 = pneg %p128
      $region18: #{gnn_forward.11} parent=11 // pred_check_branch
        %243 = sbr.rel (%p241) target = $region20
      $region19: #{gnn_forward.11} parent=11 // pred_region
        _
      $region20: #{gnn_forward.11} parent=11 // pred_fallthru
        _
      // Predicated region
      $region21: #{gnn_forward.11} parent=11 // pred_check
        %p244 = pneg %p149
      $region22: #{gnn_forward.11} parent=11 // pred_check_branch
        %246 = sbr.rel (%p244) target = $region24
      $region23: #{gnn_forward.11} parent=11 // pred_region
        _
      $region24: #{gnn_forward.11} parent=11 // pred_fallthru
        _
      // Predicated region
      $region25: #{gnn_forward.11} parent=11 // pred_check
        %p247 = pneg %p170
      $region26: #{gnn_forward.11} parent=11 // pred_check_branch
        %249 = sbr.rel (%p247) target = $region28
      $region27: #{gnn_forward.11} parent=11 // pred_region
        _
      $region28: #{gnn_forward.11} parent=11 // pred_fallthru
        _
      // Predicated region
      $region29: #{gnn_forward.11} parent=11 // pred_check
        %p250 = pneg %p191
      $region30: #{gnn_forward.11} parent=11 // pred_check_branch
        %252 = sbr.rel (%p250) target = $region32
      $region31: #{gnn_forward.11} parent=11 // pred_region
        _
      $region32: #{gnn_forward.11} parent=11 // pred_fallthru
        _
    $region12: #{gnn_forward.11} parent=5 // pred_fallthru
      _
    %p253 = scmp.lt.s32.totalorder %s15, 2
    // Predicated region
    $region33: #{gnn_forward.11} parent=5 // pred_check
      %p254 = pneg %p253
    $region34: #{gnn_forward.11} parent=5 // pred_check_branch
      %256 = sbr.rel (%p254) target = $region36
    $region35: #{gnn_forward.11} parent=5 // pred_region
      // Predicated region
      $region37: #{gnn_forward.11} parent=35 // pred_check
        %p257 = pneg %p49
      $region38: #{gnn_forward.11} parent=35 // pred_check_branch
        %259 = sbr.rel (%p257) target = $region40
      $region39: #{gnn_forward.11} parent=35 // pred_region
        %s260 = smul.u32 8, %s22
        %s261 = smul.u32 25, %s23
        %p262 = scmp.lt.s32.totalorder %s260, 15
        %s263 = scalar_select %p262, %s260, 15
        %p264 = scmp.lt.s32.totalorder %s261, 24
        %s265 = scalar_select %p264, %s261, 24
        %s266 = smul.addr %s263, 25
        %s267 = sadd.s32 %s265, %s266
        %s268 = smul.addr %s267, 4
        %s269 = scalar_lea.vmem %s0, %s268
        %s270 = smul.u32 8, %s22
        %s271 = smul.u32 25, %s23
      $region40: #{gnn_forward.11} parent=35 // pred_fallthru
        _
      // Predicated region
      $region41: #{gnn_forward.11} parent=35 // pred_check
        %p272 = pneg %p101
      $region42: #{gnn_forward.11} parent=35 // pred_check_branch
        %274 = sbr.rel (%p272) target = $region44
      $region43: #{gnn_forward.11} parent=35 // pred_region
        %s275 = smul.u32 8, %s22
        %p276 = scmp.lt.s32.totalorder %s275, 15
        %s277 = scalar_select %p276, %s275, 15
        %s278 = smul.addr %s277, 4
        %s279 = scalar_lea.vmem %s2, %s278
        %s280 = smul.u32 8, %s22
      $region44: #{gnn_forward.11} parent=35 // pred_fallthru
        _
    $region36: #{gnn_forward.11} parent=5 // pred_fallthru
      _
    %p281 = scmp.le.s32.totalorder 1, %s15
    %p282 = scmp.lt.s32.totalorder %s15, 3
    %p283 = pnand %p281, %p282
    %p284 = pneg %p283
    // Predicated region
    $region45: #{gnn_forward.11} parent=5 // pred_check
      _
    $region46: #{gnn_forward.11} parent=5 // pred_check_branch
      %286 = sbr.rel (%p283) target = $region48
    $region47: #{gnn_forward.11} parent=5 // pred_region
      %s287 = ssub.s32 %s15, 1
      %s288 = smul.u32 8, %s24
      %s289 = smul.u32 25, %s25
      %p290 = scmp.lt.s32.totalorder %s288, 15
      %s291 = scalar_select %p290, %s288, 15
      %p292 = scmp.lt.s32.totalorder %s289, 24
      %s293 = scalar_select %p292, %s289, 24
      %s294 = smul.addr %s291, 25
      %s295 = sadd.s32 %s293, %s294
      %s296 = smul.addr %s295, 4
      %s297 = scalar_lea.vmem %s0, %s296
      %p298 = pneg %p55
      %p299 = pneg %p52
      %s300 = smul.u32 400, %s25
      %p301 = scmp.lt.s32.totalorder %s300, 399
      %s302 = scalar_select %p301, %s300, 399
      %s303 = smul.addr %s302, 4
      %s304 = scalar_lea.vmem %s1, %s303
      %p305 = pneg %p81
      %p306 = pneg %p78
      %s307 = smul.u32 8, %s24
      %p308 = scmp.lt.s32.totalorder %s307, 15
      %s309 = scalar_select %p308, %s307, 15
      %s310 = smul.addr %s309, 4
      %s311 = scalar_lea.vmem %s2, %s310
      %p312 = pneg %p107
      %p313 = pneg %p104
      %p314 = pneg %p128
      %p315 = pneg %p125
      %p316 = pneg %p149
      %p317 = pneg %p146
      %p318 = pneg %p170
      %p319 = pneg %p167
      %p320 = pneg %p191
      %p321 = pneg %p188
      %p322 = pneg %p217
      %p323 = pneg %p214
      %s324 = smul.u32 8, %s24
      %p325 = scmp.lt.s32.totalorder %s324, 15
      %s326 = scalar_select %p325, %s324, 15
      %s327 = smul.addr %s326, 8
      %s328 = scalar_lea.vmem %s7, %s327
      %s329 = smul.u32 8, %s24
      %s330 = smul.u32 25, %s25
      %p331 = scmp.lt.s32.totalorder %s329, 15
      %s332 = scalar_select %p331, %s329, 15
      %p333 = scmp.lt.s32.totalorder %s330, 24
      %s334 = scalar_select %p333, %s330, 24
      %s335 = smul.addr %s332, 25
      %s336 = sadd.s32 %s334, %s335
      %s337 = smul.addr %s336, 4
      %s338 = scalar_lea.vmem %s0, %s337
      %s339 = smul.u32 8, %s24
      %s340 = smul.u32 25, %s25
      %s341 = smul.u32 400, %s25
      %p342 = scmp.lt.s32.totalorder %s341, 399
      %s343 = scalar_select %p342, %s341, 399
      %s344 = smul.addr %s343, 4
      %s345 = scalar_lea.vmem %s1, %s344
      %s346 = smul.u32 400, %s25
      %s347 = smul.u32 8, %s24
      %p348 = scmp.lt.s32.totalorder %s347, 15
      %s349 = scalar_select %p348, %s347, 15
      %s350 = smul.addr %s349, 4
      %s351 = scalar_lea.vmem %s2, %s350
      %s352 = smul.u32 8, %s24
      %s353 = smul.u32 8, %s24
      %p354 = scmp.lt.s32.totalorder %s353, 15
      %s355 = scalar_select %p354, %s353, 15
      %s356 = smul.addr %s355, 8
      %s357 = scalar_lea.vmem %s7, %s356
      %s358 = smul.u32 8, %s24
      %p360 = scmp.eq.s32.totalorder %s25, 0
      // Predicated region
      $region49: #{gnn_forward.11} parent=47 // pred_check
        %p361 = pneg %p360
      $region50: #{gnn_forward.11} parent=47 // pred_check_branch
        %363 = sbr.rel (%p361) target = $region52
      $region51: #{gnn_forward.11} parent=47 // pred_region
        %vm364 = vcmask 130048
        %365 = vst.msk [vmem:[#allocation2] sm:$0xff] %vm364, 0.0
        %366 = vst.msk [vmem:[#allocation2 + $0x8] sm:$0xff] %vm364, 0.0
        %367 = vst.msk [vmem:[#allocation2 + $0x10] sm:$0xff] %vm364, 0.0
        %368 = vst.msk [vmem:[#allocation2 + $0x18] sm:$0xff] %vm364, 0.0
        %369 = vst.msk [vmem:[#allocation2 + $0x20] sm:$0xff] %vm364, 0.0
        %370 = vst.msk [vmem:[#allocation2 + $0x28] sm:$0xff] %vm364, 0.0
        %371 = vst.msk [vmem:[#allocation2 + $0x30] sm:$0xff] %vm364, 0.0
        %372 = vst.msk [vmem:[#allocation2 + $0x38] sm:$0xff] %vm364, 0.0
      $region52: #{gnn_forward.11} parent=47 // pred_fallthru
        _
      %v373 = vld [vmem:[#allocation2] sm:$0xff]
      %v374 = vld [vmem:[#allocation2 + $0x8] sm:$0xff]
      %v375 = vld [vmem:[#allocation2 + $0x10] sm:$0xff]
      %v376 = vld [vmem:[#allocation2 + $0x18] sm:$0xff]
      %v377 = vld [vmem:[#allocation2 + $0x20] sm:$0xff]
      %v378 = vld [vmem:[#allocation2 + $0x28] sm:$0xff]
      %v379 = vld [vmem:[#allocation2 + $0x30] sm:$0xff]
      %v380 = vld [vmem:[#allocation2 + $0x38] sm:$0xff]
      %v381 = vld [vmem:[%s338] sm:$0xff]
      %v382 = vld [vmem:[%s338 + $0x8] sm:$0xff]
      %v383 = vld [vmem:[%s338 + $0x10] sm:$0xff]
      %v384 = vld [vmem:[%s338 + $0x18] sm:$0xff]
      %v385 = vld [vmem:[%s338 + $0x20] sm:$0xff]
      %v386 = vld [vmem:[%s338 + $0x28] sm:$0xff]
      %v387 = vld [vmem:[%s338 + $0x30] sm:$0xff]
      %v388 = vld [vmem:[%s338 + $0x38] sm:$0xff]
      %v389 = vld [vmem:[%s338 + $0x40] sm:$0xff]
      %v390 = vld [vmem:[%s338 + $0x48] sm:$0xff]
      %v391 = vld [vmem:[%s338 + $0x50] sm:$0xff]
      %v392 = vld [vmem:[%s338 + $0x58] sm:$0xff]
      %v393 = vld [vmem:[%s338 + $0x60] sm:$0xf]
      %v394 = vld [vmem:[%s338 + $0x64] sm:$0xff]
      %v395 = vld [vmem:[%s338 + $0x6c] sm:$0xff]
      %v396 = vld [vmem:[%s338 + $0x74] sm:$0xff]
      %v397 = vld [vmem:[%s338 + $0x7c] sm:$0xff]
      %v398 = vld [vmem:[%s338 + $0x84] sm:$0xff]
      %v399 = vld [vmem:[%s338 + $0x8c] sm:$0xff]
      %v400 = vld [vmem:[%s338 + $0x94] sm:$0xff]
      %v401 = vld [vmem:[%s338 + $0x9c] sm:$0xff]
      %v402 = vld [vmem:[%s338 + $0xa4] sm:$0xff]
      %v403 = vld [vmem:[%s338 + $0xac] sm:$0xff]
      %v404 = vld [vmem:[%s338 + $0xb4] sm:$0xff]
      %v405 = vld [vmem:[%s338 + $0xbc] sm:$0xff]
      %v406 = vld [vmem:[%s338 + $0xc4] sm:$0xf]
      %v407 = vld [vmem:[%s338 + $0xc8] sm:$0xff]
      %v408 = vld [vmem:[%s338 + $0xd0] sm:$0xff]
      %v409 = vld [vmem:[%s338 + $0xd8] sm:$0xff]
      %v410 = vld [vmem:[%s338 + $0xe0] sm:$0xff]
      %v411 = vld [vmem:[%s338 + $0xe8] sm:$0xff]
      %v412 = vld [vmem:[%s338 + $0xf0] sm:$0xff]
      %v413 = vld [vmem:[%s338 + $0xf8] sm:$0xff]
      %v414 = vld [vmem:[%s338 + $0x100] sm:$0xff]
      %v415 = vld [vmem:[%s338 + $0x108] sm:$0xff]
      %v416 = vld [vmem:[%s338 + $0x110] sm:$0xff]
      %v417 = vld [vmem:[%s338 + $0x118] sm:$0xff]
      %v418 = vld [vmem:[%s338 + $0x120] sm:$0xff]
      %v419 = vld [vmem:[%s338 + $0x128] sm:$0xf]
      %v420 = vld [vmem:[%s338 + $0x12c] sm:$0xff]
      %v421 = vld [vmem:[%s338 + $0x134] sm:$0xff]
      %v422 = vld [vmem:[%s338 + $0x13c] sm:$0xff]
      %v423 = vld [vmem:[%s338 + $0x144] sm:$0xff]
      %v424 = vld [vmem:[%s338 + $0x14c] sm:$0xff]
      %v425 = vld [vmem:[%s338 + $0x154] sm:$0xff]
      %v426 = vld [vmem:[%s338 + $0x15c] sm:$0xff]
      %v427 = vld [vmem:[%s338 + $0x164] sm:$0xff]
      %v428 = vld [vmem:[%s338 + $0x16c] sm:$0xff]
      %v429 = vld [vmem:[%s338 + $0x174] sm:$0xff]
      %v430 = vld [vmem:[%s338 + $0x17c] sm:$0xff]
      %v431 = vld [vmem:[%s338 + $0x184] sm:$0xff]
      %v432 = vld [vmem:[%s338 + $0x18c] sm:$0xf]
      %v433 = vld [vmem:[%s338 + $0x190] sm:$0xff]
      %v434 = vld [vmem:[%s338 + $0x198] sm:$0xff]
      %v435 = vld [vmem:[%s338 + $0x1a0] sm:$0xff]
      %v436 = vld [vmem:[%s338 + $0x1a8] sm:$0xff]
      %v437 = vld [vmem:[%s338 + $0x1b0] sm:$0xff]
      %v438 = vld [vmem:[%s338 + $0x1b8] sm:$0xff]
      %v439 = vld [vmem:[%s338 + $0x1c0] sm:$0xff]
      %v440 = vld [vmem:[%s338 + $0x1c8] sm:$0xff]
      %v441 = vld [vmem:[%s338 + $0x1d0] sm:$0xff]
      %v442 = vld [vmem:[%s338 + $0x1d8] sm:$0xff]
      %v443 = vld [vmem:[%s338 + $0x1e0] sm:$0xff]
      %v444 = vld [vmem:[%s338 + $0x1e8] sm:$0xff]
      %v445 = vld [vmem:[%s338 + $0x1f0] sm:$0xf]
      %v446 = vld [vmem:[%s338 + $0x1f4] sm:$0xff]
      %v447 = vld [vmem:[%s338 + $0x1fc] sm:$0xff]
      %v448 = vld [vmem:[%s338 + $0x204] sm:$0xff]
      %v449 = vld [vmem:[%s338 + $0x20c] sm:$0xff]
      %v450 = vld [vmem:[%s338 + $0x214] sm:$0xff]
      %v451 = vld [vmem:[%s338 + $0x21c] sm:$0xff]
      %v452 = vld [vmem:[%s338 + $0x224] sm:$0xff]
      %v453 = vld [vmem:[%s338 + $0x22c] sm:$0xff]
      %v454 = vld [vmem:[%s338 + $0x234] sm:$0xff]
      %v455 = vld [vmem:[%s338 + $0x23c] sm:$0xff]
      %v456 = vld [vmem:[%s338 + $0x244] sm:$0xff]
      %v457 = vld [vmem:[%s338 + $0x24c] sm:$0xff]
      %v458 = vld [vmem:[%s338 + $0x254] sm:$0xf]
      %v459 = vld [vmem:[%s338 + $0x258] sm:$0xff]
      %v460 = vld [vmem:[%s338 + $0x260] sm:$0xff]
      %v461 = vld [vmem:[%s338 + $0x268] sm:$0xff]
      %v462 = vld [vmem:[%s338 + $0x270] sm:$0xff]
      %v463 = vld [vmem:[%s338 + $0x278] sm:$0xff]
      %v464 = vld [vmem:[%s338 + $0x280] sm:$0xff]
      %v465 = vld [vmem:[%s338 + $0x288] sm:$0xff]
      %v466 = vld [vmem:[%s338 + $0x290] sm:$0xff]
      %v467 = vld [vmem:[%s338 + $0x298] sm:$0xff]
      %v468 = vld [vmem:[%s338 + $0x2a0] sm:$0xff]
      %v469 = vld [vmem:[%s338 + $0x2a8] sm:$0xff]
      %v470 = vld [vmem:[%s338 + $0x2b0] sm:$0xff]
      %v471 = vld [vmem:[%s338 + $0x2b8] sm:$0xf]
      %v472 = vld [vmem:[%s338 + $0x2bc] sm:$0xff]
      %v473 = vld [vmem:[%s338 + $0x2c4] sm:$0xff]
      %v474 = vld [vmem:[%s338 + $0x2cc] sm:$0xff]
      %v475 = vld [vmem:[%s338 + $0x2d4] sm:$0xff]
      %v476 = vld [vmem:[%s338 + $0x2dc] sm:$0xff]
      %v477 = vld [vmem:[%s338 + $0x2e4] sm:$0xff]
      %v478 = vld [vmem:[%s338 + $0x2ec] sm:$0xff]
      %v479 = vld [vmem:[%s338 + $0x2f4] sm:$0xff]
      %v480 = vld [vmem:[%s338 + $0x2fc] sm:$0xff]
      %v481 = vld [vmem:[%s338 + $0x304] sm:$0xff]
      %v482 = vld [vmem:[%s338 + $0x30c] sm:$0xff]
      %v483 = vld [vmem:[%s338 + $0x314] sm:$0xff]
      %v484 = vld [vmem:[%s338 + $0x31c] sm:$0xf]
      %v485 = vld [vmem:[%s345] sm:$0xf]
      %v486 = vld [vmem:[%s345 + $0x4] sm:$0xf]
      %v487 = vld [vmem:[%s345 + $0x8] sm:$0xf]
      %v488 = vld [vmem:[%s345 + $0xc] sm:$0xf]
      %v489 = vld [vmem:[%s345 + $0x10] sm:$0xf]
      %v490 = vld [vmem:[%s345 + $0x14] sm:$0xf]
      %v491 = vld [vmem:[%s345 + $0x18] sm:$0xf]
      %v492 = vld [vmem:[%s345 + $0x1c] sm:$0xf]
      %v493 = vld [vmem:[%s345 + $0x20] sm:$0xf]
      %v494 = vld [vmem:[%s345 + $0x24] sm:$0xf]
      %v495 = vld [vmem:[%s345 + $0x28] sm:$0xf]
      %v496 = vld [vmem:[%s345 + $0x2c] sm:$0xf]
      %v497 = vld [vmem:[%s345 + $0x30] sm:$0xf]
      %v498 = vld [vmem:[%s345 + $0x34] sm:$0xf]
      %v499 = vld [vmem:[%s345 + $0x38] sm:$0xf]
      %v500 = vld [vmem:[%s345 + $0x3c] sm:$0xf]
      %v501 = vld [vmem:[%s345 + $0x40] sm:$0xf]
      %v502 = vld [vmem:[%s345 + $0x44] sm:$0xf]
      %v503 = vld [vmem:[%s345 + $0x48] sm:$0xf]
      %v504 = vld [vmem:[%s345 + $0x4c] sm:$0xf]
      %v505 = vld [vmem:[%s345 + $0x50] sm:$0xf]
      %v506 = vld [vmem:[%s345 + $0x54] sm:$0xf]
      %v507 = vld [vmem:[%s345 + $0x58] sm:$0xf]
      %v508 = vld [vmem:[%s345 + $0x5c] sm:$0xf]
      %v509 = vld [vmem:[%s345 + $0x60] sm:$0xf]
      %v510 = vld [vmem:[%s345 + $0x64] sm:$0xf]
      %v511 = vld [vmem:[%s345 + $0x68] sm:$0xf]
      %v512 = vld [vmem:[%s345 + $0x6c] sm:$0xf]
      %v513 = vld [vmem:[%s345 + $0x70] sm:$0xf]
      %v514 = vld [vmem:[%s345 + $0x74] sm:$0xf]
      %v515 = vld [vmem:[%s345 + $0x78] sm:$0xf]
      %v516 = vld [vmem:[%s345 + $0x7c] sm:$0xf]
      %v517 = vld [vmem:[%s345 + $0x80] sm:$0xf]
      %v518 = vld [vmem:[%s345 + $0x84] sm:$0xf]
      %v519 = vld [vmem:[%s345 + $0x88] sm:$0xf]
      %v520 = vld [vmem:[%s345 + $0x8c] sm:$0xf]
      %v521 = vld [vmem:[%s345 + $0x90] sm:$0xf]
      %v522 = vld [vmem:[%s345 + $0x94] sm:$0xf]
      %v523 = vld [vmem:[%s345 + $0x98] sm:$0xf]
      %v524 = vld [vmem:[%s345 + $0x9c] sm:$0xf]
      %v525 = vld [vmem:[%s345 + $0xa0] sm:$0xf]
      %v526 = vld [vmem:[%s345 + $0xa4] sm:$0xf]
      %v527 = vld [vmem:[%s345 + $0xa8] sm:$0xf]
      %v528 = vld [vmem:[%s345 + $0xac] sm:$0xf]
      %v529 = vld [vmem:[%s345 + $0xb0] sm:$0xf]
      %v530 = vld [vmem:[%s345 + $0xb4] sm:$0xf]
      %v531 = vld [vmem:[%s345 + $0xb8] sm:$0xf]
      %v532 = vld [vmem:[%s345 + $0xbc] sm:$0xf]
      %v533 = vld [vmem:[%s345 + $0xc0] sm:$0xf]
      %v534 = vld [vmem:[%s345 + $0xc4] sm:$0xf]
      %v535 = vld [vmem:[%s345 + $0xc8] sm:$0xf]
      %v536 = vld [vmem:[%s345 + $0xcc] sm:$0xf]
      %v537 = vld [vmem:[%s345 + $0xd0] sm:$0xf]
      %v538 = vld [vmem:[%s345 + $0xd4] sm:$0xf]
      %v539 = vld [vmem:[%s345 + $0xd8] sm:$0xf]
      %v540 = vld [vmem:[%s345 + $0xdc] sm:$0xf]
      %v541 = vld [vmem:[%s345 + $0xe0] sm:$0xf]
      %v542 = vld [vmem:[%s345 + $0xe4] sm:$0xf]
      %v543 = vld [vmem:[%s345 + $0xe8] sm:$0xf]
      %v544 = vld [vmem:[%s345 + $0xec] sm:$0xf]
      %v545 = vld [vmem:[%s345 + $0xf0] sm:$0xf]
      %v546 = vld [vmem:[%s345 + $0xf4] sm:$0xf]
      %v547 = vld [vmem:[%s345 + $0xf8] sm:$0xf]
      %v548 = vld [vmem:[%s345 + $0xfc] sm:$0xf]
      %v549 = vld [vmem:[%s345 + $0x100] sm:$0xf]
      %v550 = vld [vmem:[%s345 + $0x104] sm:$0xf]
      %v551 = vld [vmem:[%s345 + $0x108] sm:$0xf]
      %v552 = vld [vmem:[%s345 + $0x10c] sm:$0xf]
      %v553 = vld [vmem:[%s345 + $0x110] sm:$0xf]
      %v554 = vld [vmem:[%s345 + $0x114] sm:$0xf]
      %v555 = vld [vmem:[%s345 + $0x118] sm:$0xf]
      %v556 = vld [vmem:[%s345 + $0x11c] sm:$0xf]
      %v557 = vld [vmem:[%s345 + $0x120] sm:$0xf]
      %v558 = vld [vmem:[%s345 + $0x124] sm:$0xf]
      %v559 = vld [vmem:[%s345 + $0x128] sm:$0xf]
      %v560 = vld [vmem:[%s345 + $0x12c] sm:$0xf]
      %v561 = vld [vmem:[%s345 + $0x130] sm:$0xf]
      %v562 = vld [vmem:[%s345 + $0x134] sm:$0xf]
      %v563 = vld [vmem:[%s345 + $0x138] sm:$0xf]
      %v564 = vld [vmem:[%s345 + $0x13c] sm:$0xf]
      %v565 = vld [vmem:[%s345 + $0x140] sm:$0xf]
      %v566 = vld [vmem:[%s345 + $0x144] sm:$0xf]
      %v567 = vld [vmem:[%s345 + $0x148] sm:$0xf]
      %v568 = vld [vmem:[%s345 + $0x14c] sm:$0xf]
      %v569 = vld [vmem:[%s345 + $0x150] sm:$0xf]
      %v570 = vld [vmem:[%s345 + $0x154] sm:$0xf]
      %v571 = vld [vmem:[%s345 + $0x158] sm:$0xf]
      %v572 = vld [vmem:[%s345 + $0x15c] sm:$0xf]
      %v573 = vld [vmem:[%s345 + $0x160] sm:$0xf]
      %v574 = vld [vmem:[%s345 + $0x164] sm:$0xf]
      %v575 = vld [vmem:[%s345 + $0x168] sm:$0xf]
      %v576 = vld [vmem:[%s345 + $0x16c] sm:$0xf]
      %v577 = vld [vmem:[%s345 + $0x170] sm:$0xf]
      %v578 = vld [vmem:[%s345 + $0x174] sm:$0xf]
      %v579 = vld [vmem:[%s345 + $0x178] sm:$0xf]
      %v580 = vld [vmem:[%s345 + $0x17c] sm:$0xf]
      %v581 = vld [vmem:[%s345 + $0x180] sm:$0xf]
      %v582 = vld [vmem:[%s345 + $0x184] sm:$0xf]
      %v583 = vld [vmem:[%s345 + $0x188] sm:$0xf]
      %v584 = vld [vmem:[%s345 + $0x18c] sm:$0xf]
      %v585 = vld [vmem:[%s345 + $0x190] sm:$0xf]
      %v586 = vld [vmem:[%s345 + $0x194] sm:$0xf]
      %v587 = vld [vmem:[%s345 + $0x198] sm:$0xf]
      %v588 = vld [vmem:[%s345 + $0x19c] sm:$0xf]
      %v589 = vld [vmem:[%s345 + $0x1a0] sm:$0xf]
      %v590 = vld [vmem:[%s345 + $0x1a4] sm:$0xf]
      %v591 = vld [vmem:[%s345 + $0x1a8] sm:$0xf]
      %v592 = vld [vmem:[%s345 + $0x1ac] sm:$0xf]
      %v593 = vld [vmem:[%s345 + $0x1b0] sm:$0xf]
      %v594 = vld [vmem:[%s345 + $0x1b4] sm:$0xf]
      %v595 = vld [vmem:[%s345 + $0x1b8] sm:$0xf]
      %v596 = vld [vmem:[%s345 + $0x1bc] sm:$0xf]
      %v597 = vld [vmem:[%s345 + $0x1c0] sm:$0xf]
      %v598 = vld [vmem:[%s345 + $0x1c4] sm:$0xf]
      %v599 = vld [vmem:[%s345 + $0x1c8] sm:$0xf]
      %v600 = vld [vmem:[%s345 + $0x1cc] sm:$0xf]
      %v601 = vld [vmem:[%s345 + $0x1d0] sm:$0xf]
      %v602 = vld [vmem:[%s345 + $0x1d4] sm:$0xf]
      %v603 = vld [vmem:[%s345 + $0x1d8] sm:$0xf]
      %v604 = vld [vmem:[%s345 + $0x1dc] sm:$0xf]
      %v605 = vld [vmem:[%s345 + $0x1e0] sm:$0xf]
      %v606 = vld [vmem:[%s345 + $0x1e4] sm:$0xf]
      %v607 = vld [vmem:[%s345 + $0x1e8] sm:$0xf]
      %v608 = vld [vmem:[%s345 + $0x1ec] sm:$0xf]
      %v609 = vld [vmem:[%s345 + $0x1f0] sm:$0xf]
      %v610 = vld [vmem:[%s345 + $0x1f4] sm:$0xf]
      %v611 = vld [vmem:[%s345 + $0x1f8] sm:$0xf]
      %v612 = vld [vmem:[%s345 + $0x1fc] sm:$0xf]
      %v613 = vld [vmem:[%s345 + $0x200] sm:$0xf]
      %v614 = vld [vmem:[%s345 + $0x204] sm:$0xf]
      %v615 = vld [vmem:[%s345 + $0x208] sm:$0xf]
      %v616 = vld [vmem:[%s345 + $0x20c] sm:$0xf]
      %v617 = vld [vmem:[%s345 + $0x210] sm:$0xf]
      %v618 = vld [vmem:[%s345 + $0x214] sm:$0xf]
      %v619 = vld [vmem:[%s345 + $0x218] sm:$0xf]
      %v620 = vld [vmem:[%s345 + $0x21c] sm:$0xf]
      %v621 = vld [vmem:[%s345 + $0x220] sm:$0xf]
      %v622 = vld [vmem:[%s345 + $0x224] sm:$0xf]
      %v623 = vld [vmem:[%s345 + $0x228] sm:$0xf]
      %v624 = vld [vmem:[%s345 + $0x22c] sm:$0xf]
      %v625 = vld [vmem:[%s345 + $0x230] sm:$0xf]
      %v626 = vld [vmem:[%s345 + $0x234] sm:$0xf]
      %v627 = vld [vmem:[%s345 + $0x238] sm:$0xf]
      %v628 = vld [vmem:[%s345 + $0x23c] sm:$0xf]
      %v629 = vld [vmem:[%s345 + $0x240] sm:$0xf]
      %v630 = vld [vmem:[%s345 + $0x244] sm:$0xf]
      %v631 = vld [vmem:[%s345 + $0x248] sm:$0xf]
      %v632 = vld [vmem:[%s345 + $0x24c] sm:$0xf]
      %v633 = vld [vmem:[%s345 + $0x250] sm:$0xf]
      %v634 = vld [vmem:[%s345 + $0x254] sm:$0xf]
      %v635 = vld [vmem:[%s345 + $0x258] sm:$0xf]
      %v636 = vld [vmem:[%s345 + $0x25c] sm:$0xf]
      %v637 = vld [vmem:[%s345 + $0x260] sm:$0xf]
      %v638 = vld [vmem:[%s345 + $0x264] sm:$0xf]
      %v639 = vld [vmem:[%s345 + $0x268] sm:$0xf]
      %v640 = vld [vmem:[%s345 + $0x26c] sm:$0xf]
      %v641 = vld [vmem:[%s345 + $0x270] sm:$0xf]
      %v642 = vld [vmem:[%s345 + $0x274] sm:$0xf]
      %v643 = vld [vmem:[%s345 + $0x278] sm:$0xf]
      %v644 = vld [vmem:[%s345 + $0x27c] sm:$0xf]
      %v645 = vld [vmem:[%s345 + $0x280] sm:$0xf]
      %v646 = vld [vmem:[%s345 + $0x284] sm:$0xf]
      %v647 = vld [vmem:[%s345 + $0x288] sm:$0xf]
      %v648 = vld [vmem:[%s345 + $0x28c] sm:$0xf]
      %v649 = vld [vmem:[%s345 + $0x290] sm:$0xf]
      %v650 = vld [vmem:[%s345 + $0x294] sm:$0xf]
      %v651 = vld [vmem:[%s345 + $0x298] sm:$0xf]
      %v652 = vld [vmem:[%s345 + $0x29c] sm:$0xf]
      %v653 = vld [vmem:[%s345 + $0x2a0] sm:$0xf]
      %v654 = vld [vmem:[%s345 + $0x2a4] sm:$0xf]
      %v655 = vld [vmem:[%s345 + $0x2a8] sm:$0xf]
      %v656 = vld [vmem:[%s345 + $0x2ac] sm:$0xf]
      %v657 = vld [vmem:[%s345 + $0x2b0] sm:$0xf]
      %v658 = vld [vmem:[%s345 + $0x2b4] sm:$0xf]
      %v659 = vld [vmem:[%s345 + $0x2b8] sm:$0xf]
      %v660 = vld [vmem:[%s345 + $0x2bc] sm:$0xf]
      %v661 = vld [vmem:[%s345 + $0x2c0] sm:$0xf]
      %v662 = vld [vmem:[%s345 + $0x2c4] sm:$0xf]
      %v663 = vld [vmem:[%s345 + $0x2c8] sm:$0xf]
      %v664 = vld [vmem:[%s345 + $0x2cc] sm:$0xf]
      %v665 = vld [vmem:[%s345 + $0x2d0] sm:$0xf]
      %v666 = vld [vmem:[%s345 + $0x2d4] sm:$0xf]
      %v667 = vld [vmem:[%s345 + $0x2d8] sm:$0xf]
      %v668 = vld [vmem:[%s345 + $0x2dc] sm:$0xf]
      %v669 = vld [vmem:[%s345 + $0x2e0] sm:$0xf]
      %v670 = vld [vmem:[%s345 + $0x2e4] sm:$0xf]
      %v671 = vld [vmem:[%s345 + $0x2e8] sm:$0xf]
      %v672 = vld [vmem:[%s345 + $0x2ec] sm:$0xf]
      %v673 = vld [vmem:[%s345 + $0x2f0] sm:$0xf]
      %v674 = vld [vmem:[%s345 + $0x2f4] sm:$0xf]
      %v675 = vld [vmem:[%s345 + $0x2f8] sm:$0xf]
      %v676 = vld [vmem:[%s345 + $0x2fc] sm:$0xf]
      %v677 = vld [vmem:[%s345 + $0x300] sm:$0xf]
      %v678 = vld [vmem:[%s345 + $0x304] sm:$0xf]
      %v679 = vld [vmem:[%s345 + $0x308] sm:$0xf]
      %v680 = vld [vmem:[%s345 + $0x30c] sm:$0xf]
      %v681 = vld [vmem:[%s345 + $0x310] sm:$0xf]
      %v682 = vld [vmem:[%s345 + $0x314] sm:$0xf]
      %v683 = vld [vmem:[%s345 + $0x318] sm:$0xf]
      %v684 = vld [vmem:[%s345 + $0x31c] sm:$0xf]
      %v685 = vld [vmem:[%s345 + $0x320] sm:$0xf]
      %v686 = vld [vmem:[%s345 + $0x324] sm:$0xf]
      %v687 = vld [vmem:[%s345 + $0x328] sm:$0xf]
      %v688 = vld [vmem:[%s345 + $0x32c] sm:$0xf]
      %v689 = vld [vmem:[%s345 + $0x330] sm:$0xf]
      %v690 = vld [vmem:[%s345 + $0x334] sm:$0xf]
      %v691 = vld [vmem:[%s345 + $0x338] sm:$0xf]
      %v692 = vld [vmem:[%s345 + $0x33c] sm:$0xf]
      %v693 = vld [vmem:[%s345 + $0x340] sm:$0xf]
      %v694 = vld [vmem:[%s345 + $0x344] sm:$0xf]
      %v695 = vld [vmem:[%s345 + $0x348] sm:$0xf]
      %v696 = vld [vmem:[%s345 + $0x34c] sm:$0xf]
      %v697 = vld [vmem:[%s345 + $0x350] sm:$0xf]
      %v698 = vld [vmem:[%s345 + $0x354] sm:$0xf]
      %v699 = vld [vmem:[%s345 + $0x358] sm:$0xf]
      %v700 = vld [vmem:[%s345 + $0x35c] sm:$0xf]
      %v701 = vld [vmem:[%s345 + $0x360] sm:$0xf]
      %v702 = vld [vmem:[%s345 + $0x364] sm:$0xf]
      %v703 = vld [vmem:[%s345 + $0x368] sm:$0xf]
      %v704 = vld [vmem:[%s345 + $0x36c] sm:$0xf]
      %v705 = vld [vmem:[%s345 + $0x370] sm:$0xf]
      %v706 = vld [vmem:[%s345 + $0x374] sm:$0xf]
      %v707 = vld [vmem:[%s345 + $0x378] sm:$0xf]
      %v708 = vld [vmem:[%s345 + $0x37c] sm:$0xf]
      %v709 = vld [vmem:[%s345 + $0x380] sm:$0xf]
      %v710 = vld [vmem:[%s345 + $0x384] sm:$0xf]
      %v711 = vld [vmem:[%s345 + $0x388] sm:$0xf]
      %v712 = vld [vmem:[%s345 + $0x38c] sm:$0xf]
      %v713 = vld [vmem:[%s345 + $0x390] sm:$0xf]
      %v714 = vld [vmem:[%s345 + $0x394] sm:$0xf]
      %v715 = vld [vmem:[%s345 + $0x398] sm:$0xf]
      %v716 = vld [vmem:[%s345 + $0x39c] sm:$0xf]
      %v717 = vld [vmem:[%s345 + $0x3a0] sm:$0xf]
      %v718 = vld [vmem:[%s345 + $0x3a4] sm:$0xf]
      %v719 = vld [vmem:[%s345 + $0x3a8] sm:$0xf]
      %v720 = vld [vmem:[%s345 + $0x3ac] sm:$0xf]
      %v721 = vld [vmem:[%s345 + $0x3b0] sm:$0xf]
      %v722 = vld [vmem:[%s345 + $0x3b4] sm:$0xf]
      %v723 = vld [vmem:[%s345 + $0x3b8] sm:$0xf]
      %v724 = vld [vmem:[%s345 + $0x3bc] sm:$0xf]
      %v725 = vld [vmem:[%s345 + $0x3c0] sm:$0xf]
      %v726 = vld [vmem:[%s345 + $0x3c4] sm:$0xf]
      %v727 = vld [vmem:[%s345 + $0x3c8] sm:$0xf]
      %v728 = vld [vmem:[%s345 + $0x3cc] sm:$0xf]
      %v729 = vld [vmem:[%s345 + $0x3d0] sm:$0xf]
      %v730 = vld [vmem:[%s345 + $0x3d4] sm:$0xf]
      %v731 = vld [vmem:[%s345 + $0x3d8] sm:$0xf]
      %v732 = vld [vmem:[%s345 + $0x3dc] sm:$0xf]
      %v733 = vld [vmem:[%s345 + $0x3e0] sm:$0xf]
      %v734 = vld [vmem:[%s345 + $0x3e4] sm:$0xf]
      %v735 = vld [vmem:[%s345 + $0x3e8] sm:$0xf]
      %v736 = vld [vmem:[%s345 + $0x3ec] sm:$0xf]
      %v737 = vld [vmem:[%s345 + $0x3f0] sm:$0xf]
      %v738 = vld [vmem:[%s345 + $0x3f4] sm:$0xf]
      %v739 = vld [vmem:[%s345 + $0x3f8] sm:$0xf]
      %v740 = vld [vmem:[%s345 + $0x3fc] sm:$0xf]
      %v741 = vld [vmem:[%s345 + $0x400] sm:$0xf]
      %v742 = vld [vmem:[%s345 + $0x404] sm:$0xf]
      %v743 = vld [vmem:[%s345 + $0x408] sm:$0xf]
      %v744 = vld [vmem:[%s345 + $0x40c] sm:$0xf]
      %v745 = vld [vmem:[%s345 + $0x410] sm:$0xf]
      %v746 = vld [vmem:[%s345 + $0x414] sm:$0xf]
      %v747 = vld [vmem:[%s345 + $0x418] sm:$0xf]
      %v748 = vld [vmem:[%s345 + $0x41c] sm:$0xf]
      %v749 = vld [vmem:[%s345 + $0x420] sm:$0xf]
      %v750 = vld [vmem:[%s345 + $0x424] sm:$0xf]
      %v751 = vld [vmem:[%s345 + $0x428] sm:$0xf]
      %v752 = vld [vmem:[%s345 + $0x42c] sm:$0xf]
      %v753 = vld [vmem:[%s345 + $0x430] sm:$0xf]
      %v754 = vld [vmem:[%s345 + $0x434] sm:$0xf]
      %v755 = vld [vmem:[%s345 + $0x438] sm:$0xf]
      %v756 = vld [vmem:[%s345 + $0x43c] sm:$0xf]
      %v757 = vld [vmem:[%s345 + $0x440] sm:$0xf]
      %v758 = vld [vmem:[%s345 + $0x444] sm:$0xf]
      %v759 = vld [vmem:[%s345 + $0x448] sm:$0xf]
      %v760 = vld [vmem:[%s345 + $0x44c] sm:$0xf]
      %v761 = vld [vmem:[%s345 + $0x450] sm:$0xf]
      %v762 = vld [vmem:[%s345 + $0x454] sm:$0xf]
      %v763 = vld [vmem:[%s345 + $0x458] sm:$0xf]
      %v764 = vld [vmem:[%s345 + $0x45c] sm:$0xf]
      %v765 = vld [vmem:[%s345 + $0x460] sm:$0xf]
      %v766 = vld [vmem:[%s345 + $0x464] sm:$0xf]
      %v767 = vld [vmem:[%s345 + $0x468] sm:$0xf]
      %v768 = vld [vmem:[%s345 + $0x46c] sm:$0xf]
      %v769 = vld [vmem:[%s345 + $0x470] sm:$0xf]
      %v770 = vld [vmem:[%s345 + $0x474] sm:$0xf]
      %v771 = vld [vmem:[%s345 + $0x478] sm:$0xf]
      %v772 = vld [vmem:[%s345 + $0x47c] sm:$0xf]
      %v773 = vld [vmem:[%s345 + $0x480] sm:$0xf]
      %v774 = vld [vmem:[%s345 + $0x484] sm:$0xf]
      %v775 = vld [vmem:[%s345 + $0x488] sm:$0xf]
      %v776 = vld [vmem:[%s345 + $0x48c] sm:$0xf]
      %v777 = vld [vmem:[%s345 + $0x490] sm:$0xf]
      %v778 = vld [vmem:[%s345 + $0x494] sm:$0xf]
      %v779 = vld [vmem:[%s345 + $0x498] sm:$0xf]
      %v780 = vld [vmem:[%s345 + $0x49c] sm:$0xf]
      %v781 = vld [vmem:[%s345 + $0x4a0] sm:$0xf]
      %v782 = vld [vmem:[%s345 + $0x4a4] sm:$0xf]
      %v783 = vld [vmem:[%s345 + $0x4a8] sm:$0xf]
      %v784 = vld [vmem:[%s345 + $0x4ac] sm:$0xf]
      %v785 = vld [vmem:[%s345 + $0x4b0] sm:$0xf]
      %v786 = vld [vmem:[%s345 + $0x4b4] sm:$0xf]
      %v787 = vld [vmem:[%s345 + $0x4b8] sm:$0xf]
      %v788 = vld [vmem:[%s345 + $0x4bc] sm:$0xf]
      %v789 = vld [vmem:[%s345 + $0x4c0] sm:$0xf]
      %v790 = vld [vmem:[%s345 + $0x4c4] sm:$0xf]
      %v791 = vld [vmem:[%s345 + $0x4c8] sm:$0xf]
      %v792 = vld [vmem:[%s345 + $0x4cc] sm:$0xf]
      %v793 = vld [vmem:[%s345 + $0x4d0] sm:$0xf]
      %v794 = vld [vmem:[%s345 + $0x4d4] sm:$0xf]
      %v795 = vld [vmem:[%s345 + $0x4d8] sm:$0xf]
      %v796 = vld [vmem:[%s345 + $0x4dc] sm:$0xf]
      %v797 = vld [vmem:[%s345 + $0x4e0] sm:$0xf]
      %v798 = vld [vmem:[%s345 + $0x4e4] sm:$0xf]
      %v799 = vld [vmem:[%s345 + $0x4e8] sm:$0xf]
      %v800 = vld [vmem:[%s345 + $0x4ec] sm:$0xf]
      %v801 = vld [vmem:[%s345 + $0x4f0] sm:$0xf]
      %v802 = vld [vmem:[%s345 + $0x4f4] sm:$0xf]
      %v803 = vld [vmem:[%s345 + $0x4f8] sm:$0xf]
      %v804 = vld [vmem:[%s345 + $0x4fc] sm:$0xf]
      %v805 = vld [vmem:[%s345 + $0x500] sm:$0xf]
      %v806 = vld [vmem:[%s345 + $0x504] sm:$0xf]
      %v807 = vld [vmem:[%s345 + $0x508] sm:$0xf]
      %v808 = vld [vmem:[%s345 + $0x50c] sm:$0xf]
      %v809 = vld [vmem:[%s345 + $0x510] sm:$0xf]
      %v810 = vld [vmem:[%s345 + $0x514] sm:$0xf]
      %v811 = vld [vmem:[%s345 + $0x518] sm:$0xf]
      %v812 = vld [vmem:[%s345 + $0x51c] sm:$0xf]
      %v813 = vld [vmem:[%s345 + $0x520] sm:$0xf]
      %v814 = vld [vmem:[%s345 + $0x524] sm:$0xf]
      %v815 = vld [vmem:[%s345 + $0x528] sm:$0xf]
      %v816 = vld [vmem:[%s345 + $0x52c] sm:$0xf]
      %v817 = vld [vmem:[%s345 + $0x530] sm:$0xf]
      %v818 = vld [vmem:[%s345 + $0x534] sm:$0xf]
      %v819 = vld [vmem:[%s345 + $0x538] sm:$0xf]
      %v820 = vld [vmem:[%s345 + $0x53c] sm:$0xf]
      %v821 = vld [vmem:[%s345 + $0x540] sm:$0xf]
      %v822 = vld [vmem:[%s345 + $0x544] sm:$0xf]
      %v823 = vld [vmem:[%s345 + $0x548] sm:$0xf]
      %v824 = vld [vmem:[%s345 + $0x54c] sm:$0xf]
      %v825 = vld [vmem:[%s345 + $0x550] sm:$0xf]
      %v826 = vld [vmem:[%s345 + $0x554] sm:$0xf]
      %v827 = vld [vmem:[%s345 + $0x558] sm:$0xf]
      %v828 = vld [vmem:[%s345 + $0x55c] sm:$0xf]
      %v829 = vld [vmem:[%s345 + $0x560] sm:$0xf]
      %v830 = vld [vmem:[%s345 + $0x564] sm:$0xf]
      %v831 = vld [vmem:[%s345 + $0x568] sm:$0xf]
      %v832 = vld [vmem:[%s345 + $0x56c] sm:$0xf]
      %v833 = vld [vmem:[%s345 + $0x570] sm:$0xf]
      %v834 = vld [vmem:[%s345 + $0x574] sm:$0xf]
      %v835 = vld [vmem:[%s345 + $0x578] sm:$0xf]
      %v836 = vld [vmem:[%s345 + $0x57c] sm:$0xf]
      %v837 = vld [vmem:[%s345 + $0x580] sm:$0xf]
      %v838 = vld [vmem:[%s345 + $0x584] sm:$0xf]
      %v839 = vld [vmem:[%s345 + $0x588] sm:$0xf]
      %v840 = vld [vmem:[%s345 + $0x58c] sm:$0xf]
      %v841 = vld [vmem:[%s345 + $0x590] sm:$0xf]
      %v842 = vld [vmem:[%s345 + $0x594] sm:$0xf]
      %v843 = vld [vmem:[%s345 + $0x598] sm:$0xf]
      %v844 = vld [vmem:[%s345 + $0x59c] sm:$0xf]
      %v845 = vld [vmem:[%s345 + $0x5a0] sm:$0xf]
      %v846 = vld [vmem:[%s345 + $0x5a4] sm:$0xf]
      %v847 = vld [vmem:[%s345 + $0x5a8] sm:$0xf]
      %v848 = vld [vmem:[%s345 + $0x5ac] sm:$0xf]
      %v849 = vld [vmem:[%s345 + $0x5b0] sm:$0xf]
      %v850 = vld [vmem:[%s345 + $0x5b4] sm:$0xf]
      %v851 = vld [vmem:[%s345 + $0x5b8] sm:$0xf]
      %v852 = vld [vmem:[%s345 + $0x5bc] sm:$0xf]
      %v853 = vld [vmem:[%s345 + $0x5c0] sm:$0xf]
      %v854 = vld [vmem:[%s345 + $0x5c4] sm:$0xf]
      %v855 = vld [vmem:[%s345 + $0x5c8] sm:$0xf]
      %v856 = vld [vmem:[%s345 + $0x5cc] sm:$0xf]
      %v857 = vld [vmem:[%s345 + $0x5d0] sm:$0xf]
      %v858 = vld [vmem:[%s345 + $0x5d4] sm:$0xf]
      %v859 = vld [vmem:[%s345 + $0x5d8] sm:$0xf]
      %v860 = vld [vmem:[%s345 + $0x5dc] sm:$0xf]
      %v861 = vld [vmem:[%s345 + $0x5e0] sm:$0xf]
      %v862 = vld [vmem:[%s345 + $0x5e4] sm:$0xf]
      %v863 = vld [vmem:[%s345 + $0x5e8] sm:$0xf]
      %v864 = vld [vmem:[%s345 + $0x5ec] sm:$0xf]
      %v865 = vld [vmem:[%s345 + $0x5f0] sm:$0xf]
      %v866 = vld [vmem:[%s345 + $0x5f4] sm:$0xf]
      %v867 = vld [vmem:[%s345 + $0x5f8] sm:$0xf]
      %v868 = vld [vmem:[%s345 + $0x5fc] sm:$0xf]
      %v869 = vld [vmem:[%s345 + $0x600] sm:$0xf]
      %v870 = vld [vmem:[%s345 + $0x604] sm:$0xf]
      %v871 = vld [vmem:[%s345 + $0x608] sm:$0xf]
      %v872 = vld [vmem:[%s345 + $0x60c] sm:$0xf]
      %v873 = vld [vmem:[%s345 + $0x610] sm:$0xf]
      %v874 = vld [vmem:[%s345 + $0x614] sm:$0xf]
      %v875 = vld [vmem:[%s345 + $0x618] sm:$0xf]
      %v876 = vld [vmem:[%s345 + $0x61c] sm:$0xf]
      %v877 = vld [vmem:[%s345 + $0x620] sm:$0xf]
      %v878 = vld [vmem:[%s345 + $0x624] sm:$0xf]
      %v879 = vld [vmem:[%s345 + $0x628] sm:$0xf]
      %v880 = vld [vmem:[%s345 + $0x62c] sm:$0xf]
      %v881 = vld [vmem:[%s345 + $0x630] sm:$0xf]
      %v882 = vld [vmem:[%s345 + $0x634] sm:$0xf]
      %v883 = vld [vmem:[%s345 + $0x638] sm:$0xf]
      %v884 = vld [vmem:[%s345 + $0x63c] sm:$0xf]
      %v989 = vunpack.c.l.b16 %v381
      %v990 = vunpack.c.h.b16 %v381
      %v991 = vunpack.c.l.b16 %v382
      %v992 = vunpack.c.h.b16 %v382
      %v993 = vunpack.c.l.b16 %v383
      %v994 = vunpack.c.h.b16 %v383
      %v995 = vunpack.c.l.b16 %v384
      %v996 = vunpack.c.h.b16 %v384
      %v997 = vunpack.c.l.b16 %v385
      %v998 = vunpack.c.h.b16 %v385
      %v999 = vunpack.c.l.b16 %v386
      %v1000 = vunpack.c.h.b16 %v386
      %v1001 = vunpack.c.l.b16 %v387
      %v1002 = vunpack.c.h.b16 %v387
      %v1003 = vunpack.c.l.b16 %v388
      %v1004 = vunpack.c.h.b16 %v388
      %v1005 = vunpack.c.l.b16 %v389
      %v1006 = vunpack.c.h.b16 %v389
      %v1007 = vunpack.c.l.b16 %v390
      %v1008 = vunpack.c.h.b16 %v390
      %v1009 = vunpack.c.l.b16 %v391
      %v1010 = vunpack.c.h.b16 %v391
      %v1011 = vunpack.c.l.b16 %v392
      %v1012 = vunpack.c.h.b16 %v392
      %v1013 = vunpack.c.l.b16 %v393
      %v1014 = vunpack.c.l.b16 %v394
      %v1015 = vunpack.c.h.b16 %v394
      %v1016 = vunpack.c.l.b16 %v395
      %v1017 = vunpack.c.h.b16 %v395
      %v1018 = vunpack.c.l.b16 %v396
      %v1019 = vunpack.c.h.b16 %v396
      %v1020 = vunpack.c.l.b16 %v397
      %v1021 = vunpack.c.h.b16 %v397
      %v1022 = vunpack.c.l.b16 %v398
      %v1023 = vunpack.c.h.b16 %v398
      %v1024 = vunpack.c.l.b16 %v399
      %v1025 = vunpack.c.h.b16 %v399
      %v1026 = vunpack.c.l.b16 %v400
      %v1027 = vunpack.c.h.b16 %v400
      %v1028 = vunpack.c.l.b16 %v401
      %v1029 = vunpack.c.h.b16 %v401
      %v1030 = vunpack.c.l.b16 %v402
      %v1031 = vunpack.c.h.b16 %v402
      %v1032 = vunpack.c.l.b16 %v403
      %v1033 = vunpack.c.h.b16 %v403
      %v1034 = vunpack.c.l.b16 %v404
      %v1035 = vunpack.c.h.b16 %v404
      %v1036 = vunpack.c.l.b16 %v405
      %v1037 = vunpack.c.h.b16 %v405
      %v1038 = vunpack.c.l.b16 %v406
      %v1039 = vunpack.c.l.b16 %v407
      %v1040 = vunpack.c.h.b16 %v407
      %v1041 = vunpack.c.l.b16 %v408
      %v1042 = vunpack.c.h.b16 %v408
      %v1043 = vunpack.c.l.b16 %v409
      %v1044 = vunpack.c.h.b16 %v409
      %v1045 = vunpack.c.l.b16 %v410
      %v1046 = vunpack.c.h.b16 %v410
      %v1047 = vunpack.c.l.b16 %v411
      %v1048 = vunpack.c.h.b16 %v411
      %v1049 = vunpack.c.l.b16 %v412
      %v1050 = vunpack.c.h.b16 %v412
      %v1051 = vunpack.c.l.b16 %v413
      %v1052 = vunpack.c.h.b16 %v413
      %v1053 = vunpack.c.l.b16 %v414
      %v1054 = vunpack.c.h.b16 %v414
      %v1055 = vunpack.c.l.b16 %v415
      %v1056 = vunpack.c.h.b16 %v415
      %v1057 = vunpack.c.l.b16 %v416
      %v1058 = vunpack.c.h.b16 %v416
      %v1059 = vunpack.c.l.b16 %v417
      %v1060 = vunpack.c.h.b16 %v417
      %v1061 = vunpack.c.l.b16 %v418
      %v1062 = vunpack.c.h.b16 %v418
      %v1063 = vunpack.c.l.b16 %v419
      %v1064 = vunpack.c.l.b16 %v420
      %v1065 = vunpack.c.h.b16 %v420
      %v1066 = vunpack.c.l.b16 %v421
      %v1067 = vunpack.c.h.b16 %v421
      %v1068 = vunpack.c.l.b16 %v422
      %v1069 = vunpack.c.h.b16 %v422
      %v1070 = vunpack.c.l.b16 %v423
      %v1071 = vunpack.c.h.b16 %v423
      %v1072 = vunpack.c.l.b16 %v424
      %v1073 = vunpack.c.h.b16 %v424
      %v1074 = vunpack.c.l.b16 %v425
      %v1075 = vunpack.c.h.b16 %v425
      %v1076 = vunpack.c.l.b16 %v426
      %v1077 = vunpack.c.h.b16 %v426
      %v1078 = vunpack.c.l.b16 %v427
      %v1079 = vunpack.c.h.b16 %v427
      %v1080 = vunpack.c.l.b16 %v428
      %v1081 = vunpack.c.h.b16 %v428
      %v1082 = vunpack.c.l.b16 %v429
      %v1083 = vunpack.c.h.b16 %v429
      %v1084 = vunpack.c.l.b16 %v430
      %v1085 = vunpack.c.h.b16 %v430
      %v1086 = vunpack.c.l.b16 %v431
      %v1087 = vunpack.c.h.b16 %v431
      %v1088 = vunpack.c.l.b16 %v432
      %v1089 = vunpack.c.l.b16 %v433
      %v1090 = vunpack.c.h.b16 %v433
      %v1091 = vunpack.c.l.b16 %v434
      %v1092 = vunpack.c.h.b16 %v434
      %v1093 = vunpack.c.l.b16 %v435
      %v1094 = vunpack.c.h.b16 %v435
      %v1095 = vunpack.c.l.b16 %v436
      %v1096 = vunpack.c.h.b16 %v436
      %v1097 = vunpack.c.l.b16 %v437
      %v1098 = vunpack.c.h.b16 %v437
      %v1099 = vunpack.c.l.b16 %v438
      %v1100 = vunpack.c.h.b16 %v438
      %v1101 = vunpack.c.l.b16 %v439
      %v1102 = vunpack.c.h.b16 %v439
      %v1103 = vunpack.c.l.b16 %v440
      %v1104 = vunpack.c.h.b16 %v440
      %v1105 = vunpack.c.l.b16 %v441
      %v1106 = vunpack.c.h.b16 %v441
      %v1107 = vunpack.c.l.b16 %v442
      %v1108 = vunpack.c.h.b16 %v442
      %v1109 = vunpack.c.l.b16 %v443
      %v1110 = vunpack.c.h.b16 %v443
      %v1111 = vunpack.c.l.b16 %v444
      %v1112 = vunpack.c.h.b16 %v444
      %v1113 = vunpack.c.l.b16 %v445
      %v1114 = vunpack.c.l.b16 %v446
      %v1115 = vunpack.c.h.b16 %v446
      %v1116 = vunpack.c.l.b16 %v447
      %v1117 = vunpack.c.h.b16 %v447
      %v1118 = vunpack.c.l.b16 %v448
      %v1119 = vunpack.c.h.b16 %v448
      %v1120 = vunpack.c.l.b16 %v449
      %v1121 = vunpack.c.h.b16 %v449
      %v1122 = vunpack.c.l.b16 %v450
      %v1123 = vunpack.c.h.b16 %v450
      %v1124 = vunpack.c.l.b16 %v451
      %v1125 = vunpack.c.h.b16 %v451
      %v1126 = vunpack.c.l.b16 %v452
      %v1127 = vunpack.c.h.b16 %v452
      %v1128 = vunpack.c.l.b16 %v453
      %v1129 = vunpack.c.h.b16 %v453
      %v1130 = vunpack.c.l.b16 %v454
      %v1131 = vunpack.c.h.b16 %v454
      %v1132 = vunpack.c.l.b16 %v455
      %v1133 = vunpack.c.h.b16 %v455
      %v1134 = vunpack.c.l.b16 %v456
      %v1135 = vunpack.c.h.b16 %v456
      %v1136 = vunpack.c.l.b16 %v457
      %v1137 = vunpack.c.h.b16 %v457
      %v1138 = vunpack.c.l.b16 %v458
      %v1139 = vunpack.c.l.b16 %v459
      %v1140 = vunpack.c.h.b16 %v459
      %v1141 = vunpack.c.l.b16 %v460
      %v1142 = vunpack.c.h.b16 %v460
      %v1143 = vunpack.c.l.b16 %v461
      %v1144 = vunpack.c.h.b16 %v461
      %v1145 = vunpack.c.l.b16 %v462
      %v1146 = vunpack.c.h.b16 %v462
      %v1147 = vunpack.c.l.b16 %v463
      %v1148 = vunpack.c.h.b16 %v463
      %v1149 = vunpack.c.l.b16 %v464
      %v1150 = vunpack.c.h.b16 %v464
      %v1151 = vunpack.c.l.b16 %v465
      %v1152 = vunpack.c.h.b16 %v465
      %v1153 = vunpack.c.l.b16 %v466
      %v1154 = vunpack.c.h.b16 %v466
      %v1155 = vunpack.c.l.b16 %v467
      %v1156 = vunpack.c.h.b16 %v467
      %v1157 = vunpack.c.l.b16 %v468
      %v1158 = vunpack.c.h.b16 %v468
      %v1159 = vunpack.c.l.b16 %v469
      %v1160 = vunpack.c.h.b16 %v469
      %v1161 = vunpack.c.l.b16 %v470
      %v1162 = vunpack.c.h.b16 %v470
      %v1163 = vunpack.c.l.b16 %v471
      %v1164 = vunpack.c.l.b16 %v472
      %v1165 = vunpack.c.h.b16 %v472
      %v1166 = vunpack.c.l.b16 %v473
      %v1167 = vunpack.c.h.b16 %v473
      %v1168 = vunpack.c.l.b16 %v474
      %v1169 = vunpack.c.h.b16 %v474
      %v1170 = vunpack.c.l.b16 %v475
      %v1171 = vunpack.c.h.b16 %v475
      %v1172 = vunpack.c.l.b16 %v476
      %v1173 = vunpack.c.h.b16 %v476
      %v1174 = vunpack.c.l.b16 %v477
      %v1175 = vunpack.c.h.b16 %v477
      %v1176 = vunpack.c.l.b16 %v478
      %v1177 = vunpack.c.h.b16 %v478
      %v1178 = vunpack.c.l.b16 %v479
      %v1179 = vunpack.c.h.b16 %v479
      %v1180 = vunpack.c.l.b16 %v480
      %v1181 = vunpack.c.h.b16 %v480
      %v1182 = vunpack.c.l.b16 %v481
      %v1183 = vunpack.c.h.b16 %v481
      %v1184 = vunpack.c.l.b16 %v482
      %v1185 = vunpack.c.h.b16 %v482
      %v1186 = vunpack.c.l.b16 %v483
      %v1187 = vunpack.c.h.b16 %v483
      %v1188 = vunpack.c.l.b16 %v484
      %v1189 = vpack.c.b16 %v1014, %v989
      %v1190 = vpack.c.b16 %v1015, %v990
      %v1191 = vpack.c.b16 %v1016, %v991
      %v1192 = vpack.c.b16 %v1017, %v992
      %v1193 = vpack.c.b16 %v1018, %v993
      %v1194 = vpack.c.b16 %v1019, %v994
      %v1195 = vpack.c.b16 %v1020, %v995
      %v1196 = vpack.c.b16 %v1021, %v996
      %v1197 = vpack.c.b16 %v1022, %v997
      %v1198 = vpack.c.b16 %v1023, %v998
      %v1199 = vpack.c.b16 %v1024, %v999
      %v1200 = vpack.c.b16 %v1025, %v1000
      %v1201 = vpack.c.b16 %v1026, %v1001
      %v1202 = vpack.c.b16 %v1027, %v1002
      %v1203 = vpack.c.b16 %v1028, %v1003
      %v1204 = vpack.c.b16 %v1029, %v1004
      %v1205 = vpack.c.b16 %v1030, %v1005
      %v1206 = vpack.c.b16 %v1031, %v1006
      %v1207 = vpack.c.b16 %v1032, %v1007
      %v1208 = vpack.c.b16 %v1033, %v1008
      %v1209 = vpack.c.b16 %v1034, %v1009
      %v1210 = vpack.c.b16 %v1035, %v1010
      %v1211 = vpack.c.b16 %v1036, %v1011
      %v1212 = vpack.c.b16 %v1037, %v1012
      %v1213 = vpack.c.b16 %v1038, %v1013
      %v1214 = vpack.c.b16 %v1064, %v1039
      %v1215 = vpack.c.b16 %v1065, %v1040
      %v1216 = vpack.c.b16 %v1066, %v1041
      %v1217 = vpack.c.b16 %v1067, %v1042
      %v1218 = vpack.c.b16 %v1068, %v1043
      %v1219 = vpack.c.b16 %v1069, %v1044
      %v1220 = vpack.c.b16 %v1070, %v1045
      %v1221 = vpack.c.b16 %v1071, %v1046
      %v1222 = vpack.c.b16 %v1072, %v1047
      %v1223 = vpack.c.b16 %v1073, %v1048
      %v1224 = vpack.c.b16 %v1074, %v1049
      %v1225 = vpack.c.b16 %v1075, %v1050
      %v1226 = vpack.c.b16 %v1076, %v1051
      %v1227 = vpack.c.b16 %v1077, %v1052
      %v1228 = vpack.c.b16 %v1078, %v1053
      %v1229 = vpack.c.b16 %v1079, %v1054
      %v1230 = vpack.c.b16 %v1080, %v1055
      %v1231 = vpack.c.b16 %v1081, %v1056
      %v1232 = vpack.c.b16 %v1082, %v1057
      %v1233 = vpack.c.b16 %v1083, %v1058
      %v1234 = vpack.c.b16 %v1084, %v1059
      %v1235 = vpack.c.b16 %v1085, %v1060
      %v1236 = vpack.c.b16 %v1086, %v1061
      %v1237 = vpack.c.b16 %v1087, %v1062
      %v1238 = vpack.c.b16 %v1088, %v1063
      %v1239 = vpack.c.b16 %v1114, %v1089
      %v1240 = vpack.c.b16 %v1115, %v1090
      %v1241 = vpack.c.b16 %v1116, %v1091
      %v1242 = vpack.c.b16 %v1117, %v1092
      %v1243 = vpack.c.b16 %v1118, %v1093
      %v1244 = vpack.c.b16 %v1119, %v1094
      %v1245 = vpack.c.b16 %v1120, %v1095
      %v1246 = vpack.c.b16 %v1121, %v1096
      %v1247 = vpack.c.b16 %v1122, %v1097
      %v1248 = vpack.c.b16 %v1123, %v1098
      %v1249 = vpack.c.b16 %v1124, %v1099
      %v1250 = vpack.c.b16 %v1125, %v1100
      %v1251 = vpack.c.b16 %v1126, %v1101
      %v1252 = vpack.c.b16 %v1127, %v1102
      %v1253 = vpack.c.b16 %v1128, %v1103
      %v1254 = vpack.c.b16 %v1129, %v1104
      %v1255 = vpack.c.b16 %v1130, %v1105
      %v1256 = vpack.c.b16 %v1131, %v1106
      %v1257 = vpack.c.b16 %v1132, %v1107
      %v1258 = vpack.c.b16 %v1133, %v1108
      %v1259 = vpack.c.b16 %v1134, %v1109
      %v1260 = vpack.c.b16 %v1135, %v1110
      %v1261 = vpack.c.b16 %v1136, %v1111
      %v1262 = vpack.c.b16 %v1137, %v1112
      %v1263 = vpack.c.b16 %v1138, %v1113
      %v1264 = vpack.c.b16 %v1164, %v1139
      %v1265 = vpack.c.b16 %v1165, %v1140
      %v1266 = vpack.c.b16 %v1166, %v1141
      %v1267 = vpack.c.b16 %v1167, %v1142
      %v1268 = vpack.c.b16 %v1168, %v1143
      %v1269 = vpack.c.b16 %v1169, %v1144
      %v1270 = vpack.c.b16 %v1170, %v1145
      %v1271 = vpack.c.b16 %v1171, %v1146
      %v1272 = vpack.c.b16 %v1172, %v1147
      %v1273 = vpack.c.b16 %v1173, %v1148
      %v1274 = vpack.c.b16 %v1174, %v1149
      %v1275 = vpack.c.b16 %v1175, %v1150
      %v1276 = vpack.c.b16 %v1176, %v1151
      %v1277 = vpack.c.b16 %v1177, %v1152
      %v1278 = vpack.c.b16 %v1178, %v1153
      %v1279 = vpack.c.b16 %v1179, %v1154
      %v1280 = vpack.c.b16 %v1180, %v1155
      %v1281 = vpack.c.b16 %v1181, %v1156
      %v1282 = vpack.c.b16 %v1182, %v1157
      %v1283 = vpack.c.b16 %v1183, %v1158
      %v1284 = vpack.c.b16 %v1184, %v1159
      %v1285 = vpack.c.b16 %v1185, %v1160
      %v1286 = vpack.c.b16 %v1186, %v1161
      %v1287 = vpack.c.b16 %v1187, %v1162
      %v1288 = vpack.c.b16 %v1188, %v1163
      %v1789 = vunpack.c.l.b16 %v485
      %v1790 = vunpack.c.l.b16 %v486
      %v1791 = vunpack.c.l.b16 %v487
      %v1792 = vunpack.c.l.b16 %v488
      %v1793 = vunpack.c.l.b16 %v489
      %v1794 = vunpack.c.l.b16 %v490
      %v1795 = vunpack.c.l.b16 %v491
      %v1796 = vunpack.c.l.b16 %v492
      %v1797 = vunpack.c.l.b16 %v493
      %v1798 = vunpack.c.l.b16 %v494
      %v1799 = vunpack.c.l.b16 %v495
      %v1800 = vunpack.c.l.b16 %v496
      %v1801 = vunpack.c.l.b16 %v497
      %v1802 = vunpack.c.l.b16 %v498
      %v1803 = vunpack.c.l.b16 %v499
      %v1804 = vunpack.c.l.b16 %v500
      %v1805 = vunpack.c.l.b16 %v501
      %v1806 = vunpack.c.l.b16 %v502
      %v1807 = vunpack.c.l.b16 %v503
      %v1808 = vunpack.c.l.b16 %v504
      %v1809 = vunpack.c.l.b16 %v505
      %v1810 = vunpack.c.l.b16 %v506
      %v1811 = vunpack.c.l.b16 %v507
      %v1812 = vunpack.c.l.b16 %v508
      %v1813 = vunpack.c.l.b16 %v509
      %v1814 = vunpack.c.l.b16 %v510
      %v1815 = vunpack.c.l.b16 %v511
      %v1816 = vunpack.c.l.b16 %v512
      %v1817 = vunpack.c.l.b16 %v513
      %v1818 = vunpack.c.l.b16 %v514
      %v1819 = vunpack.c.l.b16 %v515
      %v1820 = vunpack.c.l.b16 %v516
      %v1821 = vunpack.c.l.b16 %v517
      %v1822 = vunpack.c.l.b16 %v518
      %v1823 = vunpack.c.l.b16 %v519
      %v1824 = vunpack.c.l.b16 %v520
      %v1825 = vunpack.c.l.b16 %v521
      %v1826 = vunpack.c.l.b16 %v522
      %v1827 = vunpack.c.l.b16 %v523
      %v1828 = vunpack.c.l.b16 %v524
      %v1829 = vunpack.c.l.b16 %v525
      %v1830 = vunpack.c.l.b16 %v526
      %v1831 = vunpack.c.l.b16 %v527
      %v1832 = vunpack.c.l.b16 %v528
      %v1833 = vunpack.c.l.b16 %v529
      %v1834 = vunpack.c.l.b16 %v530
      %v1835 = vunpack.c.l.b16 %v531
      %v1836 = vunpack.c.l.b16 %v532
      %v1837 = vunpack.c.l.b16 %v533
      %v1838 = vunpack.c.l.b16 %v534
      %v1839 = vunpack.c.l.b16 %v535
      %v1840 = vunpack.c.l.b16 %v536
      %v1841 = vunpack.c.l.b16 %v537
      %v1842 = vunpack.c.l.b16 %v538
      %v1843 = vunpack.c.l.b16 %v539
      %v1844 = vunpack.c.l.b16 %v540
      %v1845 = vunpack.c.l.b16 %v541
      %v1846 = vunpack.c.l.b16 %v542
      %v1847 = vunpack.c.l.b16 %v543
      %v1848 = vunpack.c.l.b16 %v544
      %v1849 = vunpack.c.l.b16 %v545
      %v1850 = vunpack.c.l.b16 %v546
      %v1851 = vunpack.c.l.b16 %v547
      %v1852 = vunpack.c.l.b16 %v548
      %v1853 = vunpack.c.l.b16 %v549
      %v1854 = vunpack.c.l.b16 %v550
      %v1855 = vunpack.c.l.b16 %v551
      %v1856 = vunpack.c.l.b16 %v552
      %v1857 = vunpack.c.l.b16 %v553
      %v1858 = vunpack.c.l.b16 %v554
      %v1859 = vunpack.c.l.b16 %v555
      %v1860 = vunpack.c.l.b16 %v556
      %v1861 = vunpack.c.l.b16 %v557
      %v1862 = vunpack.c.l.b16 %v558
      %v1863 = vunpack.c.l.b16 %v559
      %v1864 = vunpack.c.l.b16 %v560
      %v1865 = vunpack.c.l.b16 %v561
      %v1866 = vunpack.c.l.b16 %v562
      %v1867 = vunpack.c.l.b16 %v563
      %v1868 = vunpack.c.l.b16 %v564
      %v1869 = vunpack.c.l.b16 %v565
      %v1870 = vunpack.c.l.b16 %v566
      %v1871 = vunpack.c.l.b16 %v567
      %v1872 = vunpack.c.l.b16 %v568
      %v1873 = vunpack.c.l.b16 %v569
      %v1874 = vunpack.c.l.b16 %v570
      %v1875 = vunpack.c.l.b16 %v571
      %v1876 = vunpack.c.l.b16 %v572
      %v1877 = vunpack.c.l.b16 %v573
      %v1878 = vunpack.c.l.b16 %v574
      %v1879 = vunpack.c.l.b16 %v575
      %v1880 = vunpack.c.l.b16 %v576
      %v1881 = vunpack.c.l.b16 %v577
      %v1882 = vunpack.c.l.b16 %v578
      %v1883 = vunpack.c.l.b16 %v579
      %v1884 = vunpack.c.l.b16 %v580
      %v1885 = vunpack.c.l.b16 %v581
      %v1886 = vunpack.c.l.b16 %v582
      %v1887 = vunpack.c.l.b16 %v583
      %v1888 = vunpack.c.l.b16 %v584
      %v1889 = vunpack.c.l.b16 %v585
      %v1890 = vunpack.c.l.b16 %v586
      %v1891 = vunpack.c.l.b16 %v587
      %v1892 = vunpack.c.l.b16 %v588
      %v1893 = vunpack.c.l.b16 %v589
      %v1894 = vunpack.c.l.b16 %v590
      %v1895 = vunpack.c.l.b16 %v591
      %v1896 = vunpack.c.l.b16 %v592
      %v1897 = vunpack.c.l.b16 %v593
      %v1898 = vunpack.c.l.b16 %v594
      %v1899 = vunpack.c.l.b16 %v595
      %v1900 = vunpack.c.l.b16 %v596
      %v1901 = vunpack.c.l.b16 %v597
      %v1902 = vunpack.c.l.b16 %v598
      %v1903 = vunpack.c.l.b16 %v599
      %v1904 = vunpack.c.l.b16 %v600
      %v1905 = vunpack.c.l.b16 %v601
      %v1906 = vunpack.c.l.b16 %v602
      %v1907 = vunpack.c.l.b16 %v603
      %v1908 = vunpack.c.l.b16 %v604
      %v1909 = vunpack.c.l.b16 %v605
      %v1910 = vunpack.c.l.b16 %v606
      %v1911 = vunpack.c.l.b16 %v607
      %v1912 = vunpack.c.l.b16 %v608
      %v1913 = vunpack.c.l.b16 %v609
      %v1914 = vunpack.c.l.b16 %v610
      %v1915 = vunpack.c.l.b16 %v611
      %v1916 = vunpack.c.l.b16 %v612
      %v1917 = vunpack.c.l.b16 %v613
      %v1918 = vunpack.c.l.b16 %v614
      %v1919 = vunpack.c.l.b16 %v615
      %v1920 = vunpack.c.l.b16 %v616
      %v1921 = vunpack.c.l.b16 %v617
      %v1922 = vunpack.c.l.b16 %v618
      %v1923 = vunpack.c.l.b16 %v619
      %v1924 = vunpack.c.l.b16 %v620
      %v1925 = vunpack.c.l.b16 %v621
      %v1926 = vunpack.c.l.b16 %v622
      %v1927 = vunpack.c.l.b16 %v623
      %v1928 = vunpack.c.l.b16 %v624
      %v1929 = vunpack.c.l.b16 %v625
      %v1930 = vunpack.c.l.b16 %v626
      %v1931 = vunpack.c.l.b16 %v627
      %v1932 = vunpack.c.l.b16 %v628
      %v1933 = vunpack.c.l.b16 %v629
      %v1934 = vunpack.c.l.b16 %v630
      %v1935 = vunpack.c.l.b16 %v631
      %v1936 = vunpack.c.l.b16 %v632
      %v1937 = vunpack.c.l.b16 %v633
      %v1938 = vunpack.c.l.b16 %v634
      %v1939 = vunpack.c.l.b16 %v635
      %v1940 = vunpack.c.l.b16 %v636
      %v1941 = vunpack.c.l.b16 %v637
      %v1942 = vunpack.c.l.b16 %v638
      %v1943 = vunpack.c.l.b16 %v639
      %v1944 = vunpack.c.l.b16 %v640
      %v1945 = vunpack.c.l.b16 %v641
      %v1946 = vunpack.c.l.b16 %v642
      %v1947 = vunpack.c.l.b16 %v643
      %v1948 = vunpack.c.l.b16 %v644
      %v1949 = vunpack.c.l.b16 %v645
      %v1950 = vunpack.c.l.b16 %v646
      %v1951 = vunpack.c.l.b16 %v647
      %v1952 = vunpack.c.l.b16 %v648
      %v1953 = vunpack.c.l.b16 %v649
      %v1954 = vunpack.c.l.b16 %v650
      %v1955 = vunpack.c.l.b16 %v651
      %v1956 = vunpack.c.l.b16 %v652
      %v1957 = vunpack.c.l.b16 %v653
      %v1958 = vunpack.c.l.b16 %v654
      %v1959 = vunpack.c.l.b16 %v655
      %v1960 = vunpack.c.l.b16 %v656
      %v1961 = vunpack.c.l.b16 %v657
      %v1962 = vunpack.c.l.b16 %v658
      %v1963 = vunpack.c.l.b16 %v659
      %v1964 = vunpack.c.l.b16 %v660
      %v1965 = vunpack.c.l.b16 %v661
      %v1966 = vunpack.c.l.b16 %v662
      %v1967 = vunpack.c.l.b16 %v663
      %v1968 = vunpack.c.l.b16 %v664
      %v1969 = vunpack.c.l.b16 %v665
      %v1970 = vunpack.c.l.b16 %v666
      %v1971 = vunpack.c.l.b16 %v667
      %v1972 = vunpack.c.l.b16 %v668
      %v1973 = vunpack.c.l.b16 %v669
      %v1974 = vunpack.c.l.b16 %v670
      %v1975 = vunpack.c.l.b16 %v671
      %v1976 = vunpack.c.l.b16 %v672
      %v1977 = vunpack.c.l.b16 %v673
      %v1978 = vunpack.c.l.b16 %v674
      %v1979 = vunpack.c.l.b16 %v675
      %v1980 = vunpack.c.l.b16 %v676
      %v1981 = vunpack.c.l.b16 %v677
      %v1982 = vunpack.c.l.b16 %v678
      %v1983 = vunpack.c.l.b16 %v679
      %v1984 = vunpack.c.l.b16 %v680
      %v1985 = vunpack.c.l.b16 %v681
      %v1986 = vunpack.c.l.b16 %v682
      %v1987 = vunpack.c.l.b16 %v683
      %v1988 = vunpack.c.l.b16 %v684
      %v1989 = vunpack.c.l.b16 %v685
      %v1990 = vunpack.c.l.b16 %v686
      %v1991 = vunpack.c.l.b16 %v687
      %v1992 = vunpack.c.l.b16 %v688
      %v1993 = vunpack.c.l.b16 %v689
      %v1994 = vunpack.c.l.b16 %v690
      %v1995 = vunpack.c.l.b16 %v691
      %v1996 = vunpack.c.l.b16 %v692
      %v1997 = vunpack.c.l.b16 %v693
      %v1998 = vunpack.c.l.b16 %v694
      %v1999 = vunpack.c.l.b16 %v695
      %v2000 = vunpack.c.l.b16 %v696
      %v2001 = vunpack.c.l.b16 %v697
      %v2002 = vunpack.c.l.b16 %v698
      %v2003 = vunpack.c.l.b16 %v699
      %v2004 = vunpack.c.l.b16 %v700
      %v2005 = vunpack.c.l.b16 %v701
      %v2006 = vunpack.c.l.b16 %v702
      %v2007 = vunpack.c.l.b16 %v703
      %v2008 = vunpack.c.l.b16 %v704
      %v2009 = vunpack.c.l.b16 %v705
      %v2010 = vunpack.c.l.b16 %v706
      %v2011 = vunpack.c.l.b16 %v707
      %v2012 = vunpack.c.l.b16 %v708
      %v2013 = vunpack.c.l.b16 %v709
      %v2014 = vunpack.c.l.b16 %v710
      %v2015 = vunpack.c.l.b16 %v711
      %v2016 = vunpack.c.l.b16 %v712
      %v2017 = vunpack.c.l.b16 %v713
      %v2018 = vunpack.c.l.b16 %v714
      %v2019 = vunpack.c.l.b16 %v715
      %v2020 = vunpack.c.l.b16 %v716
      %v2021 = vunpack.c.l.b16 %v717
      %v2022 = vunpack.c.l.b16 %v718
      %v2023 = vunpack.c.l.b16 %v719
      %v2024 = vunpack.c.l.b16 %v720
      %v2025 = vunpack.c.l.b16 %v721
      %v2026 = vunpack.c.l.b16 %v722
      %v2027 = vunpack.c.l.b16 %v723
      %v2028 = vunpack.c.l.b16 %v724
      %v2029 = vunpack.c.l.b16 %v725
      %v2030 = vunpack.c.l.b16 %v726
      %v2031 = vunpack.c.l.b16 %v727
      %v2032 = vunpack.c.l.b16 %v728
      %v2033 = vunpack.c.l.b16 %v729
      %v2034 = vunpack.c.l.b16 %v730
      %v2035 = vunpack.c.l.b16 %v731
      %v2036 = vunpack.c.l.b16 %v732
      %v2037 = vunpack.c.l.b16 %v733
      %v2038 = vunpack.c.l.b16 %v734
      %v2039 = vunpack.c.l.b16 %v735
      %v2040 = vunpack.c.l.b16 %v736
      %v2041 = vunpack.c.l.b16 %v737
      %v2042 = vunpack.c.l.b16 %v738
      %v2043 = vunpack.c.l.b16 %v739
      %v2044 = vunpack.c.l.b16 %v740
      %v2045 = vunpack.c.l.b16 %v741
      %v2046 = vunpack.c.l.b16 %v742
      %v2047 = vunpack.c.l.b16 %v743
      %v2048 = vunpack.c.l.b16 %v744
      %v2049 = vunpack.c.l.b16 %v745
      %v2050 = vunpack.c.l.b16 %v746
      %v2051 = vunpack.c.l.b16 %v747
      %v2052 = vunpack.c.l.b16 %v748
      %v2053 = vunpack.c.l.b16 %v749
      %v2054 = vunpack.c.l.b16 %v750
      %v2055 = vunpack.c.l.b16 %v751
      %v2056 = vunpack.c.l.b16 %v752
      %v2057 = vunpack.c.l.b16 %v753
      %v2058 = vunpack.c.l.b16 %v754
      %v2059 = vunpack.c.l.b16 %v755
      %v2060 = vunpack.c.l.b16 %v756
      %v2061 = vunpack.c.l.b16 %v757
      %v2062 = vunpack.c.l.b16 %v758
      %v2063 = vunpack.c.l.b16 %v759
      %v2064 = vunpack.c.l.b16 %v760
      %v2065 = vunpack.c.l.b16 %v761
      %v2066 = vunpack.c.l.b16 %v762
      %v2067 = vunpack.c.l.b16 %v763
      %v2068 = vunpack.c.l.b16 %v764
      %v2069 = vunpack.c.l.b16 %v765
      %v2070 = vunpack.c.l.b16 %v766
      %v2071 = vunpack.c.l.b16 %v767
      %v2072 = vunpack.c.l.b16 %v768
      %v2073 = vunpack.c.l.b16 %v769
      %v2074 = vunpack.c.l.b16 %v770
      %v2075 = vunpack.c.l.b16 %v771
      %v2076 = vunpack.c.l.b16 %v772
      %v2077 = vunpack.c.l.b16 %v773
      %v2078 = vunpack.c.l.b16 %v774
      %v2079 = vunpack.c.l.b16 %v775
      %v2080 = vunpack.c.l.b16 %v776
      %v2081 = vunpack.c.l.b16 %v777
      %v2082 = vunpack.c.l.b16 %v778
      %v2083 = vunpack.c.l.b16 %v779
      %v2084 = vunpack.c.l.b16 %v780
      %v2085 = vunpack.c.l.b16 %v781
      %v2086 = vunpack.c.l.b16 %v782
      %v2087 = vunpack.c.l.b16 %v783
      %v2088 = vunpack.c.l.b16 %v784
      %v2089 = vunpack.c.l.b16 %v785
      %v2090 = vunpack.c.l.b16 %v786
      %v2091 = vunpack.c.l.b16 %v787
      %v2092 = vunpack.c.l.b16 %v788
      %v2093 = vunpack.c.l.b16 %v789
      %v2094 = vunpack.c.l.b16 %v790
      %v2095 = vunpack.c.l.b16 %v791
      %v2096 = vunpack.c.l.b16 %v792
      %v2097 = vunpack.c.l.b16 %v793
      %v2098 = vunpack.c.l.b16 %v794
      %v2099 = vunpack.c.l.b16 %v795
      %v2100 = vunpack.c.l.b16 %v796
      %v2101 = vunpack.c.l.b16 %v797
      %v2102 = vunpack.c.l.b16 %v798
      %v2103 = vunpack.c.l.b16 %v799
      %v2104 = vunpack.c.l.b16 %v800
      %v2105 = vunpack.c.l.b16 %v801
      %v2106 = vunpack.c.l.b16 %v802
      %v2107 = vunpack.c.l.b16 %v803
      %v2108 = vunpack.c.l.b16 %v804
      %v2109 = vunpack.c.l.b16 %v805
      %v2110 = vunpack.c.l.b16 %v806
      %v2111 = vunpack.c.l.b16 %v807
      %v2112 = vunpack.c.l.b16 %v808
      %v2113 = vunpack.c.l.b16 %v809
      %v2114 = vunpack.c.l.b16 %v810
      %v2115 = vunpack.c.l.b16 %v811
      %v2116 = vunpack.c.l.b16 %v812
      %v2117 = vunpack.c.l.b16 %v813
      %v2118 = vunpack.c.l.b16 %v814
      %v2119 = vunpack.c.l.b16 %v815
      %v2120 = vunpack.c.l.b16 %v816
      %v2121 = vunpack.c.l.b16 %v817
      %v2122 = vunpack.c.l.b16 %v818
      %v2123 = vunpack.c.l.b16 %v819
      %v2124 = vunpack.c.l.b16 %v820
      %v2125 = vunpack.c.l.b16 %v821
      %v2126 = vunpack.c.l.b16 %v822
      %v2127 = vunpack.c.l.b16 %v823
      %v2128 = vunpack.c.l.b16 %v824
      %v2129 = vunpack.c.l.b16 %v825
      %v2130 = vunpack.c.l.b16 %v826
      %v2131 = vunpack.c.l.b16 %v827
      %v2132 = vunpack.c.l.b16 %v828
      %v2133 = vunpack.c.l.b16 %v829
      %v2134 = vunpack.c.l.b16 %v830
      %v2135 = vunpack.c.l.b16 %v831
      %v2136 = vunpack.c.l.b16 %v832
      %v2137 = vunpack.c.l.b16 %v833
      %v2138 = vunpack.c.l.b16 %v834
      %v2139 = vunpack.c.l.b16 %v835
      %v2140 = vunpack.c.l.b16 %v836
      %v2141 = vunpack.c.l.b16 %v837
      %v2142 = vunpack.c.l.b16 %v838
      %v2143 = vunpack.c.l.b16 %v839
      %v2144 = vunpack.c.l.b16 %v840
      %v2145 = vunpack.c.l.b16 %v841
      %v2146 = vunpack.c.l.b16 %v842
      %v2147 = vunpack.c.l.b16 %v843
      %v2148 = vunpack.c.l.b16 %v844
      %v2149 = vunpack.c.l.b16 %v845
      %v2150 = vunpack.c.l.b16 %v846
      %v2151 = vunpack.c.l.b16 %v847
      %v2152 = vunpack.c.l.b16 %v848
      %v2153 = vunpack.c.l.b16 %v849
      %v2154 = vunpack.c.l.b16 %v850
      %v2155 = vunpack.c.l.b16 %v851
      %v2156 = vunpack.c.l.b16 %v852
      %v2157 = vunpack.c.l.b16 %v853
      %v2158 = vunpack.c.l.b16 %v854
      %v2159 = vunpack.c.l.b16 %v855
      %v2160 = vunpack.c.l.b16 %v856
      %v2161 = vunpack.c.l.b16 %v857
      %v2162 = vunpack.c.l.b16 %v858
      %v2163 = vunpack.c.l.b16 %v859
      %v2164 = vunpack.c.l.b16 %v860
      %v2165 = vunpack.c.l.b16 %v861
      %v2166 = vunpack.c.l.b16 %v862
      %v2167 = vunpack.c.l.b16 %v863
      %v2168 = vunpack.c.l.b16 %v864
      %v2169 = vunpack.c.l.b16 %v865
      %v2170 = vunpack.c.l.b16 %v866
      %v2171 = vunpack.c.l.b16 %v867
      %v2172 = vunpack.c.l.b16 %v868
      %v2173 = vunpack.c.l.b16 %v869
      %v2174 = vunpack.c.l.b16 %v870
      %v2175 = vunpack.c.l.b16 %v871
      %v2176 = vunpack.c.l.b16 %v872
      %v2177 = vunpack.c.l.b16 %v873
      %v2178 = vunpack.c.l.b16 %v874
      %v2179 = vunpack.c.l.b16 %v875
      %v2180 = vunpack.c.l.b16 %v876
      %v2181 = vunpack.c.l.b16 %v877
      %v2182 = vunpack.c.l.b16 %v878
      %v2183 = vunpack.c.l.b16 %v879
      %v2184 = vunpack.c.l.b16 %v880
      %v2185 = vunpack.c.l.b16 %v881
      %v2186 = vunpack.c.l.b16 %v882
      %v2187 = vunpack.c.l.b16 %v883
      %v2188 = vunpack.c.l.b16 %v884
      %v2189 = vpack.c.b16 %v1790, %v1789
      %v2190 = vpack.c.b16 %v1792, %v1791
      %v2191 = vpack.c.b16 %v1794, %v1793
      %v2192 = vpack.c.b16 %v1796, %v1795
      %v2193 = vpack.c.b16 %v1798, %v1797
      %v2194 = vpack.c.b16 %v1800, %v1799
      %v2195 = vpack.c.b16 %v1802, %v1801
      %v2196 = vpack.c.b16 %v1804, %v1803
      %v2197 = vpack.c.b16 %v1806, %v1805
      %v2198 = vpack.c.b16 %v1808, %v1807
      %v2199 = vpack.c.b16 %v1810, %v1809
      %v2200 = vpack.c.b16 %v1812, %v1811
      %v2201 = vpack.c.b16 %v1814, %v1813
      %v2202 = vpack.c.b16 %v1816, %v1815
      %v2203 = vpack.c.b16 %v1818, %v1817
      %v2204 = vpack.c.b16 %v1820, %v1819
      %v2205 = vpack.c.b16 %v1822, %v1821
      %v2206 = vpack.c.b16 %v1824, %v1823
      %v2207 = vpack.c.b16 %v1826, %v1825
      %v2208 = vpack.c.b16 %v1828, %v1827
      %v2209 = vpack.c.b16 %v1830, %v1829
      %v2210 = vpack.c.b16 %v1832, %v1831
      %v2211 = vpack.c.b16 %v1834, %v1833
      %v2212 = vpack.c.b16 %v1836, %v1835
      %v2213 = vpack.c.b16 %v1838, %v1837
      %v2214 = vpack.c.b16 %v1840, %v1839
      %v2215 = vpack.c.b16 %v1842, %v1841
      %v2216 = vpack.c.b16 %v1844, %v1843
      %v2217 = vpack.c.b16 %v1846, %v1845
      %v2218 = vpack.c.b16 %v1848, %v1847
      %v2219 = vpack.c.b16 %v1850, %v1849
      %v2220 = vpack.c.b16 %v1852, %v1851
      %v2221 = vpack.c.b16 %v1854, %v1853
      %v2222 = vpack.c.b16 %v1856, %v1855
      %v2223 = vpack.c.b16 %v1858, %v1857
      %v2224 = vpack.c.b16 %v1860, %v1859
      %v2225 = vpack.c.b16 %v1862, %v1861
      %v2226 = vpack.c.b16 %v1864, %v1863
      %v2227 = vpack.c.b16 %v1866, %v1865
      %v2228 = vpack.c.b16 %v1868, %v1867
      %v2229 = vpack.c.b16 %v1870, %v1869
      %v2230 = vpack.c.b16 %v1872, %v1871
      %v2231 = vpack.c.b16 %v1874, %v1873
      %v2232 = vpack.c.b16 %v1876, %v1875
      %v2233 = vpack.c.b16 %v1878, %v1877
      %v2234 = vpack.c.b16 %v1880, %v1879
      %v2235 = vpack.c.b16 %v1882, %v1881
      %v2236 = vpack.c.b16 %v1884, %v1883
      %v2237 = vpack.c.b16 %v1886, %v1885
      %v2238 = vpack.c.b16 %v1888, %v1887
      %v2239 = vpack.c.b16 %v1890, %v1889
      %v2240 = vpack.c.b16 %v1892, %v1891
      %v2241 = vpack.c.b16 %v1894, %v1893
      %v2242 = vpack.c.b16 %v1896, %v1895
      %v2243 = vpack.c.b16 %v1898, %v1897
      %v2244 = vpack.c.b16 %v1900, %v1899
      %v2245 = vpack.c.b16 %v1902, %v1901
      %v2246 = vpack.c.b16 %v1904, %v1903
      %v2247 = vpack.c.b16 %v1906, %v1905
      %v2248 = vpack.c.b16 %v1908, %v1907
      %v2249 = vpack.c.b16 %v1910, %v1909
      %v2250 = vpack.c.b16 %v1912, %v1911
      %v2251 = vpack.c.b16 %v1914, %v1913
      %v2252 = vpack.c.b16 %v1916, %v1915
      %v2253 = vpack.c.b16 %v1918, %v1917
      %v2254 = vpack.c.b16 %v1920, %v1919
      %v2255 = vpack.c.b16 %v1922, %v1921
      %v2256 = vpack.c.b16 %v1924, %v1923
      %v2257 = vpack.c.b16 %v1926, %v1925
      %v2258 = vpack.c.b16 %v1928, %v1927
      %v2259 = vpack.c.b16 %v1930, %v1929
      %v2260 = vpack.c.b16 %v1932, %v1931
      %v2261 = vpack.c.b16 %v1934, %v1933
      %v2262 = vpack.c.b16 %v1936, %v1935
      %v2263 = vpack.c.b16 %v1938, %v1937
      %v2264 = vpack.c.b16 %v1940, %v1939
      %v2265 = vpack.c.b16 %v1942, %v1941
      %v2266 = vpack.c.b16 %v1944, %v1943
      %v2267 = vpack.c.b16 %v1946, %v1945
      %v2268 = vpack.c.b16 %v1948, %v1947
      %v2269 = vpack.c.b16 %v1950, %v1949
      %v2270 = vpack.c.b16 %v1952, %v1951
      %v2271 = vpack.c.b16 %v1954, %v1953
      %v2272 = vpack.c.b16 %v1956, %v1955
      %v2273 = vpack.c.b16 %v1958, %v1957
      %v2274 = vpack.c.b16 %v1960, %v1959
      %v2275 = vpack.c.b16 %v1962, %v1961
      %v2276 = vpack.c.b16 %v1964, %v1963
      %v2277 = vpack.c.b16 %v1966, %v1965
      %v2278 = vpack.c.b16 %v1968, %v1967
      %v2279 = vpack.c.b16 %v1970, %v1969
      %v2280 = vpack.c.b16 %v1972, %v1971
      %v2281 = vpack.c.b16 %v1974, %v1973
      %v2282 = vpack.c.b16 %v1976, %v1975
      %v2283 = vpack.c.b16 %v1978, %v1977
      %v2284 = vpack.c.b16 %v1980, %v1979
      %v2285 = vpack.c.b16 %v1982, %v1981
      %v2286 = vpack.c.b16 %v1984, %v1983
      %v2287 = vpack.c.b16 %v1986, %v1985
      %v2288 = vpack.c.b16 %v1988, %v1987
      %v2289 = vpack.c.b16 %v1990, %v1989
      %v2290 = vpack.c.b16 %v1992, %v1991
      %v2291 = vpack.c.b16 %v1994, %v1993
      %v2292 = vpack.c.b16 %v1996, %v1995
      %v2293 = vpack.c.b16 %v1998, %v1997
      %v2294 = vpack.c.b16 %v2000, %v1999
      %v2295 = vpack.c.b16 %v2002, %v2001
      %v2296 = vpack.c.b16 %v2004, %v2003
      %v2297 = vpack.c.b16 %v2006, %v2005
      %v2298 = vpack.c.b16 %v2008, %v2007
      %v2299 = vpack.c.b16 %v2010, %v2009
      %v2300 = vpack.c.b16 %v2012, %v2011
      %v2301 = vpack.c.b16 %v2014, %v2013
      %v2302 = vpack.c.b16 %v2016, %v2015
      %v2303 = vpack.c.b16 %v2018, %v2017
      %v2304 = vpack.c.b16 %v2020, %v2019
      %v2305 = vpack.c.b16 %v2022, %v2021
      %v2306 = vpack.c.b16 %v2024, %v2023
      %v2307 = vpack.c.b16 %v2026, %v2025
      %v2308 = vpack.c.b16 %v2028, %v2027
      %v2309 = vpack.c.b16 %v2030, %v2029
      %v2310 = vpack.c.b16 %v2032, %v2031
      %v2311 = vpack.c.b16 %v2034, %v2033
      %v2312 = vpack.c.b16 %v2036, %v2035
      %v2313 = vpack.c.b16 %v2038, %v2037
      %v2314 = vpack.c.b16 %v2040, %v2039
      %v2315 = vpack.c.b16 %v2042, %v2041
      %v2316 = vpack.c.b16 %v2044, %v2043
      %v2317 = vpack.c.b16 %v2046, %v2045
      %v2318 = vpack.c.b16 %v2048, %v2047
      %v2319 = vpack.c.b16 %v2050, %v2049
      %v2320 = vpack.c.b16 %v2052, %v2051
      %v2321 = vpack.c.b16 %v2054, %v2053
      %v2322 = vpack.c.b16 %v2056, %v2055
      %v2323 = vpack.c.b16 %v2058, %v2057
      %v2324 = vpack.c.b16 %v2060, %v2059
      %v2325 = vpack.c.b16 %v2062, %v2061
      %v2326 = vpack.c.b16 %v2064, %v2063
      %v2327 = vpack.c.b16 %v2066, %v2065
      %v2328 = vpack.c.b16 %v2068, %v2067
      %v2329 = vpack.c.b16 %v2070, %v2069
      %v2330 = vpack.c.b16 %v2072, %v2071
      %v2331 = vpack.c.b16 %v2074, %v2073
      %v2332 = vpack.c.b16 %v2076, %v2075
      %v2333 = vpack.c.b16 %v2078, %v2077
      %v2334 = vpack.c.b16 %v2080, %v2079
      %v2335 = vpack.c.b16 %v2082, %v2081
      %v2336 = vpack.c.b16 %v2084, %v2083
      %v2337 = vpack.c.b16 %v2086, %v2085
      %v2338 = vpack.c.b16 %v2088, %v2087
      %v2339 = vpack.c.b16 %v2090, %v2089
      %v2340 = vpack.c.b16 %v2092, %v2091
      %v2341 = vpack.c.b16 %v2094, %v2093
      %v2342 = vpack.c.b16 %v2096, %v2095
      %v2343 = vpack.c.b16 %v2098, %v2097
      %v2344 = vpack.c.b16 %v2100, %v2099
      %v2345 = vpack.c.b16 %v2102, %v2101
      %v2346 = vpack.c.b16 %v2104, %v2103
      %v2347 = vpack.c.b16 %v2106, %v2105
      %v2348 = vpack.c.b16 %v2108, %v2107
      %v2349 = vpack.c.b16 %v2110, %v2109
      %v2350 = vpack.c.b16 %v2112, %v2111
      %v2351 = vpack.c.b16 %v2114, %v2113
      %v2352 = vpack.c.b16 %v2116, %v2115
      %v2353 = vpack.c.b16 %v2118, %v2117
      %v2354 = vpack.c.b16 %v2120, %v2119
      %v2355 = vpack.c.b16 %v2122, %v2121
      %v2356 = vpack.c.b16 %v2124, %v2123
      %v2357 = vpack.c.b16 %v2126, %v2125
      %v2358 = vpack.c.b16 %v2128, %v2127
      %v2359 = vpack.c.b16 %v2130, %v2129
      %v2360 = vpack.c.b16 %v2132, %v2131
      %v2361 = vpack.c.b16 %v2134, %v2133
      %v2362 = vpack.c.b16 %v2136, %v2135
      %v2363 = vpack.c.b16 %v2138, %v2137
      %v2364 = vpack.c.b16 %v2140, %v2139
      %v2365 = vpack.c.b16 %v2142, %v2141
      %v2366 = vpack.c.b16 %v2144, %v2143
      %v2367 = vpack.c.b16 %v2146, %v2145
      %v2368 = vpack.c.b16 %v2148, %v2147
      %v2369 = vpack.c.b16 %v2150, %v2149
      %v2370 = vpack.c.b16 %v2152, %v2151
      %v2371 = vpack.c.b16 %v2154, %v2153
      %v2372 = vpack.c.b16 %v2156, %v2155
      %v2373 = vpack.c.b16 %v2158, %v2157
      %v2374 = vpack.c.b16 %v2160, %v2159
      %v2375 = vpack.c.b16 %v2162, %v2161
      %v2376 = vpack.c.b16 %v2164, %v2163
      %v2377 = vpack.c.b16 %v2166, %v2165
      %v2378 = vpack.c.b16 %v2168, %v2167
      %v2379 = vpack.c.b16 %v2170, %v2169
      %v2380 = vpack.c.b16 %v2172, %v2171
      %v2381 = vpack.c.b16 %v2174, %v2173
      %v2382 = vpack.c.b16 %v2176, %v2175
      %v2383 = vpack.c.b16 %v2178, %v2177
      %v2384 = vpack.c.b16 %v2180, %v2179
      %v2385 = vpack.c.b16 %v2182, %v2181
      %v2386 = vpack.c.b16 %v2184, %v2183
      %v2387 = vpack.c.b16 %v2186, %v2185
      %v2388 = vpack.c.b16 %v2188, %v2187
      %2589 = vmatprep.subr.bf16.mxu0 0
      %2590 = vmatpush1.bf16.msra.mxu0 %v2189
      %2591 = vmatprep.subr.bf16.mxu0 0
      %2592 = vmatpush1.bf16.msra.mxu0 %v2190
      %2593 = vmatprep.subr.bf16.mxu0 0
      %2594 = vmatpush1.bf16.msra.mxu0 %v2191
      %2595 = vmatprep.subr.bf16.mxu0 0
      %2596 = vmatpush1.bf16.msra.mxu0 %v2192
      %2597 = vmatprep.subr.bf16.mxu0 0
      %2598 = vmatpush1.bf16.msra.mxu0 %v2193
      %2599 = vmatprep.subr.bf16.mxu0 0
      %2600 = vmatpush1.bf16.msra.mxu0 %v2194
      %2601 = vmatprep.subr.bf16.mxu0 0
      %2602 = vmatpush1.bf16.msra.mxu0 %v2195
      %2603 = vmatprep.subr.bf16.mxu0 0
      %2604 = vmatpush1.bf16.msra.mxu0 %v2196
      %2605 = vmatprep.subr.bf16.mxu0 0
      %2606 = vmatpush1.bf16.msra.mxu0 %v2197
      %2607 = vmatprep.subr.bf16.mxu0 0
      %2608 = vmatpush1.bf16.msra.mxu0 %v2198
      %2609 = vmatprep.subr.bf16.mxu0 0
      %2610 = vmatpush1.bf16.msra.mxu0 %v2199
      %2611 = vmatprep.subr.bf16.mxu0 0
      %2612 = vmatpush1.bf16.msra.mxu0 %v2200
      %2613 = vmatprep.subr.bf16.mxu0 0
      %2614 = vmatpush1.bf16.msra.mxu0 %v2201
      %2615 = vmatprep.subr.bf16.mxu0 0
      %2616 = vmatpush1.bf16.msra.mxu0 %v2202
      %2617 = vmatprep.subr.bf16.mxu0 0
      %2618 = vmatpush1.bf16.msra.mxu0 %v2203
      %2619 = vmatprep.subr.bf16.mxu0 0
      %2620 = vmatpush1.bf16.msra.mxu0 %v2204
      %2621 = vmatprep.mubr.bf16.mxu0 %v1190
      %2622 = vmatmul.mubr.bf16.gmra.mrb[0].mxu0 %v1189
      %v2623 = vpop.f32.mrb[0].mxu0
      %v2624 = vadd.f32 0.0, %v2623
      %v2625 = vpop.f32.mrb[0].mxu0
      %v2626 = vpop.f32.mrb[0].mxu0
      %v2627 = vadd.f32 0.0, %v2626
      %v2628 = vpop.f32.mrb[0].mxu0
      %2629 = vmatprep.mubr.bf16.mxu0 %v1215
      %2630 = vmatmul.mubr.bf16.gmra.mrb[0].mxu0 %v1214
      %v2631 = vpop.f32.mrb[0].mxu0
      %v2632 = vadd.f32 0.0, %v2631
      %v2633 = vpop.f32.mrb[0].mxu0
      %v2634 = vpop.f32.mrb[0].mxu0
      %v2635 = vadd.f32 0.0, %v2634
      %v2636 = vpop.f32.mrb[0].mxu0
      %2637 = vmatprep.mubr.bf16.mxu0 %v1240
      %2638 = vmatmul.mubr.bf16.gmra.mrb[0].mxu0 %v1239
      %v2639 = vpop.f32.mrb[0].mxu0
      %v2640 = vadd.f32 0.0, %v2639
      %v2641 = vpop.f32.mrb[0].mxu0
      %v2642 = vpop.f32.mrb[0].mxu0
      %v2643 = vadd.f32 0.0, %v2642
      %v2644 = vpop.f32.mrb[0].mxu0
      %2645 = vmatprep.mubr.bf16.mxu0 %v1265
      %2646 = vmatmul.mubr.bf16.gmra.mrb[0].mxu0 %v1264
      %v2647 = vpop.f32.mrb[0].mxu0
      %v2648 = vadd.f32 0.0, %v2647
      %v2649 = vpop.f32.mrb[0].mxu0
      %v2650 = vpop.f32.mrb[0].mxu0
      %v2651 = vadd.f32 0.0, %v2650
      %v2652 = vpop.f32.mrb[0].mxu0
      %2653 = vdwg.mxu0
      %2654 = vmatprep.subr.bf16.mxu0 0
      %2655 = vmatpush1.bf16.msra.mxu0 %v2205
      %2656 = vmatprep.subr.bf16.mxu0 0
      %2657 = vmatpush1.bf16.msra.mxu0 %v2206
      %2658 = vmatprep.subr.bf16.mxu0 0
      %2659 = vmatpush1.bf16.msra.mxu0 %v2207
      %2660 = vmatprep.subr.bf16.mxu0 0
      %2661 = vmatpush1.bf16.msra.mxu0 %v2208
      %2662 = vmatprep.subr.bf16.mxu0 0
      %2663 = vmatpush1.bf16.msra.mxu0 %v2209
      %2664 = vmatprep.subr.bf16.mxu0 0
      %2665 = vmatpush1.bf16.msra.mxu0 %v2210
      %2666 = vmatprep.subr.bf16.mxu0 0
      %2667 = vmatpush1.bf16.msra.mxu0 %v2211
      %2668 = vmatprep.subr.bf16.mxu0 0
      %2669 = vmatpush1.bf16.msra.mxu0 %v2212
      %2670 = vmatprep.subr.bf16.mxu0 0
      %2671 = vmatpush1.bf16.msra.mxu0 %v2213
      %2672 = vmatprep.subr.bf16.mxu0 0
      %2673 = vmatpush1.bf16.msra.mxu0 %v2214
      %2674 = vmatprep.subr.bf16.mxu0 0
      %2675 = vmatpush1.bf16.msra.mxu0 %v2215
      %2676 = vmatprep.subr.bf16.mxu0 0
      %2677 = vmatpush1.bf16.msra.mxu0 %v2216
      %2678 = vmatprep.subr.bf16.mxu0 0
      %2679 = vmatpush1.bf16.msra.mxu0 %v2217
      %2680 = vmatprep.subr.bf16.mxu0 0
      %2681 = vmatpush1.bf16.msra.mxu0 %v2218
      %2682 = vmatprep.subr.bf16.mxu0 0
      %2683 = vmatpush1.bf16.msra.mxu0 %v2219
      %2684 = vmatprep.subr.bf16.mxu0 0
      %2685 = vmatpush1.bf16.msra.mxu0 %v2220
      %2686 = vmatprep.mubr.bf16.mxu0 %v1192
      %2687 = vmatmul.mubr.bf16.gmra.mrb[0].mxu0 %v1191
      %v2688 = vpop.f32.mrb[0].mxu0
      %v2689 = vadd.f32 %v2624, %v2688
      %v2690 = vpop.f32.mrb[0].mxu0
      %v2691 = vpop.f32.mrb[0].mxu0
      %v2692 = vadd.f32 %v2627, %v2691
      %v2693 = vpop.f32.mrb[0].mxu0
      %2694 = vmatprep.mubr.bf16.mxu0 %v1217
      %2695 = vmatmul.mubr.bf16.gmra.mrb[0].mxu0 %v1216
      %v2696 = vpop.f32.mrb[0].mxu0
      %v2697 = vadd.f32 %v2632, %v2696
      %v2698 = vpop.f32.mrb[0].mxu0
      %v2699 = vpop.f32.mrb[0].mxu0
      %v2700 = vadd.f32 %v2635, %v2699
      %v2701 = vpop.f32.mrb[0].mxu0
      %2702 = vmatprep.mubr.bf16.mxu0 %v1242
      %2703 = vmatmul.mubr.bf16.gmra.mrb[0].mxu0 %v1241
      %v2704 = vpop.f32.mrb[0].mxu0
      %v2705 = vadd.f32 %v2640, %v2704
      %v2706 = vpop.f32.mrb[0].mxu0
      %v2707 = vpop.f32.mrb[0].mxu0
      %v2708 = vadd.f32 %v2643, %v2707
      %v2709 = vpop.f32.mrb[0].mxu0
      %2710 = vmatprep.mubr.bf16.mxu0 %v1267
      %2711 = vmatmul.mubr.bf16.gmra.mrb[0].mxu0 %v1266
      %v2712 = vpop.f32.mrb[0].mxu0
      %v2713 = vadd.f32 %v2648, %v2712
      %v2714 = vpop.f32.mrb[0].mxu0
      %v2715 = vpop.f32.mrb[0].mxu0
      %v2716 = vadd.f32 %v2651, %v2715
      %v2717 = vpop.f32.mrb[0].mxu0
      %2718 = vdwg.mxu0
      %2719 = vmatprep.subr.bf16.mxu0 0
      %2720 = vmatpush1.bf16.msra.mxu0 %v2221
      %2721 = vmatprep.subr.bf16.mxu0 0
      %2722 = vmatpush1.bf16.msra.mxu0 %v2222
      %2723 = vmatprep.subr.bf16.mxu0 0
      %2724 = vmatpush1.bf16.msra.mxu0 %v2223
      %2725 = vmatprep.subr.bf16.mxu0 0
      %2726 = vmatpush1.bf16.msra.mxu0 %v2224
      %2727 = vmatprep.subr.bf16.mxu0 0
      %2728 = vmatpush1.bf16.msra.mxu0 %v2225
      %2729 = vmatprep.subr.bf16.mxu0 0
      %2730 = vmatpush1.bf16.msra.mxu0 %v2226
      %2731 = vmatprep.subr.bf16.mxu0 0
      %2732 = vmatpush1.bf16.msra.mxu0 %v2227
      %2733 = vmatprep.subr.bf16.mxu0 0
      %2734 = vmatpush1.bf16.msra.mxu0 %v2228
      %2735 = vmatprep.subr.bf16.mxu0 0
      %2736 = vmatpush1.bf16.msra.mxu0 %v2229
      %2737 = vmatprep.subr.bf16.mxu0 0
      %2738 = vmatpush1.bf16.msra.mxu0 %v2230
      %2739 = vmatprep.subr.bf16.mxu0 0
      %2740 = vmatpush1.bf16.msra.mxu0 %v2231
      %2741 = vmatprep.subr.bf16.mxu0 0
      %2742 = vmatpush1.bf16.msra.mxu0 %v2232
      %2743 = vmatprep.subr.bf16.mxu0 0
      %2744 = vmatpush1.bf16.msra.mxu0 %v2233
      %2745 = vmatprep.subr.bf16.mxu0 0
      %2746 = vmatpush1.bf16.msra.mxu0 %v2234
      %2747 = vmatprep.subr.bf16.mxu0 0
      %2748 = vmatpush1.bf16.msra.mxu0 %v2235
      %2749 = vmatprep.subr.bf16.mxu0 0
      %2750 = vmatpush1.bf16.msra.mxu0 %v2236
      %2751 = vmatprep.mubr.bf16.mxu0 %v1194
      %2752 = vmatmul.mubr.bf16.gmra.mrb[0].mxu0 %v1193
      %v2753 = vpop.f32.mrb[0].mxu0
      %v2754 = vadd.f32 %v2689, %v2753
      %v2755 = vpop.f32.mrb[0].mxu0
      %v2756 = vpop.f32.mrb[0].mxu0
      %v2757 = vadd.f32 %v2692, %v2756
      %v2758 = vpop.f32.mrb[0].mxu0
      %2759 = vmatprep.mubr.bf16.mxu0 %v1219
      %2760 = vmatmul.mubr.bf16.gmra.mrb[0].mxu0 %v1218
      %v2761 = vpop.f32.mrb[0].mxu0
      %v2762 = vadd.f32 %v2697, %v2761
      %v2763 = vpop.f32.mrb[0].mxu0
      %v2764 = vpop.f32.mrb[0].mxu0
      %v2765 = vadd.f32 %v2700, %v2764
      %v2766 = vpop.f32.mrb[0].mxu0
      %2767 = vmatprep.mubr.bf16.mxu0 %v1244
      %2768 = vmatmul.mubr.bf16.gmra.mrb[0].mxu0 %v1243
      %v2769 = vpop.f32.mrb[0].mxu0
      %v2770 = vadd.f32 %v2705, %v2769
      %v2771 = vpop.f32.mrb[0].mxu0
      %v2772 = vpop.f32.mrb[0].mxu0
      %v2773 = vadd.f32 %v2708, %v2772
      %v2774 = vpop.f32.mrb[0].mxu0
      %2775 = vmatprep.mubr.bf16.mxu0 %v1269
      %2776 = vmatmul.mubr.bf16.gmra.mrb[0].mxu0 %v1268
      %v2777 = vpop.f32.mrb[0].mxu0
      %v2778 = vadd.f32 %v2713, %v2777
      %v2779 = vpop.f32.mrb[0].mxu0
      %v2780 = vpop.f32.mrb[0].mxu0
      %v2781 = vadd.f32 %v2716, %v2780
      %v2782 = vpop.f32.mrb[0].mxu0
      %2783 = vdwg.mxu0
      %2784 = vmatprep.subr.bf16.mxu0 0
      %2785 = vmatpush1.bf16.msra.mxu0 %v2237
      %2786 = vmatprep.subr.bf16.mxu0 0
      %2787 = vmatpush1.bf16.msra.mxu0 %v2238
      %2788 = vmatprep.subr.bf16.mxu0 0
      %2789 = vmatpush1.bf16.msra.mxu0 %v2239
      %2790 = vmatprep.subr.bf16.mxu0 0
      %2791 = vmatpush1.bf16.msra.mxu0 %v2240
      %2792 = vmatprep.subr.bf16.mxu0 0
      %2793 = vmatpush1.bf16.msra.mxu0 %v2241
      %2794 = vmatprep.subr.bf16.mxu0 0
      %2795 = vmatpush1.bf16.msra.mxu0 %v2242
      %2796 = vmatprep.subr.bf16.mxu0 0
      %2797 = vmatpush1.bf16.msra.mxu0 %v2243
      %2798 = vmatprep.subr.bf16.mxu0 0
      %2799 = vmatpush1.bf16.msra.mxu0 %v2244
      %2800 = vmatprep.subr.bf16.mxu0 0
      %2801 = vmatpush1.bf16.msra.mxu0 %v2245
      %2802 = vmatprep.subr.bf16.mxu0 0
      %2803 = vmatpush1.bf16.msra.mxu0 %v2246
      %2804 = vmatprep.subr.bf16.mxu0 0
      %2805 = vmatpush1.bf16.msra.mxu0 %v2247
      %2806 = vmatprep.subr.bf16.mxu0 0
      %2807 = vmatpush1.bf16.msra.mxu0 %v2248
      %2808 = vmatprep.subr.bf16.mxu0 0
      %2809 = vmatpush1.bf16.msra.mxu0 %v2249
      %2810 = vmatprep.subr.bf16.mxu0 0
      %2811 = vmatpush1.bf16.msra.mxu0 %v2250
      %2812 = vmatprep.subr.bf16.mxu0 0
      %2813 = vmatpush1.bf16.msra.mxu0 %v2251
      %2814 = vmatprep.subr.bf16.mxu0 0
      %2815 = vmatpush1.bf16.msra.mxu0 %v2252
      %2816 = vmatprep.mubr.bf16.mxu0 %v1196
      %2817 = vmatmul.mubr.bf16.gmra.mrb[0].mxu0 %v1195
      %v2818 = vpop.f32.mrb[0].mxu0
      %v2819 = vadd.f32 %v2754, %v2818
      %v2820 = vpop.f32.mrb[0].mxu0
      %v2821 = vpop.f32.mrb[0].mxu0
      %v2822 = vadd.f32 %v2757, %v2821
      %v2823 = vpop.f32.mrb[0].mxu0
      %2824 = vmatprep.mubr.bf16.mxu0 %v1221
      %2825 = vmatmul.mubr.bf16.gmra.mrb[0].mxu0 %v1220
      %v2826 = vpop.f32.mrb[0].mxu0
      %v2827 = vadd.f32 %v2762, %v2826
      %v2828 = vpop.f32.mrb[0].mxu0
      %v2829 = vpop.f32.mrb[0].mxu0
      %v2830 = vadd.f32 %v2765, %v2829
      %v2831 = vpop.f32.mrb[0].mxu0
      %2832 = vmatprep.mubr.bf16.mxu0 %v1246
      %2833 = vmatmul.mubr.bf16.gmra.mrb[0].mxu0 %v1245
      %v2834 = vpop.f32.mrb[0].mxu0
      %v2835 = vadd.f32 %v2770, %v2834
      %v2836 = vpop.f32.mrb[0].mxu0
      %v2837 = vpop.f32.mrb[0].mxu0
      %v2838 = vadd.f32 %v2773, %v2837
      %v2839 = vpop.f32.mrb[0].mxu0
      %2840 = vmatprep.mubr.bf16.mxu0 %v1271
      %2841 = vmatmul.mubr.bf16.gmra.mrb[0].mxu0 %v1270
      %v2842 = vpop.f32.mrb[0].mxu0
      %v2843 = vadd.f32 %v2778, %v2842
      %v2844 = vpop.f32.mrb[0].mxu0
      %v2845 = vpop.f32.mrb[0].mxu0
      %v2846 = vadd.f32 %v2781, %v2845
      %v2847 = vpop.f32.mrb[0].mxu0
      %2848 = vdwg.mxu0
      %2849 = vmatprep.subr.bf16.mxu0 0
      %2850 = vmatpush1.bf16.msra.mxu0 %v2253
      %2851 = vmatprep.subr.bf16.mxu0 0
      %2852 = vmatpush1.bf16.msra.mxu0 %v2254
      %2853 = vmatprep.subr.bf16.mxu0 0
      %2854 = vmatpush1.bf16.msra.mxu0 %v2255
      %2855 = vmatprep.subr.bf16.mxu0 0
      %2856 = vmatpush1.bf16.msra.mxu0 %v2256
      %2857 = vmatprep.subr.bf16.mxu0 0
      %2858 = vmatpush1.bf16.msra.mxu0 %v2257
      %2859 = vmatprep.subr.bf16.mxu0 0
      %2860 = vmatpush1.bf16.msra.mxu0 %v2258
      %2861 = vmatprep.subr.bf16.mxu0 0
      %2862 = vmatpush1.bf16.msra.mxu0 %v2259
      %2863 = vmatprep.subr.bf16.mxu0 0
      %2864 = vmatpush1.bf16.msra.mxu0 %v2260
      %2865 = vmatprep.subr.bf16.mxu0 0
      %2866 = vmatpush1.bf16.msra.mxu0 %v2261
      %2867 = vmatprep.subr.bf16.mxu0 0
      %2868 = vmatpush1.bf16.msra.mxu0 %v2262
      %2869 = vmatprep.subr.bf16.mxu0 0
      %2870 = vmatpush1.bf16.msra.mxu0 %v2263
      %2871 = vmatprep.subr.bf16.mxu0 0
      %2872 = vmatpush1.bf16.msra.mxu0 %v2264
      %2873 = vmatprep.subr.bf16.mxu0 0
      %2874 = vmatpush1.bf16.msra.mxu0 %v2265
      %2875 = vmatprep.subr.bf16.mxu0 0
      %2876 = vmatpush1.bf16.msra.mxu0 %v2266
      %2877 = vmatprep.subr.bf16.mxu0 0
      %2878 = vmatpush1.bf16.msra.mxu0 %v2267
      %2879 = vmatprep.subr.bf16.mxu0 0
      %2880 = vmatpush1.bf16.msra.mxu0 %v2268
      %2881 = vmatprep.mubr.bf16.mxu0 %v1198
      %2882 = vmatmul.mubr.bf16.gmra.mrb[0].mxu0 %v1197
      %v2883 = vpop.f32.mrb[0].mxu0
      %v2884 = vadd.f32 %v2819, %v2883
      %v2885 = vpop.f32.mrb[0].mxu0
      %v2886 = vpop.f32.mrb[0].mxu0
      %v2887 = vadd.f32 %v2822, %v2886
      %v2888 = vpop.f32.mrb[0].mxu0
      %2889 = vmatprep.mubr.bf16.mxu0 %v1223
      %2890 = vmatmul.mubr.bf16.gmra.mrb[0].mxu0 %v1222
      %v2891 = vpop.f32.mrb[0].mxu0
      %v2892 = vadd.f32 %v2827, %v2891
      %v2893 = vpop.f32.mrb[0].mxu0
      %v2894 = vpop.f32.mrb[0].mxu0
      %v2895 = vadd.f32 %v2830, %v2894
      %v2896 = vpop.f32.mrb[0].mxu0
      %2897 = vmatprep.mubr.bf16.mxu0 %v1248
      %2898 = vmatmul.mubr.bf16.gmra.mrb[0].mxu0 %v1247
      %v2899 = vpop.f32.mrb[0].mxu0
      %v2900 = vadd.f32 %v2835, %v2899
      %v2901 = vpop.f32.mrb[0].mxu0
      %v2902 = vpop.f32.mrb[0].mxu0
      %v2903 = vadd.f32 %v2838, %v2902
      %v2904 = vpop.f32.mrb[0].mxu0
      %2905 = vmatprep.mubr.bf16.mxu0 %v1273
      %2906 = vmatmul.mubr.bf16.gmra.mrb[0].mxu0 %v1272
      %v2907 = vpop.f32.mrb[0].mxu0
      %v2908 = vadd.f32 %v2843, %v2907
      %v2909 = vpop.f32.mrb[0].mxu0
      %v2910 = vpop.f32.mrb[0].mxu0
      %v2911 = vadd.f32 %v2846, %v2910
      %v2912 = vpop.f32.mrb[0].mxu0
      %2913 = vdwg.mxu0
      %2914 = vmatprep.subr.bf16.mxu0 0
      %2915 = vmatpush1.bf16.msra.mxu0 %v2269
      %2916 = vmatprep.subr.bf16.mxu0 0
      %2917 = vmatpush1.bf16.msra.mxu0 %v2270
      %2918 = vmatprep.subr.bf16.mxu0 0
      %2919 = vmatpush1.bf16.msra.mxu0 %v2271
      %2920 = vmatprep.subr.bf16.mxu0 0
      %2921 = vmatpush1.bf16.msra.mxu0 %v2272
      %2922 = vmatprep.subr.bf16.mxu0 0
      %2923 = vmatpush1.bf16.msra.mxu0 %v2273
      %2924 = vmatprep.subr.bf16.mxu0 0
      %2925 = vmatpush1.bf16.msra.mxu0 %v2274
      %2926 = vmatprep.subr.bf16.mxu0 0
      %2927 = vmatpush1.bf16.msra.mxu0 %v2275
      %2928 = vmatprep.subr.bf16.mxu0 0
      %2929 = vmatpush1.bf16.msra.mxu0 %v2276
      %2930 = vmatprep.subr.bf16.mxu0 0
      %2931 = vmatpush1.bf16.msra.mxu0 %v2277
      %2932 = vmatprep.subr.bf16.mxu0 0
      %2933 = vmatpush1.bf16.msra.mxu0 %v2278
      %2934 = vmatprep.subr.bf16.mxu0 0
      %2935 = vmatpush1.bf16.msra.mxu0 %v2279
      %2936 = vmatprep.subr.bf16.mxu0 0
      %2937 = vmatpush1.bf16.msra.mxu0 %v2280
      %2938 = vmatprep.subr.bf16.mxu0 0
      %2939 = vmatpush1.bf16.msra.mxu0 %v2281
      %2940 = vmatprep.subr.bf16.mxu0 0
      %2941 = vmatpush1.bf16.msra.mxu0 %v2282
      %2942 = vmatprep.subr.bf16.mxu0 0
      %2943 = vmatpush1.bf16.msra.mxu0 %v2283
      %2944 = vmatprep.subr.bf16.mxu0 0
      %2945 = vmatpush1.bf16.msra.mxu0 %v2284
      %2946 = vmatprep.mubr.bf16.mxu0 %v1200
      %2947 = vmatmul.mubr.bf16.gmra.mrb[0].mxu0 %v1199
      %v2948 = vpop.f32.mrb[0].mxu0
      %v2949 = vadd.f32 %v2884, %v2948
      %v2950 = vpop.f32.mrb[0].mxu0
      %v2951 = vpop.f32.mrb[0].mxu0
      %v2952 = vadd.f32 %v2887, %v2951
      %v2953 = vpop.f32.mrb[0].mxu0
      %2954 = vmatprep.mubr.bf16.mxu0 %v1225
      %2955 = vmatmul.mubr.bf16.gmra.mrb[0].mxu0 %v1224
      %v2956 = vpop.f32.mrb[0].mxu0
      %v2957 = vadd.f32 %v2892, %v2956
      %v2958 = vpop.f32.mrb[0].mxu0
      %v2959 = vpop.f32.mrb[0].mxu0
      %v2960 = vadd.f32 %v2895, %v2959
      %v2961 = vpop.f32.mrb[0].mxu0
      %2962 = vmatprep.mubr.bf16.mxu0 %v1250
      %2963 = vmatmul.mubr.bf16.gmra.mrb[0].mxu0 %v1249
      %v2964 = vpop.f32.mrb[0].mxu0
      %v2965 = vadd.f32 %v2900, %v2964
      %v2966 = vpop.f32.mrb[0].mxu0
      %v2967 = vpop.f32.mrb[0].mxu0
      %v2968 = vadd.f32 %v2903, %v2967
      %v2969 = vpop.f32.mrb[0].mxu0
      %2970 = vmatprep.mubr.bf16.mxu0 %v1275
      %2971 = vmatmul.mubr.bf16.gmra.mrb[0].mxu0 %v1274
      %v2972 = vpop.f32.mrb[0].mxu0
      %v2973 = vadd.f32 %v2908, %v2972
      %v2974 = vpop.f32.mrb[0].mxu0
      %v2975 = vpop.f32.mrb[0].mxu0
      %v2976 = vadd.f32 %v2911, %v2975
      %v2977 = vpop.f32.mrb[0].mxu0
      %2978 = vdwg.mxu0
      %2979 = vmatprep.subr.bf16.mxu0 0
      %2980 = vmatpush1.bf16.msra.mxu0 %v2285
      %2981 = vmatprep.subr.bf16.mxu0 0
      %2982 = vmatpush1.bf16.msra.mxu0 %v2286
      %2983 = vmatprep.subr.bf16.mxu0 0
      %2984 = vmatpush1.bf16.msra.mxu0 %v2287
      %2985 = vmatprep.subr.bf16.mxu0 0
      %2986 = vmatpush1.bf16.msra.mxu0 %v2288
      %2987 = vmatprep.subr.bf16.mxu0 0
      %2988 = vmatpush1.bf16.msra.mxu0 %v2289
      %2989 = vmatprep.subr.bf16.mxu0 0
      %2990 = vmatpush1.bf16.msra.mxu0 %v2290
      %2991 = vmatprep.subr.bf16.mxu0 0
      %2992 = vmatpush1.bf16.msra.mxu0 %v2291
      %2993 = vmatprep.subr.bf16.mxu0 0
      %2994 = vmatpush1.bf16.msra.mxu0 %v2292
      %2995 = vmatprep.subr.bf16.mxu0 0
      %2996 = vmatpush1.bf16.msra.mxu0 %v2293
      %2997 = vmatprep.subr.bf16.mxu0 0
      %2998 = vmatpush1.bf16.msra.mxu0 %v2294
      %2999 = vmatprep.subr.bf16.mxu0 0
      %3000 = vmatpush1.bf16.msra.mxu0 %v2295
      %3001 = vmatprep.subr.bf16.mxu0 0
      %3002 = vmatpush1.bf16.msra.mxu0 %v2296
      %3003 = vmatprep.subr.bf16.mxu0 0
      %3004 = vmatpush1.bf16.msra.mxu0 %v2297
      %3005 = vmatprep.subr.bf16.mxu0 0
      %3006 = vmatpush1.bf16.msra.mxu0 %v2298
      %3007 = vmatprep.subr.bf16.mxu0 0
      %3008 = vmatpush1.bf16.msra.mxu0 %v2299
      %3009 = vmatprep.subr.bf16.mxu0 0
      %3010 = vmatpush1.bf16.msra.mxu0 %v2300
      %3011 = vmatprep.mubr.bf16.mxu0 %v1202
      %3012 = vmatmul.mubr.bf16.gmra.mrb[0].mxu0 %v1201
      %v3013 = vpop.f32.mrb[0].mxu0
      %v3014 = vadd.f32 %v2949, %v3013
      %v3015 = vpop.f32.mrb[0].mxu0
      %v3016 = vpop.f32.mrb[0].mxu0
      %v3017 = vadd.f32 %v2952, %v3016
      %v3018 = vpop.f32.mrb[0].mxu0
      %3019 = vmatprep.mubr.bf16.mxu0 %v1227
      %3020 = vmatmul.mubr.bf16.gmra.mrb[0].mxu0 %v1226
      %v3021 = vpop.f32.mrb[0].mxu0
      %v3022 = vadd.f32 %v2957, %v3021
      %v3023 = vpop.f32.mrb[0].mxu0
      %v3024 = vpop.f32.mrb[0].mxu0
      %v3025 = vadd.f32 %v2960, %v3024
      %v3026 = vpop.f32.mrb[0].mxu0
      %3027 = vmatprep.mubr.bf16.mxu0 %v1252
      %3028 = vmatmul.mubr.bf16.gmra.mrb[0].mxu0 %v1251
      %v3029 = vpop.f32.mrb[0].mxu0
      %v3030 = vadd.f32 %v2965, %v3029
      %v3031 = vpop.f32.mrb[0].mxu0
      %v3032 = vpop.f32.mrb[0].mxu0
      %v3033 = vadd.f32 %v2968, %v3032
      %v3034 = vpop.f32.mrb[0].mxu0
      %3035 = vmatprep.mubr.bf16.mxu0 %v1277
      %3036 = vmatmul.mubr.bf16.gmra.mrb[0].mxu0 %v1276
      %v3037 = vpop.f32.mrb[0].mxu0
      %v3038 = vadd.f32 %v2973, %v3037
      %v3039 = vpop.f32.mrb[0].mxu0
      %v3040 = vpop.f32.mrb[0].mxu0
      %v3041 = vadd.f32 %v2976, %v3040
      %v3042 = vpop.f32.mrb[0].mxu0
      %3043 = vdwg.mxu0
      %3044 = vmatprep.subr.bf16.mxu0 0
      %3045 = vmatpush1.bf16.msra.mxu0 %v2301
      %3046 = vmatprep.subr.bf16.mxu0 0
      %3047 = vmatpush1.bf16.msra.mxu0 %v2302
      %3048 = vmatprep.subr.bf16.mxu0 0
      %3049 = vmatpush1.bf16.msra.mxu0 %v2303
      %3050 = vmatprep.subr.bf16.mxu0 0
      %3051 = vmatpush1.bf16.msra.mxu0 %v2304
      %3052 = vmatprep.subr.bf16.mxu0 0
      %3053 = vmatpush1.bf16.msra.mxu0 %v2305
      %3054 = vmatprep.subr.bf16.mxu0 0
      %3055 = vmatpush1.bf16.msra.mxu0 %v2306
      %3056 = vmatprep.subr.bf16.mxu0 0
      %3057 = vmatpush1.bf16.msra.mxu0 %v2307
      %3058 = vmatprep.subr.bf16.mxu0 0
      %3059 = vmatpush1.bf16.msra.mxu0 %v2308
      %3060 = vmatprep.subr.bf16.mxu0 0
      %3061 = vmatpush1.bf16.msra.mxu0 %v2309
      %3062 = vmatprep.subr.bf16.mxu0 0
      %3063 = vmatpush1.bf16.msra.mxu0 %v2310
      %3064 = vmatprep.subr.bf16.mxu0 0
      %3065 = vmatpush1.bf16.msra.mxu0 %v2311
      %3066 = vmatprep.subr.bf16.mxu0 0
      %3067 = vmatpush1.bf16.msra.mxu0 %v2312
      %3068 = vmatprep.subr.bf16.mxu0 0
      %3069 = vmatpush1.bf16.msra.mxu0 %v2313
      %3070 = vmatprep.subr.bf16.mxu0 0
      %3071 = vmatpush1.bf16.msra.mxu0 %v2314
      %3072 = vmatprep.subr.bf16.mxu0 0
      %3073 = vmatpush1.bf16.msra.mxu0 %v2315
      %3074 = vmatprep.subr.bf16.mxu0 0
      %3075 = vmatpush1.bf16.msra.mxu0 %v2316
      %3076 = vmatprep.mubr.bf16.mxu0 %v1204
      %3077 = vmatmul.mubr.bf16.gmra.mrb[0].mxu0 %v1203
      %v3078 = vpop.f32.mrb[0].mxu0
      %v3079 = vadd.f32 %v3014, %v3078
      %v3080 = vpop.f32.mrb[0].mxu0
      %v3081 = vpop.f32.mrb[0].mxu0
      %v3082 = vadd.f32 %v3017, %v3081
      %v3083 = vpop.f32.mrb[0].mxu0
      %3084 = vmatprep.mubr.bf16.mxu0 %v1229
      %3085 = vmatmul.mubr.bf16.gmra.mrb[0].mxu0 %v1228
      %v3086 = vpop.f32.mrb[0].mxu0
      %v3087 = vadd.f32 %v3022, %v3086
      %v3088 = vpop.f32.mrb[0].mxu0
      %v3089 = vpop.f32.mrb[0].mxu0
      %v3090 = vadd.f32 %v3025, %v3089
      %v3091 = vpop.f32.mrb[0].mxu0
      %3092 = vmatprep.mubr.bf16.mxu0 %v1254
      %3093 = vmatmul.mubr.bf16.gmra.mrb[0].mxu0 %v1253
      %v3094 = vpop.f32.mrb[0].mxu0
      %v3095 = vadd.f32 %v3030, %v3094
      %v3096 = vpop.f32.mrb[0].mxu0
      %v3097 = vpop.f32.mrb[0].mxu0
      %v3098 = vadd.f32 %v3033, %v3097
      %v3099 = vpop.f32.mrb[0].mxu0
      %3100 = vmatprep.mubr.bf16.mxu0 %v1279
      %3101 = vmatmul.mubr.bf16.gmra.mrb[0].mxu0 %v1278
      %v3102 = vpop.f32.mrb[0].mxu0
      %v3103 = vadd.f32 %v3038, %v3102
      %v3104 = vpop.f32.mrb[0].mxu0
      %v3105 = vpop.f32.mrb[0].mxu0
      %v3106 = vadd.f32 %v3041, %v3105
      %v3107 = vpop.f32.mrb[0].mxu0
      %3108 = vdwg.mxu0
      %3109 = vmatprep.subr.bf16.mxu0 0
      %3110 = vmatpush1.bf16.msra.mxu0 %v2317
      %3111 = vmatprep.subr.bf16.mxu0 0
      %3112 = vmatpush1.bf16.msra.mxu0 %v2318
      %3113 = vmatprep.subr.bf16.mxu0 0
      %3114 = vmatpush1.bf16.msra.mxu0 %v2319
      %3115 = vmatprep.subr.bf16.mxu0 0
      %3116 = vmatpush1.bf16.msra.mxu0 %v2320
      %3117 = vmatprep.subr.bf16.mxu0 0
      %3118 = vmatpush1.bf16.msra.mxu0 %v2321
      %3119 = vmatprep.subr.bf16.mxu0 0
      %3120 = vmatpush1.bf16.msra.mxu0 %v2322
      %3121 = vmatprep.subr.bf16.mxu0 0
      %3122 = vmatpush1.bf16.msra.mxu0 %v2323
      %3123 = vmatprep.subr.bf16.mxu0 0
      %3124 = vmatpush1.bf16.msra.mxu0 %v2324
      %3125 = vmatprep.subr.bf16.mxu0 0
      %3126 = vmatpush1.bf16.msra.mxu0 %v2325
      %3127 = vmatprep.subr.bf16.mxu0 0
      %3128 = vmatpush1.bf16.msra.mxu0 %v2326
      %3129 = vmatprep.subr.bf16.mxu0 0
      %3130 = vmatpush1.bf16.msra.mxu0 %v2327
      %3131 = vmatprep.subr.bf16.mxu0 0
      %3132 = vmatpush1.bf16.msra.mxu0 %v2328
      %3133 = vmatprep.subr.bf16.mxu0 0
      %3134 = vmatpush1.bf16.msra.mxu0 %v2329
      %3135 = vmatprep.subr.bf16.mxu0 0
      %3136 = vmatpush1.bf16.msra.mxu0 %v2330
      %3137 = vmatprep.subr.bf16.mxu0 0
      %3138 = vmatpush1.bf16.msra.mxu0 %v2331
      %3139 = vmatprep.subr.bf16.mxu0 0
      %3140 = vmatpush1.bf16.msra.mxu0 %v2332
      %3141 = vmatprep.mubr.bf16.mxu0 %v1206
      %3142 = vmatmul.mubr.bf16.gmra.mrb[0].mxu0 %v1205
      %v3143 = vpop.f32.mrb[0].mxu0
      %v3144 = vadd.f32 %v3079, %v3143
      %v3145 = vpop.f32.mrb[0].mxu0
      %v3146 = vpop.f32.mrb[0].mxu0
      %v3147 = vadd.f32 %v3082, %v3146
      %v3148 = vpop.f32.mrb[0].mxu0
      %3149 = vmatprep.mubr.bf16.mxu0 %v1231
      %3150 = vmatmul.mubr.bf16.gmra.mrb[0].mxu0 %v1230
      %v3151 = vpop.f32.mrb[0].mxu0
      %v3152 = vadd.f32 %v3087, %v3151
      %v3153 = vpop.f32.mrb[0].mxu0
      %v3154 = vpop.f32.mrb[0].mxu0
      %v3155 = vadd.f32 %v3090, %v3154
      %v3156 = vpop.f32.mrb[0].mxu0
      %3157 = vmatprep.mubr.bf16.mxu0 %v1256
      %3158 = vmatmul.mubr.bf16.gmra.mrb[0].mxu0 %v1255
      %v3159 = vpop.f32.mrb[0].mxu0
      %v3160 = vadd.f32 %v3095, %v3159
      %v3161 = vpop.f32.mrb[0].mxu0
      %v3162 = vpop.f32.mrb[0].mxu0
      %v3163 = vadd.f32 %v3098, %v3162
      %v3164 = vpop.f32.mrb[0].mxu0
      %3165 = vmatprep.mubr.bf16.mxu0 %v1281
      %3166 = vmatmul.mubr.bf16.gmra.mrb[0].mxu0 %v1280
      %v3167 = vpop.f32.mrb[0].mxu0
      %v3168 = vadd.f32 %v3103, %v3167
      %v3169 = vpop.f32.mrb[0].mxu0
      %v3170 = vpop.f32.mrb[0].mxu0
      %v3171 = vadd.f32 %v3106, %v3170
      %v3172 = vpop.f32.mrb[0].mxu0
      %3173 = vdwg.mxu0
      %3174 = vmatprep.subr.bf16.mxu0 0
      %3175 = vmatpush1.bf16.msra.mxu0 %v2333
      %3176 = vmatprep.subr.bf16.mxu0 0
      %3177 = vmatpush1.bf16.msra.mxu0 %v2334
      %3178 = vmatprep.subr.bf16.mxu0 0
      %3179 = vmatpush1.bf16.msra.mxu0 %v2335
      %3180 = vmatprep.subr.bf16.mxu0 0
      %3181 = vmatpush1.bf16.msra.mxu0 %v2336
      %3182 = vmatprep.subr.bf16.mxu0 0
      %3183 = vmatpush1.bf16.msra.mxu0 %v2337
      %3184 = vmatprep.subr.bf16.mxu0 0
      %3185 = vmatpush1.bf16.msra.mxu0 %v2338
      %3186 = vmatprep.subr.bf16.mxu0 0
      %3187 = vmatpush1.bf16.msra.mxu0 %v2339
      %3188 = vmatprep.subr.bf16.mxu0 0
      %3189 = vmatpush1.bf16.msra.mxu0 %v2340
      %3190 = vmatprep.subr.bf16.mxu0 0
      %3191 = vmatpush1.bf16.msra.mxu0 %v2341
      %3192 = vmatprep.subr.bf16.mxu0 0
      %3193 = vmatpush1.bf16.msra.mxu0 %v2342
      %3194 = vmatprep.subr.bf16.mxu0 0
      %3195 = vmatpush1.bf16.msra.mxu0 %v2343
      %3196 = vmatprep.subr.bf16.mxu0 0
      %3197 = vmatpush1.bf16.msra.mxu0 %v2344
      %3198 = vmatprep.subr.bf16.mxu0 0
      %3199 = vmatpush1.bf16.msra.mxu0 %v2345
      %3200 = vmatprep.subr.bf16.mxu0 0
      %3201 = vmatpush1.bf16.msra.mxu0 %v2346
      %3202 = vmatprep.subr.bf16.mxu0 0
      %3203 = vmatpush1.bf16.msra.mxu0 %v2347
      %3204 = vmatprep.subr.bf16.mxu0 0
      %3205 = vmatpush1.bf16.msra.mxu0 %v2348
      %3206 = vmatprep.mubr.bf16.mxu0 %v1208
      %3207 = vmatmul.mubr.bf16.gmra.mrb[0].mxu0 %v1207
      %v3208 = vpop.f32.mrb[0].mxu0
      %v3209 = vadd.f32 %v3144, %v3208
      %v3210 = vpop.f32.mrb[0].mxu0
      %v3211 = vpop.f32.mrb[0].mxu0
      %v3212 = vadd.f32 %v3147, %v3211
      %v3213 = vpop.f32.mrb[0].mxu0
      %3214 = vmatprep.mubr.bf16.mxu0 %v1233
      %3215 = vmatmul.mubr.bf16.gmra.mrb[0].mxu0 %v1232
      %v3216 = vpop.f32.mrb[0].mxu0
      %v3217 = vadd.f32 %v3152, %v3216
      %v3218 = vpop.f32.mrb[0].mxu0
      %v3219 = vpop.f32.mrb[0].mxu0
      %v3220 = vadd.f32 %v3155, %v3219
      %v3221 = vpop.f32.mrb[0].mxu0
      %3222 = vmatprep.mubr.bf16.mxu0 %v1258
      %3223 = vmatmul.mubr.bf16.gmra.mrb[0].mxu0 %v1257
      %v3224 = vpop.f32.mrb[0].mxu0
      %v3225 = vadd.f32 %v3160, %v3224
      %v3226 = vpop.f32.mrb[0].mxu0
      %v3227 = vpop.f32.mrb[0].mxu0
      %v3228 = vadd.f32 %v3163, %v3227
      %v3229 = vpop.f32.mrb[0].mxu0
      %3230 = vmatprep.mubr.bf16.mxu0 %v1283
      %3231 = vmatmul.mubr.bf16.gmra.mrb[0].mxu0 %v1282
      %v3232 = vpop.f32.mrb[0].mxu0
      %v3233 = vadd.f32 %v3168, %v3232
      %v3234 = vpop.f32.mrb[0].mxu0
      %v3235 = vpop.f32.mrb[0].mxu0
      %v3236 = vadd.f32 %v3171, %v3235
      %v3237 = vpop.f32.mrb[0].mxu0
      %3238 = vdwg.mxu0
      %3239 = vmatprep.subr.bf16.mxu0 0
      %3240 = vmatpush1.bf16.msra.mxu0 %v2349
      %3241 = vmatprep.subr.bf16.mxu0 0
      %3242 = vmatpush1.bf16.msra.mxu0 %v2350
      %3243 = vmatprep.subr.bf16.mxu0 0
      %3244 = vmatpush1.bf16.msra.mxu0 %v2351
      %3245 = vmatprep.subr.bf16.mxu0 0
      %3246 = vmatpush1.bf16.msra.mxu0 %v2352
      %3247 = vmatprep.subr.bf16.mxu0 0
      %3248 = vmatpush1.bf16.msra.mxu0 %v2353
      %3249 = vmatprep.subr.bf16.mxu0 0
      %3250 = vmatpush1.bf16.msra.mxu0 %v2354
      %3251 = vmatprep.subr.bf16.mxu0 0
      %3252 = vmatpush1.bf16.msra.mxu0 %v2355
      %3253 = vmatprep.subr.bf16.mxu0 0
      %3254 = vmatpush1.bf16.msra.mxu0 %v2356
      %3255 = vmatprep.subr.bf16.mxu0 0
      %3256 = vmatpush1.bf16.msra.mxu0 %v2357
      %3257 = vmatprep.subr.bf16.mxu0 0
      %3258 = vmatpush1.bf16.msra.mxu0 %v2358
      %3259 = vmatprep.subr.bf16.mxu0 0
      %3260 = vmatpush1.bf16.msra.mxu0 %v2359
      %3261 = vmatprep.subr.bf16.mxu0 0
      %3262 = vmatpush1.bf16.msra.mxu0 %v2360
      %3263 = vmatprep.subr.bf16.mxu0 0
      %3264 = vmatpush1.bf16.msra.mxu0 %v2361
      %3265 = vmatprep.subr.bf16.mxu0 0
      %3266 = vmatpush1.bf16.msra.mxu0 %v2362
      %3267 = vmatprep.subr.bf16.mxu0 0
      %3268 = vmatpush1.bf16.msra.mxu0 %v2363
      %3269 = vmatprep.subr.bf16.mxu0 0
      %3270 = vmatpush1.bf16.msra.mxu0 %v2364
      %3271 = vmatprep.mubr.bf16.mxu0 %v1210
      %3272 = vmatmul.mubr.bf16.gmra.mrb[0].mxu0 %v1209
      %v3273 = vpop.f32.mrb[0].mxu0
      %v3274 = vadd.f32 %v3209, %v3273
      %v3275 = vpop.f32.mrb[0].mxu0
      %v3276 = vpop.f32.mrb[0].mxu0
      %v3277 = vadd.f32 %v3212, %v3276
      %v3278 = vpop.f32.mrb[0].mxu0
      %3279 = vmatprep.mubr.bf16.mxu0 %v1235
      %3280 = vmatmul.mubr.bf16.gmra.mrb[0].mxu0 %v1234
      %v3281 = vpop.f32.mrb[0].mxu0
      %v3282 = vadd.f32 %v3217, %v3281
      %v3283 = vpop.f32.mrb[0].mxu0
      %v3284 = vpop.f32.mrb[0].mxu0
      %v3285 = vadd.f32 %v3220, %v3284
      %v3286 = vpop.f32.mrb[0].mxu0
      %3287 = vmatprep.mubr.bf16.mxu0 %v1260
      %3288 = vmatmul.mubr.bf16.gmra.mrb[0].mxu0 %v1259
      %v3289 = vpop.f32.mrb[0].mxu0
      %v3290 = vadd.f32 %v3225, %v3289
      %v3291 = vpop.f32.mrb[0].mxu0
      %v3292 = vpop.f32.mrb[0].mxu0
      %v3293 = vadd.f32 %v3228, %v3292
      %v3294 = vpop.f32.mrb[0].mxu0
      %3295 = vmatprep.mubr.bf16.mxu0 %v1285
      %3296 = vmatmul.mubr.bf16.gmra.mrb[0].mxu0 %v1284
      %v3297 = vpop.f32.mrb[0].mxu0
      %v3298 = vadd.f32 %v3233, %v3297
      %v3299 = vpop.f32.mrb[0].mxu0
      %v3300 = vpop.f32.mrb[0].mxu0
      %v3301 = vadd.f32 %v3236, %v3300
      %v3302 = vpop.f32.mrb[0].mxu0
      %3303 = vdwg.mxu0
      %3304 = vmatprep.subr.bf16.mxu0 0
      %3305 = vmatpush1.bf16.msra.mxu0 %v2365
      %3306 = vmatprep.subr.bf16.mxu0 0
      %3307 = vmatpush1.bf16.msra.mxu0 %v2366
      %3308 = vmatprep.subr.bf16.mxu0 0
      %3309 = vmatpush1.bf16.msra.mxu0 %v2367
      %3310 = vmatprep.subr.bf16.mxu0 0
      %3311 = vmatpush1.bf16.msra.mxu0 %v2368
      %3312 = vmatprep.subr.bf16.mxu0 0
      %3313 = vmatpush1.bf16.msra.mxu0 %v2369
      %3314 = vmatprep.subr.bf16.mxu0 0
      %3315 = vmatpush1.bf16.msra.mxu0 %v2370
      %3316 = vmatprep.subr.bf16.mxu0 0
      %3317 = vmatpush1.bf16.msra.mxu0 %v2371
      %3318 = vmatprep.subr.bf16.mxu0 0
      %3319 = vmatpush1.bf16.msra.mxu0 %v2372
      %3320 = vmatprep.subr.bf16.mxu0 0
      %3321 = vmatpush1.bf16.msra.mxu0 %v2373
      %3322 = vmatprep.subr.bf16.mxu0 0
      %3323 = vmatpush1.bf16.msra.mxu0 %v2374
      %3324 = vmatprep.subr.bf16.mxu0 0
      %3325 = vmatpush1.bf16.msra.mxu0 %v2375
      %3326 = vmatprep.subr.bf16.mxu0 0
      %3327 = vmatpush1.bf16.msra.mxu0 %v2376
      %3328 = vmatprep.subr.bf16.mxu0 0
      %3329 = vmatpush1.bf16.msra.mxu0 %v2377
      %3330 = vmatprep.subr.bf16.mxu0 0
      %3331 = vmatpush1.bf16.msra.mxu0 %v2378
      %3332 = vmatprep.subr.bf16.mxu0 0
      %3333 = vmatpush1.bf16.msra.mxu0 %v2379
      %3334 = vmatprep.subr.bf16.mxu0 0
      %3335 = vmatpush1.bf16.msra.mxu0 %v2380
      %3336 = vmatprep.mubr.bf16.mxu0 %v1212
      %3337 = vmatmul.mubr.bf16.gmra.mrb[0].mxu0 %v1211
      %v3338 = vpop.f32.mrb[0].mxu0
      %v3339 = vadd.f32 %v3274, %v3338
      %v3340 = vpop.f32.mrb[0].mxu0
      %v3341 = vpop.f32.mrb[0].mxu0
      %v3342 = vadd.f32 %v3277, %v3341
      %v3343 = vpop.f32.mrb[0].mxu0
      %3344 = vmatprep.mubr.bf16.mxu0 %v1237
      %3345 = vmatmul.mubr.bf16.gmra.mrb[0].mxu0 %v1236
      %v3346 = vpop.f32.mrb[0].mxu0
      %v3347 = vadd.f32 %v3282, %v3346
      %v3348 = vpop.f32.mrb[0].mxu0
      %v3349 = vpop.f32.mrb[0].mxu0
      %v3350 = vadd.f32 %v3285, %v3349
      %v3351 = vpop.f32.mrb[0].mxu0
      %3352 = vmatprep.mubr.bf16.mxu0 %v1262
      %3353 = vmatmul.mubr.bf16.gmra.mrb[0].mxu0 %v1261
      %v3354 = vpop.f32.mrb[0].mxu0
      %v3355 = vadd.f32 %v3290, %v3354
      %v3356 = vpop.f32.mrb[0].mxu0
      %v3357 = vpop.f32.mrb[0].mxu0
      %v3358 = vadd.f32 %v3293, %v3357
      %v3359 = vpop.f32.mrb[0].mxu0
      %3360 = vmatprep.mubr.bf16.mxu0 %v1287
      %3361 = vmatmul.mubr.bf16.gmra.mrb[0].mxu0 %v1286
      %v3362 = vpop.f32.mrb[0].mxu0
      %v3363 = vadd.f32 %v3298, %v3362
      %v3364 = vpop.f32.mrb[0].mxu0
      %v3365 = vpop.f32.mrb[0].mxu0
      %v3366 = vadd.f32 %v3301, %v3365
      %v3367 = vpop.f32.mrb[0].mxu0
      %3368 = vdwg.mxu0
      %3369 = vmatprep.subr.bf16.mxu0 0
      %3370 = vmatpush1.bf16.msra.mxu0 %v2381
      %3371 = vmatprep.subr.bf16.mxu0 0
      %3372 = vmatpush1.bf16.msra.mxu0 %v2382
      %3373 = vmatprep.subr.bf16.mxu0 0
      %3374 = vmatpush1.bf16.msra.mxu0 %v2383
      %3375 = vmatprep.subr.bf16.mxu0 0
      %3376 = vmatpush1.bf16.msra.mxu0 %v2384
      %3377 = vmatprep.subr.bf16.mxu0 0
      %3378 = vmatpush1.bf16.msra.mxu0 %v2385
      %3379 = vmatprep.subr.bf16.mxu0 0
      %3380 = vmatpush1.bf16.msra.mxu0 %v2386
      %3381 = vmatprep.subr.bf16.mxu0 0
      %3382 = vmatpush1.bf16.msra.mxu0 %v2387
      %3383 = vmatprep.subr.bf16.mxu0 0
      %3384 = vmatpush1.bf16.msra.mxu0 %v2388
      %3385 = vmatprep.subr.bf16.mxu0 0
      %3386 = vmatpush1.bf16.msra.mxu0 0
      %3387 = vmatprep.subr.bf16.mxu0 0
      %3388 = vmatpush1.bf16.msra.mxu0 0
      %3389 = vmatprep.subr.bf16.mxu0 0
      %3390 = vmatpush1.bf16.msra.mxu0 0
      %3391 = vmatprep.subr.bf16.mxu0 0
      %3392 = vmatpush1.bf16.msra.mxu0 0
      %3393 = vmatprep.subr.bf16.mxu0 0
      %3394 = vmatpush1.bf16.msra.mxu0 0
      %3395 = vmatprep.subr.bf16.mxu0 0
      %3396 = vmatpush1.bf16.msra.mxu0 0
      %3397 = vmatprep.subr.bf16.mxu0 0
      %3398 = vmatpush1.bf16.msra.mxu0 0
      %3399 = vmatprep.subr.bf16.mxu0 0
      %3400 = vmatpush1.bf16.msra.mxu0 0
      %3401 = vmatprep.mubr.bf16.mxu0 0
      %3402 = vmatmul.mubr.bf16.gmra.mrb[0].mxu0 %v1213
      %v3403 = vpop.f32.mrb[0].mxu0
      %v3404 = vadd.f32 %v3339, %v3403
      %v3405 = vpop.f32.mrb[0].mxu0
      %v3406 = vpop.f32.mrb[0].mxu0
      %v3407 = vadd.f32 %v3342, %v3406
      %v3408 = vpop.f32.mrb[0].mxu0
      %3409 = vmatprep.mubr.bf16.mxu0 0
      %3410 = vmatmul.mubr.bf16.gmra.mrb[0].mxu0 %v1238
      %v3411 = vpop.f32.mrb[0].mxu0
      %v3412 = vadd.f32 %v3347, %v3411
      %v3413 = vpop.f32.mrb[0].mxu0
      %v3414 = vpop.f32.mrb[0].mxu0
      %v3415 = vadd.f32 %v3350, %v3414
      %v3416 = vpop.f32.mrb[0].mxu0
      %3417 = vmatprep.mubr.bf16.mxu0 0
      %3418 = vmatmul.mubr.bf16.gmra.mrb[0].mxu0 %v1263
      %v3419 = vpop.f32.mrb[0].mxu0
      %v3420 = vadd.f32 %v3355, %v3419
      %v3421 = vpop.f32.mrb[0].mxu0
      %v3422 = vpop.f32.mrb[0].mxu0
      %v3423 = vadd.f32 %v3358, %v3422
      %v3424 = vpop.f32.mrb[0].mxu0
      %3425 = vmatprep.mubr.bf16.mxu0 0
      %3426 = vmatmul.mubr.bf16.gmra.mrb[0].mxu0 %v1288
      %v3427 = vpop.f32.mrb[0].mxu0
      %v3428 = vadd.f32 %v3363, %v3427
      %v3429 = vpop.f32.mrb[0].mxu0
      %v3430 = vpop.f32.mrb[0].mxu0
      %v3431 = vadd.f32 %v3366, %v3430
      %v3432 = vpop.f32.mrb[0].mxu0
      %3433 = vdwg.mxu0
      %v3434 = vadd.f32 %v373, %v3404
      %v3435 = vadd.f32 %v374, %v3407
      %v3436 = vadd.f32 %v375, %v3412
      %v3437 = vadd.f32 %v376, %v3415
      %v3438 = vadd.f32 %v377, %v3420
      %v3439 = vadd.f32 %v378, %v3423
      %v3440 = vadd.f32 %v379, %v3428
      %v3441 = vadd.f32 %v380, %v3431
      %vm3442 = vcmask 130048
      %3443 = vst.msk [vmem:[#allocation2] sm:$0xff] %vm3442, %v3434
      %3444 = vst.msk [vmem:[#allocation2 + $0x8] sm:$0xff] %vm3442, %v3435
      %3445 = vst.msk [vmem:[#allocation2 + $0x10] sm:$0xff] %vm3442, %v3436
      %3446 = vst.msk [vmem:[#allocation2 + $0x18] sm:$0xff] %vm3442, %v3437
      %3447 = vst.msk [vmem:[#allocation2 + $0x20] sm:$0xff] %vm3442, %v3438
      %3448 = vst.msk [vmem:[#allocation2 + $0x28] sm:$0xff] %vm3442, %v3439
      %3449 = vst.msk [vmem:[#allocation2 + $0x30] sm:$0xff] %vm3442, %v3440
      %3450 = vst.msk [vmem:[#allocation2 + $0x38] sm:$0xff] %vm3442, %v3441
      // Predicated region
      $region53: #{gnn_forward.11} parent=47 // pred_check
        %p3451 = pneg %p360
      $region54: #{gnn_forward.11} parent=47 // pred_check_branch
        %3453 = sbr.rel (%p3451) target = $region56
      $region55: #{gnn_forward.11} parent=47 // pred_region
        %v3454 = vld [vmem:[%s351] sm:$0xf]
        %v3455 = vld [vmem:[%s351 + $0x4] sm:$0xf]
        %v3456 = vld [vmem:[%s351 + $0x8] sm:$0xf]
        %v3457 = vld [vmem:[%s351 + $0xc] sm:$0xf]
        %v3458 = vld [vmem:[%s351 + $0x10] sm:$0xf]
        %v3459 = vld [vmem:[%s351 + $0x14] sm:$0xf]
        %v3460 = vld [vmem:[%s351 + $0x18] sm:$0xf]
        %v3461 = vld [vmem:[%s351 + $0x1c] sm:$0xf]
        %v3462 = vld [vmem:[%s3] sm:$0xf]
        %v3463 = vld [vmem:[%s3 + $0x4] sm:$0xf]
        %v3472 = vunpack.c.l.b16 %v3454
        %v3473 = vunpack.c.l.b16 %v3455
        %v3474 = vunpack.c.l.b16 %v3456
        %v3475 = vunpack.c.l.b16 %v3457
        %v3476 = vunpack.c.l.b16 %v3458
        %v3477 = vunpack.c.l.b16 %v3459
        %v3478 = vunpack.c.l.b16 %v3460
        %v3479 = vunpack.c.l.b16 %v3461
        %v3480 = vpack.c.b16 %v3473, %v3472
        %v3481 = vpack.c.b16 %v3475, %v3474
        %v3482 = vpack.c.b16 %v3477, %v3476
        %v3483 = vpack.c.b16 %v3479, %v3478
        %v3486 = vunpack.c.l.b16 %v3462
        %v3487 = vunpack.c.l.b16 %v3463
        %v3488 = vpack.c.b16 %v3487, %v3486
        %v3491 = vsel %vm3442, %v3480, 0
        %v3494 = vsel %vm3442, %v3481, 0
        %v3497 = vsel %vm3442, %v3482, 0
        %v3500 = vsel %vm3442, %v3483, 0
        %3502 = vmatprep.subr.bf16.mxu0 0
        %3503 = vmatpush1.bf16.msra.mxu0 %v3488
        %3504 = vmatprep.subr.bf16.mxu0 0
        %3505 = vmatpush1.bf16.msra.mxu0 0
        %3506 = vmatprep.subr.bf16.mxu0 0
        %3507 = vmatpush1.bf16.msra.mxu0 0
        %3508 = vmatprep.subr.bf16.mxu0 0
        %3509 = vmatpush1.bf16.msra.mxu0 0
        %3510 = vmatprep.subr.bf16.mxu0 0
        %3511 = vmatpush1.bf16.msra.mxu0 0
        %3512 = vmatprep.subr.bf16.mxu0 0
        %3513 = vmatpush1.bf16.msra.mxu0 0
        %3514 = vmatprep.subr.bf16.mxu0 0
        %3515 = vmatpush1.bf16.msra.mxu0 0
        %3516 = vmatprep.subr.bf16.mxu0 0
        %3517 = vmatpush1.bf16.msra.mxu0 0
        %3518 = vmatprep.subr.bf16.mxu0 0
        %3519 = vmatpush1.bf16.msra.mxu0 0
        %3520 = vmatprep.subr.bf16.mxu0 0
        %3521 = vmatpush1.bf16.msra.mxu0 0
        %3522 = vmatprep.subr.bf16.mxu0 0
        %3523 = vmatpush1.bf16.msra.mxu0 0
        %3524 = vmatprep.subr.bf16.mxu0 0
        %3525 = vmatpush1.bf16.msra.mxu0 0
        %3526 = vmatprep.subr.bf16.mxu0 0
        %3527 = vmatpush1.bf16.msra.mxu0 0
        %3528 = vmatprep.subr.bf16.mxu0 0
        %3529 = vmatpush1.bf16.msra.mxu0 0
        %3530 = vmatprep.subr.bf16.mxu0 0
        %3531 = vmatpush1.bf16.msra.mxu0 0
        %3532 = vmatprep.subr.bf16.mxu0 0
        %3533 = vmatpush1.bf16.msra.mxu0 0
        %3534 = vmatprep.mubr.bf16.mxu0 0
        %3535 = vmatmul.mubr.bf16.gmra.mrb[0].mxu0 %v3491
        %v3536 = vpop.f32.mrb[0].mxu0
        %v3537 = vadd.f32 0.0, %v3536
        %v3538 = vpop.f32.mrb[0].mxu0
        %v3539 = vpop.f32.mrb[0].mxu0
        %v3540 = vadd.f32 0.0, %v3539
        %v3541 = vpop.f32.mrb[0].mxu0
        %3542 = vmatprep.mubr.bf16.mxu0 0
        %3543 = vmatmul.mubr.bf16.gmra.mrb[0].mxu0 %v3494
        %v3544 = vpop.f32.mrb[0].mxu0
        %v3545 = vadd.f32 0.0, %v3544
        %v3546 = vpop.f32.mrb[0].mxu0
        %v3547 = vpop.f32.mrb[0].mxu0
        %v3548 = vadd.f32 0.0, %v3547
        %v3549 = vpop.f32.mrb[0].mxu0
        %3550 = vmatprep.mubr.bf16.mxu0 0
        %3551 = vmatmul.mubr.bf16.gmra.mrb[0].mxu0 %v3497
        %v3552 = vpop.f32.mrb[0].mxu0
        %v3553 = vadd.f32 0.0, %v3552
        %v3554 = vpop.f32.mrb[0].mxu0
        %v3555 = vpop.f32.mrb[0].mxu0
        %v3556 = vadd.f32 0.0, %v3555
        %v3557 = vpop.f32.mrb[0].mxu0
        %3558 = vmatprep.mubr.bf16.mxu0 0
        %3559 = vmatmul.mubr.bf16.gmra.mrb[0].mxu0 %v3500
        %v3560 = vpop.f32.mrb[0].mxu0
        %v3561 = vadd.f32 0.0, %v3560
        %v3562 = vpop.f32.mrb[0].mxu0
        %v3563 = vpop.f32.mrb[0].mxu0
        %v3564 = vadd.f32 0.0, %v3563
        %v3565 = vpop.f32.mrb[0].mxu0
        %3566 = vdwg.mxu0
        %v3567 = vld [vmem:[#allocation2] sm:$0xff]
        %v3568 = vld [vmem:[#allocation2 + $0x8] sm:$0xff]
        %v3569 = vld [vmem:[#allocation2 + $0x10] sm:$0xff]
        %v3570 = vld [vmem:[#allocation2 + $0x18] sm:$0xff]
        %v3571 = vld [vmem:[#allocation2 + $0x20] sm:$0xff]
        %v3572 = vld [vmem:[#allocation2 + $0x28] sm:$0xff]
        %v3573 = vld [vmem:[#allocation2 + $0x30] sm:$0xff]
        %v3574 = vld [vmem:[#allocation2 + $0x38] sm:$0xff]
        %v3575 = vadd.f32 %v3567, %v3537
        %v3576 = vadd.f32 %v3568, %v3540
        %v3577 = vadd.f32 %v3569, %v3545
        %v3578 = vadd.f32 %v3570, %v3548
        %v3579 = vadd.f32 %v3571, %v3553
        %v3580 = vadd.f32 %v3572, %v3556
        %v3581 = vadd.f32 %v3573, %v3561
        %v3582 = vadd.f32 %v3574, %v3564
        %v3583 = vld [vmem:[%s4] sm:$0x1]
        %v3585 = vlaneseq
        %v3586 = vshrl.u32 %v3585, 7
        %v3587 = vsub.s32 0, %v3586
        %v3588 = vrot.slane %v3583, %v3587
        %v3590 = vadd.f32 %v3575, %v3588
        %v3591 = vadd.f32 %v3576, %v3588
        %v3592 = vadd.f32 %v3577, %v3588
        %v3593 = vadd.f32 %v3578, %v3588
        %v3594 = vadd.f32 %v3579, %v3588
        %v3595 = vadd.f32 %v3580, %v3588
        %v3596 = vadd.f32 %v3581, %v3588
        %v3597 = vadd.f32 %v3582, %v3588
        %v3598 = vmax.f32 %v3590, 0.0
        %v3599 = vmax.f32 %v3591, 0.0
        %v3600 = vmax.f32 %v3592, 0.0
        %v3601 = vmax.f32 %v3593, 0.0
        %v3602 = vmax.f32 %v3594, 0.0
        %v3603 = vmax.f32 %v3595, 0.0
        %v3604 = vmax.f32 %v3596, 0.0
        %v3605 = vmax.f32 %v3597, 0.0
        %v3606 = vld [vmem:[%s5] sm:$0xff]
        %v3607 = vld [vmem:[%s5 + $0x8] sm:$0xff]
        %v3608 = vld [vmem:[#allocation3] sm:$0x1]
        %v3610 = vlaneseq
        %v3611 = vshrl.u32 %v3610, 7
        %v3612 = vsub.s32 0, %v3611
        %v3613 = vrot.slane %v3608, %v3612
        %v3616 = vsel %vm3442, %v3598, 0
        %v3619 = vsel %vm3442, %v3599, 0
        %v3622 = vsel %vm3442, %v3600, 0
        %v3625 = vsel %vm3442, %v3601, 0
        %v3628 = vsel %vm3442, %v3602, 0
        %v3631 = vsel %vm3442, %v3603, 0
        %v3634 = vsel %vm3442, %v3604, 0
        %v3637 = vsel %vm3442, %v3605, 0
        %3639 = vmatprep.subr.mxu0 0.0
        %3640 = vmatpush1.msra.mxu0 %v3606
        %3641 = vmatprep.subr.mxu0 0.0
        %3642 = vmatpush1.msra.mxu0 %v3607
        %3643 = vmatprep.subr.mxu0 0.0
        %3644 = vmatpush1.msra.mxu0 0.0
        %3645 = vmatprep.subr.mxu0 0.0
        %3646 = vmatpush1.msra.mxu0 0.0
        %3647 = vmatprep.subr.mxu0 0.0
        %3648 = vmatpush1.msra.mxu0 0.0
        %3649 = vmatprep.subr.mxu0 0.0
        %3650 = vmatpush1.msra.mxu0 0.0
        %3651 = vmatprep.subr.mxu0 0.0
        %3652 = vmatpush1.msra.mxu0 0.0
        %3653 = vmatprep.subr.mxu0 0.0
        %3654 = vmatpush1.msra.mxu0 0.0
        %3655 = vmatprep.subr.mxu0 0.0
        %3656 = vmatpush1.msra.mxu0 0.0
        %3657 = vmatprep.subr.mxu0 0.0
        %3658 = vmatpush1.msra.mxu0 0.0
        %3659 = vmatprep.subr.mxu0 0.0
        %3660 = vmatpush1.msra.mxu0 0.0
        %3661 = vmatprep.subr.mxu0 0.0
        %3662 = vmatpush1.msra.mxu0 0.0
        %3663 = vmatprep.subr.mxu0 0.0
        %3664 = vmatpush1.msra.mxu0 0.0
        %3665 = vmatprep.subr.mxu0 0.0
        %3666 = vmatpush1.msra.mxu0 0.0
        %3667 = vmatprep.subr.mxu0 0.0
        %3668 = vmatpush1.msra.mxu0 0.0
        %3669 = vmatprep.subr.mxu0 0.0
        %3670 = vmatpush1.msra.mxu0 0.0
        %3671 = vmatprep.subr.mxu0 0.0
        %3672 = vmatpush1.msra.mxu0 0.0
        %3673 = vmatprep.subr.mxu0 0.0
        %3674 = vmatpush1.msra.mxu0 0.0
        %3675 = vmatprep.subr.mxu0 0.0
        %3676 = vmatpush1.msra.mxu0 0.0
        %3677 = vmatprep.subr.mxu0 0.0
        %3678 = vmatpush1.msra.mxu0 0.0
        %3679 = vmatprep.subr.mxu0 0.0
        %3680 = vmatpush1.msra.mxu0 0.0
        %3681 = vmatprep.subr.mxu0 0.0
        %3682 = vmatpush1.msra.mxu0 0.0
        %3683 = vmatprep.subr.mxu0 0.0
        %3684 = vmatpush1.msra.mxu0 0.0
        %3685 = vmatprep.subr.mxu0 0.0
        %3686 = vmatpush1.msra.mxu0 0.0
        %3687 = vmatprep.subr.mxu0 0.0
        %3688 = vmatpush1.msra.mxu0 0.0
        %3689 = vmatprep.subr.mxu0 0.0
        %3690 = vmatpush1.msra.mxu0 0.0
        %3691 = vmatprep.subr.mxu0 0.0
        %3692 = vmatpush1.msra.mxu0 0.0
        %3693 = vmatprep.subr.mxu0 0.0
        %3694 = vmatpush1.msra.mxu0 0.0
        %3695 = vmatprep.subr.mxu0 0.0
        %3696 = vmatpush1.msra.mxu0 0.0
        %3697 = vmatprep.subr.mxu0 0.0
        %3698 = vmatpush1.msra.mxu0 0.0
        %3699 = vmatprep.subr.mxu0 0.0
        %3700 = vmatpush1.msra.mxu0 0.0
        %3701 = vmatprep.subr.mxu0 0.0
        %3702 = vmatpush1.msra.mxu0 0.0
        %3703 = vmatprep.mubr.f32.mxu0 0.0
        %3704 = vmatmul.mubr.f32.gmra.mrb[0].mxu0 %v3616
        %v3705 = vpop.f32.mrb[0].mxu0
        %v3706 = vadd.f32 %v3613, %v3705
        %v3707 = vpop.f32.mrb[0].mxu0
        %3708 = vmatprep.mubr.f32.mxu0 0.0
        %3709 = vmatmul.mubr.f32.gmra.mrb[0].mxu0 %v3619
        %v3710 = vpop.f32.mrb[0].mxu0
        %v3711 = vadd.f32 %v3613, %v3710
        %v3712 = vpop.f32.mrb[0].mxu0
        %3713 = vmatprep.mubr.f32.mxu0 0.0
        %3714 = vmatmul.mubr.f32.gmra.mrb[0].mxu0 %v3622
        %v3715 = vpop.f32.mrb[0].mxu0
        %v3716 = vadd.f32 %v3613, %v3715
        %v3717 = vpop.f32.mrb[0].mxu0
        %3718 = vmatprep.mubr.f32.mxu0 0.0
        %3719 = vmatmul.mubr.f32.gmra.mrb[0].mxu0 %v3625
        %v3720 = vpop.f32.mrb[0].mxu0
        %v3721 = vadd.f32 %v3613, %v3720
        %v3722 = vpop.f32.mrb[0].mxu0
        %3723 = vmatprep.mubr.f32.mxu0 0.0
        %3724 = vmatmul.mubr.f32.gmra.mrb[0].mxu0 %v3628
        %v3725 = vpop.f32.mrb[0].mxu0
        %v3726 = vadd.f32 %v3613, %v3725
        %v3727 = vpop.f32.mrb[0].mxu0
        %3728 = vmatprep.mubr.f32.mxu0 0.0
        %3729 = vmatmul.mubr.f32.gmra.mrb[0].mxu0 %v3631
        %v3730 = vpop.f32.mrb[0].mxu0
        %v3731 = vadd.f32 %v3613, %v3730
        %v3732 = vpop.f32.mrb[0].mxu0
        %3733 = vmatprep.mubr.f32.mxu0 0.0
        %3734 = vmatmul.mubr.f32.gmra.mrb[0].mxu0 %v3634
        %v3735 = vpop.f32.mrb[0].mxu0
        %v3736 = vadd.f32 %v3613, %v3735
        %v3737 = vpop.f32.mrb[0].mxu0
        %3738 = vmatprep.mubr.f32.mxu0 0.0
        %3739 = vmatmul.mubr.f32.gmra.mrb[0].mxu0 %v3637
        %v3740 = vpop.f32.mrb[0].mxu0
        %v3741 = vadd.f32 %v3613, %v3740
        %v3742 = vpop.f32.mrb[0].mxu0
        %3743 = vdwg.mxu0
        %v3744 = vxor.u32 %v3706, 2147483648
        %v3745 = vxor.u32 %v3711, 2147483648
        %v3746 = vxor.u32 %v3716, 2147483648
        %v3747 = vxor.u32 %v3721, 2147483648
        %v3748 = vxor.u32 %v3726, 2147483648
        %v3749 = vxor.u32 %v3731, 2147483648
        %v3750 = vxor.u32 %v3736, 2147483648
        %v3751 = vxor.u32 %v3741, 2147483648
        %v3752 = vmul.f32 %v3744, 1.442695
        %v3753 = vpow.pop %v3752
        %v3754 = vmul.f32 %v3745, 1.442695
        %v3755 = vpow.pop %v3754
        %v3756 = vmul.f32 %v3746, 1.442695
        %v3757 = vpow.pop %v3756
        %v3758 = vmul.f32 %v3747, 1.442695
        %v3759 = vpow.pop %v3758
        %v3760 = vmul.f32 %v3748, 1.442695
        %v3761 = vpow.pop %v3760
        %v3762 = vmul.f32 %v3749, 1.442695
        %v3763 = vpow.pop %v3762
        %v3764 = vmul.f32 %v3750, 1.442695
        %v3765 = vpow.pop %v3764
        %v3766 = vmul.f32 %v3751, 1.442695
        %v3767 = vpow.pop %v3766
        %v3768 = vadd.f32 %v3753, 1.0
        %v3769 = vadd.f32 %v3755, 1.0
        %v3770 = vadd.f32 %v3757, 1.0
        %v3771 = vadd.f32 %v3759, 1.0
        %v3772 = vadd.f32 %v3761, 1.0
        %v3773 = vadd.f32 %v3763, 1.0
        %v3774 = vadd.f32 %v3765, 1.0
        %v3775 = vadd.f32 %v3767, 1.0
        %v3776 = vrcp.pop %v3768
        %v3777 = vmul.f32 1.0, %v3776
        %v3778 = vrcp.pop %v3769
        %v3779 = vmul.f32 1.0, %v3778
        %v3780 = vrcp.pop %v3770
        %v3781 = vmul.f32 1.0, %v3780
        %v3782 = vrcp.pop %v3771
        %v3783 = vmul.f32 1.0, %v3782
        %v3784 = vrcp.pop %v3772
        %v3785 = vmul.f32 1.0, %v3784
        %v3786 = vrcp.pop %v3773
        %v3787 = vmul.f32 1.0, %v3786
        %v3788 = vrcp.pop %v3774
        %v3789 = vmul.f32 1.0, %v3788
        %v3790 = vrcp.pop %v3775
        %v3791 = vmul.f32 1.0, %v3790
        %vm3792 = vcmask 7168
        %3793 = vst.msk [vmem:[%s357] sm:$0xff] %vm3792, %v3777
        %3794 = vst.msk [vmem:[%s357 + $0x8] sm:$0xff] %vm3792, %v3779
        %3795 = vst.msk [vmem:[%s357 + $0x10] sm:$0xff] %vm3792, %v3781
        %3796 = vst.msk [vmem:[%s357 + $0x18] sm:$0xff] %vm3792, %v3783
        %3797 = vst.msk [vmem:[%s357 + $0x20] sm:$0xff] %vm3792, %v3785
        %3798 = vst.msk [vmem:[%s357 + $0x28] sm:$0xff] %vm3792, %v3787
        %3799 = vst.msk [vmem:[%s357 + $0x30] sm:$0xff] %vm3792, %v3789
        %3800 = vst.msk [vmem:[%s357 + $0x38] sm:$0xff] %vm3792, %v3791
      $region56: #{gnn_forward.11} parent=47 // pred_fallthru
        _
      %s3801 = smul.u32 8, %s24
      %p3802 = scmp.lt.s32.totalorder %s3801, 15
      %s3803 = scalar_select %p3802, %s3801, 15
      %s3804 = smul.addr %s3803, 8
      %s3805 = scalar_lea.vmem %s7, %s3804
      // Predicated region
      $region57: #{gnn_forward.11} parent=47 // pred_check
        %p3806 = pneg %p214
      $region58: #{gnn_forward.11} parent=47 // pred_check_branch
        %3808 = sbr.rel (%p3806) target = $region60
      $region59: #{gnn_forward.11} parent=47 // pred_region
        %s3809 = smul.u32 8, %s24
      $region60: #{gnn_forward.11} parent=47 // pred_fallthru
        _
    $region48: #{gnn_forward.11} parent=5 // pred_fallthru
      _
    %p3810 = scmp.le.s32.totalorder 2, %s15
    // Predicated region
    $region61: #{gnn_forward.11} parent=5 // pred_check
      %p3811 = pneg %p3810
    $region62: #{gnn_forward.11} parent=5 // pred_check_branch
      %3813 = sbr.rel (%p3811) target = $region64
    $region63: #{gnn_forward.11} parent=5 // pred_region
      %s3814 = ssub.s32 %s15, 2
      // Predicated region
      $region65: #{gnn_forward.11} parent=63 // pred_check
        %p3815 = pneg %p220
      $region66: #{gnn_forward.11} parent=63 // pred_check_branch
        %3817 = sbr.rel (%p3815) target = $region68
      $region67: #{gnn_forward.11} parent=63 // pred_region
        %s3818 = smul.u32 8, %s26
        %p3819 = scmp.lt.s32.totalorder %s3818, 15
        %s3820 = scalar_select %p3819, %s3818, 15
        %s3821 = smul.addr %s3820, 8
        %s3822 = scalar_lea.vmem %s7, %s3821
      $region68: #{gnn_forward.11} parent=63 // pred_fallthru
        _
    $region64: #{gnn_forward.11} parent=5 // pred_fallthru
      _
  $region6: #{gnn_forward.11} parent=0 // loop_footer
    %s19 = sadd.s32 1, %s15
  $region7: #{gnn_forward.11} parent=0 // loop_footer_branch
    %14 = sbr.rel target = $region3
  $region8: #{gnn_forward.11} parent=0 // loop_exit
    _

</llo_original>
